<compile_context>
chip_gen: v5e
topology: v5e:2x2
jax: 0.10.0
libtpu: 0.0.40
codegen_flags: <defaults>
</compile_context>

<pallas_src>
import functools

import jax
import jax.numpy as jnp
from jax.experimental import pallas as pl
from jax.experimental.pallas import tpu as pltpu

EPS = 1e-5                      # PyTorch BatchNorm2d default
LANE = 128                      # TPU lane width
VMEM_LIMIT = 64 * 1024 * 1024   # <= physical VMEM on v5e/v6e/v7x


def _ceil_to(x, m):
    return (x + m - 1) // m * m


def _pad_hw1(a):
    """Zero-pad an (H, W, C) value by 1 on both spatial dims (concat-based)."""
    h, w, c = a.shape
    zc = jnp.zeros((h, 1, c), a.dtype)
    a = jnp.concatenate([zc, a, zc], axis=1)
    zr = jnp.zeros((1, w + 2, c), a.dtype)
    return jnp.concatenate([zr, a, zr], axis=0)


# ----------------------------- Pallas kernels ------------------------------

def _conv3x3_kernel(*refs, H, W, n_inputs, fuse_input_act, pad_output):
    """3x3 conv (padding=1) on one image as 3 deep-K bf16 matmuls.

    in refs : n_inputs spatially padded tiles (1, H+2, W+2, Cin_i) bf16,
              weights (3, 3*sum(Cin_i), Cout_p) bf16 ordered [kx, (ky,cin), cout],
              and, if fuse_input_act, prev-layer BN scale/shift (1,1,Cin) f32.
    out refs: y (1, H+2, W+2, Cout_p) bf16 if pad_output else (1, H*W, Cout_p),
              stats (1, 8, Cout_p) f32 with rows [sum, sum_sq, 0, ...].
    """
    x_refs = refs[:n_inputs]
    w_ref = refs[n_inputs]
    if fuse_input_act:
        scale_ref, shift_ref = refs[n_inputs + 1], refs[n_inputs + 2]
    y_ref, stats_ref = refs[-2], refs[-1]
    cout = stats_ref.shape[-1]

    tiles = []
    for xr in x_refs:
        xb = xr[0]                                       # (H+2, W+2, Cin) bf16
        if fuse_input_act:
            # Previous layer's BatchNorm + SiLU (+ Dropout(p=0) = identity)
            # fused into this conv's input stage; interior only, then the
            # zero padding ring is restored exactly.
            a = xb[1:H + 1, 1:W + 1, :].astype(jnp.float32)
            a = a * scale_ref[0] + shift_ref[0]
            a = a * jax.nn.sigmoid(a)                    # SiLU (f32, v5e-safe)
            xb = _pad_hw1(a.astype(jnp.bfloat16))
        tiles.append(xb)

    # Deep-K operand: the 3 ky taps (of every input) concatenated along the
    # channel axis -> 3 matmuls with K = 3*Cin instead of 9 with K = Cin.
    xcat = jnp.concatenate(
        [t[ky:ky + H] for ky in range(3) for t in tiles], axis=-1)
    k = xcat.shape[-1]                                   # 3 * total Cin

    acc = jnp.zeros((H * W, cout), jnp.float32)
    for kx in range(3):
        xs = xcat[:, kx:kx + W, :].reshape(H * W, k)
        acc = acc + jnp.dot(xs, w_ref[kx], preferred_element_type=jnp.float32)

    if pad_output:
        # Store directly into a spatially padded tile so the next conv needs
        # no XLA-side pad (saves an HBM round trip of this activation).
        y_ref[0] = _pad_hw1(acc.reshape(H, W, cout).astype(y_ref.dtype))
    else:
        y_ref[0] = acc.astype(y_ref.dtype)

    # Partial BN statistics (tiling-safe; reduced across the grid in XLA),
    # padded to 8 sublanes so the store is unmasked.
    s = jnp.sum(acc, axis=0, keepdims=True)              # (1, Cout_p)
    ss = jnp.sum(acc * acc, axis=0, keepdims=True)       # (1, Cout_p)
    stats_ref[0] = jnp.concatenate(
        [s, ss, jnp.zeros((6, cout), jnp.float32)], axis=0)


def _upconv_kernel(x_ref, w_ref, b_ref, scale_ref, shift_ref, o_ref):
    """BN2+SiLU (fused input) -> ConvTranspose2d(k=2,s=2) -> SiLU, bf16 out.

    x_ref:  (TM, Cp) bf16  pre-BN conv2 output rows (rows = (n, y, x))
    w_ref:  (Cp, 4*Cu_p) bf16  columns ordered [co_padded, ki, kj]
    b_ref:  (1, 4*Cu_p) f32
    scale_ref/shift_ref: (1, Cp) f32
    o_ref:  (TM, 4*Cu_p) bf16
    """
    a = x_ref[...].astype(jnp.float32) * scale_ref[...] + shift_ref[...]
    a = a * jax.nn.sigmoid(a)                            # SiLU
    y = jnp.dot(a.astype(jnp.bfloat16), w_ref[...],
                preferred_element_type=jnp.float32) + b_ref[...]
    o_ref[...] = (y * jax.nn.sigmoid(y)).astype(o_ref.dtype)   # final SiLU


# ------------------------------ pallas_call wrappers ------------------------

def _conv3x3(xs, w, scale, shift, *, fuse_input_act, pad_output):
    """xs: list of spatially padded NHWC bf16 inputs (N, H+2, W+2, Cin_i)."""
    N, Hp2, Wp2, _ = xs[0].shape
    H, W = Hp2 - 2, Wp2 - 2
    cout_p = w.shape[-1]
    kernel = functools.partial(
        _conv3x3_kernel, H=H, W=W, n_inputs=len(xs),
        fuse_input_act=fuse_input_act, pad_output=pad_output)

    in_specs = [pl.BlockSpec((1, Hp2, Wp2, x.shape[-1]),
                             lambda n: (n, 0, 0, 0)) for x in xs]
    in_specs.append(pl.BlockSpec(w.shape, lambda n: (0, 0, 0)))
    operands = list(xs) + [w]
    if fuse_input_act:
        cin = scale.shape[-1]
        in_specs += [pl.BlockSpec((1, 1, cin), lambda n: (0, 0, 0)),
                     pl.BlockSpec((1, 1, cin), lambda n: (0, 0, 0))]
        operands += [scale, shift]

    if pad_output:
        y_shape = (N, Hp2, Wp2, cout_p)
        y_spec = pl.BlockSpec((1, Hp2, Wp2, cout_p), lambda n: (n, 0, 0, 0))
    else:
        y_shape = (N, H * W, cout_p)
        y_spec = pl.BlockSpec((1, H * W, cout_p), lambda n: (n, 0, 0))

    return pl.pallas_call(
        kernel,
        grid=(N,),
        in_specs=in_specs,
        out_specs=(y_spec, pl.BlockSpec((1, 8, cout_p), lambda n: (n, 0, 0))),
        out_shape=(jax.ShapeDtypeStruct(y_shape, jnp.bfloat16),
                   jax.ShapeDtypeStruct((N, 8, cout_p), jnp.float32)),
        compiler_params=pltpu.CompilerParams(
            dimension_semantics=("parallel",),
            vmem_limit_bytes=VMEM_LIMIT),
    )(*operands)


def _upconv(x2d, w, b, scale, shift):
    rows, cp = x2d.shape
    ncols = w.shape[-1]
    # Row tile: target ~8 grid steps for real pipelining / megacore balance,
    # keep blocks large enough to amortize per-step overhead, cap at 2048.
    TM = min(2048, max(256, _ceil_to(max(rows // 8, 1), 256)))
    rows_p = _ceil_to(rows, TM)
    if rows_p != rows:
        x2d = jnp.pad(x2d, ((0, rows_p - rows), (0, 0)))   # tail sliced off below
    out = pl.pallas_call(
        _upconv_kernel,
        grid=(rows_p // TM,),
        in_specs=[
            pl.BlockSpec((TM, cp), lambda i: (i, 0)),
            pl.BlockSpec((cp, ncols), lambda i: (0, 0)),
            pl.BlockSpec((1, ncols), lambda i: (0, 0)),
            pl.BlockSpec((1, cp), lambda i: (0, 0)),
            pl.BlockSpec((1, cp), lambda i: (0, 0)),
        ],
        out_specs=pl.BlockSpec((TM, ncols), lambda i: (i, 0)),
        out_shape=jax.ShapeDtypeStruct((rows_p, ncols), jnp.bfloat16),
        compiler_params=pltpu.CompilerParams(
            dimension_semantics=("parallel",),
            vmem_limit_bytes=VMEM_LIMIT),
    )(x2d, w, b, scale, shift)
    return out[:rows]


# ------------------------------ parameter prep ------------------------------

def prepare_params(params, input_channels):
    """One-time reshape / zero-pad (lane-dense) / bf16 cast of the weights."""
    C = input_channels
    Cp = _ceil_to(C, LANE)               # conv output channels, padded to 128
    Cu = C // 2
    Cup = _ceil_to(Cu, LANE // 4)        # up-conv channels: 4*Cup % 128 == 0

    def conv_weight(w, cin_pad, cout_pad):
        cout, cin = w.shape[0], w.shape[1]
        wt = jnp.transpose(w, (3, 2, 1, 0))              # (kx, ky, cin, cout)
        wt = jnp.pad(wt, ((0, 0), (0, 0),
                          (0, cin_pad - cin), (0, cout_pad - cout)))
        # K rows ordered (ky, cin) to match the in-kernel ky channel concat.
        return wt.reshape(3, 3 * cin_pad, cout_pad).astype(jnp.bfloat16)

    wu = params["wu"]                                    # (C, Cu, 2, 2)
    wu_m = jnp.pad(wu.reshape(C, Cu, 4),
                   ((0, Cp - C), (0, Cup - Cu), (0, 0)))
    wu_m = wu_m.reshape(Cp, 4 * Cup).astype(jnp.bfloat16)
    bu = jnp.repeat(jnp.pad(params["bu"], (0, Cup - Cu)), 4)
    bu = bu.reshape(1, 4 * Cup).astype(jnp.float32)

    pad_c = lambda v: jnp.pad(v, (0, Cp - C)).astype(jnp.float32)
    return {
        # conv biases b1/b2 intentionally dropped: a per-channel constant added
        # before BatchNorm is exactly cancelled by the mean subtraction.
        "w1": conv_weight(params["w1"], 2 * C, Cp),
        "w2": conv_weight(params["w2"], Cp, Cp),
        "g1": pad_c(params["g1"]), "be1": pad_c(params["be1"]),
        "g2": pad_c(params["g2"]), "be2": pad_c(params["be2"]),
        "wu": wu_m, "bu": bu,
    }


def _bn_scale_shift(stats, gamma_p, beta_p, count):
    """Reduce per-tile [sum, sum_sq] rows and fold BN into one scale/shift."""
    s = jnp.sum(stats, axis=0)                           # (8, Cp)
    mean = s[0] / count
    var = jnp.maximum(s[1] / count - mean * mean, 0.0)   # biased var (train mode)
    scale = gamma_p * jax.lax.rsqrt(var + EPS)
    shift = beta_p - mean * scale
    return scale, shift


# ------------------------------ forward pass --------------------------------

@jax.jit
def up_block_forward(x_nchw, x_conn_nchw, prep):
    """UpBlock forward. Inputs NCHW f32, output NCHW (N, C//2, 2H, 2W) f32."""
    N, C, H, W = x_nchw.shape
    Cp = prep["w2"].shape[-1]
    Cu = C // 2
    Cup = prep["wu"].shape[-1] // 4

    # NCHW -> NHWC, 1-px spatial zero pad, bf16 cast: one fused XLA pass per
    # input.  The inputs stay separate (torch.cat folded into the kernel's
    # channel concat + weight layout), so the 2C tensor never hits HBM.
    def to_nhwc_pad(t):
        t = jnp.transpose(t, (0, 2, 3, 1))
        return jnp.pad(t, ((0, 0), (1, 1), (1, 1), (0, 0))).astype(jnp.bfloat16)

    x_p, xc_p = to_nhwc_pad(x_nchw), to_nhwc_pad(x_conn_nchw)

    # conv1 (no preceding activation); output written already spatially padded.
    y1p, st1 = _conv3x3([x_p, xc_p], prep["w1"], None, None,
                        fuse_input_act=False, pad_output=True)
    scale1, shift1 = _bn_scale_shift(st1, prep["g1"], prep["be1"], N * H * W)

    # conv2 with BN1 + SiLU (+ Dropout(p=0) = identity) fused into its input.
    y2, st2 = _conv3x3([y1p], prep["w2"],
                       scale1.reshape(1, 1, Cp), shift1.reshape(1, 1, Cp),
                       fuse_input_act=True, pad_output=False)
    scale2, shift2 = _bn_scale_shift(st2, prep["g2"], prep["be2"], N * H * W)

    # up-conv with BN2 + SiLU fused into its input; SiLU on its output (bf16).
    t = _upconv(y2.reshape(N * H * W, Cp), prep["wu"], prep["bu"],
                scale2.reshape(1, Cp), shift2.reshape(1, Cp))

    # sub-pixel rearrangement + NHWC->NCHW in ONE transpose (on bf16), drop
    # channel padding, cast to f32 last.
    t = t.reshape(N, H, W, Cup, 2, 2)
    t = jnp.transpose(t, (0, 3, 1, 4, 2, 5)).reshape(N, Cup, 2 * H, 2 * W)
    return t[:, :Cu].astype(jnp.float32)


# --------------------------------- main --------------------------------------

if __name__ == "__main__":
    key = jax.random.PRNGKey(0)
    ks = jax.random.split(key, 8)

    N, C, H, W = 2, 4, 16, 16          # input_channels = 4, conv_layers = 2

    x = jax.random.normal(ks[0], (N, C, H, W), jnp.float32)
    x_connection = jax.random.normal(ks[1], (N, C, H, W), jnp.float32)

    params = {
        # convs[0]: Conv2d(2C -> C, k=3, pad=1)
        "w1": 0.1 * jax.random.normal(ks[2], (C, 2 * C, 3, 3), jnp.float32),
        "b1": 0.1 * jax.random.normal(ks[3], (C,), jnp.float32),
        # convs[1]: Conv2d(C -> C, k=3, pad=1)
        "w2": 0.1 * jax.random.normal(ks[4], (C, C, 3, 3), jnp.float32),
        "b2": 0.1 * jax.random.normal(ks[5], (C,), jnp.float32),
        # BatchNorm2d(C) affine params (PyTorch default init)
        "g1": jnp.ones((C,), jnp.float32),
        "be1": jnp.zeros((C,), jnp.float32),
        "g2": jnp.ones((C,), jnp.float32),
        "be2": jnp.zeros((C,), jnp.float32),
        # up_conv: ConvTranspose2d(C -> C//2, k=2, s=2); weight (Cin, Cout, 2, 2)
        "wu": 0.1 * jax.random.normal(ks[6], (C, C // 2, 2, 2), jnp.float32),
        "bu": 0.1 * jax.random.normal(ks[7], (C // 2,), jnp.float32),
    }

    prep = prepare_params(params, C)              # one-time weight prep (static)
    out = up_block_forward(x, x_connection, prep)
    out = jax.block_until_ready(out)

    assert out.shape == (N, C // 2, 2 * H, 2 * W), out.shape
    assert out.dtype == jnp.float32
    assert bool(jnp.all(jnp.isfinite(out)))
    print("KERNEL_OK")
</pallas_src>

<mosaic_0001>
module attributes {stable_mosaic.version = 11 : i64} {
  func.func @_conv3x3_kernel(%arg0: i32, %arg1: memref<1x18x18x4xbf16, #tpu.memory_space<vmem>>, %arg2: memref<1x18x18x4xbf16, #tpu.memory_space<vmem>>, %arg3: memref<3x24x128xbf16, #tpu.memory_space<vmem>>, %arg4: memref<1x18x18x128xbf16, #tpu.memory_space<vmem>>, %arg5: memref<1x8x128xf32, #tpu.memory_space<vmem>>) attributes {dimension_semantics = [#tpu.dimension_semantics<parallel>], iteration_bounds = array<i64: 2>, scalar_prefetch = 0 : i64, scratch_operands = 0 : i64, tpu.core_type = #tpu.core_type<tc>, window_params = [{transform_indices = @transform_0, window_bounds = array<i64: 1, 18, 18, 4>}, {transform_indices = @transform_1, window_bounds = array<i64: 1, 18, 18, 4>}, {pipeline_mode = #tpu.pipeline_mode<synchronous>, transform_indices = @transform_2, window_bounds = array<i64: 3, 24, 128>}, {transform_indices = @transform_3, window_bounds = array<i64: 1, 18, 18, 128>}, {transform_indices = @transform_4, window_bounds = array<i64: 1, 8, 128>}]} {
    %c0 = arith.constant 0 : index
    %c0_0 = arith.constant 0 : index
    %c0_1 = arith.constant 0 : index
    %c0_2 = arith.constant 0 : index
    %0 = vector.load %arg1[%c0, %c0_0, %c0_1, %c0_2] : memref<1x18x18x4xbf16, #tpu.memory_space<vmem>>, vector<1x18x18x4xbf16>
    %1 = vector.shape_cast %0 : vector<1x18x18x4xbf16> to vector<18x18x4xbf16>
    %c0_3 = arith.constant 0 : index
    %c0_4 = arith.constant 0 : index
    %c0_5 = arith.constant 0 : index
    %c0_6 = arith.constant 0 : index
    %2 = vector.load %arg2[%c0_3, %c0_4, %c0_5, %c0_6] : memref<1x18x18x4xbf16, #tpu.memory_space<vmem>>, vector<1x18x18x4xbf16>
    %3 = vector.shape_cast %2 : vector<1x18x18x4xbf16> to vector<18x18x4xbf16>
    %4 = vector.extract_strided_slice %1 {offsets = [0, 0, 0], sizes = [16, 18, 4], strides = [1, 1, 1]} : vector<18x18x4xbf16> to vector<16x18x4xbf16>
    %5 = vector.extract_strided_slice %3 {offsets = [0, 0, 0], sizes = [16, 18, 4], strides = [1, 1, 1]} : vector<18x18x4xbf16> to vector<16x18x4xbf16>
    %6 = vector.extract_strided_slice %1 {offsets = [1, 0, 0], sizes = [16, 18, 4], strides = [1, 1, 1]} : vector<18x18x4xbf16> to vector<16x18x4xbf16>
    %7 = vector.extract_strided_slice %3 {offsets = [1, 0, 0], sizes = [16, 18, 4], strides = [1, 1, 1]} : vector<18x18x4xbf16> to vector<16x18x4xbf16>
    %8 = vector.extract_strided_slice %1 {offsets = [2, 0, 0], sizes = [16, 18, 4], strides = [1, 1, 1]} : vector<18x18x4xbf16> to vector<16x18x4xbf16>
    %9 = vector.extract_strided_slice %3 {offsets = [2, 0, 0], sizes = [16, 18, 4], strides = [1, 1, 1]} : vector<18x18x4xbf16> to vector<16x18x4xbf16>
    %10 = tpu.concatenate %4, %5, %6, %7, %8, %9 in 2 : vector<16x18x4xbf16>, vector<16x18x4xbf16>, vector<16x18x4xbf16>, vector<16x18x4xbf16>, vector<16x18x4xbf16>, vector<16x18x4xbf16> -> vector<16x18x24xbf16>
    %cst = arith.constant 0.000000e+00 : f32
    %11 = vector.broadcast %cst : f32 to vector<256x128xf32>
    %12 = vector.extract_strided_slice %10 {offsets = [0, 0, 0], sizes = [16, 16, 24], strides = [1, 1, 1]} : vector<16x18x24xbf16> to vector<16x16x24xbf16>
    %13 = vector.shape_cast %12 : vector<16x16x24xbf16> to vector<256x24xbf16>
    %c0_7 = arith.constant 0 : index
    %c0_8 = arith.constant 0 : index
    %c0_9 = arith.constant 0 : index
    %14 = vector.load %arg3[%c0_7, %c0_8, %c0_9] : memref<3x24x128xbf16, #tpu.memory_space<vmem>>, vector<1x24x128xbf16>
    %15 = vector.shape_cast %14 : vector<1x24x128xbf16> to vector<24x128xbf16>
    %cst_10 = arith.constant dense<0.000000e+00> : vector<256x128xf32>
    %16 = tpu.matmul %13, %15, %cst_10 {dimension_numbers = #tpu.dot_dimension_numbers<[1], [0], [0], [1], [0, 0, 1, 1], [], []>} : vector<256x24xbf16>, vector<24x128xbf16>, vector<256x128xf32> -> vector<256x128xf32>
    %17 = arith.addf %11, %16 : vector<256x128xf32>
    %18 = vector.extract_strided_slice %10 {offsets = [0, 1, 0], sizes = [16, 16, 24], strides = [1, 1, 1]} : vector<16x18x24xbf16> to vector<16x16x24xbf16>
    %19 = vector.shape_cast %18 : vector<16x16x24xbf16> to vector<256x24xbf16>
    %c1 = arith.constant 1 : index
    %c0_11 = arith.constant 0 : index
    %c0_12 = arith.constant 0 : index
    %20 = vector.load %arg3[%c1, %c0_11, %c0_12] : memref<3x24x128xbf16, #tpu.memory_space<vmem>>, vector<1x24x128xbf16>
    %21 = vector.shape_cast %20 : vector<1x24x128xbf16> to vector<24x128xbf16>
    %cst_13 = arith.constant dense<0.000000e+00> : vector<256x128xf32>
    %22 = tpu.matmul %19, %21, %cst_13 {dimension_numbers = #tpu.dot_dimension_numbers<[1], [0], [0], [1], [0, 0, 1, 1], [], []>} : vector<256x24xbf16>, vector<24x128xbf16>, vector<256x128xf32> -> vector<256x128xf32>
    %23 = arith.addf %17, %22 : vector<256x128xf32>
    %24 = vector.extract_strided_slice %10 {offsets = [0, 2, 0], sizes = [16, 16, 24], strides = [1, 1, 1]} : vector<16x18x24xbf16> to vector<16x16x24xbf16>
    %25 = vector.shape_cast %24 : vector<16x16x24xbf16> to vector<256x24xbf16>
    %c2 = arith.constant 2 : index
    %c0_14 = arith.constant 0 : index
    %c0_15 = arith.constant 0 : index
    %26 = vector.load %arg3[%c2, %c0_14, %c0_15] : memref<3x24x128xbf16, #tpu.memory_space<vmem>>, vector<1x24x128xbf16>
    %27 = vector.shape_cast %26 : vector<1x24x128xbf16> to vector<24x128xbf16>
    %cst_16 = arith.constant dense<0.000000e+00> : vector<256x128xf32>
    %28 = tpu.matmul %25, %27, %cst_16 {dimension_numbers = #tpu.dot_dimension_numbers<[1], [0], [0], [1], [0, 0, 1, 1], [], []>} : vector<256x24xbf16>, vector<24x128xbf16>, vector<256x128xf32> -> vector<256x128xf32>
    %29 = arith.addf %23, %28 : vector<256x128xf32>
    %30 = vector.shape_cast %29 : vector<256x128xf32> to vector<16x16x128xf32>
    %31 = arith.truncf %30 : vector<16x16x128xf32> to vector<16x16x128xbf16>
    %cst_17 = arith.constant 0.000000e+00 : bf16
    %32 = vector.broadcast %cst_17 : bf16 to vector<16x1x128xbf16>
    %33 = tpu.concatenate %32, %31, %32 in 1 : vector<16x1x128xbf16>, vector<16x16x128xbf16>, vector<16x1x128xbf16> -> vector<16x18x128xbf16>
    %cst_18 = arith.constant 0.000000e+00 : bf16
    %34 = vector.broadcast %cst_18 : bf16 to vector<1x18x128xbf16>
    %35 = tpu.concatenate %34, %33, %34 in 0 : vector<1x18x128xbf16>, vector<16x18x128xbf16>, vector<1x18x128xbf16> -> vector<18x18x128xbf16>
    %c0_19 = arith.constant 0 : index
    %c0_20 = arith.constant 0 : index
    %c0_21 = arith.constant 0 : index
    %c0_22 = arith.constant 0 : index
    %36 = vector.load %arg4[%c0_19, %c0_20, %c0_21, %c0_22] : memref<1x18x18x128xbf16, #tpu.memory_space<vmem>>, vector<1x18x18x128xbf16>
    %37 = vector.shape_cast %36 : vector<1x18x18x128xbf16> to vector<18x18x128xbf16>
    %38 = vector.shape_cast %35 : vector<18x18x128xbf16> to vector<1x18x18x128xbf16>
    tpu.vector_store %arg4[%c0_19, %c0_20, %c0_21, %c0_22], %38 {strides = array<i32>} : memref<1x18x18x128xbf16, #tpu.memory_space<vmem>>, vector<1x18x18x128xbf16>,
    %cst_23 = arith.constant dense<0.000000e+00> : vector<128xf32>
    %39 = vector.multi_reduction <add>, %29, %cst_23 [0] : vector<256x128xf32> to vector<128xf32>
    %40 = vector.shape_cast %39 : vector<128xf32> to vector<1x128xf32>
    %41 = arith.mulf %29, %29 : vector<256x128xf32>
    %cst_24 = arith.constant dense<0.000000e+00> : vector<128xf32>
    %42 = vector.multi_reduction <add>, %41, %cst_24 [0] : vector<256x128xf32> to vector<128xf32>
    %43 = vector.shape_cast %42 : vector<128xf32> to vector<1x128xf32>
    %cst_25 = arith.constant 0.000000e+00 : f32
    %44 = vector.broadcast %cst_25 : f32 to vector<6x128xf32>
    %45 = tpu.concatenate %40, %43, %44 in 0 : vector<1x128xf32>, vector<1x128xf32>, vector<6x128xf32> -> vector<8x128xf32>
    %c0_26 = arith.constant 0 : index
    %c0_27 = arith.constant 0 : index
    %c0_28 = arith.constant 0 : index
    %46 = vector.load %arg5[%c0_26, %c0_27, %c0_28] : memref<1x8x128xf32, #tpu.memory_space<vmem>>, vector<1x8x128xf32>
    %47 = vector.shape_cast %46 : vector<1x8x128xf32> to vector<8x128xf32>
    %48 = vector.shape_cast %45 : vector<8x128xf32> to vector<1x8x128xf32>
    tpu.vector_store %arg5[%c0_26, %c0_27, %c0_28], %48 {strides = array<i32>} : memref<1x8x128xf32, #tpu.memory_space<vmem>>, vector<1x8x128xf32>,
    return
  }
  func.func @transform_0(%arg0: i32) -> (i32, i32, i32, i32) {
    %c0_i32 = arith.constant 0 : i32
    %c0_i32_0 = arith.constant 0 : i32
    %c0_i32_1 = arith.constant 0 : i32
    %c0_i32_2 = arith.constant 0 : i32
    return %arg0, %c0_i32, %c0_i32_0, %c0_i32_1 : i32, i32, i32, i32
  }
  func.func @transform_1(%arg0: i32) -> (i32, i32, i32, i32) {
    %c0_i32 = arith.constant 0 : i32
    %c0_i32_0 = arith.constant 0 : i32
    %c0_i32_1 = arith.constant 0 : i32
    %c0_i32_2 = arith.constant 0 : i32
    return %arg0, %c0_i32, %c0_i32_0, %c0_i32_1 : i32, i32, i32, i32
  }
  func.func @transform_2(%arg0: i32) -> (i32, i32, i32) {
    %c0_i32 = arith.constant 0 : i32
    %c0_i32_0 = arith.constant 0 : i32
    %c0_i32_1 = arith.constant 0 : i32
    %c0_i32_2 = arith.constant 0 : i32
    return %c0_i32, %c0_i32_0, %c0_i32_1 : i32, i32, i32
  }
  func.func @transform_3(%arg0: i32) -> (i32, i32, i32, i32) {
    %c0_i32 = arith.constant 0 : i32
    %c0_i32_0 = arith.constant 0 : i32
    %c0_i32_1 = arith.constant 0 : i32
    %c0_i32_2 = arith.constant 0 : i32
    return %arg0, %c0_i32, %c0_i32_0, %c0_i32_1 : i32, i32, i32, i32
  }
  func.func @transform_4(%arg0: i32) -> (i32, i32, i32) {
    %c0_i32 = arith.constant 0 : i32
    %c0_i32_0 = arith.constant 0 : i32
    %c0_i32_1 = arith.constant 0 : i32
    return %arg0, %c0_i32, %c0_i32_0 : i32, i32, i32
  }
}

module attributes {stable_mosaic.version = 11 : i64} {
  func.func @_conv3x3_kernel(%arg0: i32, %arg1: memref<1x18x18x128xbf16, #tpu.memory_space<vmem>>, %arg2: memref<3x384x128xbf16, #tpu.memory_space<vmem>>, %arg3: memref<1x1x128xf32, #tpu.memory_space<vmem>>, %arg4: memref<1x1x128xf32, #tpu.memory_space<vmem>>, %arg5: memref<1x256x128xbf16, #tpu.memory_space<vmem>>, %arg6: memref<1x8x128xf32, #tpu.memory_space<vmem>>) attributes {dimension_semantics = [#tpu.dimension_semantics<parallel>], iteration_bounds = array<i64: 2>, scalar_prefetch = 0 : i64, scratch_operands = 0 : i64, tpu.core_type = #tpu.core_type<tc>, window_params = [{transform_indices = @transform_0, window_bounds = array<i64: 1, 18, 18, 128>}, {pipeline_mode = #tpu.pipeline_mode<synchronous>, transform_indices = @transform_1, window_bounds = array<i64: 3, 384, 128>}, {pipeline_mode = #tpu.pipeline_mode<synchronous>, transform_indices = @transform_2, window_bounds = array<i64: 1, 1, 128>}, {pipeline_mode = #tpu.pipeline_mode<synchronous>, transform_indices = @transform_3, window_bounds = array<i64: 1, 1, 128>}, {transform_indices = @transform_4, window_bounds = array<i64: 1, 256, 128>}, {transform_indices = @transform_5, window_bounds = array<i64: 1, 8, 128>}]} {
    %c0 = arith.constant 0 : index
    %c0_0 = arith.constant 0 : index
    %c0_1 = arith.constant 0 : index
    %c0_2 = arith.constant 0 : index
    %0 = vector.load %arg1[%c0, %c0_0, %c0_1, %c0_2] : memref<1x18x18x128xbf16, #tpu.memory_space<vmem>>, vector<1x18x18x128xbf16>
    %1 = vector.shape_cast %0 : vector<1x18x18x128xbf16> to vector<18x18x128xbf16>
    %2 = vector.extract_strided_slice %1 {offsets = [1, 1, 0], sizes = [16, 16, 128], strides = [1, 1, 1]} : vector<18x18x128xbf16> to vector<16x16x128xbf16>
    %3 = arith.extf %2 : vector<16x16x128xbf16> to vector<16x16x128xf32>
    %c0_3 = arith.constant 0 : index
    %c0_4 = arith.constant 0 : index
    %c0_5 = arith.constant 0 : index
    %4 = vector.load %arg3[%c0_3, %c0_4, %c0_5] : memref<1x1x128xf32, #tpu.memory_space<vmem>>, vector<1x1x128xf32>
    %5 = vector.shape_cast %4 : vector<1x1x128xf32> to vector<1x128xf32>
    %6 = vector.shape_cast %5 : vector<1x128xf32> to vector<1x1x128xf32>
    %7 = vector.broadcast %6 : vector<1x1x128xf32> to vector<16x16x128xf32>
    %8 = arith.mulf %3, %7 : vector<16x16x128xf32>
    %c0_6 = arith.constant 0 : index
    %c0_7 = arith.constant 0 : index
    %c0_8 = arith.constant 0 : index
    %9 = vector.load %arg4[%c0_6, %c0_7, %c0_8] : memref<1x1x128xf32, #tpu.memory_space<vmem>>, vector<1x1x128xf32>
    %10 = vector.shape_cast %9 : vector<1x1x128xf32> to vector<1x128xf32>
    %11 = vector.shape_cast %10 : vector<1x128xf32> to vector<1x1x128xf32>
    %12 = vector.broadcast %11 : vector<1x1x128xf32> to vector<16x16x128xf32>
    %13 = arith.addf %8, %12 : vector<16x16x128xf32>
    %14 = arith.negf %13 : vector<16x16x128xf32>
    %15 = math.exp %14 : vector<16x16x128xf32>
    %cst = arith.constant 1.000000e+00 : f32
    %16 = vector.broadcast %cst : f32 to vector<16x16x128xf32>
    %17 = arith.addf %16, %15 : vector<16x16x128xf32>
    %18 = arith.divf %16, %17 : vector<16x16x128xf32>
    %19 = arith.mulf %13, %18 : vector<16x16x128xf32>
    %20 = arith.truncf %19 : vector<16x16x128xf32> to vector<16x16x128xbf16>
    %cst_9 = arith.constant 0.000000e+00 : bf16
    %21 = vector.broadcast %cst_9 : bf16 to vector<16x1x128xbf16>
    %22 = tpu.concatenate %21, %20, %21 in 1 : vector<16x1x128xbf16>, vector<16x16x128xbf16>, vector<16x1x128xbf16> -> vector<16x18x128xbf16>
    %cst_10 = arith.constant 0.000000e+00 : bf16
    %23 = vector.broadcast %cst_10 : bf16 to vector<1x18x128xbf16>
    %24 = tpu.concatenate %23, %22, %23 in 0 : vector<1x18x128xbf16>, vector<16x18x128xbf16>, vector<1x18x128xbf16> -> vector<18x18x128xbf16>
    %25 = vector.extract_strided_slice %24 {offsets = [0, 0, 0], sizes = [16, 18, 128], strides = [1, 1, 1]} : vector<18x18x128xbf16> to vector<16x18x128xbf16>
    %26 = vector.extract_strided_slice %24 {offsets = [1, 0, 0], sizes = [16, 18, 128], strides = [1, 1, 1]} : vector<18x18x128xbf16> to vector<16x18x128xbf16>
    %27 = vector.extract_strided_slice %24 {offsets = [2, 0, 0], sizes = [16, 18, 128], strides = [1, 1, 1]} : vector<18x18x128xbf16> to vector<16x18x128xbf16>
    %28 = tpu.concatenate %25, %26, %27 in 2 : vector<16x18x128xbf16>, vector<16x18x128xbf16>, vector<16x18x128xbf16> -> vector<16x18x384xbf16>
    %cst_11 = arith.constant 0.000000e+00 : f32
    %29 = vector.broadcast %cst_11 : f32 to vector<256x128xf32>
    %30 = vector.extract_strided_slice %28 {offsets = [0, 0, 0], sizes = [16, 16, 384], strides = [1, 1, 1]} : vector<16x18x384xbf16> to vector<16x16x384xbf16>
    %31 = vector.shape_cast %30 : vector<16x16x384xbf16> to vector<256x384xbf16>
    %c0_12 = arith.constant 0 : index
    %c0_13 = arith.constant 0 : index
    %c0_14 = arith.constant 0 : index
    %32 = vector.load %arg2[%c0_12, %c0_13, %c0_14] : memref<3x384x128xbf16, #tpu.memory_space<vmem>>, vector<1x384x128xbf16>
    %33 = vector.shape_cast %32 : vector<1x384x128xbf16> to vector<384x128xbf16>
    %cst_15 = arith.constant dense<0.000000e+00> : vector<256x128xf32>
    %34 = tpu.matmul %31, %33, %cst_15 {dimension_numbers = #tpu.dot_dimension_numbers<[1], [0], [0], [1], [0, 0, 1, 1], [], []>} : vector<256x384xbf16>, vector<384x128xbf16>, vector<256x128xf32> -> vector<256x128xf32>
    %35 = arith.addf %29, %34 : vector<256x128xf32>
    %36 = vector.extract_strided_slice %28 {offsets = [0, 1, 0], sizes = [16, 16, 384], strides = [1, 1, 1]} : vector<16x18x384xbf16> to vector<16x16x384xbf16>
    %37 = vector.shape_cast %36 : vector<16x16x384xbf16> to vector<256x384xbf16>
    %c1 = arith.constant 1 : index
    %c0_16 = arith.constant 0 : index
    %c0_17 = arith.constant 0 : index
    %38 = vector.load %arg2[%c1, %c0_16, %c0_17] : memref<3x384x128xbf16, #tpu.memory_space<vmem>>, vector<1x384x128xbf16>
    %39 = vector.shape_cast %38 : vector<1x384x128xbf16> to vector<384x128xbf16>
    %cst_18 = arith.constant dense<0.000000e+00> : vector<256x128xf32>
    %40 = tpu.matmul %37, %39, %cst_18 {dimension_numbers = #tpu.dot_dimension_numbers<[1], [0], [0], [1], [0, 0, 1, 1], [], []>} : vector<256x384xbf16>, vector<384x128xbf16>, vector<256x128xf32> -> vector<256x128xf32>
    %41 = arith.addf %35, %40 : vector<256x128xf32>
    %42 = vector.extract_strided_slice %28 {offsets = [0, 2, 0], sizes = [16, 16, 384], strides = [1, 1, 1]} : vector<16x18x384xbf16> to vector<16x16x384xbf16>
    %43 = vector.shape_cast %42 : vector<16x16x384xbf16> to vector<256x384xbf16>
    %c2 = arith.constant 2 : index
    %c0_19 = arith.constant 0 : index
    %c0_20 = arith.constant 0 : index
    %44 = vector.load %arg2[%c2, %c0_19, %c0_20] : memref<3x384x128xbf16, #tpu.memory_space<vmem>>, vector<1x384x128xbf16>
    %45 = vector.shape_cast %44 : vector<1x384x128xbf16> to vector<384x128xbf16>
    %cst_21 = arith.constant dense<0.000000e+00> : vector<256x128xf32>
    %46 = tpu.matmul %43, %45, %cst_21 {dimension_numbers = #tpu.dot_dimension_numbers<[1], [0], [0], [1], [0, 0, 1, 1], [], []>} : vector<256x384xbf16>, vector<384x128xbf16>, vector<256x128xf32> -> vector<256x128xf32>
    %47 = arith.addf %41, %46 : vector<256x128xf32>
    %48 = arith.truncf %47 : vector<256x128xf32> to vector<256x128xbf16>
    %c0_22 = arith.constant 0 : index
    %c0_23 = arith.constant 0 : index
    %c0_24 = arith.constant 0 : index
    %49 = vector.load %arg5[%c0_22, %c0_23, %c0_24] : memref<1x256x128xbf16, #tpu.memory_space<vmem>>, vector<1x256x128xbf16>
    %50 = vector.shape_cast %49 : vector<1x256x128xbf16> to vector<256x128xbf16>
    %51 = vector.shape_cast %48 : vector<256x128xbf16> to vector<1x256x128xbf16>
    tpu.vector_store %arg5[%c0_22, %c0_23, %c0_24], %51 {strides = array<i32>} : memref<1x256x128xbf16, #tpu.memory_space<vmem>>, vector<1x256x128xbf16>,
    %cst_25 = arith.constant dense<0.000000e+00> : vector<128xf32>
    %52 = vector.multi_reduction <add>, %47, %cst_25 [0] : vector<256x128xf32> to vector<128xf32>
    %53 = vector.shape_cast %52 : vector<128xf32> to vector<1x128xf32>
    %54 = arith.mulf %47, %47 : vector<256x128xf32>
    %cst_26 = arith.constant dense<0.000000e+00> : vector<128xf32>
    %55 = vector.multi_reduction <add>, %54, %cst_26 [0] : vector<256x128xf32> to vector<128xf32>
    %56 = vector.shape_cast %55 : vector<128xf32> to vector<1x128xf32>
    %cst_27 = arith.constant 0.000000e+00 : f32
    %57 = vector.broadcast %cst_27 : f32 to vector<6x128xf32>
    %58 = tpu.concatenate %53, %56, %57 in 0 : vector<1x128xf32>, vector<1x128xf32>, vector<6x128xf32> -> vector<8x128xf32>
    %c0_28 = arith.constant 0 : index
    %c0_29 = arith.constant 0 : index
    %c0_30 = arith.constant 0 : index
    %59 = vector.load %arg6[%c0_28, %c0_29, %c0_30] : memref<1x8x128xf32, #tpu.memory_space<vmem>>, vector<1x8x128xf32>
    %60 = vector.shape_cast %59 : vector<1x8x128xf32> to vector<8x128xf32>
    %61 = vector.shape_cast %58 : vector<8x128xf32> to vector<1x8x128xf32>
    tpu.vector_store %arg6[%c0_28, %c0_29, %c0_30], %61 {strides = array<i32>} : memref<1x8x128xf32, #tpu.memory_space<vmem>>, vector<1x8x128xf32>,
    return
  }
  func.func @transform_0(%arg0: i32) -> (i32, i32, i32, i32) {
    %c0_i32 = arith.constant 0 : i32
    %c0_i32_0 = arith.constant 0 : i32
    %c0_i32_1 = arith.constant 0 : i32
    %c0_i32_2 = arith.constant 0 : i32
    return %arg0, %c0_i32, %c0_i32_0, %c0_i32_1 : i32, i32, i32, i32
  }
  func.func @transform_1(%arg0: i32) -> (i32, i32, i32) {
    %c0_i32 = arith.constant 0 : i32
    %c0_i32_0 = arith.constant 0 : i32
    %c0_i32_1 = arith.constant 0 : i32
    %c0_i32_2 = arith.constant 0 : i32
    return %c0_i32, %c0_i32_0, %c0_i32_1 : i32, i32, i32
  }
  func.func @transform_2(%arg0: i32) -> (i32, i32, i32) {
    %c0_i32 = arith.constant 0 : i32
    %c0_i32_0 = arith.constant 0 : i32
    %c0_i32_1 = arith.constant 0 : i32
    %c0_i32_2 = arith.constant 0 : i32
    return %c0_i32, %c0_i32_0, %c0_i32_1 : i32, i32, i32
  }
  func.func @transform_3(%arg0: i32) -> (i32, i32, i32) {
    %c0_i32 = arith.constant 0 : i32
    %c0_i32_0 = arith.constant 0 : i32
    %c0_i32_1 = arith.constant 0 : i32
    %c0_i32_2 = arith.constant 0 : i32
    return %c0_i32, %c0_i32_0, %c0_i32_1 : i32, i32, i32
  }
  func.func @transform_4(%arg0: i32) -> (i32, i32, i32) {
    %c0_i32 = arith.constant 0 : i32
    %c0_i32_0 = arith.constant 0 : i32
    %c0_i32_1 = arith.constant 0 : i32
    return %arg0, %c0_i32, %c0_i32_0 : i32, i32, i32
  }
  func.func @transform_5(%arg0: i32) -> (i32, i32, i32) {
    %c0_i32 = arith.constant 0 : i32
    %c0_i32_0 = arith.constant 0 : i32
    %c0_i32_1 = arith.constant 0 : i32
    return %arg0, %c0_i32, %c0_i32_0 : i32, i32, i32
  }
}

module attributes {stable_mosaic.version = 11 : i64} {
  func.func @_upconv_kernel(%arg0: i32, %arg1: memref<256x128xbf16, #tpu.memory_space<vmem>>, %arg2: memref<128x128xbf16, #tpu.memory_space<vmem>>, %arg3: memref<1x128xf32, #tpu.memory_space<vmem>>, %arg4: memref<1x128xf32, #tpu.memory_space<vmem>>, %arg5: memref<1x128xf32, #tpu.memory_space<vmem>>, %arg6: memref<256x128xbf16, #tpu.memory_space<vmem>>) attributes {dimension_semantics = [#tpu.dimension_semantics<parallel>], iteration_bounds = array<i64: 2>, scalar_prefetch = 0 : i64, scratch_operands = 0 : i64, tpu.core_type = #tpu.core_type<tc>, window_params = [{transform_indices = @transform_0, window_bounds = array<i64: 256, 128>}, {pipeline_mode = #tpu.pipeline_mode<synchronous>, transform_indices = @transform_1, window_bounds = array<i64: 128, 128>}, {pipeline_mode = #tpu.pipeline_mode<synchronous>, transform_indices = @transform_2, window_bounds = array<i64: 1, 128>}, {pipeline_mode = #tpu.pipeline_mode<synchronous>, transform_indices = @transform_3, window_bounds = array<i64: 1, 128>}, {pipeline_mode = #tpu.pipeline_mode<synchronous>, transform_indices = @transform_4, window_bounds = array<i64: 1, 128>}, {transform_indices = @transform_5, window_bounds = array<i64: 256, 128>}]} {
    %c0 = arith.constant 0 : index
    %c0_0 = arith.constant 0 : index
    %0 = vector.load %arg1[%c0, %c0_0] : memref<256x128xbf16, #tpu.memory_space<vmem>>, vector<256x128xbf16>
    %1 = arith.extf %0 : vector<256x128xbf16> to vector<256x128xf32>
    %c0_1 = arith.constant 0 : index
    %c0_2 = arith.constant 0 : index
    %2 = vector.load %arg4[%c0_1, %c0_2] : memref<1x128xf32, #tpu.memory_space<vmem>>, vector<1x128xf32>
    %3 = vector.broadcast %2 : vector<1x128xf32> to vector<256x128xf32>
    %4 = arith.mulf %1, %3 : vector<256x128xf32>
    %c0_3 = arith.constant 0 : index
    %c0_4 = arith.constant 0 : index
    %5 = vector.load %arg5[%c0_3, %c0_4] : memref<1x128xf32, #tpu.memory_space<vmem>>, vector<1x128xf32>
    %6 = vector.broadcast %5 : vector<1x128xf32> to vector<256x128xf32>
    %7 = arith.addf %4, %6 : vector<256x128xf32>
    %8 = arith.negf %7 : vector<256x128xf32>
    %9 = math.exp %8 : vector<256x128xf32>
    %cst = arith.constant 1.000000e+00 : f32
    %10 = vector.broadcast %cst : f32 to vector<256x128xf32>
    %11 = arith.addf %10, %9 : vector<256x128xf32>
    %12 = arith.divf %10, %11 : vector<256x128xf32>
    %13 = arith.mulf %7, %12 : vector<256x128xf32>
    %14 = arith.truncf %13 : vector<256x128xf32> to vector<256x128xbf16>
    %c0_5 = arith.constant 0 : index
    %c0_6 = arith.constant 0 : index
    %15 = vector.load %arg2[%c0_5, %c0_6] : memref<128x128xbf16, #tpu.memory_space<vmem>>, vector<128x128xbf16>
    %cst_7 = arith.constant dense<0.000000e+00> : vector<256x128xf32>
    %16 = tpu.matmul %14, %15, %cst_7 {dimension_numbers = #tpu.dot_dimension_numbers<[1], [0], [0], [1], [0, 0, 1, 1], [], []>} : vector<256x128xbf16>, vector<128x128xbf16>, vector<256x128xf32> -> vector<256x128xf32>
    %c0_8 = arith.constant 0 : index
    %c0_9 = arith.constant 0 : index
    %17 = vector.load %arg3[%c0_8, %c0_9] : memref<1x128xf32, #tpu.memory_space<vmem>>, vector<1x128xf32>
    %18 = vector.broadcast %17 : vector<1x128xf32> to vector<256x128xf32>
    %19 = arith.addf %16, %18 : vector<256x128xf32>
    %20 = arith.negf %19 : vector<256x128xf32>
    %21 = math.exp %20 : vector<256x128xf32>
    %cst_10 = arith.constant 1.000000e+00 : f32
    %22 = vector.broadcast %cst_10 : f32 to vector<256x128xf32>
    %23 = arith.addf %22, %21 : vector<256x128xf32>
    %24 = arith.divf %22, %23 : vector<256x128xf32>
    %25 = arith.mulf %19, %24 : vector<256x128xf32>
    %26 = arith.truncf %25 : vector<256x128xf32> to vector<256x128xbf16>
    %c0_11 = arith.constant 0 : index
    %c0_12 = arith.constant 0 : index
    %27 = vector.load %arg6[%c0_11, %c0_12] : memref<256x128xbf16, #tpu.memory_space<vmem>>, vector<256x128xbf16>
    tpu.vector_store %arg6[%c0_11, %c0_12], %26 {strides = array<i32>} : memref<256x128xbf16, #tpu.memory_space<vmem>>, vector<256x128xbf16>,
    return
  }
  func.func @transform_0(%arg0: i32) -> (i32, i32) {
    %c0_i32 = arith.constant 0 : i32
    %c0_i32_0 = arith.constant 0 : i32
    return %arg0, %c0_i32 : i32, i32
  }
  func.func @transform_1(%arg0: i32) -> (i32, i32) {
    %c0_i32 = arith.constant 0 : i32
    %c0_i32_0 = arith.constant 0 : i32
    %c0_i32_1 = arith.constant 0 : i32
    return %c0_i32, %c0_i32_0 : i32, i32
  }
  func.func @transform_2(%arg0: i32) -> (i32, i32) {
    %c0_i32 = arith.constant 0 : i32
    %c0_i32_0 = arith.constant 0 : i32
    %c0_i32_1 = arith.constant 0 : i32
    return %c0_i32, %c0_i32_0 : i32, i32
  }
  func.func @transform_3(%arg0: i32) -> (i32, i32) {
    %c0_i32 = arith.constant 0 : i32
    %c0_i32_0 = arith.constant 0 : i32
    %c0_i32_1 = arith.constant 0 : i32
    return %c0_i32, %c0_i32_0 : i32, i32
  }
  func.func @transform_4(%arg0: i32) -> (i32, i32) {
    %c0_i32 = arith.constant 0 : i32
    %c0_i32_0 = arith.constant 0 : i32
    %c0_i32_1 = arith.constant 0 : i32
    return %c0_i32, %c0_i32_0 : i32, i32
  }
  func.func @transform_5(%arg0: i32) -> (i32, i32) {
    %c0_i32 = arith.constant 0 : i32
    %c0_i32_0 = arith.constant 0 : i32
    return %arg0, %c0_i32 : i32, i32
  }
}

</mosaic_0001>

<llo_original>
// kernel: up_block_forward.5
$region0: #{up_block_forward.5}
  #allocation0 [shape = 'u32[]', space=smem, size = 0x4, offset = 0x4, fixed_abs, tag = 'smem constant byte address 0x4 - core index']
  #allocation1 [shape = 'u32[72,128]{1,0:T(1,128)}', space=vmem, size = 0x9000, scoped, tag = 'internal scratch']
  %s0 = inlined_call_operand.vmem [shape: bf16[512,128], index: 0, kind: input, shape index: {}]
  %s1 = inlined_call_operand.vmem [shape: bf16[128,128], index: 1, kind: input, shape index: {}]
  %s2 = inlined_call_operand.vmem [shape: f32[1,128], index: 2, kind: input, shape index: {}]
  %s3 = inlined_call_operand.vmem [shape: f32[1,128], index: 3, kind: input, shape index: {}]
  %s4 = inlined_call_operand.vmem [shape: f32[1,128], index: 4, kind: input, shape index: {}]
  %s5 = inlined_call_operand.vmem [shape: bf16[512,128], index: 5, kind: output, shape index: {}]
  %s6 = sld [smem:[#allocation0]]
  $region53: #{up_block_forward.5} parent=0
    _
  %s8 = ssub.s32 1, %s6
  %s9 = scalar_select 0, %s8, %s6
  loop: start=0, step=1, limit=4
  $region2: #{up_block_forward.5} parent=0 // loop_pre_header
    _
  $region3: #{up_block_forward.5} parent=0 // loop_header
    %s11 = sphi 0, %s15
    %p12 = scmp.ge.s32.totalorder %s11, 4
    %s21 = sphi 0, %s23
    %s24 = sphi 0, %s21
    %s25 = sphi 0, %s24
    %s41 = sphi 0, %s25
    %s45 = sphi 0, %s45
    %s47 = sphi 0, %s45
    %s48 = sphi 0, %s47
    %s62 = sphi 0, %s48
    %s66 = sphi 0, %s66
    %s68 = sphi 0, %s66
    %s69 = sphi 0, %s68
    %s83 = sphi 0, %s69
    %s87 = sphi 0, %s87
    %s89 = sphi 0, %s87
    %s90 = sphi 0, %s89
    %s104 = sphi 0, %s90
    %s108 = sphi 0, %s108
    %s110 = sphi 0, %s108
    %s111 = sphi 0, %s110
    %s125 = sphi 0, %s111
    %s131 = sphi 0, %s133
    %s134 = sphi 0, %s131
    %s135 = sphi 0, %s134
    %s151 = sphi 0, %s135
  $region4: #{up_block_forward.5} parent=0 // loop_header_branch
    %14 = sbr.rel (%p12) target = $region8
  $region5: #{up_block_forward.5} parent=0 // loop_body
    %s16 = ssub.s32 %s11, 1
    %s17 = ssub.s32 %s11, 2
    %s18 = sadd.s32 %s11, 1
    %s19 = ssub.s32 %s11, %s18
    %p20 = scmp.eq.s32.totalorder %s19, 0
    %s22 = sadd.s32 %s21, 1
    %s23 = scalar_select %p20, %s21, %s22
    %p26 = pneg %p20
    %p27 = scmp.eq.s32.totalorder %s11, 1
    %p28 = por %p26, %p27
    %p29 = scmp.ne.s32.totalorder %s21, %s24
    %p30 = scmp.eq.s32.totalorder %s11, 0
    %p31 = por %p29, %p30
    %p32 = scmp.ne.s32.totalorder %s21, %s24
    %p33 = scmp.eq.s32.totalorder %s16, 1
    %p34 = por %p32, %p33
    %p35 = scmp.ne.s32.totalorder %s24, %s25
    %p36 = scmp.eq.s32.totalorder %s16, 0
    %p37 = por %p35, %p36
    %p38 = scmp.ne.s32.totalorder %s24, %s25
    %p39 = scmp.eq.s32.totalorder %s17, 1
    %p40 = por %p38, %p39
    %p42 = scmp.ne.s32.totalorder %s25, %s41
    %p43 = scmp.eq.s32.totalorder %s17, 0
    %p44 = por %p42, %p43
    %s46 = sadd.s32 %s45, 1
    %p49 = scmp.eq.s32.totalorder %s11, 1
    %p50 = scmp.ne.s32.totalorder %s45, %s47
    %p51 = scmp.eq.s32.totalorder %s11, 0
    %p52 = por %p50, %p51
    %p53 = scmp.ne.s32.totalorder %s45, %s47
    %p54 = scmp.eq.s32.totalorder %s16, 1
    %p55 = por %p53, %p54
    %p56 = scmp.ne.s32.totalorder %s47, %s48
    %p57 = scmp.eq.s32.totalorder %s16, 0
    %p58 = por %p56, %p57
    %p59 = scmp.ne.s32.totalorder %s47, %s48
    %p60 = scmp.eq.s32.totalorder %s17, 1
    %p61 = por %p59, %p60
    %p63 = scmp.ne.s32.totalorder %s48, %s62
    %p64 = scmp.eq.s32.totalorder %s17, 0
    %p65 = por %p63, %p64
    %s67 = sadd.s32 %s66, 1
    %p70 = scmp.eq.s32.totalorder %s11, 1
    %p71 = scmp.ne.s32.totalorder %s66, %s68
    %p72 = scmp.eq.s32.totalorder %s11, 0
    %p73 = por %p71, %p72
    %p74 = scmp.ne.s32.totalorder %s66, %s68
    %p75 = scmp.eq.s32.totalorder %s16, 1
    %p76 = por %p74, %p75
    %p77 = scmp.ne.s32.totalorder %s68, %s69
    %p78 = scmp.eq.s32.totalorder %s16, 0
    %p79 = por %p77, %p78
    %p80 = scmp.ne.s32.totalorder %s68, %s69
    %p81 = scmp.eq.s32.totalorder %s17, 1
    %p82 = por %p80, %p81
    %p84 = scmp.ne.s32.totalorder %s69, %s83
    %p85 = scmp.eq.s32.totalorder %s17, 0
    %p86 = por %p84, %p85
    %s88 = sadd.s32 %s87, 1
    %p91 = scmp.eq.s32.totalorder %s11, 1
    %p92 = scmp.ne.s32.totalorder %s87, %s89
    %p93 = scmp.eq.s32.totalorder %s11, 0
    %p94 = por %p92, %p93
    %p95 = scmp.ne.s32.totalorder %s87, %s89
    %p96 = scmp.eq.s32.totalorder %s16, 1
    %p97 = por %p95, %p96
    %p98 = scmp.ne.s32.totalorder %s89, %s90
    %p99 = scmp.eq.s32.totalorder %s16, 0
    %p100 = por %p98, %p99
    %p101 = scmp.ne.s32.totalorder %s89, %s90
    %p102 = scmp.eq.s32.totalorder %s17, 1
    %p103 = por %p101, %p102
    %p105 = scmp.ne.s32.totalorder %s90, %s104
    %p106 = scmp.eq.s32.totalorder %s17, 0
    %p107 = por %p105, %p106
    %s109 = sadd.s32 %s108, 1
    %p112 = scmp.eq.s32.totalorder %s11, 1
    %p113 = scmp.ne.s32.totalorder %s108, %s110
    %p114 = scmp.eq.s32.totalorder %s11, 0
    %p115 = por %p113, %p114
    %p116 = scmp.ne.s32.totalorder %s108, %s110
    %p117 = scmp.eq.s32.totalorder %s16, 1
    %p118 = por %p116, %p117
    %p119 = scmp.ne.s32.totalorder %s110, %s111
    %p120 = scmp.eq.s32.totalorder %s16, 0
    %p121 = por %p119, %p120
    %p122 = scmp.ne.s32.totalorder %s110, %s111
    %p123 = scmp.eq.s32.totalorder %s17, 1
    %p124 = por %p122, %p123
    %p126 = scmp.ne.s32.totalorder %s111, %s125
    %p127 = scmp.eq.s32.totalorder %s17, 0
    %p128 = por %p126, %p127
    %s129 = ssub.s32 %s11, %s18
    %p130 = scmp.eq.s32.totalorder %s129, 0
    %s132 = sadd.s32 %s131, 1
    %s133 = scalar_select %p130, %s131, %s132
    %p136 = pneg %p130
    %p137 = scmp.eq.s32.totalorder %s11, 1
    %p138 = por %p136, %p137
    %p139 = scmp.ne.s32.totalorder %s131, %s134
    %p140 = scmp.eq.s32.totalorder %s11, 0
    %p141 = por %p139, %p140
    %p142 = scmp.ne.s32.totalorder %s131, %s134
    %p143 = scmp.eq.s32.totalorder %s16, 1
    %p144 = por %p142, %p143
    %p145 = scmp.ne.s32.totalorder %s134, %s135
    %p146 = scmp.eq.s32.totalorder %s16, 0
    %p147 = por %p145, %p146
    %p148 = scmp.ne.s32.totalorder %s134, %s135
    %p149 = scmp.eq.s32.totalorder %s17, 1
    %p150 = por %p148, %p149
    %p152 = scmp.ne.s32.totalorder %s135, %s151
    %p153 = scmp.eq.s32.totalorder %s17, 0
    %p154 = por %p152, %p153
    %p155 = scmp.le.s32.totalorder 1, %s11
    %p156 = scmp.lt.s32.totalorder %s11, 3
    %p157 = pnand %p155, %p156
    %p158 = pneg %p157
    // Predicated region
    $region9: #{up_block_forward.5} parent=5 // pred_check
      _
    $region10: #{up_block_forward.5} parent=5 // pred_check_branch
      %160 = sbr.rel (%p157) target = $region12
    $region11: #{up_block_forward.5} parent=5 // pred_region
      %s161 = ssub.s32 %s11, 1
      // Predicated region
      $region13: #{up_block_forward.5} parent=11 // pred_check
        %p162 = pneg %p58
      $region14: #{up_block_forward.5} parent=11 // pred_check_branch
        %164 = sbr.rel (%p162) target = $region16
      $region15: #{up_block_forward.5} parent=11 // pred_region
        _
      $region16: #{up_block_forward.5} parent=11 // pred_fallthru
        _
      // Predicated region
      $region17: #{up_block_forward.5} parent=11 // pred_check
        %p165 = pneg %p79
      $region18: #{up_block_forward.5} parent=11 // pred_check_branch
        %167 = sbr.rel (%p165) target = $region20
      $region19: #{up_block_forward.5} parent=11 // pred_region
        _
      $region20: #{up_block_forward.5} parent=11 // pred_fallthru
        _
      // Predicated region
      $region21: #{up_block_forward.5} parent=11 // pred_check
        %p168 = pneg %p100
      $region22: #{up_block_forward.5} parent=11 // pred_check_branch
        %170 = sbr.rel (%p168) target = $region24
      $region23: #{up_block_forward.5} parent=11 // pred_region
        _
      $region24: #{up_block_forward.5} parent=11 // pred_fallthru
        _
      // Predicated region
      $region25: #{up_block_forward.5} parent=11 // pred_check
        %p171 = pneg %p121
      $region26: #{up_block_forward.5} parent=11 // pred_check_branch
        %173 = sbr.rel (%p171) target = $region28
      $region27: #{up_block_forward.5} parent=11 // pred_region
        _
      $region28: #{up_block_forward.5} parent=11 // pred_fallthru
        _
    $region12: #{up_block_forward.5} parent=5 // pred_fallthru
      _
    %p174 = scmp.lt.s32.totalorder %s11, 2
    // Predicated region
    $region29: #{up_block_forward.5} parent=5 // pred_check
      %p175 = pneg %p174
    $region30: #{up_block_forward.5} parent=5 // pred_check_branch
      %177 = sbr.rel (%p175) target = $region32
    $region31: #{up_block_forward.5} parent=5 // pred_region
      // Predicated region
      $region33: #{up_block_forward.5} parent=31 // pred_check
        %p178 = pneg %p31
      $region34: #{up_block_forward.5} parent=31 // pred_check_branch
        %180 = sbr.rel (%p178) target = $region36
      $region35: #{up_block_forward.5} parent=31 // pred_region
        %s181 = smul.u32 32, %s11
        %p182 = scmp.lt.s32.totalorder %s181, 63
        %s183 = scalar_select %p182, %s181, 63
        %s184 = smul.addr %s183, 4
        %s185 = scalar_lea.vmem %s0, %s184
        %s186 = smul.u32 32, %s11
      $region36: #{up_block_forward.5} parent=31 // pred_fallthru
        _
    $region32: #{up_block_forward.5} parent=5 // pred_fallthru
      _
    %p187 = scmp.le.s32.totalorder 1, %s11
    %p188 = scmp.lt.s32.totalorder %s11, 3
    %p189 = pnand %p187, %p188
    %p190 = pneg %p189
    // Predicated region
    $region37: #{up_block_forward.5} parent=5 // pred_check
      _
    $region38: #{up_block_forward.5} parent=5 // pred_check_branch
      %192 = sbr.rel (%p189) target = $region40
    $region39: #{up_block_forward.5} parent=5 // pred_region
      %s193 = ssub.s32 %s11, 1
      %s194 = smul.u32 32, %s16
      %p195 = scmp.lt.s32.totalorder %s194, 63
      %s196 = scalar_select %p195, %s194, 63
      %s197 = smul.addr %s196, 4
      %s198 = scalar_lea.vmem %s0, %s197
      %p199 = pneg %p37
      %p200 = pneg %p34
      %p201 = pneg %p58
      %p202 = pneg %p55
      %p203 = pneg %p79
      %p204 = pneg %p76
      %p205 = pneg %p100
      %p206 = pneg %p97
      %p207 = pneg %p121
      %p208 = pneg %p118
      %p209 = pneg %p147
      %p210 = pneg %p144
      %s211 = smul.u32 32, %s16
      %p212 = scmp.lt.s32.totalorder %s211, 63
      %s213 = scalar_select %p212, %s211, 63
      %s214 = smul.addr %s213, 4
      %s215 = scalar_lea.vmem %s5, %s214
      %s216 = smul.u32 32, %s16
      %p217 = scmp.lt.s32.totalorder %s216, 63
      %s218 = scalar_select %p217, %s216, 63
      %s219 = smul.addr %s218, 4
      %s220 = scalar_lea.vmem %s0, %s219
      %s221 = smul.u32 32, %s16
      %s222 = smul.u32 32, %s16
      %p223 = scmp.lt.s32.totalorder %s222, 63
      %s224 = scalar_select %p223, %s222, 63
      %s225 = smul.addr %s224, 4
      %s226 = scalar_lea.vmem %s5, %s225
      %s227 = smul.u32 32, %s16
      %v228 = vld [vmem:[%s220] sm:$0xf]
      %v229 = vld [vmem:[%s220 + $0x4] sm:$0xf]
      %v230 = vld [vmem:[%s220 + $0x8] sm:$0xf]
      %v231 = vld [vmem:[%s220 + $0xc] sm:$0xf]
      %v232 = vld [vmem:[%s220 + $0x10] sm:$0xf]
      %v233 = vld [vmem:[%s220 + $0x14] sm:$0xf]
      %v234 = vld [vmem:[%s220 + $0x18] sm:$0xf]
      %v235 = vld [vmem:[%s220 + $0x1c] sm:$0xf]
      %v236 = vld [vmem:[%s220 + $0x20] sm:$0xf]
      %v237 = vld [vmem:[%s220 + $0x24] sm:$0xf]
      %v238 = vld [vmem:[%s220 + $0x28] sm:$0xf]
      %v239 = vld [vmem:[%s220 + $0x2c] sm:$0xf]
      %v240 = vld [vmem:[%s220 + $0x30] sm:$0xf]
      %v241 = vld [vmem:[%s220 + $0x34] sm:$0xf]
      %v242 = vld [vmem:[%s220 + $0x38] sm:$0xf]
      %v243 = vld [vmem:[%s220 + $0x3c] sm:$0xf]
      %v244 = vld [vmem:[%s220 + $0x40] sm:$0xf]
      %v245 = vld [vmem:[%s220 + $0x44] sm:$0xf]
      %v246 = vld [vmem:[%s220 + $0x48] sm:$0xf]
      %v247 = vld [vmem:[%s220 + $0x4c] sm:$0xf]
      %v248 = vld [vmem:[%s220 + $0x50] sm:$0xf]
      %v249 = vld [vmem:[%s220 + $0x54] sm:$0xf]
      %v250 = vld [vmem:[%s220 + $0x58] sm:$0xf]
      %v251 = vld [vmem:[%s220 + $0x5c] sm:$0xf]
      %v252 = vld [vmem:[%s220 + $0x60] sm:$0xf]
      %v253 = vld [vmem:[%s220 + $0x64] sm:$0xf]
      %v254 = vld [vmem:[%s220 + $0x68] sm:$0xf]
      %v255 = vld [vmem:[%s220 + $0x6c] sm:$0xf]
      %v256 = vld [vmem:[%s220 + $0x70] sm:$0xf]
      %v257 = vld [vmem:[%s220 + $0x74] sm:$0xf]
      %v258 = vld [vmem:[%s220 + $0x78] sm:$0xf]
      %v259 = vld [vmem:[%s220 + $0x7c] sm:$0xf]
      %v260 = vunpack.c.l.bf16 %v228
      %v261 = vunpack.c.l.bf16 %v229
      %v262 = vunpack.c.l.bf16 %v230
      %v263 = vunpack.c.l.bf16 %v231
      %v264 = vunpack.c.l.bf16 %v232
      %v265 = vunpack.c.l.bf16 %v233
      %v266 = vunpack.c.l.bf16 %v234
      %v267 = vunpack.c.l.bf16 %v235
      %v268 = vunpack.c.l.bf16 %v236
      %v269 = vunpack.c.l.bf16 %v237
      %v270 = vunpack.c.l.bf16 %v238
      %v271 = vunpack.c.l.bf16 %v239
      %v272 = vunpack.c.l.bf16 %v240
      %v273 = vunpack.c.l.bf16 %v241
      %v274 = vunpack.c.l.bf16 %v242
      %v275 = vunpack.c.l.bf16 %v243
      %v276 = vunpack.c.l.bf16 %v244
      %v277 = vunpack.c.l.bf16 %v245
      %v278 = vunpack.c.l.bf16 %v246
      %v279 = vunpack.c.l.bf16 %v247
      %v280 = vunpack.c.l.bf16 %v248
      %v281 = vunpack.c.l.bf16 %v249
      %v282 = vunpack.c.l.bf16 %v250
      %v283 = vunpack.c.l.bf16 %v251
      %v284 = vunpack.c.l.bf16 %v252
      %v285 = vunpack.c.l.bf16 %v253
      %v286 = vunpack.c.l.bf16 %v254
      %v287 = vunpack.c.l.bf16 %v255
      %v288 = vunpack.c.l.bf16 %v256
      %v289 = vunpack.c.l.bf16 %v257
      %v290 = vunpack.c.l.bf16 %v258
      %v291 = vunpack.c.l.bf16 %v259
      %v292 = vld [vmem:[%s3] sm:$0x1]
      %v294 = vperm.slane %v292, 0
      %v296 = vmul.f32 %v260, %v294
      %v297 = vmul.f32 %v261, %v294
      %v298 = vmul.f32 %v262, %v294
      %v299 = vmul.f32 %v263, %v294
      %v300 = vmul.f32 %v264, %v294
      %v301 = vmul.f32 %v265, %v294
      %v302 = vmul.f32 %v266, %v294
      %v303 = vmul.f32 %v267, %v294
      %v304 = vmul.f32 %v268, %v294
      %v305 = vmul.f32 %v269, %v294
      %v306 = vmul.f32 %v270, %v294
      %v307 = vmul.f32 %v271, %v294
      %v308 = vmul.f32 %v272, %v294
      %v309 = vmul.f32 %v273, %v294
      %v310 = vmul.f32 %v274, %v294
      %v311 = vmul.f32 %v275, %v294
      %v312 = vmul.f32 %v276, %v294
      %v313 = vmul.f32 %v277, %v294
      %v314 = vmul.f32 %v278, %v294
      %v315 = vmul.f32 %v279, %v294
      %v316 = vmul.f32 %v280, %v294
      %v317 = vmul.f32 %v281, %v294
      %v318 = vmul.f32 %v282, %v294
      %v319 = vmul.f32 %v283, %v294
      %v320 = vmul.f32 %v284, %v294
      %v321 = vmul.f32 %v285, %v294
      %v322 = vmul.f32 %v286, %v294
      %v323 = vmul.f32 %v287, %v294
      %v324 = vmul.f32 %v288, %v294
      %v325 = vmul.f32 %v289, %v294
      %v326 = vmul.f32 %v290, %v294
      %v327 = vmul.f32 %v291, %v294
      %v328 = vld [vmem:[%s4] sm:$0x1]
      %v330 = vperm.slane %v328, 0
      %v332 = vadd.f32 %v296, %v330
      %v333 = vadd.f32 %v297, %v330
      %v334 = vadd.f32 %v298, %v330
      %v335 = vadd.f32 %v299, %v330
      %v336 = vadd.f32 %v300, %v330
      %v337 = vadd.f32 %v301, %v330
      %v338 = vadd.f32 %v302, %v330
      %v339 = vadd.f32 %v303, %v330
      %v340 = vadd.f32 %v304, %v330
      %v341 = vadd.f32 %v305, %v330
      %v342 = vadd.f32 %v306, %v330
      %v343 = vadd.f32 %v307, %v330
      %v344 = vadd.f32 %v308, %v330
      %v345 = vadd.f32 %v309, %v330
      %v346 = vadd.f32 %v310, %v330
      %v347 = vadd.f32 %v311, %v330
      %v348 = vadd.f32 %v312, %v330
      %v349 = vadd.f32 %v313, %v330
      %v350 = vadd.f32 %v314, %v330
      %v351 = vadd.f32 %v315, %v330
      %v352 = vadd.f32 %v316, %v330
      %v353 = vadd.f32 %v317, %v330
      %v354 = vadd.f32 %v318, %v330
      %v355 = vadd.f32 %v319, %v330
      %v356 = vadd.f32 %v320, %v330
      %v357 = vadd.f32 %v321, %v330
      %v358 = vadd.f32 %v322, %v330
      %v359 = vadd.f32 %v323, %v330
      %v360 = vadd.f32 %v324, %v330
      %v361 = vadd.f32 %v325, %v330
      %v362 = vadd.f32 %v326, %v330
      %v363 = vadd.f32 %v327, %v330
      %v364 = vxor.u32 %v332, 2147483648
      %v365 = vxor.u32 %v333, 2147483648
      %v366 = vxor.u32 %v334, 2147483648
      %v367 = vxor.u32 %v335, 2147483648
      %v368 = vxor.u32 %v336, 2147483648
      %v369 = vxor.u32 %v337, 2147483648
      %v370 = vxor.u32 %v338, 2147483648
      %v371 = vxor.u32 %v339, 2147483648
      %v372 = vxor.u32 %v340, 2147483648
      %v373 = vxor.u32 %v341, 2147483648
      %v374 = vxor.u32 %v342, 2147483648
      %v375 = vxor.u32 %v343, 2147483648
      %v376 = vxor.u32 %v344, 2147483648
      %v377 = vxor.u32 %v345, 2147483648
      %v378 = vxor.u32 %v346, 2147483648
      %v379 = vxor.u32 %v347, 2147483648
      %v380 = vxor.u32 %v348, 2147483648
      %v381 = vxor.u32 %v349, 2147483648
      %v382 = vxor.u32 %v350, 2147483648
      %v383 = vxor.u32 %v351, 2147483648
      %v384 = vxor.u32 %v352, 2147483648
      %v385 = vxor.u32 %v353, 2147483648
      %v386 = vxor.u32 %v354, 2147483648
      %v387 = vxor.u32 %v355, 2147483648
      %v388 = vxor.u32 %v356, 2147483648
      %v389 = vxor.u32 %v357, 2147483648
      %v390 = vxor.u32 %v358, 2147483648
      %v391 = vxor.u32 %v359, 2147483648
      %v392 = vxor.u32 %v360, 2147483648
      %v393 = vxor.u32 %v361, 2147483648
      %v394 = vxor.u32 %v362, 2147483648
      %v395 = vxor.u32 %v363, 2147483648
      %v396 = vmul.f32 %v364, 1.442695
      %v397 = vpow.pop %v396
      %v398 = vmul.f32 %v365, 1.442695
      %v399 = vpow.pop %v398
      %v400 = vmul.f32 %v366, 1.442695
      %v401 = vpow.pop %v400
      %v402 = vmul.f32 %v367, 1.442695
      %v403 = vpow.pop %v402
      %v404 = vmul.f32 %v368, 1.442695
      %v405 = vpow.pop %v404
      %v406 = vmul.f32 %v369, 1.442695
      %v407 = vpow.pop %v406
      %v408 = vmul.f32 %v370, 1.442695
      %v409 = vpow.pop %v408
      %v410 = vmul.f32 %v371, 1.442695
      %v411 = vpow.pop %v410
      %v412 = vmul.f32 %v372, 1.442695
      %v413 = vpow.pop %v412
      %v414 = vmul.f32 %v373, 1.442695
      %v415 = vpow.pop %v414
      %v416 = vmul.f32 %v374, 1.442695
      %v417 = vpow.pop %v416
      %v418 = vmul.f32 %v375, 1.442695
      %v419 = vpow.pop %v418
      %v420 = vmul.f32 %v376, 1.442695
      %v421 = vpow.pop %v420
      %v422 = vmul.f32 %v377, 1.442695
      %v423 = vpow.pop %v422
      %v424 = vmul.f32 %v378, 1.442695
      %v425 = vpow.pop %v424
      %v426 = vmul.f32 %v379, 1.442695
      %v427 = vpow.pop %v426
      %v428 = vmul.f32 %v380, 1.442695
      %v429 = vpow.pop %v428
      %v430 = vmul.f32 %v381, 1.442695
      %v431 = vpow.pop %v430
      %v432 = vmul.f32 %v382, 1.442695
      %v433 = vpow.pop %v432
      %v434 = vmul.f32 %v383, 1.442695
      %v435 = vpow.pop %v434
      %v436 = vmul.f32 %v384, 1.442695
      %v437 = vpow.pop %v436
      %v438 = vmul.f32 %v385, 1.442695
      %v439 = vpow.pop %v438
      %v440 = vmul.f32 %v386, 1.442695
      %v441 = vpow.pop %v440
      %v442 = vmul.f32 %v387, 1.442695
      %v443 = vpow.pop %v442
      %v444 = vmul.f32 %v388, 1.442695
      %v445 = vpow.pop %v444
      %v446 = vmul.f32 %v389, 1.442695
      %v447 = vpow.pop %v446
      %v448 = vmul.f32 %v390, 1.442695
      %v449 = vpow.pop %v448
      %v450 = vmul.f32 %v391, 1.442695
      %v451 = vpow.pop %v450
      %v452 = vmul.f32 %v392, 1.442695
      %v453 = vpow.pop %v452
      %v454 = vmul.f32 %v393, 1.442695
      %v455 = vpow.pop %v454
      %v456 = vmul.f32 %v394, 1.442695
      %v457 = vpow.pop %v456
      %v458 = vmul.f32 %v395, 1.442695
      %v459 = vpow.pop %v458
      %v460 = vadd.f32 %v397, 1.0
      %v461 = vadd.f32 %v399, 1.0
      %v462 = vadd.f32 %v401, 1.0
      %v463 = vadd.f32 %v403, 1.0
      %v464 = vadd.f32 %v405, 1.0
      %v465 = vadd.f32 %v407, 1.0
      %v466 = vadd.f32 %v409, 1.0
      %v467 = vadd.f32 %v411, 1.0
      %v468 = vadd.f32 %v413, 1.0
      %v469 = vadd.f32 %v415, 1.0
      %v470 = vadd.f32 %v417, 1.0
      %v471 = vadd.f32 %v419, 1.0
      %v472 = vadd.f32 %v421, 1.0
      %v473 = vadd.f32 %v423, 1.0
      %v474 = vadd.f32 %v425, 1.0
      %v475 = vadd.f32 %v427, 1.0
      %v476 = vadd.f32 %v429, 1.0
      %v477 = vadd.f32 %v431, 1.0
      %v478 = vadd.f32 %v433, 1.0
      %v479 = vadd.f32 %v435, 1.0
      %v480 = vadd.f32 %v437, 1.0
      %v481 = vadd.f32 %v439, 1.0
      %v482 = vadd.f32 %v441, 1.0
      %v483 = vadd.f32 %v443, 1.0
      %v484 = vadd.f32 %v445, 1.0
      %v485 = vadd.f32 %v447, 1.0
      %v486 = vadd.f32 %v449, 1.0
      %v487 = vadd.f32 %v451, 1.0
      %v488 = vadd.f32 %v453, 1.0
      %v489 = vadd.f32 %v455, 1.0
      %v490 = vadd.f32 %v457, 1.0
      %v491 = vadd.f32 %v459, 1.0
      %v492 = vrcp.pop %v460
      %v493 = vmul.f32 %v460, %v492
      %v494 = vsub.f32 1.0, %v493
      %v495 = vmul.f32 %v492, %v494
      %v496 = vadd.f32 %v492, %v495
      %vm497 = vweird.f32 %v460
      %vm498 = vweird.f32 %v492
      %vm499 = vmor %vm497, %vm498
      %v500 = vsel %vm499, %v492, %v496
      %v501 = vand.u32 2147483647, %v460
      %vm502 = vcmp.eq.f32.partialorder %v501, 8.507059e+37
      %v503 = vand.u32 %v460, 2147483648
      %v504 = vor.u32 1.1754944e-38, %v503
      %v505 = vsel %vm502, %v504, %v500
      %v506 = vmul.f32 1.0, %v505
      %v507 = vrcp.pop %v461
      %v508 = vmul.f32 %v461, %v507
      %v509 = vsub.f32 1.0, %v508
      %v510 = vmul.f32 %v507, %v509
      %v511 = vadd.f32 %v507, %v510
      %vm512 = vweird.f32 %v461
      %vm513 = vweird.f32 %v507
      %vm514 = vmor %vm512, %vm513
      %v515 = vsel %vm514, %v507, %v511
      %v516 = vand.u32 2147483647, %v461
      %vm517 = vcmp.eq.f32.partialorder %v516, 8.507059e+37
      %v518 = vand.u32 %v461, 2147483648
      %v519 = vor.u32 1.1754944e-38, %v518
      %v520 = vsel %vm517, %v519, %v515
      %v521 = vmul.f32 1.0, %v520
      %v522 = vrcp.pop %v462
      %v523 = vmul.f32 %v462, %v522
      %v524 = vsub.f32 1.0, %v523
      %v525 = vmul.f32 %v522, %v524
      %v526 = vadd.f32 %v522, %v525
      %vm527 = vweird.f32 %v462
      %vm528 = vweird.f32 %v522
      %vm529 = vmor %vm527, %vm528
      %v530 = vsel %vm529, %v522, %v526
      %v531 = vand.u32 2147483647, %v462
      %vm532 = vcmp.eq.f32.partialorder %v531, 8.507059e+37
      %v533 = vand.u32 %v462, 2147483648
      %v534 = vor.u32 1.1754944e-38, %v533
      %v535 = vsel %vm532, %v534, %v530
      %v536 = vmul.f32 1.0, %v535
      %v537 = vrcp.pop %v463
      %v538 = vmul.f32 %v463, %v537
      %v539 = vsub.f32 1.0, %v538
      %v540 = vmul.f32 %v537, %v539
      %v541 = vadd.f32 %v537, %v540
      %vm542 = vweird.f32 %v463
      %vm543 = vweird.f32 %v537
      %vm544 = vmor %vm542, %vm543
      %v545 = vsel %vm544, %v537, %v541
      %v546 = vand.u32 2147483647, %v463
      %vm547 = vcmp.eq.f32.partialorder %v546, 8.507059e+37
      %v548 = vand.u32 %v463, 2147483648
      %v549 = vor.u32 1.1754944e-38, %v548
      %v550 = vsel %vm547, %v549, %v545
      %v551 = vmul.f32 1.0, %v550
      %v552 = vrcp.pop %v464
      %v553 = vmul.f32 %v464, %v552
      %v554 = vsub.f32 1.0, %v553
      %v555 = vmul.f32 %v552, %v554
      %v556 = vadd.f32 %v552, %v555
      %vm557 = vweird.f32 %v464
      %vm558 = vweird.f32 %v552
      %vm559 = vmor %vm557, %vm558
      %v560 = vsel %vm559, %v552, %v556
      %v561 = vand.u32 2147483647, %v464
      %vm562 = vcmp.eq.f32.partialorder %v561, 8.507059e+37
      %v563 = vand.u32 %v464, 2147483648
      %v564 = vor.u32 1.1754944e-38, %v563
      %v565 = vsel %vm562, %v564, %v560
      %v566 = vmul.f32 1.0, %v565
      %v567 = vrcp.pop %v465
      %v568 = vmul.f32 %v465, %v567
      %v569 = vsub.f32 1.0, %v568
      %v570 = vmul.f32 %v567, %v569
      %v571 = vadd.f32 %v567, %v570
      %vm572 = vweird.f32 %v465
      %vm573 = vweird.f32 %v567
      %vm574 = vmor %vm572, %vm573
      %v575 = vsel %vm574, %v567, %v571
      %v576 = vand.u32 2147483647, %v465
      %vm577 = vcmp.eq.f32.partialorder %v576, 8.507059e+37
      %v578 = vand.u32 %v465, 2147483648
      %v579 = vor.u32 1.1754944e-38, %v578
      %v580 = vsel %vm577, %v579, %v575
      %v581 = vmul.f32 1.0, %v580
      %v582 = vrcp.pop %v466
      %v583 = vmul.f32 %v466, %v582
      %v584 = vsub.f32 1.0, %v583
      %v585 = vmul.f32 %v582, %v584
      %v586 = vadd.f32 %v582, %v585
      %vm587 = vweird.f32 %v466
      %vm588 = vweird.f32 %v582
      %vm589 = vmor %vm587, %vm588
      %v590 = vsel %vm589, %v582, %v586
      %v591 = vand.u32 2147483647, %v466
      %vm592 = vcmp.eq.f32.partialorder %v591, 8.507059e+37
      %v593 = vand.u32 %v466, 2147483648
      %v594 = vor.u32 1.1754944e-38, %v593
      %v595 = vsel %vm592, %v594, %v590
      %v596 = vmul.f32 1.0, %v595
      %v597 = vrcp.pop %v467
      %v598 = vmul.f32 %v467, %v597
      %v599 = vsub.f32 1.0, %v598
      %v600 = vmul.f32 %v597, %v599
      %v601 = vadd.f32 %v597, %v600
      %vm602 = vweird.f32 %v467
      %vm603 = vweird.f32 %v597
      %vm604 = vmor %vm602, %vm603
      %v605 = vsel %vm604, %v597, %v601
      %v606 = vand.u32 2147483647, %v467
      %vm607 = vcmp.eq.f32.partialorder %v606, 8.507059e+37
      %v608 = vand.u32 %v467, 2147483648
      %v609 = vor.u32 1.1754944e-38, %v608
      %v610 = vsel %vm607, %v609, %v605
      %v611 = vmul.f32 1.0, %v610
      %v612 = vrcp.pop %v468
      %v613 = vmul.f32 %v468, %v612
      %v614 = vsub.f32 1.0, %v613
      %v615 = vmul.f32 %v612, %v614
      %v616 = vadd.f32 %v612, %v615
      %vm617 = vweird.f32 %v468
      %vm618 = vweird.f32 %v612
      %vm619 = vmor %vm617, %vm618
      %v620 = vsel %vm619, %v612, %v616
      %v621 = vand.u32 2147483647, %v468
      %vm622 = vcmp.eq.f32.partialorder %v621, 8.507059e+37
      %v623 = vand.u32 %v468, 2147483648
      %v624 = vor.u32 1.1754944e-38, %v623
      %v625 = vsel %vm622, %v624, %v620
      %v626 = vmul.f32 1.0, %v625
      %v627 = vrcp.pop %v469
      %v628 = vmul.f32 %v469, %v627
      %v629 = vsub.f32 1.0, %v628
      %v630 = vmul.f32 %v627, %v629
      %v631 = vadd.f32 %v627, %v630
      %vm632 = vweird.f32 %v469
      %vm633 = vweird.f32 %v627
      %vm634 = vmor %vm632, %vm633
      %v635 = vsel %vm634, %v627, %v631
      %v636 = vand.u32 2147483647, %v469
      %vm637 = vcmp.eq.f32.partialorder %v636, 8.507059e+37
      %v638 = vand.u32 %v469, 2147483648
      %v639 = vor.u32 1.1754944e-38, %v638
      %v640 = vsel %vm637, %v639, %v635
      %v641 = vmul.f32 1.0, %v640
      %v642 = vrcp.pop %v470
      %v643 = vmul.f32 %v470, %v642
      %v644 = vsub.f32 1.0, %v643
      %v645 = vmul.f32 %v642, %v644
      %v646 = vadd.f32 %v642, %v645
      %vm647 = vweird.f32 %v470
      %vm648 = vweird.f32 %v642
      %vm649 = vmor %vm647, %vm648
      %v650 = vsel %vm649, %v642, %v646
      %v651 = vand.u32 2147483647, %v470
      %vm652 = vcmp.eq.f32.partialorder %v651, 8.507059e+37
      %v653 = vand.u32 %v470, 2147483648
      %v654 = vor.u32 1.1754944e-38, %v653
      %v655 = vsel %vm652, %v654, %v650
      %v656 = vmul.f32 1.0, %v655
      %v657 = vrcp.pop %v471
      %v658 = vmul.f32 %v471, %v657
      %v659 = vsub.f32 1.0, %v658
      %v660 = vmul.f32 %v657, %v659
      %v661 = vadd.f32 %v657, %v660
      %vm662 = vweird.f32 %v471
      %vm663 = vweird.f32 %v657
      %vm664 = vmor %vm662, %vm663
      %v665 = vsel %vm664, %v657, %v661
      %v666 = vand.u32 2147483647, %v471
      %vm667 = vcmp.eq.f32.partialorder %v666, 8.507059e+37
      %v668 = vand.u32 %v471, 2147483648
      %v669 = vor.u32 1.1754944e-38, %v668
      %v670 = vsel %vm667, %v669, %v665
      %v671 = vmul.f32 1.0, %v670
      %v672 = vrcp.pop %v472
      %v673 = vmul.f32 %v472, %v672
      %v674 = vsub.f32 1.0, %v673
      %v675 = vmul.f32 %v672, %v674
      %v676 = vadd.f32 %v672, %v675
      %vm677 = vweird.f32 %v472
      %vm678 = vweird.f32 %v672
      %vm679 = vmor %vm677, %vm678
      %v680 = vsel %vm679, %v672, %v676
      %v681 = vand.u32 2147483647, %v472
      %vm682 = vcmp.eq.f32.partialorder %v681, 8.507059e+37
      %v683 = vand.u32 %v472, 2147483648
      %v684 = vor.u32 1.1754944e-38, %v683
      %v685 = vsel %vm682, %v684, %v680
      %v686 = vmul.f32 1.0, %v685
      %v687 = vrcp.pop %v473
      %v688 = vmul.f32 %v473, %v687
      %v689 = vsub.f32 1.0, %v688
      %v690 = vmul.f32 %v687, %v689
      %v691 = vadd.f32 %v687, %v690
      %vm692 = vweird.f32 %v473
      %vm693 = vweird.f32 %v687
      %vm694 = vmor %vm692, %vm693
      %v695 = vsel %vm694, %v687, %v691
      %v696 = vand.u32 2147483647, %v473
      %vm697 = vcmp.eq.f32.partialorder %v696, 8.507059e+37
      %v698 = vand.u32 %v473, 2147483648
      %v699 = vor.u32 1.1754944e-38, %v698
      %v700 = vsel %vm697, %v699, %v695
      %v701 = vmul.f32 1.0, %v700
      %v702 = vrcp.pop %v474
      %v703 = vmul.f32 %v474, %v702
      %v704 = vsub.f32 1.0, %v703
      %v705 = vmul.f32 %v702, %v704
      %v706 = vadd.f32 %v702, %v705
      %vm707 = vweird.f32 %v474
      %vm708 = vweird.f32 %v702
      %vm709 = vmor %vm707, %vm708
      %v710 = vsel %vm709, %v702, %v706
      %v711 = vand.u32 2147483647, %v474
      %vm712 = vcmp.eq.f32.partialorder %v711, 8.507059e+37
      %v713 = vand.u32 %v474, 2147483648
      %v714 = vor.u32 1.1754944e-38, %v713
      %v715 = vsel %vm712, %v714, %v710
      %v716 = vmul.f32 1.0, %v715
      %v717 = vrcp.pop %v475
      %v718 = vmul.f32 %v475, %v717
      %v719 = vsub.f32 1.0, %v718
      %v720 = vmul.f32 %v717, %v719
      %v721 = vadd.f32 %v717, %v720
      %vm722 = vweird.f32 %v475
      %vm723 = vweird.f32 %v717
      %vm724 = vmor %vm722, %vm723
      %v725 = vsel %vm724, %v717, %v721
      %v726 = vand.u32 2147483647, %v475
      %vm727 = vcmp.eq.f32.partialorder %v726, 8.507059e+37
      %v728 = vand.u32 %v475, 2147483648
      %v729 = vor.u32 1.1754944e-38, %v728
      %v730 = vsel %vm727, %v729, %v725
      %v731 = vmul.f32 1.0, %v730
      %v732 = vrcp.pop %v476
      %v733 = vmul.f32 %v476, %v732
      %v734 = vsub.f32 1.0, %v733
      %v735 = vmul.f32 %v732, %v734
      %v736 = vadd.f32 %v732, %v735
      %vm737 = vweird.f32 %v476
      %vm738 = vweird.f32 %v732
      %vm739 = vmor %vm737, %vm738
      %v740 = vsel %vm739, %v732, %v736
      %v741 = vand.u32 2147483647, %v476
      %vm742 = vcmp.eq.f32.partialorder %v741, 8.507059e+37
      %v743 = vand.u32 %v476, 2147483648
      %v744 = vor.u32 1.1754944e-38, %v743
      %v745 = vsel %vm742, %v744, %v740
      %v746 = vmul.f32 1.0, %v745
      %v747 = vrcp.pop %v477
      %v748 = vmul.f32 %v477, %v747
      %v749 = vsub.f32 1.0, %v748
      %v750 = vmul.f32 %v747, %v749
      %v751 = vadd.f32 %v747, %v750
      %vm752 = vweird.f32 %v477
      %vm753 = vweird.f32 %v747
      %vm754 = vmor %vm752, %vm753
      %v755 = vsel %vm754, %v747, %v751
      %v756 = vand.u32 2147483647, %v477
      %vm757 = vcmp.eq.f32.partialorder %v756, 8.507059e+37
      %v758 = vand.u32 %v477, 2147483648
      %v759 = vor.u32 1.1754944e-38, %v758
      %v760 = vsel %vm757, %v759, %v755
      %v761 = vmul.f32 1.0, %v760
      %v762 = vrcp.pop %v478
      %v763 = vmul.f32 %v478, %v762
      %v764 = vsub.f32 1.0, %v763
      %v765 = vmul.f32 %v762, %v764
      %v766 = vadd.f32 %v762, %v765
      %vm767 = vweird.f32 %v478
      %vm768 = vweird.f32 %v762
      %vm769 = vmor %vm767, %vm768
      %v770 = vsel %vm769, %v762, %v766
      %v771 = vand.u32 2147483647, %v478
      %vm772 = vcmp.eq.f32.partialorder %v771, 8.507059e+37
      %v773 = vand.u32 %v478, 2147483648
      %v774 = vor.u32 1.1754944e-38, %v773
      %v775 = vsel %vm772, %v774, %v770
      %v776 = vmul.f32 1.0, %v775
      %v777 = vrcp.pop %v479
      %v778 = vmul.f32 %v479, %v777
      %v779 = vsub.f32 1.0, %v778
      %v780 = vmul.f32 %v777, %v779
      %v781 = vadd.f32 %v777, %v780
      %vm782 = vweird.f32 %v479
      %vm783 = vweird.f32 %v777
      %vm784 = vmor %vm782, %vm783
      %v785 = vsel %vm784, %v777, %v781
      %v786 = vand.u32 2147483647, %v479
      %vm787 = vcmp.eq.f32.partialorder %v786, 8.507059e+37
      %v788 = vand.u32 %v479, 2147483648
      %v789 = vor.u32 1.1754944e-38, %v788
      %v790 = vsel %vm787, %v789, %v785
      %v791 = vmul.f32 1.0, %v790
      %v792 = vrcp.pop %v480
      %v793 = vmul.f32 %v480, %v792
      %v794 = vsub.f32 1.0, %v793
      %v795 = vmul.f32 %v792, %v794
      %v796 = vadd.f32 %v792, %v795
      %vm797 = vweird.f32 %v480
      %vm798 = vweird.f32 %v792
      %vm799 = vmor %vm797, %vm798
      %v800 = vsel %vm799, %v792, %v796
      %v801 = vand.u32 2147483647, %v480
      %vm802 = vcmp.eq.f32.partialorder %v801, 8.507059e+37
      %v803 = vand.u32 %v480, 2147483648
      %v804 = vor.u32 1.1754944e-38, %v803
      %v805 = vsel %vm802, %v804, %v800
      %v806 = vmul.f32 1.0, %v805
      %v807 = vrcp.pop %v481
      %v808 = vmul.f32 %v481, %v807
      %v809 = vsub.f32 1.0, %v808
      %v810 = vmul.f32 %v807, %v809
      %v811 = vadd.f32 %v807, %v810
      %vm812 = vweird.f32 %v481
      %vm813 = vweird.f32 %v807
      %vm814 = vmor %vm812, %vm813
      %v815 = vsel %vm814, %v807, %v811
      %v816 = vand.u32 2147483647, %v481
      %vm817 = vcmp.eq.f32.partialorder %v816, 8.507059e+37
      %v818 = vand.u32 %v481, 2147483648
      %v819 = vor.u32 1.1754944e-38, %v818
      %v820 = vsel %vm817, %v819, %v815
      %v821 = vmul.f32 1.0, %v820
      %v822 = vrcp.pop %v482
      %v823 = vmul.f32 %v482, %v822
      %v824 = vsub.f32 1.0, %v823
      %v825 = vmul.f32 %v822, %v824
      %v826 = vadd.f32 %v822, %v825
      %vm827 = vweird.f32 %v482
      %vm828 = vweird.f32 %v822
      %vm829 = vmor %vm827, %vm828
      %v830 = vsel %vm829, %v822, %v826
      %v831 = vand.u32 2147483647, %v482
      %vm832 = vcmp.eq.f32.partialorder %v831, 8.507059e+37
      %v833 = vand.u32 %v482, 2147483648
      %v834 = vor.u32 1.1754944e-38, %v833
      %v835 = vsel %vm832, %v834, %v830
      %v836 = vmul.f32 1.0, %v835
      %v837 = vrcp.pop %v483
      %v838 = vmul.f32 %v483, %v837
      %v839 = vsub.f32 1.0, %v838
      %v840 = vmul.f32 %v837, %v839
      %v841 = vadd.f32 %v837, %v840
      %vm842 = vweird.f32 %v483
      %vm843 = vweird.f32 %v837
      %vm844 = vmor %vm842, %vm843
      %v845 = vsel %vm844, %v837, %v841
      %v846 = vand.u32 2147483647, %v483
      %vm847 = vcmp.eq.f32.partialorder %v846, 8.507059e+37
      %v848 = vand.u32 %v483, 2147483648
      %v849 = vor.u32 1.1754944e-38, %v848
      %v850 = vsel %vm847, %v849, %v845
      %v851 = vmul.f32 1.0, %v850
      %v852 = vrcp.pop %v484
      %v853 = vmul.f32 %v484, %v852
      %v854 = vsub.f32 1.0, %v853
      %v855 = vmul.f32 %v852, %v854
      %v856 = vadd.f32 %v852, %v855
      %vm857 = vweird.f32 %v484
      %vm858 = vweird.f32 %v852
      %vm859 = vmor %vm857, %vm858
      %v860 = vsel %vm859, %v852, %v856
      %v861 = vand.u32 2147483647, %v484
      %vm862 = vcmp.eq.f32.partialorder %v861, 8.507059e+37
      %v863 = vand.u32 %v484, 2147483648
      %v864 = vor.u32 1.1754944e-38, %v863
      %v865 = vsel %vm862, %v864, %v860
      %v866 = vmul.f32 1.0, %v865
      %v867 = vrcp.pop %v485
      %v868 = vmul.f32 %v485, %v867
      %v869 = vsub.f32 1.0, %v868
      %v870 = vmul.f32 %v867, %v869
      %v871 = vadd.f32 %v867, %v870
      %vm872 = vweird.f32 %v485
      %vm873 = vweird.f32 %v867
      %vm874 = vmor %vm872, %vm873
      %v875 = vsel %vm874, %v867, %v871
      %v876 = vand.u32 2147483647, %v485
      %vm877 = vcmp.eq.f32.partialorder %v876, 8.507059e+37
      %v878 = vand.u32 %v485, 2147483648
      %v879 = vor.u32 1.1754944e-38, %v878
      %v880 = vsel %vm877, %v879, %v875
      %v881 = vmul.f32 1.0, %v880
      %v882 = vrcp.pop %v486
      %v883 = vmul.f32 %v486, %v882
      %v884 = vsub.f32 1.0, %v883
      %v885 = vmul.f32 %v882, %v884
      %v886 = vadd.f32 %v882, %v885
      %vm887 = vweird.f32 %v486
      %vm888 = vweird.f32 %v882
      %vm889 = vmor %vm887, %vm888
      %v890 = vsel %vm889, %v882, %v886
      %v891 = vand.u32 2147483647, %v486
      %vm892 = vcmp.eq.f32.partialorder %v891, 8.507059e+37
      %v893 = vand.u32 %v486, 2147483648
      %v894 = vor.u32 1.1754944e-38, %v893
      %v895 = vsel %vm892, %v894, %v890
      %v896 = vmul.f32 1.0, %v895
      %v897 = vrcp.pop %v487
      %v898 = vmul.f32 %v487, %v897
      %v899 = vsub.f32 1.0, %v898
      %v900 = vmul.f32 %v897, %v899
      %v901 = vadd.f32 %v897, %v900
      %vm902 = vweird.f32 %v487
      %vm903 = vweird.f32 %v897
      %vm904 = vmor %vm902, %vm903
      %v905 = vsel %vm904, %v897, %v901
      %v906 = vand.u32 2147483647, %v487
      %vm907 = vcmp.eq.f32.partialorder %v906, 8.507059e+37
      %v908 = vand.u32 %v487, 2147483648
      %v909 = vor.u32 1.1754944e-38, %v908
      %v910 = vsel %vm907, %v909, %v905
      %v911 = vmul.f32 1.0, %v910
      %v912 = vrcp.pop %v488
      %v913 = vmul.f32 %v488, %v912
      %v914 = vsub.f32 1.0, %v913
      %v915 = vmul.f32 %v912, %v914
      %v916 = vadd.f32 %v912, %v915
      %vm917 = vweird.f32 %v488
      %vm918 = vweird.f32 %v912
      %vm919 = vmor %vm917, %vm918
      %v920 = vsel %vm919, %v912, %v916
      %v921 = vand.u32 2147483647, %v488
      %vm922 = vcmp.eq.f32.partialorder %v921, 8.507059e+37
      %v923 = vand.u32 %v488, 2147483648
      %v924 = vor.u32 1.1754944e-38, %v923
      %v925 = vsel %vm922, %v924, %v920
      %v926 = vmul.f32 1.0, %v925
      %v927 = vrcp.pop %v489
      %v928 = vmul.f32 %v489, %v927
      %v929 = vsub.f32 1.0, %v928
      %v930 = vmul.f32 %v927, %v929
      %v931 = vadd.f32 %v927, %v930
      %vm932 = vweird.f32 %v489
      %vm933 = vweird.f32 %v927
      %vm934 = vmor %vm932, %vm933
      %v935 = vsel %vm934, %v927, %v931
      %v936 = vand.u32 2147483647, %v489
      %vm937 = vcmp.eq.f32.partialorder %v936, 8.507059e+37
      %v938 = vand.u32 %v489, 2147483648
      %v939 = vor.u32 1.1754944e-38, %v938
      %v940 = vsel %vm937, %v939, %v935
      %v941 = vmul.f32 1.0, %v940
      %v942 = vrcp.pop %v490
      %v943 = vmul.f32 %v490, %v942
      %v944 = vsub.f32 1.0, %v943
      %v945 = vmul.f32 %v942, %v944
      %v946 = vadd.f32 %v942, %v945
      %vm947 = vweird.f32 %v490
      %vm948 = vweird.f32 %v942
      %vm949 = vmor %vm947, %vm948
      %v950 = vsel %vm949, %v942, %v946
      %v951 = vand.u32 2147483647, %v490
      %vm952 = vcmp.eq.f32.partialorder %v951, 8.507059e+37
      %v953 = vand.u32 %v490, 2147483648
      %v954 = vor.u32 1.1754944e-38, %v953
      %v955 = vsel %vm952, %v954, %v950
      %v956 = vmul.f32 1.0, %v955
      %v957 = vrcp.pop %v491
      %v958 = vmul.f32 %v491, %v957
      %v959 = vsub.f32 1.0, %v958
      %v960 = vmul.f32 %v957, %v959
      %v961 = vadd.f32 %v957, %v960
      %vm962 = vweird.f32 %v491
      %vm963 = vweird.f32 %v957
      %vm964 = vmor %vm962, %vm963
      %v965 = vsel %vm964, %v957, %v961
      %v966 = vand.u32 2147483647, %v491
      %vm967 = vcmp.eq.f32.partialorder %v966, 8.507059e+37
      %v968 = vand.u32 %v491, 2147483648
      %v969 = vor.u32 1.1754944e-38, %v968
      %v970 = vsel %vm967, %v969, %v965
      %v971 = vmul.f32 1.0, %v970
      %v972 = vmul.f32 %v332, %v506
      %v973 = vmul.f32 %v333, %v521
      %v974 = vmul.f32 %v334, %v536
      %v975 = vmul.f32 %v335, %v551
      %v976 = vmul.f32 %v336, %v566
      %v977 = vmul.f32 %v337, %v581
      %v978 = vmul.f32 %v338, %v596
      %v979 = vmul.f32 %v339, %v611
      %v980 = vmul.f32 %v340, %v626
      %v981 = vmul.f32 %v341, %v641
      %v982 = vmul.f32 %v342, %v656
      %v983 = vmul.f32 %v343, %v671
      %v984 = vmul.f32 %v344, %v686
      %v985 = vmul.f32 %v345, %v701
      %v986 = vmul.f32 %v346, %v716
      %v987 = vmul.f32 %v347, %v731
      %v988 = vmul.f32 %v348, %v746
      %v989 = vmul.f32 %v349, %v761
      %v990 = vmul.f32 %v350, %v776
      %v991 = vmul.f32 %v351, %v791
      %v992 = vmul.f32 %v352, %v806
      %v993 = vmul.f32 %v353, %v821
      %v994 = vmul.f32 %v354, %v836
      %v995 = vmul.f32 %v355, %v851
      %v996 = vmul.f32 %v356, %v866
      %v997 = vmul.f32 %v357, %v881
      %v998 = vmul.f32 %v358, %v896
      %v999 = vmul.f32 %v359, %v911
      %v1000 = vmul.f32 %v360, %v926
      %v1001 = vmul.f32 %v361, %v941
      %v1002 = vmul.f32 %v362, %v956
      %v1003 = vmul.f32 %v363, %v971
      %v1004 = vpack.c.bf16 %v973, %v972
      %v1005 = vpack.c.bf16 %v975, %v974
      %v1006 = vpack.c.bf16 %v977, %v976
      %v1007 = vpack.c.bf16 %v979, %v978
      %v1008 = vpack.c.bf16 %v981, %v980
      %v1009 = vpack.c.bf16 %v983, %v982
      %v1010 = vpack.c.bf16 %v985, %v984
      %v1011 = vpack.c.bf16 %v987, %v986
      %v1012 = vpack.c.bf16 %v989, %v988
      %v1013 = vpack.c.bf16 %v991, %v990
      %v1014 = vpack.c.bf16 %v993, %v992
      %v1015 = vpack.c.bf16 %v995, %v994
      %v1016 = vpack.c.bf16 %v997, %v996
      %v1017 = vpack.c.bf16 %v999, %v998
      %v1018 = vpack.c.bf16 %v1001, %v1000
      %v1019 = vpack.c.bf16 %v1003, %v1002
      %v1020 = vld [vmem:[%s1] sm:$0xf]
      %v1021 = vld [vmem:[%s1 + $0x4] sm:$0xf]
      %v1022 = vld [vmem:[%s1 + $0x8] sm:$0xf]
      %v1023 = vld [vmem:[%s1 + $0xc] sm:$0xf]
      %v1024 = vld [vmem:[%s1 + $0x10] sm:$0xf]
      %v1025 = vld [vmem:[%s1 + $0x14] sm:$0xf]
      %v1026 = vld [vmem:[%s1 + $0x18] sm:$0xf]
      %v1027 = vld [vmem:[%s1 + $0x1c] sm:$0xf]
      %v1028 = vld [vmem:[%s1 + $0x20] sm:$0xf]
      %v1029 = vld [vmem:[%s1 + $0x24] sm:$0xf]
      %v1030 = vld [vmem:[%s1 + $0x28] sm:$0xf]
      %v1031 = vld [vmem:[%s1 + $0x2c] sm:$0xf]
      %v1032 = vld [vmem:[%s1 + $0x30] sm:$0xf]
      %v1033 = vld [vmem:[%s1 + $0x34] sm:$0xf]
      %v1034 = vld [vmem:[%s1 + $0x38] sm:$0xf]
      %v1035 = vld [vmem:[%s1 + $0x3c] sm:$0xf]
      %v1036 = vld [vmem:[%s2] sm:$0x1]
      %v1038 = vperm.slane %v1036, 0
      %v1056 = vunpack.c.l.b16 %v1020
      %v1057 = vunpack.c.l.b16 %v1021
      %v1058 = vunpack.c.l.b16 %v1022
      %v1059 = vunpack.c.l.b16 %v1023
      %v1060 = vunpack.c.l.b16 %v1024
      %v1061 = vunpack.c.l.b16 %v1025
      %v1062 = vunpack.c.l.b16 %v1026
      %v1063 = vunpack.c.l.b16 %v1027
      %v1064 = vunpack.c.l.b16 %v1028
      %v1065 = vunpack.c.l.b16 %v1029
      %v1066 = vunpack.c.l.b16 %v1030
      %v1067 = vunpack.c.l.b16 %v1031
      %v1068 = vunpack.c.l.b16 %v1032
      %v1069 = vunpack.c.l.b16 %v1033
      %v1070 = vunpack.c.l.b16 %v1034
      %v1071 = vunpack.c.l.b16 %v1035
      %v1072 = vpack.c.b16 %v1057, %v1056
      %v1073 = vpack.c.b16 %v1059, %v1058
      %v1074 = vpack.c.b16 %v1061, %v1060
      %v1075 = vpack.c.b16 %v1063, %v1062
      %v1076 = vpack.c.b16 %v1065, %v1064
      %v1077 = vpack.c.b16 %v1067, %v1066
      %v1078 = vpack.c.b16 %v1069, %v1068
      %v1079 = vpack.c.b16 %v1071, %v1070
      %1088 = vmatpush.bf16.msra.mxu0 %v1079
      %1089 = vmatpush.bf16.msra.mxu0 %v1078
      %1090 = vmatpush.bf16.msra.mxu0 %v1077
      %1091 = vmatpush.bf16.msra.mxu0 %v1076
      %1092 = vmatpush.bf16.msra.mxu0 %v1075
      %1093 = vmatpush.bf16.msra.mxu0 %v1074
      %1094 = vmatpush.bf16.msra.mxu0 %v1073
      %1095 = vmatpush.bf16.msra.mxu0 %v1072
      %1096 = vmatmul.bf16.gmra.mxu0 %v1004
      %v1097 = vpop.f32.mrf.mxu0
      %v1098 = vadd.f32 %v1038, %v1097
      %v1099 = vpop.f32.mrf.mxu0
      %v1100 = vadd.f32 %v1038, %v1099
      %1101 = vmatmul.bf16.gmra.mxu0 %v1005
      %v1102 = vpop.f32.mrf.mxu0
      %v1103 = vadd.f32 %v1038, %v1102
      %v1104 = vpop.f32.mrf.mxu0
      %v1105 = vadd.f32 %v1038, %v1104
      %1106 = vmatmul.bf16.gmra.mxu0 %v1006
      %v1107 = vpop.f32.mrf.mxu0
      %v1108 = vadd.f32 %v1038, %v1107
      %v1109 = vpop.f32.mrf.mxu0
      %v1110 = vadd.f32 %v1038, %v1109
      %1111 = vmatmul.bf16.gmra.mxu0 %v1007
      %v1112 = vpop.f32.mrf.mxu0
      %v1113 = vadd.f32 %v1038, %v1112
      %v1114 = vpop.f32.mrf.mxu0
      %v1115 = vadd.f32 %v1038, %v1114
      %1116 = vmatmul.bf16.gmra.mxu0 %v1008
      %v1117 = vpop.f32.mrf.mxu0
      %v1118 = vadd.f32 %v1038, %v1117
      %v1119 = vpop.f32.mrf.mxu0
      %v1120 = vadd.f32 %v1038, %v1119
      %1121 = vmatmul.bf16.gmra.mxu0 %v1009
      %v1122 = vpop.f32.mrf.mxu0
      %v1123 = vadd.f32 %v1038, %v1122
      %v1124 = vpop.f32.mrf.mxu0
      %v1125 = vadd.f32 %v1038, %v1124
      %1126 = vmatmul.bf16.gmra.mxu0 %v1010
      %v1127 = vpop.f32.mrf.mxu0
      %v1128 = vadd.f32 %v1038, %v1127
      %v1129 = vpop.f32.mrf.mxu0
      %v1130 = vadd.f32 %v1038, %v1129
      %1131 = vmatmul.bf16.gmra.mxu0 %v1011
      %v1132 = vpop.f32.mrf.mxu0
      %v1133 = vadd.f32 %v1038, %v1132
      %v1134 = vpop.f32.mrf.mxu0
      %v1135 = vadd.f32 %v1038, %v1134
      %1136 = vmatmul.bf16.gmra.mxu0 %v1012
      %v1137 = vpop.f32.mrf.mxu0
      %v1138 = vadd.f32 %v1038, %v1137
      %v1139 = vpop.f32.mrf.mxu0
      %v1140 = vadd.f32 %v1038, %v1139
      %1141 = vmatmul.bf16.gmra.mxu0 %v1013
      %v1142 = vpop.f32.mrf.mxu0
      %v1143 = vadd.f32 %v1038, %v1142
      %v1144 = vpop.f32.mrf.mxu0
      %v1145 = vadd.f32 %v1038, %v1144
      %1146 = vmatmul.bf16.gmra.mxu0 %v1014
      %v1147 = vpop.f32.mrf.mxu0
      %v1148 = vadd.f32 %v1038, %v1147
      %v1149 = vpop.f32.mrf.mxu0
      %v1150 = vadd.f32 %v1038, %v1149
      %1151 = vmatmul.bf16.gmra.mxu0 %v1015
      %v1152 = vpop.f32.mrf.mxu0
      %v1153 = vadd.f32 %v1038, %v1152
      %v1154 = vpop.f32.mrf.mxu0
      %v1155 = vadd.f32 %v1038, %v1154
      %1156 = vmatmul.bf16.gmra.mxu0 %v1016
      %v1157 = vpop.f32.mrf.mxu0
      %v1158 = vadd.f32 %v1038, %v1157
      %v1159 = vpop.f32.mrf.mxu0
      %v1160 = vadd.f32 %v1038, %v1159
      %1161 = vmatmul.bf16.gmra.mxu0 %v1017
      %v1162 = vpop.f32.mrf.mxu0
      %v1163 = vadd.f32 %v1038, %v1162
      %v1164 = vpop.f32.mrf.mxu0
      %v1165 = vadd.f32 %v1038, %v1164
      %1166 = vmatmul.bf16.gmra.mxu0 %v1018
      %v1167 = vpop.f32.mrf.mxu0
      %v1168 = vadd.f32 %v1038, %v1167
      %v1169 = vpop.f32.mrf.mxu0
      %v1170 = vadd.f32 %v1038, %v1169
      %1171 = vmatmul.bf16.gmra.mxu0 %v1019
      %v1172 = vpop.f32.mrf.mxu0
      %v1173 = vadd.f32 %v1038, %v1172
      %v1174 = vpop.f32.mrf.mxu0
      %v1175 = vadd.f32 %v1038, %v1174
      %1176 = vdwg.mxu0
      %v1177 = vxor.u32 %v1098, 2147483648
      %v1178 = vxor.u32 %v1100, 2147483648
      %v1179 = vxor.u32 %v1103, 2147483648
      %v1180 = vxor.u32 %v1105, 2147483648
      %v1181 = vxor.u32 %v1108, 2147483648
      %v1182 = vxor.u32 %v1110, 2147483648
      %v1183 = vxor.u32 %v1113, 2147483648
      %v1184 = vxor.u32 %v1115, 2147483648
      %v1185 = vxor.u32 %v1118, 2147483648
      %v1186 = vxor.u32 %v1120, 2147483648
      %v1187 = vxor.u32 %v1123, 2147483648
      %v1188 = vxor.u32 %v1125, 2147483648
      %v1189 = vxor.u32 %v1128, 2147483648
      %v1190 = vxor.u32 %v1130, 2147483648
      %v1191 = vxor.u32 %v1133, 2147483648
      %v1192 = vxor.u32 %v1135, 2147483648
      %v1193 = vxor.u32 %v1138, 2147483648
      %v1194 = vxor.u32 %v1140, 2147483648
      %v1195 = vxor.u32 %v1143, 2147483648
      %v1196 = vxor.u32 %v1145, 2147483648
      %v1197 = vxor.u32 %v1148, 2147483648
      %v1198 = vxor.u32 %v1150, 2147483648
      %v1199 = vxor.u32 %v1153, 2147483648
      %v1200 = vxor.u32 %v1155, 2147483648
      %v1201 = vxor.u32 %v1158, 2147483648
      %v1202 = vxor.u32 %v1160, 2147483648
      %v1203 = vxor.u32 %v1163, 2147483648
      %v1204 = vxor.u32 %v1165, 2147483648
      %v1205 = vxor.u32 %v1168, 2147483648
      %v1206 = vxor.u32 %v1170, 2147483648
      %v1207 = vxor.u32 %v1173, 2147483648
      %v1208 = vxor.u32 %v1175, 2147483648
      %v1209 = vmul.f32 %v1177, 1.442695
      %v1210 = vpow.pop %v1209
      %v1211 = vmul.f32 %v1178, 1.442695
      %v1212 = vpow.pop %v1211
      %v1213 = vmul.f32 %v1179, 1.442695
      %v1214 = vpow.pop %v1213
      %v1215 = vmul.f32 %v1180, 1.442695
      %v1216 = vpow.pop %v1215
      %v1217 = vmul.f32 %v1181, 1.442695
      %v1218 = vpow.pop %v1217
      %v1219 = vmul.f32 %v1182, 1.442695
      %v1220 = vpow.pop %v1219
      %v1221 = vmul.f32 %v1183, 1.442695
      %v1222 = vpow.pop %v1221
      %v1223 = vmul.f32 %v1184, 1.442695
      %v1224 = vpow.pop %v1223
      %v1225 = vmul.f32 %v1185, 1.442695
      %v1226 = vpow.pop %v1225
      %v1227 = vmul.f32 %v1186, 1.442695
      %v1228 = vpow.pop %v1227
      %v1229 = vmul.f32 %v1187, 1.442695
      %v1230 = vpow.pop %v1229
      %v1231 = vmul.f32 %v1188, 1.442695
      %v1232 = vpow.pop %v1231
      %v1233 = vmul.f32 %v1189, 1.442695
      %v1234 = vpow.pop %v1233
      %v1235 = vmul.f32 %v1190, 1.442695
      %v1236 = vpow.pop %v1235
      %v1237 = vmul.f32 %v1191, 1.442695
      %v1238 = vpow.pop %v1237
      %v1239 = vmul.f32 %v1192, 1.442695
      %v1240 = vpow.pop %v1239
      %v1241 = vmul.f32 %v1193, 1.442695
      %v1242 = vpow.pop %v1241
      %v1243 = vmul.f32 %v1194, 1.442695
      %v1244 = vpow.pop %v1243
      %v1245 = vmul.f32 %v1195, 1.442695
      %v1246 = vpow.pop %v1245
      %v1247 = vmul.f32 %v1196, 1.442695
      %v1248 = vpow.pop %v1247
      %v1249 = vmul.f32 %v1197, 1.442695
      %v1250 = vpow.pop %v1249
      %v1251 = vmul.f32 %v1198, 1.442695
      %v1252 = vpow.pop %v1251
      %v1253 = vmul.f32 %v1199, 1.442695
      %v1254 = vpow.pop %v1253
      %v1255 = vmul.f32 %v1200, 1.442695
      %v1256 = vpow.pop %v1255
      %v1257 = vmul.f32 %v1201, 1.442695
      %v1258 = vpow.pop %v1257
      %v1259 = vmul.f32 %v1202, 1.442695
      %v1260 = vpow.pop %v1259
      %v1261 = vmul.f32 %v1203, 1.442695
      %v1262 = vpow.pop %v1261
      %v1263 = vmul.f32 %v1204, 1.442695
      %v1264 = vpow.pop %v1263
      %v1265 = vmul.f32 %v1205, 1.442695
      %v1266 = vpow.pop %v1265
      %v1267 = vmul.f32 %v1206, 1.442695
      %v1268 = vpow.pop %v1267
      %v1269 = vmul.f32 %v1207, 1.442695
      %v1270 = vpow.pop %v1269
      %v1271 = vmul.f32 %v1208, 1.442695
      %v1272 = vpow.pop %v1271
      %v1273 = vadd.f32 %v1210, 1.0
      %v1274 = vadd.f32 %v1212, 1.0
      %v1275 = vadd.f32 %v1214, 1.0
      %v1276 = vadd.f32 %v1216, 1.0
      %v1277 = vadd.f32 %v1218, 1.0
      %v1278 = vadd.f32 %v1220, 1.0
      %v1279 = vadd.f32 %v1222, 1.0
      %v1280 = vadd.f32 %v1224, 1.0
      %v1281 = vadd.f32 %v1226, 1.0
      %v1282 = vadd.f32 %v1228, 1.0
      %v1283 = vadd.f32 %v1230, 1.0
      %v1284 = vadd.f32 %v1232, 1.0
      %v1285 = vadd.f32 %v1234, 1.0
      %v1286 = vadd.f32 %v1236, 1.0
      %v1287 = vadd.f32 %v1238, 1.0
      %v1288 = vadd.f32 %v1240, 1.0
      %v1289 = vadd.f32 %v1242, 1.0
      %v1290 = vadd.f32 %v1244, 1.0
      %v1291 = vadd.f32 %v1246, 1.0
      %v1292 = vadd.f32 %v1248, 1.0
      %v1293 = vadd.f32 %v1250, 1.0
      %v1294 = vadd.f32 %v1252, 1.0
      %v1295 = vadd.f32 %v1254, 1.0
      %v1296 = vadd.f32 %v1256, 1.0
      %v1297 = vadd.f32 %v1258, 1.0
      %v1298 = vadd.f32 %v1260, 1.0
      %v1299 = vadd.f32 %v1262, 1.0
      %v1300 = vadd.f32 %v1264, 1.0
      %v1301 = vadd.f32 %v1266, 1.0
      %v1302 = vadd.f32 %v1268, 1.0
      %v1303 = vadd.f32 %v1270, 1.0
      %v1304 = vadd.f32 %v1272, 1.0
      %v1305 = vrcp.pop %v1273
      %v1306 = vmul.f32 %v1273, %v1305
      %v1307 = vsub.f32 1.0, %v1306
      %v1308 = vmul.f32 %v1305, %v1307
      %v1309 = vadd.f32 %v1305, %v1308
      %vm1310 = vweird.f32 %v1273
      %vm1311 = vweird.f32 %v1305
      %vm1312 = vmor %vm1310, %vm1311
      %v1313 = vsel %vm1312, %v1305, %v1309
      %v1314 = vand.u32 2147483647, %v1273
      %vm1315 = vcmp.eq.f32.partialorder %v1314, 8.507059e+37
      %v1316 = vand.u32 %v1273, 2147483648
      %v1317 = vor.u32 1.1754944e-38, %v1316
      %v1318 = vsel %vm1315, %v1317, %v1313
      %v1319 = vmul.f32 1.0, %v1318
      %v1320 = vrcp.pop %v1274
      %v1321 = vmul.f32 %v1274, %v1320
      %v1322 = vsub.f32 1.0, %v1321
      %v1323 = vmul.f32 %v1320, %v1322
      %v1324 = vadd.f32 %v1320, %v1323
      %vm1325 = vweird.f32 %v1274
      %vm1326 = vweird.f32 %v1320
      %vm1327 = vmor %vm1325, %vm1326
      %v1328 = vsel %vm1327, %v1320, %v1324
      %v1329 = vand.u32 2147483647, %v1274
      %vm1330 = vcmp.eq.f32.partialorder %v1329, 8.507059e+37
      %v1331 = vand.u32 %v1274, 2147483648
      %v1332 = vor.u32 1.1754944e-38, %v1331
      %v1333 = vsel %vm1330, %v1332, %v1328
      %v1334 = vmul.f32 1.0, %v1333
      %v1335 = vrcp.pop %v1275
      %v1336 = vmul.f32 %v1275, %v1335
      %v1337 = vsub.f32 1.0, %v1336
      %v1338 = vmul.f32 %v1335, %v1337
      %v1339 = vadd.f32 %v1335, %v1338
      %vm1340 = vweird.f32 %v1275
      %vm1341 = vweird.f32 %v1335
      %vm1342 = vmor %vm1340, %vm1341
      %v1343 = vsel %vm1342, %v1335, %v1339
      %v1344 = vand.u32 2147483647, %v1275
      %vm1345 = vcmp.eq.f32.partialorder %v1344, 8.507059e+37
      %v1346 = vand.u32 %v1275, 2147483648
      %v1347 = vor.u32 1.1754944e-38, %v1346
      %v1348 = vsel %vm1345, %v1347, %v1343
      %v1349 = vmul.f32 1.0, %v1348
      %v1350 = vrcp.pop %v1276
      %v1351 = vmul.f32 %v1276, %v1350
      %v1352 = vsub.f32 1.0, %v1351
      %v1353 = vmul.f32 %v1350, %v1352
      %v1354 = vadd.f32 %v1350, %v1353
      %vm1355 = vweird.f32 %v1276
      %vm1356 = vweird.f32 %v1350
      %vm1357 = vmor %vm1355, %vm1356
      %v1358 = vsel %vm1357, %v1350, %v1354
      %v1359 = vand.u32 2147483647, %v1276
      %vm1360 = vcmp.eq.f32.partialorder %v1359, 8.507059e+37
      %v1361 = vand.u32 %v1276, 2147483648
      %v1362 = vor.u32 1.1754944e-38, %v1361
      %v1363 = vsel %vm1360, %v1362, %v1358
      %v1364 = vmul.f32 1.0, %v1363
      %v1365 = vrcp.pop %v1277
      %v1366 = vmul.f32 %v1277, %v1365
      %v1367 = vsub.f32 1.0, %v1366
      %v1368 = vmul.f32 %v1365, %v1367
      %v1369 = vadd.f32 %v1365, %v1368
      %vm1370 = vweird.f32 %v1277
      %vm1371 = vweird.f32 %v1365
      %vm1372 = vmor %vm1370, %vm1371
      %v1373 = vsel %vm1372, %v1365, %v1369
      %v1374 = vand.u32 2147483647, %v1277
      %vm1375 = vcmp.eq.f32.partialorder %v1374, 8.507059e+37
      %v1376 = vand.u32 %v1277, 2147483648
      %v1377 = vor.u32 1.1754944e-38, %v1376
      %v1378 = vsel %vm1375, %v1377, %v1373
      %v1379 = vmul.f32 1.0, %v1378
      %v1380 = vrcp.pop %v1278
      %v1381 = vmul.f32 %v1278, %v1380
      %v1382 = vsub.f32 1.0, %v1381
      %v1383 = vmul.f32 %v1380, %v1382
      %v1384 = vadd.f32 %v1380, %v1383
      %vm1385 = vweird.f32 %v1278
      %vm1386 = vweird.f32 %v1380
      %vm1387 = vmor %vm1385, %vm1386
      %v1388 = vsel %vm1387, %v1380, %v1384
      %v1389 = vand.u32 2147483647, %v1278
      %vm1390 = vcmp.eq.f32.partialorder %v1389, 8.507059e+37
      %v1391 = vand.u32 %v1278, 2147483648
      %v1392 = vor.u32 1.1754944e-38, %v1391
      %v1393 = vsel %vm1390, %v1392, %v1388
      %v1394 = vmul.f32 1.0, %v1393
      %v1395 = vrcp.pop %v1279
      %v1396 = vmul.f32 %v1279, %v1395
      %v1397 = vsub.f32 1.0, %v1396
      %v1398 = vmul.f32 %v1395, %v1397
      %v1399 = vadd.f32 %v1395, %v1398
      %vm1400 = vweird.f32 %v1279
      %vm1401 = vweird.f32 %v1395
      %vm1402 = vmor %vm1400, %vm1401
      %v1403 = vsel %vm1402, %v1395, %v1399
      %v1404 = vand.u32 2147483647, %v1279
      %vm1405 = vcmp.eq.f32.partialorder %v1404, 8.507059e+37
      %v1406 = vand.u32 %v1279, 2147483648
      %v1407 = vor.u32 1.1754944e-38, %v1406
      %v1408 = vsel %vm1405, %v1407, %v1403
      %v1409 = vmul.f32 1.0, %v1408
      %v1410 = vrcp.pop %v1280
      %v1411 = vmul.f32 %v1280, %v1410
      %v1412 = vsub.f32 1.0, %v1411
      %v1413 = vmul.f32 %v1410, %v1412
      %v1414 = vadd.f32 %v1410, %v1413
      %vm1415 = vweird.f32 %v1280
      %vm1416 = vweird.f32 %v1410
      %vm1417 = vmor %vm1415, %vm1416
      %v1418 = vsel %vm1417, %v1410, %v1414
      %v1419 = vand.u32 2147483647, %v1280
      %vm1420 = vcmp.eq.f32.partialorder %v1419, 8.507059e+37
      %v1421 = vand.u32 %v1280, 2147483648
      %v1422 = vor.u32 1.1754944e-38, %v1421
      %v1423 = vsel %vm1420, %v1422, %v1418
      %v1424 = vmul.f32 1.0, %v1423
      %v1425 = vrcp.pop %v1281
      %v1426 = vmul.f32 %v1281, %v1425
      %v1427 = vsub.f32 1.0, %v1426
      %v1428 = vmul.f32 %v1425, %v1427
      %v1429 = vadd.f32 %v1425, %v1428
      %vm1430 = vweird.f32 %v1281
      %vm1431 = vweird.f32 %v1425
      %vm1432 = vmor %vm1430, %vm1431
      %v1433 = vsel %vm1432, %v1425, %v1429
      %v1434 = vand.u32 2147483647, %v1281
      %vm1435 = vcmp.eq.f32.partialorder %v1434, 8.507059e+37
      %v1436 = vand.u32 %v1281, 2147483648
      %v1437 = vor.u32 1.1754944e-38, %v1436
      %v1438 = vsel %vm1435, %v1437, %v1433
      %v1439 = vmul.f32 1.0, %v1438
      %v1440 = vrcp.pop %v1282
      %v1441 = vmul.f32 %v1282, %v1440
      %v1442 = vsub.f32 1.0, %v1441
      %v1443 = vmul.f32 %v1440, %v1442
      %v1444 = vadd.f32 %v1440, %v1443
      %vm1445 = vweird.f32 %v1282
      %vm1446 = vweird.f32 %v1440
      %vm1447 = vmor %vm1445, %vm1446
      %v1448 = vsel %vm1447, %v1440, %v1444
      %v1449 = vand.u32 2147483647, %v1282
      %vm1450 = vcmp.eq.f32.partialorder %v1449, 8.507059e+37
      %v1451 = vand.u32 %v1282, 2147483648
      %v1452 = vor.u32 1.1754944e-38, %v1451
      %v1453 = vsel %vm1450, %v1452, %v1448
      %v1454 = vmul.f32 1.0, %v1453
      %v1455 = vrcp.pop %v1283
      %v1456 = vmul.f32 %v1283, %v1455
      %v1457 = vsub.f32 1.0, %v1456
      %v1458 = vmul.f32 %v1455, %v1457
      %v1459 = vadd.f32 %v1455, %v1458
      %vm1460 = vweird.f32 %v1283
      %vm1461 = vweird.f32 %v1455
      %vm1462 = vmor %vm1460, %vm1461
      %v1463 = vsel %vm1462, %v1455, %v1459
      %v1464 = vand.u32 2147483647, %v1283
      %vm1465 = vcmp.eq.f32.partialorder %v1464, 8.507059e+37
      %v1466 = vand.u32 %v1283, 2147483648
      %v1467 = vor.u32 1.1754944e-38, %v1466
      %v1468 = vsel %vm1465, %v1467, %v1463
      %v1469 = vmul.f32 1.0, %v1468
      %v1470 = vrcp.pop %v1284
      %v1471 = vmul.f32 %v1284, %v1470
      %v1472 = vsub.f32 1.0, %v1471
      %v1473 = vmul.f32 %v1470, %v1472
      %v1474 = vadd.f32 %v1470, %v1473
      %vm1475 = vweird.f32 %v1284
      %vm1476 = vweird.f32 %v1470
      %vm1477 = vmor %vm1475, %vm1476
      %v1478 = vsel %vm1477, %v1470, %v1474
      %v1479 = vand.u32 2147483647, %v1284
      %vm1480 = vcmp.eq.f32.partialorder %v1479, 8.507059e+37
      %v1481 = vand.u32 %v1284, 2147483648
      %v1482 = vor.u32 1.1754944e-38, %v1481
      %v1483 = vsel %vm1480, %v1482, %v1478
      %v1484 = vmul.f32 1.0, %v1483
      %v1485 = vrcp.pop %v1285
      %v1486 = vmul.f32 %v1285, %v1485
      %v1487 = vsub.f32 1.0, %v1486
      %v1488 = vmul.f32 %v1485, %v1487
      %v1489 = vadd.f32 %v1485, %v1488
      %vm1490 = vweird.f32 %v1285
      %vm1491 = vweird.f32 %v1485
      %vm1492 = vmor %vm1490, %vm1491
      %v1493 = vsel %vm1492, %v1485, %v1489
      %v1494 = vand.u32 2147483647, %v1285
      %vm1495 = vcmp.eq.f32.partialorder %v1494, 8.507059e+37
      %v1496 = vand.u32 %v1285, 2147483648
      %v1497 = vor.u32 1.1754944e-38, %v1496
      %v1498 = vsel %vm1495, %v1497, %v1493
      %v1499 = vmul.f32 1.0, %v1498
      %v1500 = vrcp.pop %v1286
      %v1501 = vmul.f32 %v1286, %v1500
      %v1502 = vsub.f32 1.0, %v1501
      %v1503 = vmul.f32 %v1500, %v1502
      %v1504 = vadd.f32 %v1500, %v1503
      %vm1505 = vweird.f32 %v1286
      %vm1506 = vweird.f32 %v1500
      %vm1507 = vmor %vm1505, %vm1506
      %v1508 = vsel %vm1507, %v1500, %v1504
      %v1509 = vand.u32 2147483647, %v1286
      %vm1510 = vcmp.eq.f32.partialorder %v1509, 8.507059e+37
      %v1511 = vand.u32 %v1286, 2147483648
      %v1512 = vor.u32 1.1754944e-38, %v1511
      %v1513 = vsel %vm1510, %v1512, %v1508
      %v1514 = vmul.f32 1.0, %v1513
      %v1515 = vrcp.pop %v1287
      %v1516 = vmul.f32 %v1287, %v1515
      %v1517 = vsub.f32 1.0, %v1516
      %v1518 = vmul.f32 %v1515, %v1517
      %v1519 = vadd.f32 %v1515, %v1518
      %vm1520 = vweird.f32 %v1287
      %vm1521 = vweird.f32 %v1515
      %vm1522 = vmor %vm1520, %vm1521
      %v1523 = vsel %vm1522, %v1515, %v1519
      %v1524 = vand.u32 2147483647, %v1287
      %vm1525 = vcmp.eq.f32.partialorder %v1524, 8.507059e+37
      %v1526 = vand.u32 %v1287, 2147483648
      %v1527 = vor.u32 1.1754944e-38, %v1526
      %v1528 = vsel %vm1525, %v1527, %v1523
      %v1529 = vmul.f32 1.0, %v1528
      %v1530 = vrcp.pop %v1288
      %v1531 = vmul.f32 %v1288, %v1530
      %v1532 = vsub.f32 1.0, %v1531
      %v1533 = vmul.f32 %v1530, %v1532
      %v1534 = vadd.f32 %v1530, %v1533
      %vm1535 = vweird.f32 %v1288
      %vm1536 = vweird.f32 %v1530
      %vm1537 = vmor %vm1535, %vm1536
      %v1538 = vsel %vm1537, %v1530, %v1534
      %v1539 = vand.u32 2147483647, %v1288
      %vm1540 = vcmp.eq.f32.partialorder %v1539, 8.507059e+37
      %v1541 = vand.u32 %v1288, 2147483648
      %v1542 = vor.u32 1.1754944e-38, %v1541
      %v1543 = vsel %vm1540, %v1542, %v1538
      %v1544 = vmul.f32 1.0, %v1543
      %v1545 = vrcp.pop %v1289
      %v1546 = vmul.f32 %v1289, %v1545
      %v1547 = vsub.f32 1.0, %v1546
      %v1548 = vmul.f32 %v1545, %v1547
      %v1549 = vadd.f32 %v1545, %v1548
      %vm1550 = vweird.f32 %v1289
      %vm1551 = vweird.f32 %v1545
      %vm1552 = vmor %vm1550, %vm1551
      %v1553 = vsel %vm1552, %v1545, %v1549
      %v1554 = vand.u32 2147483647, %v1289
      %vm1555 = vcmp.eq.f32.partialorder %v1554, 8.507059e+37
      %v1556 = vand.u32 %v1289, 2147483648
      %v1557 = vor.u32 1.1754944e-38, %v1556
      %v1558 = vsel %vm1555, %v1557, %v1553
      %v1559 = vmul.f32 1.0, %v1558
      %v1560 = vrcp.pop %v1290
      %v1561 = vmul.f32 %v1290, %v1560
      %v1562 = vsub.f32 1.0, %v1561
      %v1563 = vmul.f32 %v1560, %v1562
      %v1564 = vadd.f32 %v1560, %v1563
      %vm1565 = vweird.f32 %v1290
      %vm1566 = vweird.f32 %v1560
      %vm1567 = vmor %vm1565, %vm1566
      %v1568 = vsel %vm1567, %v1560, %v1564
      %v1569 = vand.u32 2147483647, %v1290
      %vm1570 = vcmp.eq.f32.partialorder %v1569, 8.507059e+37
      %v1571 = vand.u32 %v1290, 2147483648
      %v1572 = vor.u32 1.1754944e-38, %v1571
      %v1573 = vsel %vm1570, %v1572, %v1568
      %v1574 = vmul.f32 1.0, %v1573
      %v1575 = vrcp.pop %v1291
      %v1576 = vmul.f32 %v1291, %v1575
      %v1577 = vsub.f32 1.0, %v1576
      %v1578 = vmul.f32 %v1575, %v1577
      %v1579 = vadd.f32 %v1575, %v1578
      %vm1580 = vweird.f32 %v1291
      %vm1581 = vweird.f32 %v1575
      %vm1582 = vmor %vm1580, %vm1581
      %v1583 = vsel %vm1582, %v1575, %v1579
      %v1584 = vand.u32 2147483647, %v1291
      %vm1585 = vcmp.eq.f32.partialorder %v1584, 8.507059e+37
      %v1586 = vand.u32 %v1291, 2147483648
      %v1587 = vor.u32 1.1754944e-38, %v1586
      %v1588 = vsel %vm1585, %v1587, %v1583
      %v1589 = vmul.f32 1.0, %v1588
      %v1590 = vrcp.pop %v1292
      %v1591 = vmul.f32 %v1292, %v1590
      %v1592 = vsub.f32 1.0, %v1591
      %v1593 = vmul.f32 %v1590, %v1592
      %v1594 = vadd.f32 %v1590, %v1593
      %vm1595 = vweird.f32 %v1292
      %vm1596 = vweird.f32 %v1590
      %vm1597 = vmor %vm1595, %vm1596
      %v1598 = vsel %vm1597, %v1590, %v1594
      %v1599 = vand.u32 2147483647, %v1292
      %vm1600 = vcmp.eq.f32.partialorder %v1599, 8.507059e+37
      %v1601 = vand.u32 %v1292, 2147483648
      %v1602 = vor.u32 1.1754944e-38, %v1601
      %v1603 = vsel %vm1600, %v1602, %v1598
      %v1604 = vmul.f32 1.0, %v1603
      %v1605 = vrcp.pop %v1293
      %v1606 = vmul.f32 %v1293, %v1605
      %v1607 = vsub.f32 1.0, %v1606
      %v1608 = vmul.f32 %v1605, %v1607
      %v1609 = vadd.f32 %v1605, %v1608
      %vm1610 = vweird.f32 %v1293
      %vm1611 = vweird.f32 %v1605
      %vm1612 = vmor %vm1610, %vm1611
      %v1613 = vsel %vm1612, %v1605, %v1609
      %v1614 = vand.u32 2147483647, %v1293
      %vm1615 = vcmp.eq.f32.partialorder %v1614, 8.507059e+37
      %v1616 = vand.u32 %v1293, 2147483648
      %v1617 = vor.u32 1.1754944e-38, %v1616
      %v1618 = vsel %vm1615, %v1617, %v1613
      %v1619 = vmul.f32 1.0, %v1618
      %v1620 = vrcp.pop %v1294
      %v1621 = vmul.f32 %v1294, %v1620
      %v1622 = vsub.f32 1.0, %v1621
      %v1623 = vmul.f32 %v1620, %v1622
      %v1624 = vadd.f32 %v1620, %v1623
      %vm1625 = vweird.f32 %v1294
      %vm1626 = vweird.f32 %v1620
      %vm1627 = vmor %vm1625, %vm1626
      %v1628 = vsel %vm1627, %v1620, %v1624
      %v1629 = vand.u32 2147483647, %v1294
      %vm1630 = vcmp.eq.f32.partialorder %v1629, 8.507059e+37
      %v1631 = vand.u32 %v1294, 2147483648
      %v1632 = vor.u32 1.1754944e-38, %v1631
      %v1633 = vsel %vm1630, %v1632, %v1628
      %v1634 = vmul.f32 1.0, %v1633
      %v1635 = vrcp.pop %v1295
      %v1636 = vmul.f32 %v1295, %v1635
      %v1637 = vsub.f32 1.0, %v1636
      %v1638 = vmul.f32 %v1635, %v1637
      %v1639 = vadd.f32 %v1635, %v1638
      %vm1640 = vweird.f32 %v1295
      %vm1641 = vweird.f32 %v1635
      %vm1642 = vmor %vm1640, %vm1641
      %v1643 = vsel %vm1642, %v1635, %v1639
      %v1644 = vand.u32 2147483647, %v1295
      %vm1645 = vcmp.eq.f32.partialorder %v1644, 8.507059e+37
      %v1646 = vand.u32 %v1295, 2147483648
      %v1647 = vor.u32 1.1754944e-38, %v1646
      %v1648 = vsel %vm1645, %v1647, %v1643
      %v1649 = vmul.f32 1.0, %v1648
      %v1650 = vrcp.pop %v1296
      %v1651 = vmul.f32 %v1296, %v1650
      %v1652 = vsub.f32 1.0, %v1651
      %v1653 = vmul.f32 %v1650, %v1652
      %v1654 = vadd.f32 %v1650, %v1653
      %vm1655 = vweird.f32 %v1296
      %vm1656 = vweird.f32 %v1650
      %vm1657 = vmor %vm1655, %vm1656
      %v1658 = vsel %vm1657, %v1650, %v1654
      %v1659 = vand.u32 2147483647, %v1296
      %vm1660 = vcmp.eq.f32.partialorder %v1659, 8.507059e+37
      %v1661 = vand.u32 %v1296, 2147483648
      %v1662 = vor.u32 1.1754944e-38, %v1661
      %v1663 = vsel %vm1660, %v1662, %v1658
      %v1664 = vmul.f32 1.0, %v1663
      %v1665 = vrcp.pop %v1297
      %v1666 = vmul.f32 %v1297, %v1665
      %v1667 = vsub.f32 1.0, %v1666
      %v1668 = vmul.f32 %v1665, %v1667
      %v1669 = vadd.f32 %v1665, %v1668
      %vm1670 = vweird.f32 %v1297
      %vm1671 = vweird.f32 %v1665
      %vm1672 = vmor %vm1670, %vm1671
      %v1673 = vsel %vm1672, %v1665, %v1669
      %v1674 = vand.u32 2147483647, %v1297
      %vm1675 = vcmp.eq.f32.partialorder %v1674, 8.507059e+37
      %v1676 = vand.u32 %v1297, 2147483648
      %v1677 = vor.u32 1.1754944e-38, %v1676
      %v1678 = vsel %vm1675, %v1677, %v1673
      %v1679 = vmul.f32 1.0, %v1678
      %v1680 = vrcp.pop %v1298
      %v1681 = vmul.f32 %v1298, %v1680
      %v1682 = vsub.f32 1.0, %v1681
      %v1683 = vmul.f32 %v1680, %v1682
      %v1684 = vadd.f32 %v1680, %v1683
      %vm1685 = vweird.f32 %v1298
      %vm1686 = vweird.f32 %v1680
      %vm1687 = vmor %vm1685, %vm1686
      %v1688 = vsel %vm1687, %v1680, %v1684
      %v1689 = vand.u32 2147483647, %v1298
      %vm1690 = vcmp.eq.f32.partialorder %v1689, 8.507059e+37
      %v1691 = vand.u32 %v1298, 2147483648
      %v1692 = vor.u32 1.1754944e-38, %v1691
      %v1693 = vsel %vm1690, %v1692, %v1688
      %v1694 = vmul.f32 1.0, %v1693
      %v1695 = vrcp.pop %v1299
      %v1696 = vmul.f32 %v1299, %v1695
      %v1697 = vsub.f32 1.0, %v1696
      %v1698 = vmul.f32 %v1695, %v1697
      %v1699 = vadd.f32 %v1695, %v1698
      %vm1700 = vweird.f32 %v1299
      %vm1701 = vweird.f32 %v1695
      %vm1702 = vmor %vm1700, %vm1701
      %v1703 = vsel %vm1702, %v1695, %v1699
      %v1704 = vand.u32 2147483647, %v1299
      %vm1705 = vcmp.eq.f32.partialorder %v1704, 8.507059e+37
      %v1706 = vand.u32 %v1299, 2147483648
      %v1707 = vor.u32 1.1754944e-38, %v1706
      %v1708 = vsel %vm1705, %v1707, %v1703
      %v1709 = vmul.f32 1.0, %v1708
      %v1710 = vrcp.pop %v1300
      %v1711 = vmul.f32 %v1300, %v1710
      %v1712 = vsub.f32 1.0, %v1711
      %v1713 = vmul.f32 %v1710, %v1712
      %v1714 = vadd.f32 %v1710, %v1713
      %vm1715 = vweird.f32 %v1300
      %vm1716 = vweird.f32 %v1710
      %vm1717 = vmor %vm1715, %vm1716
      %v1718 = vsel %vm1717, %v1710, %v1714
      %v1719 = vand.u32 2147483647, %v1300
      %vm1720 = vcmp.eq.f32.partialorder %v1719, 8.507059e+37
      %v1721 = vand.u32 %v1300, 2147483648
      %v1722 = vor.u32 1.1754944e-38, %v1721
      %v1723 = vsel %vm1720, %v1722, %v1718
      %v1724 = vmul.f32 1.0, %v1723
      %v1725 = vrcp.pop %v1301
      %v1726 = vmul.f32 %v1301, %v1725
      %v1727 = vsub.f32 1.0, %v1726
      %v1728 = vmul.f32 %v1725, %v1727
      %v1729 = vadd.f32 %v1725, %v1728
      %vm1730 = vweird.f32 %v1301
      %vm1731 = vweird.f32 %v1725
      %vm1732 = vmor %vm1730, %vm1731
      %v1733 = vsel %vm1732, %v1725, %v1729
      %v1734 = vand.u32 2147483647, %v1301
      %vm1735 = vcmp.eq.f32.partialorder %v1734, 8.507059e+37
      %v1736 = vand.u32 %v1301, 2147483648
      %v1737 = vor.u32 1.1754944e-38, %v1736
      %v1738 = vsel %vm1735, %v1737, %v1733
      %v1739 = vmul.f32 1.0, %v1738
      %v1740 = vrcp.pop %v1302
      %v1741 = vmul.f32 %v1302, %v1740
      %v1742 = vsub.f32 1.0, %v1741
      %v1743 = vmul.f32 %v1740, %v1742
      %v1744 = vadd.f32 %v1740, %v1743
      %vm1745 = vweird.f32 %v1302
      %vm1746 = vweird.f32 %v1740
      %vm1747 = vmor %vm1745, %vm1746
      %v1748 = vsel %vm1747, %v1740, %v1744
      %v1749 = vand.u32 2147483647, %v1302
      %vm1750 = vcmp.eq.f32.partialorder %v1749, 8.507059e+37
      %v1751 = vand.u32 %v1302, 2147483648
      %v1752 = vor.u32 1.1754944e-38, %v1751
      %v1753 = vsel %vm1750, %v1752, %v1748
      %v1754 = vmul.f32 1.0, %v1753
      %v1755 = vrcp.pop %v1303
      %v1756 = vmul.f32 %v1303, %v1755
      %v1757 = vsub.f32 1.0, %v1756
      %v1758 = vmul.f32 %v1755, %v1757
      %v1759 = vadd.f32 %v1755, %v1758
      %vm1760 = vweird.f32 %v1303
      %vm1761 = vweird.f32 %v1755
      %vm1762 = vmor %vm1760, %vm1761
      %v1763 = vsel %vm1762, %v1755, %v1759
      %v1764 = vand.u32 2147483647, %v1303
      %vm1765 = vcmp.eq.f32.partialorder %v1764, 8.507059e+37
      %v1766 = vand.u32 %v1303, 2147483648
      %v1767 = vor.u32 1.1754944e-38, %v1766
      %v1768 = vsel %vm1765, %v1767, %v1763
      %v1769 = vmul.f32 1.0, %v1768
      %v1770 = vrcp.pop %v1304
      %v1771 = vmul.f32 %v1304, %v1770
      %v1772 = vsub.f32 1.0, %v1771
      %v1773 = vmul.f32 %v1770, %v1772
      %v1774 = vadd.f32 %v1770, %v1773
      %vm1775 = vweird.f32 %v1304
      %vm1776 = vweird.f32 %v1770
      %vm1777 = vmor %vm1775, %vm1776
      %v1778 = vsel %vm1777, %v1770, %v1774
      %v1779 = vand.u32 2147483647, %v1304
      %vm1780 = vcmp.eq.f32.partialorder %v1779, 8.507059e+37
      %v1781 = vand.u32 %v1304, 2147483648
      %v1782 = vor.u32 1.1754944e-38, %v1781
      %v1783 = vsel %vm1780, %v1782, %v1778
      %v1784 = vmul.f32 1.0, %v1783
      %v1785 = vmul.f32 %v1098, %v1319
      %v1786 = vmul.f32 %v1100, %v1334
      %v1787 = vmul.f32 %v1103, %v1349
      %v1788 = vmul.f32 %v1105, %v1364
      %v1789 = vmul.f32 %v1108, %v1379
      %v1790 = vmul.f32 %v1110, %v1394
      %v1791 = vmul.f32 %v1113, %v1409
      %v1792 = vmul.f32 %v1115, %v1424
      %v1793 = vmul.f32 %v1118, %v1439
      %v1794 = vmul.f32 %v1120, %v1454
      %v1795 = vmul.f32 %v1123, %v1469
      %v1796 = vmul.f32 %v1125, %v1484
      %v1797 = vmul.f32 %v1128, %v1499
      %v1798 = vmul.f32 %v1130, %v1514
      %v1799 = vmul.f32 %v1133, %v1529
      %v1800 = vmul.f32 %v1135, %v1544
      %v1801 = vmul.f32 %v1138, %v1559
      %v1802 = vmul.f32 %v1140, %v1574
      %v1803 = vmul.f32 %v1143, %v1589
      %v1804 = vmul.f32 %v1145, %v1604
      %v1805 = vmul.f32 %v1148, %v1619
      %v1806 = vmul.f32 %v1150, %v1634
      %v1807 = vmul.f32 %v1153, %v1649
      %v1808 = vmul.f32 %v1155, %v1664
      %v1809 = vmul.f32 %v1158, %v1679
      %v1810 = vmul.f32 %v1160, %v1694
      %v1811 = vmul.f32 %v1163, %v1709
      %v1812 = vmul.f32 %v1165, %v1724
      %v1813 = vmul.f32 %v1168, %v1739
      %v1814 = vmul.f32 %v1170, %v1754
      %v1815 = vmul.f32 %v1173, %v1769
      %v1816 = vmul.f32 %v1175, %v1784
      %v1817 = vpack.c.bf16 %v1785, %v1785
      %v1818 = vpack.c.bf16 %v1786, %v1786
      %v1819 = vpack.c.bf16 %v1787, %v1787
      %v1820 = vpack.c.bf16 %v1788, %v1788
      %v1821 = vpack.c.bf16 %v1789, %v1789
      %v1822 = vpack.c.bf16 %v1790, %v1790
      %v1823 = vpack.c.bf16 %v1791, %v1791
      %v1824 = vpack.c.bf16 %v1792, %v1792
      %v1825 = vpack.c.bf16 %v1793, %v1793
      %v1826 = vpack.c.bf16 %v1794, %v1794
      %v1827 = vpack.c.bf16 %v1795, %v1795
      %v1828 = vpack.c.bf16 %v1796, %v1796
      %v1829 = vpack.c.bf16 %v1797, %v1797
      %v1830 = vpack.c.bf16 %v1798, %v1798
      %v1831 = vpack.c.bf16 %v1799, %v1799
      %v1832 = vpack.c.bf16 %v1800, %v1800
      %v1833 = vpack.c.bf16 %v1801, %v1801
      %v1834 = vpack.c.bf16 %v1802, %v1802
      %v1835 = vpack.c.bf16 %v1803, %v1803
      %v1836 = vpack.c.bf16 %v1804, %v1804
      %v1837 = vpack.c.bf16 %v1805, %v1805
      %v1838 = vpack.c.bf16 %v1806, %v1806
      %v1839 = vpack.c.bf16 %v1807, %v1807
      %v1840 = vpack.c.bf16 %v1808, %v1808
      %v1841 = vpack.c.bf16 %v1809, %v1809
      %v1842 = vpack.c.bf16 %v1810, %v1810
      %v1843 = vpack.c.bf16 %v1811, %v1811
      %v1844 = vpack.c.bf16 %v1812, %v1812
      %v1845 = vpack.c.bf16 %v1813, %v1813
      %v1846 = vpack.c.bf16 %v1814, %v1814
      %v1847 = vpack.c.bf16 %v1815, %v1815
      %v1848 = vpack.c.bf16 %v1816, %v1816
      %1849 = vst [vmem:[%s226] sm:$0xf] %v1817
      %1850 = vst [vmem:[%s226 + $0x4] sm:$0xf] %v1818
      %1851 = vst [vmem:[%s226 + $0x8] sm:$0xf] %v1819
      %1852 = vst [vmem:[%s226 + $0xc] sm:$0xf] %v1820
      %1853 = vst [vmem:[%s226 + $0x10] sm:$0xf] %v1821
      %1854 = vst [vmem:[%s226 + $0x14] sm:$0xf] %v1822
      %1855 = vst [vmem:[%s226 + $0x18] sm:$0xf] %v1823
      %1856 = vst [vmem:[%s226 + $0x1c] sm:$0xf] %v1824
      %1857 = vst [vmem:[%s226 + $0x20] sm:$0xf] %v1825
      %1858 = vst [vmem:[%s226 + $0x24] sm:$0xf] %v1826
      %1859 = vst [vmem:[%s226 + $0x28] sm:$0xf] %v1827
      %1860 = vst [vmem:[%s226 + $0x2c] sm:$0xf] %v1828
      %1861 = vst [vmem:[%s226 + $0x30] sm:$0xf] %v1829
      %1862 = vst [vmem:[%s226 + $0x34] sm:$0xf] %v1830
      %1863 = vst [vmem:[%s226 + $0x38] sm:$0xf] %v1831
      %1864 = vst [vmem:[%s226 + $0x3c] sm:$0xf] %v1832
      %1865 = vst [vmem:[%s226 + $0x40] sm:$0xf] %v1833
      %1866 = vst [vmem:[%s226 + $0x44] sm:$0xf] %v1834
      %1867 = vst [vmem:[%s226 + $0x48] sm:$0xf] %v1835
      %1868 = vst [vmem:[%s226 + $0x4c] sm:$0xf] %v1836
      %1869 = vst [vmem:[%s226 + $0x50] sm:$0xf] %v1837
      %1870 = vst [vmem:[%s226 + $0x54] sm:$0xf] %v1838
      %1871 = vst [vmem:[%s226 + $0x58] sm:$0xf] %v1839
      %1872 = vst [vmem:[%s226 + $0x5c] sm:$0xf] %v1840
      %1873 = vst [vmem:[%s226 + $0x60] sm:$0xf] %v1841
      %1874 = vst [vmem:[%s226 + $0x64] sm:$0xf] %v1842
      %1875 = vst [vmem:[%s226 + $0x68] sm:$0xf] %v1843
      %1876 = vst [vmem:[%s226 + $0x6c] sm:$0xf] %v1844
      %1877 = vst [vmem:[%s226 + $0x70] sm:$0xf] %v1845
      %1878 = vst [vmem:[%s226 + $0x74] sm:$0xf] %v1846
      %1879 = vst [vmem:[%s226 + $0x78] sm:$0xf] %v1847
      %1880 = vst [vmem:[%s226 + $0x7c] sm:$0xf] %v1848
      %s1881 = smul.u32 32, %s16
      %p1882 = scmp.lt.s32.totalorder %s1881, 63
      %s1883 = scalar_select %p1882, %s1881, 63
      %s1884 = smul.addr %s1883, 4
      %s1885 = scalar_lea.vmem %s5, %s1884
      // Predicated region
      $region41: #{up_block_forward.5} parent=39 // pred_check
        %p1886 = pneg %p144
      $region42: #{up_block_forward.5} parent=39 // pred_check_branch
        %1888 = sbr.rel (%p1886) target = $region44
      $region43: #{up_block_forward.5} parent=39 // pred_region
        %s1889 = smul.u32 32, %s16
      $region44: #{up_block_forward.5} parent=39 // pred_fallthru
        _
    $region40: #{up_block_forward.5} parent=5 // pred_fallthru
      _
    %p1890 = scmp.le.s32.totalorder 2, %s11
    // Predicated region
    $region45: #{up_block_forward.5} parent=5 // pred_check
      %p1891 = pneg %p1890
    $region46: #{up_block_forward.5} parent=5 // pred_check_branch
      %1893 = sbr.rel (%p1891) target = $region48
    $region47: #{up_block_forward.5} parent=5 // pred_region
      %s1894 = ssub.s32 %s11, 2
      // Predicated region
      $region49: #{up_block_forward.5} parent=47 // pred_check
        %p1895 = pneg %p150
      $region50: #{up_block_forward.5} parent=47 // pred_check_branch
        %1897 = sbr.rel (%p1895) target = $region52
      $region51: #{up_block_forward.5} parent=47 // pred_region
        %s1898 = smul.u32 32, %s17
        %p1899 = scmp.lt.s32.totalorder %s1898, 63
        %s1900 = scalar_select %p1899, %s1898, 63
        %s1901 = smul.addr %s1900, 4
        %s1902 = scalar_lea.vmem %s5, %s1901
      $region52: #{up_block_forward.5} parent=47 // pred_fallthru
        _
    $region48: #{up_block_forward.5} parent=5 // pred_fallthru
      _
  $region6: #{up_block_forward.5} parent=0 // loop_footer
    %s15 = sadd.s32 1, %s11
  $region7: #{up_block_forward.5} parent=0 // loop_footer_branch
    %10 = sbr.rel target = $region3
  $region8: #{up_block_forward.5} parent=0 // loop_exit
    _

// kernel: up_block_forward.3
$region0: #{up_block_forward.3}
  #allocation0 [shape = 'u32[]', space=smem, size = 0x4, offset = 0x4, fixed_abs, tag = 'smem constant byte address 0x4 - core index']
  #allocation1 [shape = 'u32[72,128]{1,0:T(1,128)}', space=vmem, size = 0x9000, scoped, tag = 'internal scratch']
  %s0 = inlined_call_operand.vmem [shape: bf16[2,18,18,4], index: 0, kind: input, shape index: {}]
  %s1 = inlined_call_operand.vmem [shape: bf16[2,18,18,4], index: 1, kind: input, shape index: {}]
  %s2 = inlined_call_operand.vmem [shape: bf16[3,24,128], index: 2, kind: input, shape index: {}]
  %s3 = inlined_call_operand.vmem [shape: bf16[2,18,18,128], index: 3, kind: output, shape index: {0}]
  %s4 = inlined_call_operand.vmem [shape: f32[2,8,128], index: 4, kind: output, shape index: {1}]
  %5 = xla_tuple %s3, %s4
  %s6 = sld [smem:[#allocation0]]
  $region53: #{up_block_forward.3} parent=0
    _
  %s8 = ssub.s32 1, %s6
  %s9 = scalar_select 0, %s8, %s6
  loop: start=0, step=1, limit=4
  $region2: #{up_block_forward.3} parent=0 // loop_pre_header
    _
  $region3: #{up_block_forward.3} parent=0 // loop_header
    %s11 = sphi 0, %s15
    %p12 = scmp.ge.s32.totalorder %s11, 4
    %s21 = sphi 0, %s23
    %s24 = sphi 0, %s21
    %s25 = sphi 0, %s24
    %s41 = sphi 0, %s25
    %s47 = sphi 0, %s49
    %s50 = sphi 0, %s47
    %s51 = sphi 0, %s50
    %s67 = sphi 0, %s51
    %s71 = sphi 0, %s71
    %s73 = sphi 0, %s71
    %s74 = sphi 0, %s73
    %s88 = sphi 0, %s74
    %s94 = sphi 0, %s96
    %s97 = sphi 0, %s94
    %s98 = sphi 0, %s97
    %s114 = sphi 0, %s98
    %s120 = sphi 0, %s122
    %s123 = sphi 0, %s120
    %s124 = sphi 0, %s123
    %s140 = sphi 0, %s124
  $region4: #{up_block_forward.3} parent=0 // loop_header_branch
    %14 = sbr.rel (%p12) target = $region8
  $region5: #{up_block_forward.3} parent=0 // loop_body
    %s16 = ssub.s32 %s11, 1
    %s17 = ssub.s32 %s11, 2
    %s18 = sadd.s32 %s11, 1
    %s19 = ssub.s32 %s11, %s18
    %p20 = scmp.eq.s32.totalorder %s19, 0
    %s22 = sadd.s32 %s21, 1
    %s23 = scalar_select %p20, %s21, %s22
    %p26 = pneg %p20
    %p27 = scmp.eq.s32.totalorder %s11, 1
    %p28 = por %p26, %p27
    %p29 = scmp.ne.s32.totalorder %s21, %s24
    %p30 = scmp.eq.s32.totalorder %s11, 0
    %p31 = por %p29, %p30
    %p32 = scmp.ne.s32.totalorder %s21, %s24
    %p33 = scmp.eq.s32.totalorder %s16, 1
    %p34 = por %p32, %p33
    %p35 = scmp.ne.s32.totalorder %s24, %s25
    %p36 = scmp.eq.s32.totalorder %s16, 0
    %p37 = por %p35, %p36
    %p38 = scmp.ne.s32.totalorder %s24, %s25
    %p39 = scmp.eq.s32.totalorder %s17, 1
    %p40 = por %p38, %p39
    %p42 = scmp.ne.s32.totalorder %s25, %s41
    %p43 = scmp.eq.s32.totalorder %s17, 0
    %p44 = por %p42, %p43
    %s45 = ssub.s32 %s11, %s18
    %p46 = scmp.eq.s32.totalorder %s45, 0
    %s48 = sadd.s32 %s47, 1
    %s49 = scalar_select %p46, %s47, %s48
    %p52 = pneg %p46
    %p53 = scmp.eq.s32.totalorder %s11, 1
    %p54 = por %p52, %p53
    %p55 = scmp.ne.s32.totalorder %s47, %s50
    %p56 = scmp.eq.s32.totalorder %s11, 0
    %p57 = por %p55, %p56
    %p58 = scmp.ne.s32.totalorder %s47, %s50
    %p59 = scmp.eq.s32.totalorder %s16, 1
    %p60 = por %p58, %p59
    %p61 = scmp.ne.s32.totalorder %s50, %s51
    %p62 = scmp.eq.s32.totalorder %s16, 0
    %p63 = por %p61, %p62
    %p64 = scmp.ne.s32.totalorder %s50, %s51
    %p65 = scmp.eq.s32.totalorder %s17, 1
    %p66 = por %p64, %p65
    %p68 = scmp.ne.s32.totalorder %s51, %s67
    %p69 = scmp.eq.s32.totalorder %s17, 0
    %p70 = por %p68, %p69
    %s72 = sadd.s32 %s71, 1
    %p75 = scmp.eq.s32.totalorder %s11, 1
    %p76 = scmp.ne.s32.totalorder %s71, %s73
    %p77 = scmp.eq.s32.totalorder %s11, 0
    %p78 = por %p76, %p77
    %p79 = scmp.ne.s32.totalorder %s71, %s73
    %p80 = scmp.eq.s32.totalorder %s16, 1
    %p81 = por %p79, %p80
    %p82 = scmp.ne.s32.totalorder %s73, %s74
    %p83 = scmp.eq.s32.totalorder %s16, 0
    %p84 = por %p82, %p83
    %p85 = scmp.ne.s32.totalorder %s73, %s74
    %p86 = scmp.eq.s32.totalorder %s17, 1
    %p87 = por %p85, %p86
    %p89 = scmp.ne.s32.totalorder %s74, %s88
    %p90 = scmp.eq.s32.totalorder %s17, 0
    %p91 = por %p89, %p90
    %s92 = ssub.s32 %s11, %s18
    %p93 = scmp.eq.s32.totalorder %s92, 0
    %s95 = sadd.s32 %s94, 1
    %s96 = scalar_select %p93, %s94, %s95
    %p99 = pneg %p93
    %p100 = scmp.eq.s32.totalorder %s11, 1
    %p101 = por %p99, %p100
    %p102 = scmp.ne.s32.totalorder %s94, %s97
    %p103 = scmp.eq.s32.totalorder %s11, 0
    %p104 = por %p102, %p103
    %p105 = scmp.ne.s32.totalorder %s94, %s97
    %p106 = scmp.eq.s32.totalorder %s16, 1
    %p107 = por %p105, %p106
    %p108 = scmp.ne.s32.totalorder %s97, %s98
    %p109 = scmp.eq.s32.totalorder %s16, 0
    %p110 = por %p108, %p109
    %p111 = scmp.ne.s32.totalorder %s97, %s98
    %p112 = scmp.eq.s32.totalorder %s17, 1
    %p113 = por %p111, %p112
    %p115 = scmp.ne.s32.totalorder %s98, %s114
    %p116 = scmp.eq.s32.totalorder %s17, 0
    %p117 = por %p115, %p116
    %s118 = ssub.s32 %s11, %s18
    %p119 = scmp.eq.s32.totalorder %s118, 0
    %s121 = sadd.s32 %s120, 1
    %s122 = scalar_select %p119, %s120, %s121
    %p125 = pneg %p119
    %p126 = scmp.eq.s32.totalorder %s11, 1
    %p127 = por %p125, %p126
    %p128 = scmp.ne.s32.totalorder %s120, %s123
    %p129 = scmp.eq.s32.totalorder %s11, 0
    %p130 = por %p128, %p129
    %p131 = scmp.ne.s32.totalorder %s120, %s123
    %p132 = scmp.eq.s32.totalorder %s16, 1
    %p133 = por %p131, %p132
    %p134 = scmp.ne.s32.totalorder %s123, %s124
    %p135 = scmp.eq.s32.totalorder %s16, 0
    %p136 = por %p134, %p135
    %p137 = scmp.ne.s32.totalorder %s123, %s124
    %p138 = scmp.eq.s32.totalorder %s17, 1
    %p139 = por %p137, %p138
    %p141 = scmp.ne.s32.totalorder %s124, %s140
    %p142 = scmp.eq.s32.totalorder %s17, 0
    %p143 = por %p141, %p142
    %p144 = scmp.le.s32.totalorder 1, %s11
    %p145 = scmp.lt.s32.totalorder %s11, 3
    %p146 = pnand %p144, %p145
    %p147 = pneg %p146
    // Predicated region
    $region9: #{up_block_forward.3} parent=5 // pred_check
      _
    $region10: #{up_block_forward.3} parent=5 // pred_check_branch
      %149 = sbr.rel (%p146) target = $region12
    $region11: #{up_block_forward.3} parent=5 // pred_region
      %s150 = ssub.s32 %s11, 1
      // Predicated region
      $region13: #{up_block_forward.3} parent=11 // pred_check
        %p151 = pneg %p84
      $region14: #{up_block_forward.3} parent=11 // pred_check_branch
        %153 = sbr.rel (%p151) target = $region16
      $region15: #{up_block_forward.3} parent=11 // pred_region
        _
      $region16: #{up_block_forward.3} parent=11 // pred_fallthru
        _
    $region12: #{up_block_forward.3} parent=5 // pred_fallthru
      _
    %p154 = scmp.lt.s32.totalorder %s11, 2
    // Predicated region
    $region17: #{up_block_forward.3} parent=5 // pred_check
      %p155 = pneg %p154
    $region18: #{up_block_forward.3} parent=5 // pred_check_branch
      %157 = sbr.rel (%p155) target = $region20
    $region19: #{up_block_forward.3} parent=5 // pred_region
      // Predicated region
      $region21: #{up_block_forward.3} parent=19 // pred_check
        %p158 = pneg %p31
      $region22: #{up_block_forward.3} parent=19 // pred_check_branch
        %160 = sbr.rel (%p158) target = $region24
      $region23: #{up_block_forward.3} parent=19 // pred_region
        %p161 = scmp.lt.s32.totalorder %s11, 1
        %s162 = scalar_select %p161, %s11, 1
        %s163 = smul.addr %s162, 54
        %s164 = smul.addr %s163, 4
        %s165 = scalar_lea.vmem %s0, %s164
      $region24: #{up_block_forward.3} parent=19 // pred_fallthru
        _
      // Predicated region
      $region25: #{up_block_forward.3} parent=19 // pred_check
        %p166 = pneg %p57
      $region26: #{up_block_forward.3} parent=19 // pred_check_branch
        %168 = sbr.rel (%p166) target = $region28
      $region27: #{up_block_forward.3} parent=19 // pred_region
        %p169 = scmp.lt.s32.totalorder %s11, 1
        %s170 = scalar_select %p169, %s11, 1
        %s171 = smul.addr %s170, 54
        %s172 = smul.addr %s171, 4
        %s173 = scalar_lea.vmem %s1, %s172
      $region28: #{up_block_forward.3} parent=19 // pred_fallthru
        _
    $region20: #{up_block_forward.3} parent=5 // pred_fallthru
      _
    %p174 = scmp.le.s32.totalorder 1, %s11
    %p175 = scmp.lt.s32.totalorder %s11, 3
    %p176 = pnand %p174, %p175
    %p177 = pneg %p176
    // Predicated region
    $region29: #{up_block_forward.3} parent=5 // pred_check
      _
    $region30: #{up_block_forward.3} parent=5 // pred_check_branch
      %179 = sbr.rel (%p176) target = $region32
    $region31: #{up_block_forward.3} parent=5 // pred_region
      %s180 = ssub.s32 %s11, 1
      %p181 = scmp.lt.s32.totalorder %s16, 1
      %s182 = scalar_select %p181, %s16, 1
      %s183 = smul.addr %s182, 54
      %s184 = smul.addr %s183, 4
      %s185 = scalar_lea.vmem %s0, %s184
      %p186 = pneg %p37
      %p187 = pneg %p34
      %p188 = scmp.lt.s32.totalorder %s16, 1
      %s189 = scalar_select %p188, %s16, 1
      %s190 = smul.addr %s189, 54
      %s191 = smul.addr %s190, 4
      %s192 = scalar_lea.vmem %s1, %s191
      %p193 = pneg %p63
      %p194 = pneg %p60
      %p195 = pneg %p84
      %p196 = pneg %p81
      %p197 = pneg %p110
      %p198 = pneg %p107
      %p199 = scmp.lt.s32.totalorder %s16, 1
      %s200 = scalar_select %p199, %s16, 1
      %s201 = smul.addr %s200, 54
      %s202 = smul.addr %s201, 4
      %s203 = scalar_lea.vmem %s3, %s202
      %p204 = pneg %p136
      %p205 = pneg %p133
      %p206 = scmp.lt.s32.totalorder %s16, 1
      %s207 = scalar_select %p206, %s16, 1
      %s208 = smul.addr %s207, 8
      %s209 = scalar_lea.vmem %s4, %s208
      %p210 = scmp.lt.s32.totalorder %s16, 1
      %s211 = scalar_select %p210, %s16, 1
      %s212 = smul.addr %s211, 54
      %s213 = smul.addr %s212, 4
      %s214 = scalar_lea.vmem %s0, %s213
      %p215 = scmp.lt.s32.totalorder %s16, 1
      %s216 = scalar_select %p215, %s16, 1
      %s217 = smul.addr %s216, 54
      %s218 = smul.addr %s217, 4
      %s219 = scalar_lea.vmem %s1, %s218
      %p220 = scmp.lt.s32.totalorder %s16, 1
      %s221 = scalar_select %p220, %s16, 1
      %s222 = smul.addr %s221, 54
      %s223 = smul.addr %s222, 4
      %s224 = scalar_lea.vmem %s3, %s223
      %p225 = scmp.lt.s32.totalorder %s16, 1
      %s226 = scalar_select %p225, %s16, 1
      %s227 = smul.addr %s226, 8
      %s228 = scalar_lea.vmem %s4, %s227
      %v230 = vld [vmem:[%s214] sm:$0xf]
      %v231 = vld [vmem:[%s214 + $0x4] sm:$0xf]
      %v232 = vld [vmem:[%s214 + $0x8] sm:$0x1]
      %v233 = vld [vmem:[%s214 + $0xc] sm:$0xf]
      %v234 = vld [vmem:[%s214 + $0x10] sm:$0xf]
      %v235 = vld [vmem:[%s214 + $0x14] sm:$0x1]
      %v236 = vld [vmem:[%s214 + $0x18] sm:$0xf]
      %v237 = vld [vmem:[%s214 + $0x1c] sm:$0xf]
      %v238 = vld [vmem:[%s214 + $0x20] sm:$0x1]
      %v239 = vld [vmem:[%s214 + $0x24] sm:$0xf]
      %v240 = vld [vmem:[%s214 + $0x28] sm:$0xf]
      %v241 = vld [vmem:[%s214 + $0x2c] sm:$0x1]
      %v242 = vld [vmem:[%s214 + $0x30] sm:$0xf]
      %v243 = vld [vmem:[%s214 + $0x34] sm:$0xf]
      %v244 = vld [vmem:[%s214 + $0x38] sm:$0x1]
      %v245 = vld [vmem:[%s214 + $0x3c] sm:$0xf]
      %v246 = vld [vmem:[%s214 + $0x40] sm:$0xf]
      %v247 = vld [vmem:[%s214 + $0x44] sm:$0x1]
      %v248 = vld [vmem:[%s214 + $0x48] sm:$0xf]
      %v249 = vld [vmem:[%s214 + $0x4c] sm:$0xf]
      %v250 = vld [vmem:[%s214 + $0x50] sm:$0x1]
      %v251 = vld [vmem:[%s214 + $0x54] sm:$0xf]
      %v252 = vld [vmem:[%s214 + $0x58] sm:$0xf]
      %v253 = vld [vmem:[%s214 + $0x5c] sm:$0x1]
      %v254 = vld [vmem:[%s214 + $0x60] sm:$0xf]
      %v255 = vld [vmem:[%s214 + $0x64] sm:$0xf]
      %v256 = vld [vmem:[%s214 + $0x68] sm:$0x1]
      %v257 = vld [vmem:[%s214 + $0x6c] sm:$0xf]
      %v258 = vld [vmem:[%s214 + $0x70] sm:$0xf]
      %v259 = vld [vmem:[%s214 + $0x74] sm:$0x1]
      %v260 = vld [vmem:[%s214 + $0x78] sm:$0xf]
      %v261 = vld [vmem:[%s214 + $0x7c] sm:$0xf]
      %v262 = vld [vmem:[%s214 + $0x80] sm:$0x1]
      %v263 = vld [vmem:[%s214 + $0x84] sm:$0xf]
      %v264 = vld [vmem:[%s214 + $0x88] sm:$0xf]
      %v265 = vld [vmem:[%s214 + $0x8c] sm:$0x1]
      %v266 = vld [vmem:[%s214 + $0x90] sm:$0xf]
      %v267 = vld [vmem:[%s214 + $0x94] sm:$0xf]
      %v268 = vld [vmem:[%s214 + $0x98] sm:$0x1]
      %v269 = vld [vmem:[%s214 + $0x9c] sm:$0xf]
      %v270 = vld [vmem:[%s214 + $0xa0] sm:$0xf]
      %v271 = vld [vmem:[%s214 + $0xa4] sm:$0x1]
      %v272 = vld [vmem:[%s214 + $0xa8] sm:$0xf]
      %v273 = vld [vmem:[%s214 + $0xac] sm:$0xf]
      %v274 = vld [vmem:[%s214 + $0xb0] sm:$0x1]
      %v275 = vld [vmem:[%s214 + $0xb4] sm:$0xf]
      %v276 = vld [vmem:[%s214 + $0xb8] sm:$0xf]
      %v277 = vld [vmem:[%s214 + $0xbc] sm:$0x1]
      %v278 = vld [vmem:[%s214 + $0xc0] sm:$0xf]
      %v279 = vld [vmem:[%s214 + $0xc4] sm:$0xf]
      %v280 = vld [vmem:[%s214 + $0xc8] sm:$0x1]
      %v281 = vld [vmem:[%s214 + $0xcc] sm:$0xf]
      %v282 = vld [vmem:[%s214 + $0xd0] sm:$0xf]
      %v283 = vld [vmem:[%s214 + $0xd4] sm:$0x1]
      %v284 = vld [vmem:[%s219] sm:$0xf]
      %v285 = vld [vmem:[%s219 + $0x4] sm:$0xf]
      %v286 = vld [vmem:[%s219 + $0x8] sm:$0x1]
      %v287 = vld [vmem:[%s219 + $0xc] sm:$0xf]
      %v288 = vld [vmem:[%s219 + $0x10] sm:$0xf]
      %v289 = vld [vmem:[%s219 + $0x14] sm:$0x1]
      %v290 = vld [vmem:[%s219 + $0x18] sm:$0xf]
      %v291 = vld [vmem:[%s219 + $0x1c] sm:$0xf]
      %v292 = vld [vmem:[%s219 + $0x20] sm:$0x1]
      %v293 = vld [vmem:[%s219 + $0x24] sm:$0xf]
      %v294 = vld [vmem:[%s219 + $0x28] sm:$0xf]
      %v295 = vld [vmem:[%s219 + $0x2c] sm:$0x1]
      %v296 = vld [vmem:[%s219 + $0x30] sm:$0xf]
      %v297 = vld [vmem:[%s219 + $0x34] sm:$0xf]
      %v298 = vld [vmem:[%s219 + $0x38] sm:$0x1]
      %v299 = vld [vmem:[%s219 + $0x3c] sm:$0xf]
      %v300 = vld [vmem:[%s219 + $0x40] sm:$0xf]
      %v301 = vld [vmem:[%s219 + $0x44] sm:$0x1]
      %v302 = vld [vmem:[%s219 + $0x48] sm:$0xf]
      %v303 = vld [vmem:[%s219 + $0x4c] sm:$0xf]
      %v304 = vld [vmem:[%s219 + $0x50] sm:$0x1]
      %v305 = vld [vmem:[%s219 + $0x54] sm:$0xf]
      %v306 = vld [vmem:[%s219 + $0x58] sm:$0xf]
      %v307 = vld [vmem:[%s219 + $0x5c] sm:$0x1]
      %v308 = vld [vmem:[%s219 + $0x60] sm:$0xf]
      %v309 = vld [vmem:[%s219 + $0x64] sm:$0xf]
      %v310 = vld [vmem:[%s219 + $0x68] sm:$0x1]
      %v311 = vld [vmem:[%s219 + $0x6c] sm:$0xf]
      %v312 = vld [vmem:[%s219 + $0x70] sm:$0xf]
      %v313 = vld [vmem:[%s219 + $0x74] sm:$0x1]
      %v314 = vld [vmem:[%s219 + $0x78] sm:$0xf]
      %v315 = vld [vmem:[%s219 + $0x7c] sm:$0xf]
      %v316 = vld [vmem:[%s219 + $0x80] sm:$0x1]
      %v317 = vld [vmem:[%s219 + $0x84] sm:$0xf]
      %v318 = vld [vmem:[%s219 + $0x88] sm:$0xf]
      %v319 = vld [vmem:[%s219 + $0x8c] sm:$0x1]
      %v320 = vld [vmem:[%s219 + $0x90] sm:$0xf]
      %v321 = vld [vmem:[%s219 + $0x94] sm:$0xf]
      %v322 = vld [vmem:[%s219 + $0x98] sm:$0x1]
      %v323 = vld [vmem:[%s219 + $0x9c] sm:$0xf]
      %v324 = vld [vmem:[%s219 + $0xa0] sm:$0xf]
      %v325 = vld [vmem:[%s219 + $0xa4] sm:$0x1]
      %v326 = vld [vmem:[%s219 + $0xa8] sm:$0xf]
      %v327 = vld [vmem:[%s219 + $0xac] sm:$0xf]
      %v328 = vld [vmem:[%s219 + $0xb0] sm:$0x1]
      %v329 = vld [vmem:[%s219 + $0xb4] sm:$0xf]
      %v330 = vld [vmem:[%s219 + $0xb8] sm:$0xf]
      %v331 = vld [vmem:[%s219 + $0xbc] sm:$0x1]
      %v332 = vld [vmem:[%s219 + $0xc0] sm:$0xf]
      %v333 = vld [vmem:[%s219 + $0xc4] sm:$0xf]
      %v334 = vld [vmem:[%s219 + $0xc8] sm:$0x1]
      %v335 = vld [vmem:[%s219 + $0xcc] sm:$0xf]
      %v336 = vld [vmem:[%s219 + $0xd0] sm:$0xf]
      %v337 = vld [vmem:[%s219 + $0xd4] sm:$0x1]
      %v386 = vunpack.c.l.b16 %v230
      %v387 = vunpack.c.l.b16 %v231
      %v388 = vunpack.c.l.b16 %v232
      %v389 = vunpack.c.l.b16 %v233
      %v390 = vunpack.c.l.b16 %v234
      %v391 = vunpack.c.l.b16 %v235
      %v392 = vunpack.c.l.b16 %v236
      %v393 = vunpack.c.l.b16 %v237
      %v394 = vunpack.c.l.b16 %v238
      %v395 = vunpack.c.l.b16 %v239
      %v396 = vunpack.c.l.b16 %v240
      %v397 = vunpack.c.l.b16 %v241
      %v398 = vunpack.c.l.b16 %v242
      %v399 = vunpack.c.l.b16 %v243
      %v400 = vunpack.c.l.b16 %v244
      %v401 = vunpack.c.l.b16 %v245
      %v402 = vunpack.c.l.b16 %v246
      %v403 = vunpack.c.l.b16 %v247
      %v404 = vunpack.c.l.b16 %v248
      %v405 = vunpack.c.l.b16 %v249
      %v406 = vunpack.c.l.b16 %v250
      %v407 = vunpack.c.l.b16 %v251
      %v408 = vunpack.c.l.b16 %v252
      %v409 = vunpack.c.l.b16 %v253
      %v410 = vunpack.c.l.b16 %v254
      %v411 = vunpack.c.l.b16 %v255
      %v412 = vunpack.c.l.b16 %v256
      %v413 = vunpack.c.l.b16 %v257
      %v414 = vunpack.c.l.b16 %v258
      %v415 = vunpack.c.l.b16 %v259
      %v416 = vunpack.c.l.b16 %v260
      %v417 = vunpack.c.l.b16 %v261
      %v418 = vunpack.c.l.b16 %v262
      %v419 = vunpack.c.l.b16 %v263
      %v420 = vunpack.c.l.b16 %v264
      %v421 = vunpack.c.l.b16 %v265
      %v422 = vunpack.c.l.b16 %v266
      %v423 = vunpack.c.l.b16 %v267
      %v424 = vunpack.c.l.b16 %v268
      %v425 = vunpack.c.l.b16 %v269
      %v426 = vunpack.c.l.b16 %v270
      %v427 = vunpack.c.l.b16 %v271
      %v428 = vunpack.c.l.b16 %v272
      %v429 = vunpack.c.l.b16 %v273
      %v430 = vunpack.c.l.b16 %v274
      %v431 = vunpack.c.l.b16 %v275
      %v432 = vunpack.c.l.b16 %v276
      %v433 = vunpack.c.l.b16 %v277
      %v434 = vpack.c.b16 %v387, %v386
      %v435 = vpack.c.b16 %v388, %v388
      %v436 = vpack.c.b16 %v390, %v389
      %v437 = vpack.c.b16 %v391, %v391
      %v438 = vpack.c.b16 %v393, %v392
      %v439 = vpack.c.b16 %v394, %v394
      %v440 = vpack.c.b16 %v396, %v395
      %v441 = vpack.c.b16 %v397, %v397
      %v442 = vpack.c.b16 %v399, %v398
      %v443 = vpack.c.b16 %v400, %v400
      %v444 = vpack.c.b16 %v402, %v401
      %v445 = vpack.c.b16 %v403, %v403
      %v446 = vpack.c.b16 %v405, %v404
      %v447 = vpack.c.b16 %v406, %v406
      %v448 = vpack.c.b16 %v408, %v407
      %v449 = vpack.c.b16 %v409, %v409
      %v450 = vpack.c.b16 %v411, %v410
      %v451 = vpack.c.b16 %v412, %v412
      %v452 = vpack.c.b16 %v414, %v413
      %v453 = vpack.c.b16 %v415, %v415
      %v454 = vpack.c.b16 %v417, %v416
      %v455 = vpack.c.b16 %v418, %v418
      %v456 = vpack.c.b16 %v420, %v419
      %v457 = vpack.c.b16 %v421, %v421
      %v458 = vpack.c.b16 %v423, %v422
      %v459 = vpack.c.b16 %v424, %v424
      %v460 = vpack.c.b16 %v426, %v425
      %v461 = vpack.c.b16 %v427, %v427
      %v462 = vpack.c.b16 %v429, %v428
      %v463 = vpack.c.b16 %v430, %v430
      %v464 = vpack.c.b16 %v432, %v431
      %v465 = vpack.c.b16 %v433, %v433
      %v514 = vunpack.c.l.b16 %v284
      %v515 = vunpack.c.l.b16 %v285
      %v516 = vunpack.c.l.b16 %v286
      %v517 = vunpack.c.l.b16 %v287
      %v518 = vunpack.c.l.b16 %v288
      %v519 = vunpack.c.l.b16 %v289
      %v520 = vunpack.c.l.b16 %v290
      %v521 = vunpack.c.l.b16 %v291
      %v522 = vunpack.c.l.b16 %v292
      %v523 = vunpack.c.l.b16 %v293
      %v524 = vunpack.c.l.b16 %v294
      %v525 = vunpack.c.l.b16 %v295
      %v526 = vunpack.c.l.b16 %v296
      %v527 = vunpack.c.l.b16 %v297
      %v528 = vunpack.c.l.b16 %v298
      %v529 = vunpack.c.l.b16 %v299
      %v530 = vunpack.c.l.b16 %v300
      %v531 = vunpack.c.l.b16 %v301
      %v532 = vunpack.c.l.b16 %v302
      %v533 = vunpack.c.l.b16 %v303
      %v534 = vunpack.c.l.b16 %v304
      %v535 = vunpack.c.l.b16 %v305
      %v536 = vunpack.c.l.b16 %v306
      %v537 = vunpack.c.l.b16 %v307
      %v538 = vunpack.c.l.b16 %v308
      %v539 = vunpack.c.l.b16 %v309
      %v540 = vunpack.c.l.b16 %v310
      %v541 = vunpack.c.l.b16 %v311
      %v542 = vunpack.c.l.b16 %v312
      %v543 = vunpack.c.l.b16 %v313
      %v544 = vunpack.c.l.b16 %v314
      %v545 = vunpack.c.l.b16 %v315
      %v546 = vunpack.c.l.b16 %v316
      %v547 = vunpack.c.l.b16 %v317
      %v548 = vunpack.c.l.b16 %v318
      %v549 = vunpack.c.l.b16 %v319
      %v550 = vunpack.c.l.b16 %v320
      %v551 = vunpack.c.l.b16 %v321
      %v552 = vunpack.c.l.b16 %v322
      %v553 = vunpack.c.l.b16 %v323
      %v554 = vunpack.c.l.b16 %v324
      %v555 = vunpack.c.l.b16 %v325
      %v556 = vunpack.c.l.b16 %v326
      %v557 = vunpack.c.l.b16 %v327
      %v558 = vunpack.c.l.b16 %v328
      %v559 = vunpack.c.l.b16 %v329
      %v560 = vunpack.c.l.b16 %v330
      %v561 = vunpack.c.l.b16 %v331
      %v562 = vpack.c.b16 %v515, %v514
      %v563 = vpack.c.b16 %v516, %v516
      %v564 = vpack.c.b16 %v518, %v517
      %v565 = vpack.c.b16 %v519, %v519
      %v566 = vpack.c.b16 %v521, %v520
      %v567 = vpack.c.b16 %v522, %v522
      %v568 = vpack.c.b16 %v524, %v523
      %v569 = vpack.c.b16 %v525, %v525
      %v570 = vpack.c.b16 %v527, %v526
      %v571 = vpack.c.b16 %v528, %v528
      %v572 = vpack.c.b16 %v530, %v529
      %v573 = vpack.c.b16 %v531, %v531
      %v574 = vpack.c.b16 %v533, %v532
      %v575 = vpack.c.b16 %v534, %v534
      %v576 = vpack.c.b16 %v536, %v535
      %v577 = vpack.c.b16 %v537, %v537
      %v578 = vpack.c.b16 %v539, %v538
      %v579 = vpack.c.b16 %v540, %v540
      %v580 = vpack.c.b16 %v542, %v541
      %v581 = vpack.c.b16 %v543, %v543
      %v582 = vpack.c.b16 %v545, %v544
      %v583 = vpack.c.b16 %v546, %v546
      %v584 = vpack.c.b16 %v548, %v547
      %v585 = vpack.c.b16 %v549, %v549
      %v586 = vpack.c.b16 %v551, %v550
      %v587 = vpack.c.b16 %v552, %v552
      %v588 = vpack.c.b16 %v554, %v553
      %v589 = vpack.c.b16 %v555, %v555
      %v590 = vpack.c.b16 %v557, %v556
      %v591 = vpack.c.b16 %v558, %v558
      %v592 = vpack.c.b16 %v560, %v559
      %v593 = vpack.c.b16 %v561, %v561
      %594 = vrot.lane.b32.xlu0 %v562, 4
      %v595 = vpop.permute.xlu0 %594
      %596 = vrot.lane.b32.xlu0 %v563, 4
      %v597 = vpop.permute.xlu0 %596
      %598 = vrot.lane.b32.xlu0 %v564, 4
      %v599 = vpop.permute.xlu0 %598
      %600 = vrot.lane.b32.xlu0 %v565, 4
      %v601 = vpop.permute.xlu0 %600
      %602 = vrot.lane.b32.xlu0 %v566, 4
      %v603 = vpop.permute.xlu0 %602
      %604 = vrot.lane.b32.xlu0 %v567, 4
      %v605 = vpop.permute.xlu0 %604
      %606 = vrot.lane.b32.xlu0 %v568, 4
      %v607 = vpop.permute.xlu0 %606
      %608 = vrot.lane.b32.xlu0 %v569, 4
      %v609 = vpop.permute.xlu0 %608
      %610 = vrot.lane.b32.xlu0 %v570, 4
      %v611 = vpop.permute.xlu0 %610
      %612 = vrot.lane.b32.xlu0 %v571, 4
      %v613 = vpop.permute.xlu0 %612
      %614 = vrot.lane.b32.xlu0 %v572, 4
      %v615 = vpop.permute.xlu0 %614
      %616 = vrot.lane.b32.xlu0 %v573, 4
      %v617 = vpop.permute.xlu0 %616
      %618 = vrot.lane.b32.xlu0 %v574, 4
      %v619 = vpop.permute.xlu0 %618
      %620 = vrot.lane.b32.xlu0 %v575, 4
      %v621 = vpop.permute.xlu0 %620
      %622 = vrot.lane.b32.xlu0 %v576, 4
      %v623 = vpop.permute.xlu0 %622
      %624 = vrot.lane.b32.xlu0 %v577, 4
      %v625 = vpop.permute.xlu0 %624
      %626 = vrot.lane.b32.xlu0 %v578, 4
      %v627 = vpop.permute.xlu0 %626
      %628 = vrot.lane.b32.xlu0 %v579, 4
      %v629 = vpop.permute.xlu0 %628
      %630 = vrot.lane.b32.xlu0 %v580, 4
      %v631 = vpop.permute.xlu0 %630
      %632 = vrot.lane.b32.xlu0 %v581, 4
      %v633 = vpop.permute.xlu0 %632
      %634 = vrot.lane.b32.xlu0 %v582, 4
      %v635 = vpop.permute.xlu0 %634
      %636 = vrot.lane.b32.xlu0 %v583, 4
      %v637 = vpop.permute.xlu0 %636
      %638 = vrot.lane.b32.xlu0 %v584, 4
      %v639 = vpop.permute.xlu0 %638
      %640 = vrot.lane.b32.xlu0 %v585, 4
      %v641 = vpop.permute.xlu0 %640
      %642 = vrot.lane.b32.xlu0 %v586, 4
      %v643 = vpop.permute.xlu0 %642
      %644 = vrot.lane.b32.xlu0 %v587, 4
      %v645 = vpop.permute.xlu0 %644
      %646 = vrot.lane.b32.xlu0 %v588, 4
      %v647 = vpop.permute.xlu0 %646
      %648 = vrot.lane.b32.xlu0 %v589, 4
      %v649 = vpop.permute.xlu0 %648
      %650 = vrot.lane.b32.xlu0 %v590, 4
      %v651 = vpop.permute.xlu0 %650
      %652 = vrot.lane.b32.xlu0 %v591, 4
      %v653 = vpop.permute.xlu0 %652
      %654 = vrot.lane.b32.xlu0 %v592, 4
      %v655 = vpop.permute.xlu0 %654
      %656 = vrot.lane.b32.xlu0 %v593, 4
      %v657 = vpop.permute.xlu0 %656
      %v661 = vunpack.c.l.b16 %v278
      %v662 = vunpack.c.l.b16 %v279
      %v663 = vunpack.c.l.b16 %v280
      %v664 = vpack.c.b16 %v662, %v661
      %v665 = vpack.c.b16 %v663, %v663
      %666 = vrot.lane.b32.xlu0 %v436, 8
      %v667 = vpop.permute.xlu0 %666
      %668 = vrot.lane.b32.xlu0 %v437, 8
      %v669 = vpop.permute.xlu0 %668
      %670 = vrot.lane.b32.xlu0 %v438, 8
      %v671 = vpop.permute.xlu0 %670
      %672 = vrot.lane.b32.xlu0 %v439, 8
      %v673 = vpop.permute.xlu0 %672
      %674 = vrot.lane.b32.xlu0 %v440, 8
      %v675 = vpop.permute.xlu0 %674
      %676 = vrot.lane.b32.xlu0 %v441, 8
      %v677 = vpop.permute.xlu0 %676
      %678 = vrot.lane.b32.xlu0 %v442, 8
      %v679 = vpop.permute.xlu0 %678
      %680 = vrot.lane.b32.xlu0 %v443, 8
      %v681 = vpop.permute.xlu0 %680
      %682 = vrot.lane.b32.xlu0 %v444, 8
      %v683 = vpop.permute.xlu0 %682
      %684 = vrot.lane.b32.xlu0 %v445, 8
      %v685 = vpop.permute.xlu0 %684
      %686 = vrot.lane.b32.xlu0 %v446, 8
      %v687 = vpop.permute.xlu0 %686
      %688 = vrot.lane.b32.xlu0 %v447, 8
      %v689 = vpop.permute.xlu0 %688
      %690 = vrot.lane.b32.xlu0 %v448, 8
      %v691 = vpop.permute.xlu0 %690
      %692 = vrot.lane.b32.xlu0 %v449, 8
      %v693 = vpop.permute.xlu0 %692
      %694 = vrot.lane.b32.xlu0 %v450, 8
      %v695 = vpop.permute.xlu0 %694
      %696 = vrot.lane.b32.xlu0 %v451, 8
      %v697 = vpop.permute.xlu0 %696
      %698 = vrot.lane.b32.xlu0 %v452, 8
      %v699 = vpop.permute.xlu0 %698
      %700 = vrot.lane.b32.xlu0 %v453, 8
      %v701 = vpop.permute.xlu0 %700
      %702 = vrot.lane.b32.xlu0 %v454, 8
      %v703 = vpop.permute.xlu0 %702
      %704 = vrot.lane.b32.xlu0 %v455, 8
      %v705 = vpop.permute.xlu0 %704
      %706 = vrot.lane.b32.xlu0 %v456, 8
      %v707 = vpop.permute.xlu0 %706
      %708 = vrot.lane.b32.xlu0 %v457, 8
      %v709 = vpop.permute.xlu0 %708
      %710 = vrot.lane.b32.xlu0 %v458, 8
      %v711 = vpop.permute.xlu0 %710
      %712 = vrot.lane.b32.xlu0 %v459, 8
      %v713 = vpop.permute.xlu0 %712
      %714 = vrot.lane.b32.xlu0 %v460, 8
      %v715 = vpop.permute.xlu0 %714
      %716 = vrot.lane.b32.xlu0 %v461, 8
      %v717 = vpop.permute.xlu0 %716
      %718 = vrot.lane.b32.xlu0 %v462, 8
      %v719 = vpop.permute.xlu0 %718
      %720 = vrot.lane.b32.xlu0 %v463, 8
      %v721 = vpop.permute.xlu0 %720
      %722 = vrot.lane.b32.xlu0 %v464, 8
      %v723 = vpop.permute.xlu0 %722
      %724 = vrot.lane.b32.xlu0 %v465, 8
      %v725 = vpop.permute.xlu0 %724
      %726 = vrot.lane.b32.xlu0 %v664, 8
      %v727 = vpop.permute.xlu0 %726
      %728 = vrot.lane.b32.xlu0 %v665, 8
      %v729 = vpop.permute.xlu0 %728
      %v733 = vunpack.c.l.b16 %v332
      %v734 = vunpack.c.l.b16 %v333
      %v735 = vunpack.c.l.b16 %v334
      %v736 = vpack.c.b16 %v734, %v733
      %v737 = vpack.c.b16 %v735, %v735
      %738 = vrot.lane.b32.xlu0 %v564, 12
      %v739 = vpop.permute.xlu0 %738
      %740 = vrot.lane.b32.xlu0 %v565, 12
      %v741 = vpop.permute.xlu0 %740
      %742 = vrot.lane.b32.xlu0 %v566, 12
      %v743 = vpop.permute.xlu0 %742
      %744 = vrot.lane.b32.xlu0 %v567, 12
      %v745 = vpop.permute.xlu0 %744
      %746 = vrot.lane.b32.xlu0 %v568, 12
      %v747 = vpop.permute.xlu0 %746
      %748 = vrot.lane.b32.xlu0 %v569, 12
      %v749 = vpop.permute.xlu0 %748
      %750 = vrot.lane.b32.xlu0 %v570, 12
      %v751 = vpop.permute.xlu0 %750
      %752 = vrot.lane.b32.xlu0 %v571, 12
      %v753 = vpop.permute.xlu0 %752
      %754 = vrot.lane.b32.xlu0 %v572, 12
      %v755 = vpop.permute.xlu0 %754
      %756 = vrot.lane.b32.xlu0 %v573, 12
      %v757 = vpop.permute.xlu0 %756
      %758 = vrot.lane.b32.xlu0 %v574, 12
      %v759 = vpop.permute.xlu0 %758
      %760 = vrot.lane.b32.xlu0 %v575, 12
      %v761 = vpop.permute.xlu0 %760
      %762 = vrot.lane.b32.xlu0 %v576, 12
      %v763 = vpop.permute.xlu0 %762
      %764 = vrot.lane.b32.xlu0 %v577, 12
      %v765 = vpop.permute.xlu0 %764
      %766 = vrot.lane.b32.xlu0 %v578, 12
      %v767 = vpop.permute.xlu0 %766
      %768 = vrot.lane.b32.xlu0 %v579, 12
      %v769 = vpop.permute.xlu0 %768
      %770 = vrot.lane.b32.xlu0 %v580, 12
      %v771 = vpop.permute.xlu0 %770
      %772 = vrot.lane.b32.xlu0 %v581, 12
      %v773 = vpop.permute.xlu0 %772
      %774 = vrot.lane.b32.xlu0 %v582, 12
      %v775 = vpop.permute.xlu0 %774
      %776 = vrot.lane.b32.xlu0 %v583, 12
      %v777 = vpop.permute.xlu0 %776
      %778 = vrot.lane.b32.xlu0 %v584, 12
      %v779 = vpop.permute.xlu0 %778
      %780 = vrot.lane.b32.xlu0 %v585, 12
      %v781 = vpop.permute.xlu0 %780
      %782 = vrot.lane.b32.xlu0 %v586, 12
      %v783 = vpop.permute.xlu0 %782
      %784 = vrot.lane.b32.xlu0 %v587, 12
      %v785 = vpop.permute.xlu0 %784
      %786 = vrot.lane.b32.xlu0 %v588, 12
      %v787 = vpop.permute.xlu0 %786
      %788 = vrot.lane.b32.xlu0 %v589, 12
      %v789 = vpop.permute.xlu0 %788
      %790 = vrot.lane.b32.xlu0 %v590, 12
      %v791 = vpop.permute.xlu0 %790
      %792 = vrot.lane.b32.xlu0 %v591, 12
      %v793 = vpop.permute.xlu0 %792
      %794 = vrot.lane.b32.xlu0 %v592, 12
      %v795 = vpop.permute.xlu0 %794
      %796 = vrot.lane.b32.xlu0 %v593, 12
      %v797 = vpop.permute.xlu0 %796
      %798 = vrot.lane.b32.xlu0 %v736, 12
      %v799 = vpop.permute.xlu0 %798
      %800 = vrot.lane.b32.xlu0 %v737, 12
      %v801 = vpop.permute.xlu0 %800
      %v805 = vunpack.c.l.b16 %v281
      %v806 = vunpack.c.l.b16 %v282
      %v807 = vunpack.c.l.b16 %v283
      %v808 = vpack.c.b16 %v806, %v805
      %v809 = vpack.c.b16 %v807, %v807
      %810 = vrot.lane.b32.xlu0 %v438, 16
      %v811 = vpop.permute.xlu0 %810
      %812 = vrot.lane.b32.xlu0 %v439, 16
      %v813 = vpop.permute.xlu0 %812
      %814 = vrot.lane.b32.xlu0 %v440, 16
      %v815 = vpop.permute.xlu0 %814
      %816 = vrot.lane.b32.xlu0 %v441, 16
      %v817 = vpop.permute.xlu0 %816
      %818 = vrot.lane.b32.xlu0 %v442, 16
      %v819 = vpop.permute.xlu0 %818
      %820 = vrot.lane.b32.xlu0 %v443, 16
      %v821 = vpop.permute.xlu0 %820
      %822 = vrot.lane.b32.xlu0 %v444, 16
      %v823 = vpop.permute.xlu0 %822
      %824 = vrot.lane.b32.xlu0 %v445, 16
      %v825 = vpop.permute.xlu0 %824
      %826 = vrot.lane.b32.xlu0 %v446, 16
      %v827 = vpop.permute.xlu0 %826
      %828 = vrot.lane.b32.xlu0 %v447, 16
      %v829 = vpop.permute.xlu0 %828
      %830 = vrot.lane.b32.xlu0 %v448, 16
      %v831 = vpop.permute.xlu0 %830
      %832 = vrot.lane.b32.xlu0 %v449, 16
      %v833 = vpop.permute.xlu0 %832
      %834 = vrot.lane.b32.xlu0 %v450, 16
      %v835 = vpop.permute.xlu0 %834
      %836 = vrot.lane.b32.xlu0 %v451, 16
      %v837 = vpop.permute.xlu0 %836
      %838 = vrot.lane.b32.xlu0 %v452, 16
      %v839 = vpop.permute.xlu0 %838
      %840 = vrot.lane.b32.xlu0 %v453, 16
      %v841 = vpop.permute.xlu0 %840
      %842 = vrot.lane.b32.xlu0 %v454, 16
      %v843 = vpop.permute.xlu0 %842
      %844 = vrot.lane.b32.xlu0 %v455, 16
      %v845 = vpop.permute.xlu0 %844
      %846 = vrot.lane.b32.xlu0 %v456, 16
      %v847 = vpop.permute.xlu0 %846
      %848 = vrot.lane.b32.xlu0 %v457, 16
      %v849 = vpop.permute.xlu0 %848
      %850 = vrot.lane.b32.xlu0 %v458, 16
      %v851 = vpop.permute.xlu0 %850
      %852 = vrot.lane.b32.xlu0 %v459, 16
      %v853 = vpop.permute.xlu0 %852
      %854 = vrot.lane.b32.xlu0 %v460, 16
      %v855 = vpop.permute.xlu0 %854
      %856 = vrot.lane.b32.xlu0 %v461, 16
      %v857 = vpop.permute.xlu0 %856
      %858 = vrot.lane.b32.xlu0 %v462, 16
      %v859 = vpop.permute.xlu0 %858
      %860 = vrot.lane.b32.xlu0 %v463, 16
      %v861 = vpop.permute.xlu0 %860
      %862 = vrot.lane.b32.xlu0 %v464, 16
      %v863 = vpop.permute.xlu0 %862
      %864 = vrot.lane.b32.xlu0 %v465, 16
      %v865 = vpop.permute.xlu0 %864
      %866 = vrot.lane.b32.xlu0 %v664, 16
      %v867 = vpop.permute.xlu0 %866
      %868 = vrot.lane.b32.xlu0 %v665, 16
      %v869 = vpop.permute.xlu0 %868
      %870 = vrot.lane.b32.xlu0 %v808, 16
      %v871 = vpop.permute.xlu0 %870
      %872 = vrot.lane.b32.xlu0 %v809, 16
      %v873 = vpop.permute.xlu0 %872
      %v877 = vunpack.c.l.b16 %v335
      %v878 = vunpack.c.l.b16 %v336
      %v879 = vunpack.c.l.b16 %v337
      %v880 = vpack.c.b16 %v878, %v877
      %v881 = vpack.c.b16 %v879, %v879
      %882 = vrot.lane.b32.xlu0 %v566, 20
      %v883 = vpop.permute.xlu0 %882
      %884 = vrot.lane.b32.xlu0 %v567, 20
      %v885 = vpop.permute.xlu0 %884
      %886 = vrot.lane.b32.xlu0 %v568, 20
      %v887 = vpop.permute.xlu0 %886
      %888 = vrot.lane.b32.xlu0 %v569, 20
      %v889 = vpop.permute.xlu0 %888
      %890 = vrot.lane.b32.xlu0 %v570, 20
      %v891 = vpop.permute.xlu0 %890
      %892 = vrot.lane.b32.xlu0 %v571, 20
      %v893 = vpop.permute.xlu0 %892
      %894 = vrot.lane.b32.xlu0 %v572, 20
      %v895 = vpop.permute.xlu0 %894
      %896 = vrot.lane.b32.xlu0 %v573, 20
      %v897 = vpop.permute.xlu0 %896
      %898 = vrot.lane.b32.xlu0 %v574, 20
      %v899 = vpop.permute.xlu0 %898
      %900 = vrot.lane.b32.xlu0 %v575, 20
      %v901 = vpop.permute.xlu0 %900
      %902 = vrot.lane.b32.xlu0 %v576, 20
      %v903 = vpop.permute.xlu0 %902
      %904 = vrot.lane.b32.xlu0 %v577, 20
      %v905 = vpop.permute.xlu0 %904
      %906 = vrot.lane.b32.xlu0 %v578, 20
      %v907 = vpop.permute.xlu0 %906
      %908 = vrot.lane.b32.xlu0 %v579, 20
      %v909 = vpop.permute.xlu0 %908
      %910 = vrot.lane.b32.xlu0 %v580, 20
      %v911 = vpop.permute.xlu0 %910
      %912 = vrot.lane.b32.xlu0 %v581, 20
      %v913 = vpop.permute.xlu0 %912
      %914 = vrot.lane.b32.xlu0 %v582, 20
      %v915 = vpop.permute.xlu0 %914
      %916 = vrot.lane.b32.xlu0 %v583, 20
      %v917 = vpop.permute.xlu0 %916
      %918 = vrot.lane.b32.xlu0 %v584, 20
      %v919 = vpop.permute.xlu0 %918
      %920 = vrot.lane.b32.xlu0 %v585, 20
      %v921 = vpop.permute.xlu0 %920
      %922 = vrot.lane.b32.xlu0 %v586, 20
      %v923 = vpop.permute.xlu0 %922
      %924 = vrot.lane.b32.xlu0 %v587, 20
      %v925 = vpop.permute.xlu0 %924
      %926 = vrot.lane.b32.xlu0 %v588, 20
      %v927 = vpop.permute.xlu0 %926
      %928 = vrot.lane.b32.xlu0 %v589, 20
      %v929 = vpop.permute.xlu0 %928
      %930 = vrot.lane.b32.xlu0 %v590, 20
      %v931 = vpop.permute.xlu0 %930
      %932 = vrot.lane.b32.xlu0 %v591, 20
      %v933 = vpop.permute.xlu0 %932
      %934 = vrot.lane.b32.xlu0 %v592, 20
      %v935 = vpop.permute.xlu0 %934
      %936 = vrot.lane.b32.xlu0 %v593, 20
      %v937 = vpop.permute.xlu0 %936
      %938 = vrot.lane.b32.xlu0 %v736, 20
      %v939 = vpop.permute.xlu0 %938
      %940 = vrot.lane.b32.xlu0 %v737, 20
      %v941 = vpop.permute.xlu0 %940
      %942 = vrot.lane.b32.xlu0 %v880, 20
      %v943 = vpop.permute.xlu0 %942
      %944 = vrot.lane.b32.xlu0 %v881, 20
      %v945 = vpop.permute.xlu0 %944
      %vm946 = vcmask 31744
      %v949 = vsel %vm946, %v434, %v595
      %v952 = vsel %vm946, %v435, %v597
      %v955 = vsel %vm946, %v436, %v599
      %v958 = vsel %vm946, %v437, %v601
      %v961 = vsel %vm946, %v438, %v603
      %v964 = vsel %vm946, %v439, %v605
      %v967 = vsel %vm946, %v440, %v607
      %v970 = vsel %vm946, %v441, %v609
      %v973 = vsel %vm946, %v442, %v611
      %v976 = vsel %vm946, %v443, %v613
      %v979 = vsel %vm946, %v444, %v615
      %v982 = vsel %vm946, %v445, %v617
      %v985 = vsel %vm946, %v446, %v619
      %v988 = vsel %vm946, %v447, %v621
      %v991 = vsel %vm946, %v448, %v623
      %v994 = vsel %vm946, %v449, %v625
      %v997 = vsel %vm946, %v450, %v627
      %v1000 = vsel %vm946, %v451, %v629
      %v1003 = vsel %vm946, %v452, %v631
      %v1006 = vsel %vm946, %v453, %v633
      %v1009 = vsel %vm946, %v454, %v635
      %v1012 = vsel %vm946, %v455, %v637
      %v1015 = vsel %vm946, %v456, %v639
      %v1018 = vsel %vm946, %v457, %v641
      %v1021 = vsel %vm946, %v458, %v643
      %v1024 = vsel %vm946, %v459, %v645
      %v1027 = vsel %vm946, %v460, %v647
      %v1030 = vsel %vm946, %v461, %v649
      %v1033 = vsel %vm946, %v462, %v651
      %v1036 = vsel %vm946, %v463, %v653
      %v1039 = vsel %vm946, %v464, %v655
      %v1042 = vsel %vm946, %v465, %v657
      %vm1043 = vcmask 64512
      %v1045 = vsel %vm1043, %v949, %v667
      %v1047 = vsel %vm1043, %v952, %v669
      %v1049 = vsel %vm1043, %v955, %v671
      %v1051 = vsel %vm1043, %v958, %v673
      %v1053 = vsel %vm1043, %v961, %v675
      %v1055 = vsel %vm1043, %v964, %v677
      %v1057 = vsel %vm1043, %v967, %v679
      %v1059 = vsel %vm1043, %v970, %v681
      %v1061 = vsel %vm1043, %v973, %v683
      %v1063 = vsel %vm1043, %v976, %v685
      %v1065 = vsel %vm1043, %v979, %v687
      %v1067 = vsel %vm1043, %v982, %v689
      %v1069 = vsel %vm1043, %v985, %v691
      %v1071 = vsel %vm1043, %v988, %v693
      %v1073 = vsel %vm1043, %v991, %v695
      %v1075 = vsel %vm1043, %v994, %v697
      %v1077 = vsel %vm1043, %v997, %v699
      %v1079 = vsel %vm1043, %v1000, %v701
      %v1081 = vsel %vm1043, %v1003, %v703
      %v1083 = vsel %vm1043, %v1006, %v705
      %v1085 = vsel %vm1043, %v1009, %v707
      %v1087 = vsel %vm1043, %v1012, %v709
      %v1089 = vsel %vm1043, %v1015, %v711
      %v1091 = vsel %vm1043, %v1018, %v713
      %v1093 = vsel %vm1043, %v1021, %v715
      %v1095 = vsel %vm1043, %v1024, %v717
      %v1097 = vsel %vm1043, %v1027, %v719
      %v1099 = vsel %vm1043, %v1030, %v721
      %v1101 = vsel %vm1043, %v1033, %v723
      %v1103 = vsel %vm1043, %v1036, %v725
      %v1105 = vsel %vm1043, %v1039, %v727
      %v1107 = vsel %vm1043, %v1042, %v729
      %vm1108 = vcmask 97280
      %v1110 = vsel %vm1108, %v1045, %v739
      %v1112 = vsel %vm1108, %v1047, %v741
      %v1114 = vsel %vm1108, %v1049, %v743
      %v1116 = vsel %vm1108, %v1051, %v745
      %v1118 = vsel %vm1108, %v1053, %v747
      %v1120 = vsel %vm1108, %v1055, %v749
      %v1122 = vsel %vm1108, %v1057, %v751
      %v1124 = vsel %vm1108, %v1059, %v753
      %v1126 = vsel %vm1108, %v1061, %v755
      %v1128 = vsel %vm1108, %v1063, %v757
      %v1130 = vsel %vm1108, %v1065, %v759
      %v1132 = vsel %vm1108, %v1067, %v761
      %v1134 = vsel %vm1108, %v1069, %v763
      %v1136 = vsel %vm1108, %v1071, %v765
      %v1138 = vsel %vm1108, %v1073, %v767
      %v1140 = vsel %vm1108, %v1075, %v769
      %v1142 = vsel %vm1108, %v1077, %v771
      %v1144 = vsel %vm1108, %v1079, %v773
      %v1146 = vsel %vm1108, %v1081, %v775
      %v1148 = vsel %vm1108, %v1083, %v777
      %v1150 = vsel %vm1108, %v1085, %v779
      %v1152 = vsel %vm1108, %v1087, %v781
      %v1154 = vsel %vm1108, %v1089, %v783
      %v1156 = vsel %vm1108, %v1091, %v785
      %v1158 = vsel %vm1108, %v1093, %v787
      %v1160 = vsel %vm1108, %v1095, %v789
      %v1162 = vsel %vm1108, %v1097, %v791
      %v1164 = vsel %vm1108, %v1099, %v793
      %v1166 = vsel %vm1108, %v1101, %v795
      %v1168 = vsel %vm1108, %v1103, %v797
      %v1170 = vsel %vm1108, %v1105, %v799
      %v1172 = vsel %vm1108, %v1107, %v801
      %vm1173 = vcmask 130048
      %v1175 = vsel %vm1173, %v1110, %v811
      %v1177 = vsel %vm1173, %v1112, %v813
      %v1179 = vsel %vm1173, %v1114, %v815
      %v1181 = vsel %vm1173, %v1116, %v817
      %v1183 = vsel %vm1173, %v1118, %v819
      %v1185 = vsel %vm1173, %v1120, %v821
      %v1187 = vsel %vm1173, %v1122, %v823
      %v1189 = vsel %vm1173, %v1124, %v825
      %v1191 = vsel %vm1173, %v1126, %v827
      %v1193 = vsel %vm1173, %v1128, %v829
      %v1195 = vsel %vm1173, %v1130, %v831
      %v1197 = vsel %vm1173, %v1132, %v833
      %v1199 = vsel %vm1173, %v1134, %v835
      %v1201 = vsel %vm1173, %v1136, %v837
      %v1203 = vsel %vm1173, %v1138, %v839
      %v1205 = vsel %vm1173, %v1140, %v841
      %v1207 = vsel %vm1173, %v1142, %v843
      %v1209 = vsel %vm1173, %v1144, %v845
      %v1211 = vsel %vm1173, %v1146, %v847
      %v1213 = vsel %vm1173, %v1148, %v849
      %v1215 = vsel %vm1173, %v1150, %v851
      %v1217 = vsel %vm1173, %v1152, %v853
      %v1219 = vsel %vm1173, %v1154, %v855
      %v1221 = vsel %vm1173, %v1156, %v857
      %v1223 = vsel %vm1173, %v1158, %v859
      %v1225 = vsel %vm1173, %v1160, %v861
      %v1227 = vsel %vm1173, %v1162, %v863
      %v1229 = vsel %vm1173, %v1164, %v865
      %v1231 = vsel %vm1173, %v1166, %v867
      %v1233 = vsel %vm1173, %v1168, %v869
      %v1235 = vsel %vm1173, %v1170, %v871
      %v1237 = vsel %vm1173, %v1172, %v873
      %vm1238 = vcmask 162816
      %v1240 = vsel %vm1238, %v1175, %v883
      %v1242 = vsel %vm1238, %v1177, %v885
      %v1244 = vsel %vm1238, %v1179, %v887
      %v1246 = vsel %vm1238, %v1181, %v889
      %v1248 = vsel %vm1238, %v1183, %v891
      %v1250 = vsel %vm1238, %v1185, %v893
      %v1252 = vsel %vm1238, %v1187, %v895
      %v1254 = vsel %vm1238, %v1189, %v897
      %v1256 = vsel %vm1238, %v1191, %v899
      %v1258 = vsel %vm1238, %v1193, %v901
      %v1260 = vsel %vm1238, %v1195, %v903
      %v1262 = vsel %vm1238, %v1197, %v905
      %v1264 = vsel %vm1238, %v1199, %v907
      %v1266 = vsel %vm1238, %v1201, %v909
      %v1268 = vsel %vm1238, %v1203, %v911
      %v1270 = vsel %vm1238, %v1205, %v913
      %v1272 = vsel %vm1238, %v1207, %v915
      %v1274 = vsel %vm1238, %v1209, %v917
      %v1276 = vsel %vm1238, %v1211, %v919
      %v1278 = vsel %vm1238, %v1213, %v921
      %v1280 = vsel %vm1238, %v1215, %v923
      %v1282 = vsel %vm1238, %v1217, %v925
      %v1284 = vsel %vm1238, %v1219, %v927
      %v1286 = vsel %vm1238, %v1221, %v929
      %v1288 = vsel %vm1238, %v1223, %v931
      %v1290 = vsel %vm1238, %v1225, %v933
      %v1292 = vsel %vm1238, %v1227, %v935
      %v1294 = vsel %vm1238, %v1229, %v937
      %v1296 = vsel %vm1238, %v1231, %v939
      %v1298 = vsel %vm1238, %v1233, %v941
      %v1300 = vsel %vm1238, %v1235, %v943
      %v1302 = vsel %vm1238, %v1237, %v945
      %v1303 = vld [vmem:[%s2] sm:$0xf]
      %v1304 = vld [vmem:[%s2 + $0x4] sm:$0xf]
      %v1305 = vld [vmem:[%s2 + $0x8] sm:$0xf]
      %vm1306 = vsmask.f32 7424
      %v1307 = vshrl.u32 %v1240, 16
      %v1309 = vshll.u32 %v1240, 16
      %v1311 = vrot.slane %v1309, 1
      %v1312 = vor.u32 %v1307, %v1311
      %v1313 = vshll.u32 %v1242, 16
      %v1315 = vrot.slane %v1313, 1
      %v1316 = vsel %vm1306, %v1312, %v1315
      %v1317 = vshrl.u32 %v1244, 16
      %v1319 = vshll.u32 %v1244, 16
      %v1321 = vrot.slane %v1319, 1
      %v1322 = vor.u32 %v1317, %v1321
      %v1323 = vshll.u32 %v1246, 16
      %v1325 = vrot.slane %v1323, 1
      %v1326 = vsel %vm1306, %v1322, %v1325
      %v1327 = vshrl.u32 %v1248, 16
      %v1329 = vshll.u32 %v1248, 16
      %v1331 = vrot.slane %v1329, 1
      %v1332 = vor.u32 %v1327, %v1331
      %v1333 = vshll.u32 %v1250, 16
      %v1335 = vrot.slane %v1333, 1
      %v1336 = vsel %vm1306, %v1332, %v1335
      %v1337 = vshrl.u32 %v1252, 16
      %v1339 = vshll.u32 %v1252, 16
      %v1341 = vrot.slane %v1339, 1
      %v1342 = vor.u32 %v1337, %v1341
      %v1343 = vshll.u32 %v1254, 16
      %v1345 = vrot.slane %v1343, 1
      %v1346 = vsel %vm1306, %v1342, %v1345
      %v1347 = vshrl.u32 %v1256, 16
      %v1349 = vshll.u32 %v1256, 16
      %v1351 = vrot.slane %v1349, 1
      %v1352 = vor.u32 %v1347, %v1351
      %v1353 = vshll.u32 %v1258, 16
      %v1355 = vrot.slane %v1353, 1
      %v1356 = vsel %vm1306, %v1352, %v1355
      %v1357 = vshrl.u32 %v1260, 16
      %v1359 = vshll.u32 %v1260, 16
      %v1361 = vrot.slane %v1359, 1
      %v1362 = vor.u32 %v1357, %v1361
      %v1363 = vshll.u32 %v1262, 16
      %v1365 = vrot.slane %v1363, 1
      %v1366 = vsel %vm1306, %v1362, %v1365
      %v1367 = vshrl.u32 %v1264, 16
      %v1369 = vshll.u32 %v1264, 16
      %v1371 = vrot.slane %v1369, 1
      %v1372 = vor.u32 %v1367, %v1371
      %v1373 = vshll.u32 %v1266, 16
      %v1375 = vrot.slane %v1373, 1
      %v1376 = vsel %vm1306, %v1372, %v1375
      %v1377 = vshrl.u32 %v1268, 16
      %v1379 = vshll.u32 %v1268, 16
      %v1381 = vrot.slane %v1379, 1
      %v1382 = vor.u32 %v1377, %v1381
      %v1383 = vshll.u32 %v1270, 16
      %v1385 = vrot.slane %v1383, 1
      %v1386 = vsel %vm1306, %v1382, %v1385
      %v1387 = vshrl.u32 %v1272, 16
      %v1389 = vshll.u32 %v1272, 16
      %v1391 = vrot.slane %v1389, 1
      %v1392 = vor.u32 %v1387, %v1391
      %v1393 = vshll.u32 %v1274, 16
      %v1395 = vrot.slane %v1393, 1
      %v1396 = vsel %vm1306, %v1392, %v1395
      %v1397 = vshrl.u32 %v1276, 16
      %v1399 = vshll.u32 %v1276, 16
      %v1401 = vrot.slane %v1399, 1
      %v1402 = vor.u32 %v1397, %v1401
      %v1403 = vshll.u32 %v1278, 16
      %v1405 = vrot.slane %v1403, 1
      %v1406 = vsel %vm1306, %v1402, %v1405
      %v1407 = vshrl.u32 %v1280, 16
      %v1409 = vshll.u32 %v1280, 16
      %v1411 = vrot.slane %v1409, 1
      %v1412 = vor.u32 %v1407, %v1411
      %v1413 = vshll.u32 %v1282, 16
      %v1415 = vrot.slane %v1413, 1
      %v1416 = vsel %vm1306, %v1412, %v1415
      %v1417 = vshrl.u32 %v1284, 16
      %v1419 = vshll.u32 %v1284, 16
      %v1421 = vrot.slane %v1419, 1
      %v1422 = vor.u32 %v1417, %v1421
      %v1423 = vshll.u32 %v1286, 16
      %v1425 = vrot.slane %v1423, 1
      %v1426 = vsel %vm1306, %v1422, %v1425
      %v1427 = vshrl.u32 %v1288, 16
      %v1429 = vshll.u32 %v1288, 16
      %v1431 = vrot.slane %v1429, 1
      %v1432 = vor.u32 %v1427, %v1431
      %v1433 = vshll.u32 %v1290, 16
      %v1435 = vrot.slane %v1433, 1
      %v1436 = vsel %vm1306, %v1432, %v1435
      %v1437 = vshrl.u32 %v1292, 16
      %v1439 = vshll.u32 %v1292, 16
      %v1441 = vrot.slane %v1439, 1
      %v1442 = vor.u32 %v1437, %v1441
      %v1443 = vshll.u32 %v1294, 16
      %v1445 = vrot.slane %v1443, 1
      %v1446 = vsel %vm1306, %v1442, %v1445
      %v1447 = vshrl.u32 %v1296, 16
      %v1449 = vshll.u32 %v1296, 16
      %v1451 = vrot.slane %v1449, 1
      %v1452 = vor.u32 %v1447, %v1451
      %v1453 = vshll.u32 %v1298, 16
      %v1455 = vrot.slane %v1453, 1
      %v1456 = vsel %vm1306, %v1452, %v1455
      %v1457 = vshrl.u32 %v1300, 16
      %v1459 = vshll.u32 %v1300, 16
      %v1461 = vrot.slane %v1459, 1
      %v1462 = vor.u32 %v1457, %v1461
      %v1463 = vshll.u32 %v1302, 16
      %v1465 = vrot.slane %v1463, 1
      %v1466 = vsel %vm1306, %v1462, %v1465
      %s1467 = scalar_lea.vmem %s2, 12
      %v1468 = vld [vmem:[%s1467] sm:$0xf]
      %v1469 = vld [vmem:[%s1467 + $0x4] sm:$0xf]
      %v1470 = vld [vmem:[%s1467 + $0x8] sm:$0xf]
      %v1474 = vunpack.c.l.b16 %v1468
      %v1475 = vunpack.c.l.b16 %v1469
      %v1476 = vunpack.c.l.b16 %v1470
      %v1477 = vpack.c.b16 %v1475, %v1474
      %v1478 = vpack.c.b16 %v1476, %v1476
      %vm1480 = vcmask 195584
      %v1482 = vsel %vm1480, %v1316, 0
      %v1485 = vsel %vm1480, %v1326, 0
      %v1488 = vsel %vm1480, %v1336, 0
      %v1491 = vsel %vm1480, %v1346, 0
      %v1494 = vsel %vm1480, %v1356, 0
      %v1497 = vsel %vm1480, %v1366, 0
      %v1500 = vsel %vm1480, %v1376, 0
      %v1503 = vsel %vm1480, %v1386, 0
      %v1506 = vsel %vm1480, %v1396, 0
      %v1509 = vsel %vm1480, %v1406, 0
      %v1512 = vsel %vm1480, %v1416, 0
      %v1515 = vsel %vm1480, %v1426, 0
      %v1518 = vsel %vm1480, %v1436, 0
      %v1521 = vsel %vm1480, %v1446, 0
      %v1524 = vsel %vm1480, %v1456, 0
      %v1527 = vsel %vm1480, %v1466, 0
      %vm1529 = vcmask 1043456
      %v1531 = vsel %vm1529, %v1478, 0
      %1533 = vmatpush.bf16.msra.mxu0 0
      %1534 = vmatpush.bf16.msra.mxu0 0
      %1535 = vmatpush.bf16.msra.mxu0 0
      %1536 = vmatpush.bf16.msra.mxu0 0
      %1537 = vmatpush.bf16.msra.mxu0 0
      %1538 = vmatpush.bf16.msra.mxu0 0
      %1539 = vmatpush.bf16.msra.mxu0 %v1531
      %1540 = vmatpush.bf16.msra.mxu0 %v1477
      %1541 = vmatmul.bf16.gmra.mxu0 %v1482
      %v1542 = vpop.f32.mrf.mxu0
      %v1543 = vadd.f32 0.0, %v1542
      %v1544 = vpop.f32.mrf.mxu0
      %v1545 = vadd.f32 0.0, %v1544
      %1546 = vmatmul.bf16.gmra.mxu0 %v1485
      %v1547 = vpop.f32.mrf.mxu0
      %v1548 = vadd.f32 0.0, %v1547
      %v1549 = vpop.f32.mrf.mxu0
      %v1550 = vadd.f32 0.0, %v1549
      %1551 = vmatmul.bf16.gmra.mxu0 %v1488
      %v1552 = vpop.f32.mrf.mxu0
      %v1553 = vadd.f32 0.0, %v1552
      %v1554 = vpop.f32.mrf.mxu0
      %v1555 = vadd.f32 0.0, %v1554
      %1556 = vmatmul.bf16.gmra.mxu0 %v1491
      %v1557 = vpop.f32.mrf.mxu0
      %v1558 = vadd.f32 0.0, %v1557
      %v1559 = vpop.f32.mrf.mxu0
      %v1560 = vadd.f32 0.0, %v1559
      %1561 = vmatmul.bf16.gmra.mxu0 %v1494
      %v1562 = vpop.f32.mrf.mxu0
      %v1563 = vadd.f32 0.0, %v1562
      %v1564 = vpop.f32.mrf.mxu0
      %v1565 = vadd.f32 0.0, %v1564
      %1566 = vmatmul.bf16.gmra.mxu0 %v1497
      %v1567 = vpop.f32.mrf.mxu0
      %v1568 = vadd.f32 0.0, %v1567
      %v1569 = vpop.f32.mrf.mxu0
      %v1570 = vadd.f32 0.0, %v1569
      %1571 = vmatmul.bf16.gmra.mxu0 %v1500
      %v1572 = vpop.f32.mrf.mxu0
      %v1573 = vadd.f32 0.0, %v1572
      %v1574 = vpop.f32.mrf.mxu0
      %v1575 = vadd.f32 0.0, %v1574
      %1576 = vmatmul.bf16.gmra.mxu0 %v1503
      %v1577 = vpop.f32.mrf.mxu0
      %v1578 = vadd.f32 0.0, %v1577
      %v1579 = vpop.f32.mrf.mxu0
      %v1580 = vadd.f32 0.0, %v1579
      %1581 = vmatmul.bf16.gmra.mxu0 %v1506
      %v1582 = vpop.f32.mrf.mxu0
      %v1583 = vadd.f32 0.0, %v1582
      %v1584 = vpop.f32.mrf.mxu0
      %v1585 = vadd.f32 0.0, %v1584
      %1586 = vmatmul.bf16.gmra.mxu0 %v1509
      %v1587 = vpop.f32.mrf.mxu0
      %v1588 = vadd.f32 0.0, %v1587
      %v1589 = vpop.f32.mrf.mxu0
      %v1590 = vadd.f32 0.0, %v1589
      %1591 = vmatmul.bf16.gmra.mxu0 %v1512
      %v1592 = vpop.f32.mrf.mxu0
      %v1593 = vadd.f32 0.0, %v1592
      %v1594 = vpop.f32.mrf.mxu0
      %v1595 = vadd.f32 0.0, %v1594
      %1596 = vmatmul.bf16.gmra.mxu0 %v1515
      %v1597 = vpop.f32.mrf.mxu0
      %v1598 = vadd.f32 0.0, %v1597
      %v1599 = vpop.f32.mrf.mxu0
      %v1600 = vadd.f32 0.0, %v1599
      %1601 = vmatmul.bf16.gmra.mxu0 %v1518
      %v1602 = vpop.f32.mrf.mxu0
      %v1603 = vadd.f32 0.0, %v1602
      %v1604 = vpop.f32.mrf.mxu0
      %v1605 = vadd.f32 0.0, %v1604
      %1606 = vmatmul.bf16.gmra.mxu0 %v1521
      %v1607 = vpop.f32.mrf.mxu0
      %v1608 = vadd.f32 0.0, %v1607
      %v1609 = vpop.f32.mrf.mxu0
      %v1610 = vadd.f32 0.0, %v1609
      %1611 = vmatmul.bf16.gmra.mxu0 %v1524
      %v1612 = vpop.f32.mrf.mxu0
      %v1613 = vadd.f32 0.0, %v1612
      %v1614 = vpop.f32.mrf.mxu0
      %v1615 = vadd.f32 0.0, %v1614
      %1616 = vmatmul.bf16.gmra.mxu0 %v1527
      %v1617 = vpop.f32.mrf.mxu0
      %v1618 = vadd.f32 0.0, %v1617
      %v1619 = vpop.f32.mrf.mxu0
      %v1620 = vadd.f32 0.0, %v1619
      %1621 = vdwg.mxu0
      %v1625 = vunpack.c.l.b16 %v1303
      %v1626 = vunpack.c.l.b16 %v1304
      %v1627 = vunpack.c.l.b16 %v1305
      %v1628 = vpack.c.b16 %v1626, %v1625
      %v1629 = vpack.c.b16 %v1627, %v1627
      %v1631 = vsel %vm1480, %v1240, 0
      %v1633 = vsel %vm1480, %v1244, 0
      %v1635 = vsel %vm1480, %v1248, 0
      %v1637 = vsel %vm1480, %v1252, 0
      %v1639 = vsel %vm1480, %v1256, 0
      %v1641 = vsel %vm1480, %v1260, 0
      %v1643 = vsel %vm1480, %v1264, 0
      %v1645 = vsel %vm1480, %v1268, 0
      %v1647 = vsel %vm1480, %v1272, 0
      %v1649 = vsel %vm1480, %v1276, 0
      %v1651 = vsel %vm1480, %v1280, 0
      %v1653 = vsel %vm1480, %v1284, 0
      %v1655 = vsel %vm1480, %v1288, 0
      %v1657 = vsel %vm1480, %v1292, 0
      %v1659 = vsel %vm1480, %v1296, 0
      %v1661 = vsel %vm1480, %v1300, 0
      %v1664 = vsel %vm1529, %v1629, 0
      %1666 = vmatpush.bf16.msra.mxu0 0
      %1667 = vmatpush.bf16.msra.mxu0 0
      %1668 = vmatpush.bf16.msra.mxu0 0
      %1669 = vmatpush.bf16.msra.mxu0 0
      %1670 = vmatpush.bf16.msra.mxu0 0
      %1671 = vmatpush.bf16.msra.mxu0 0
      %1672 = vmatpush.bf16.msra.mxu0 %v1664
      %1673 = vmatpush.bf16.msra.mxu0 %v1628
      %1674 = vmatmul.bf16.gmra.mxu0 %v1631
      %v1675 = vpop.f32.mrf.mxu0
      %v1676 = vadd.f32 %v1543, %v1675
      %v1677 = vpop.f32.mrf.mxu0
      %v1678 = vadd.f32 %v1545, %v1677
      %1679 = vmatmul.bf16.gmra.mxu0 %v1633
      %v1680 = vpop.f32.mrf.mxu0
      %v1681 = vadd.f32 %v1548, %v1680
      %v1682 = vpop.f32.mrf.mxu0
      %v1683 = vadd.f32 %v1550, %v1682
      %1684 = vmatmul.bf16.gmra.mxu0 %v1635
      %v1685 = vpop.f32.mrf.mxu0
      %v1686 = vadd.f32 %v1553, %v1685
      %v1687 = vpop.f32.mrf.mxu0
      %v1688 = vadd.f32 %v1555, %v1687
      %1689 = vmatmul.bf16.gmra.mxu0 %v1637
      %v1690 = vpop.f32.mrf.mxu0
      %v1691 = vadd.f32 %v1558, %v1690
      %v1692 = vpop.f32.mrf.mxu0
      %v1693 = vadd.f32 %v1560, %v1692
      %1694 = vmatmul.bf16.gmra.mxu0 %v1639
      %v1695 = vpop.f32.mrf.mxu0
      %v1696 = vadd.f32 %v1563, %v1695
      %v1697 = vpop.f32.mrf.mxu0
      %v1698 = vadd.f32 %v1565, %v1697
      %1699 = vmatmul.bf16.gmra.mxu0 %v1641
      %v1700 = vpop.f32.mrf.mxu0
      %v1701 = vadd.f32 %v1568, %v1700
      %v1702 = vpop.f32.mrf.mxu0
      %v1703 = vadd.f32 %v1570, %v1702
      %1704 = vmatmul.bf16.gmra.mxu0 %v1643
      %v1705 = vpop.f32.mrf.mxu0
      %v1706 = vadd.f32 %v1573, %v1705
      %v1707 = vpop.f32.mrf.mxu0
      %v1708 = vadd.f32 %v1575, %v1707
      %1709 = vmatmul.bf16.gmra.mxu0 %v1645
      %v1710 = vpop.f32.mrf.mxu0
      %v1711 = vadd.f32 %v1578, %v1710
      %v1712 = vpop.f32.mrf.mxu0
      %v1713 = vadd.f32 %v1580, %v1712
      %1714 = vmatmul.bf16.gmra.mxu0 %v1647
      %v1715 = vpop.f32.mrf.mxu0
      %v1716 = vadd.f32 %v1583, %v1715
      %v1717 = vpop.f32.mrf.mxu0
      %v1718 = vadd.f32 %v1585, %v1717
      %1719 = vmatmul.bf16.gmra.mxu0 %v1649
      %v1720 = vpop.f32.mrf.mxu0
      %v1721 = vadd.f32 %v1588, %v1720
      %v1722 = vpop.f32.mrf.mxu0
      %v1723 = vadd.f32 %v1590, %v1722
      %1724 = vmatmul.bf16.gmra.mxu0 %v1651
      %v1725 = vpop.f32.mrf.mxu0
      %v1726 = vadd.f32 %v1593, %v1725
      %v1727 = vpop.f32.mrf.mxu0
      %v1728 = vadd.f32 %v1595, %v1727
      %1729 = vmatmul.bf16.gmra.mxu0 %v1653
      %v1730 = vpop.f32.mrf.mxu0
      %v1731 = vadd.f32 %v1598, %v1730
      %v1732 = vpop.f32.mrf.mxu0
      %v1733 = vadd.f32 %v1600, %v1732
      %1734 = vmatmul.bf16.gmra.mxu0 %v1655
      %v1735 = vpop.f32.mrf.mxu0
      %v1736 = vadd.f32 %v1603, %v1735
      %v1737 = vpop.f32.mrf.mxu0
      %v1738 = vadd.f32 %v1605, %v1737
      %1739 = vmatmul.bf16.gmra.mxu0 %v1657
      %v1740 = vpop.f32.mrf.mxu0
      %v1741 = vadd.f32 %v1608, %v1740
      %v1742 = vpop.f32.mrf.mxu0
      %v1743 = vadd.f32 %v1610, %v1742
      %1744 = vmatmul.bf16.gmra.mxu0 %v1659
      %v1745 = vpop.f32.mrf.mxu0
      %v1746 = vadd.f32 %v1613, %v1745
      %v1747 = vpop.f32.mrf.mxu0
      %v1748 = vadd.f32 %v1615, %v1747
      %1749 = vmatmul.bf16.gmra.mxu0 %v1661
      %v1750 = vpop.f32.mrf.mxu0
      %v1751 = vadd.f32 %v1618, %v1750
      %v1752 = vpop.f32.mrf.mxu0
      %v1753 = vadd.f32 %v1620, %v1752
      %1754 = vdwg.mxu0
      %vm1787 = vcmask 1046528
      %v1788 = vrot.slane %v1240, 1
      %v1789 = vrot.slane %v1242, 1
      %v1790 = vsel %vm1787, %v1788, %v1789
      %v1791 = vrot.slane %v1244, 1
      %v1792 = vrot.slane %v1246, 1
      %v1793 = vsel %vm1787, %v1791, %v1792
      %v1794 = vrot.slane %v1248, 1
      %v1795 = vrot.slane %v1250, 1
      %v1796 = vsel %vm1787, %v1794, %v1795
      %v1797 = vrot.slane %v1252, 1
      %v1798 = vrot.slane %v1254, 1
      %v1799 = vsel %vm1787, %v1797, %v1798
      %v1800 = vrot.slane %v1256, 1
      %v1801 = vrot.slane %v1258, 1
      %v1802 = vsel %vm1787, %v1800, %v1801
      %v1803 = vrot.slane %v1260, 1
      %v1804 = vrot.slane %v1262, 1
      %v1805 = vsel %vm1787, %v1803, %v1804
      %v1806 = vrot.slane %v1264, 1
      %v1807 = vrot.slane %v1266, 1
      %v1808 = vsel %vm1787, %v1806, %v1807
      %v1809 = vrot.slane %v1268, 1
      %v1810 = vrot.slane %v1270, 1
      %v1811 = vsel %vm1787, %v1809, %v1810
      %v1812 = vrot.slane %v1272, 1
      %v1813 = vrot.slane %v1274, 1
      %v1814 = vsel %vm1787, %v1812, %v1813
      %v1815 = vrot.slane %v1276, 1
      %v1816 = vrot.slane %v1278, 1
      %v1817 = vsel %vm1787, %v1815, %v1816
      %v1818 = vrot.slane %v1280, 1
      %v1819 = vrot.slane %v1282, 1
      %v1820 = vsel %vm1787, %v1818, %v1819
      %v1821 = vrot.slane %v1284, 1
      %v1822 = vrot.slane %v1286, 1
      %v1823 = vsel %vm1787, %v1821, %v1822
      %v1824 = vrot.slane %v1288, 1
      %v1825 = vrot.slane %v1290, 1
      %v1826 = vsel %vm1787, %v1824, %v1825
      %v1827 = vrot.slane %v1292, 1
      %v1828 = vrot.slane %v1294, 1
      %v1829 = vsel %vm1787, %v1827, %v1828
      %v1830 = vrot.slane %v1296, 1
      %v1831 = vrot.slane %v1298, 1
      %v1832 = vsel %vm1787, %v1830, %v1831
      %v1833 = vrot.slane %v1300, 1
      %v1834 = vrot.slane %v1302, 1
      %v1835 = vsel %vm1787, %v1833, %v1834
      %s1836 = scalar_lea.vmem %s2, 24
      %v1837 = vld [vmem:[%s1836] sm:$0xf]
      %v1838 = vld [vmem:[%s1836 + $0x4] sm:$0xf]
      %v1839 = vld [vmem:[%s1836 + $0x8] sm:$0xf]
      %v1843 = vunpack.c.l.b16 %v1837
      %v1844 = vunpack.c.l.b16 %v1838
      %v1845 = vunpack.c.l.b16 %v1839
      %v1846 = vpack.c.b16 %v1844, %v1843
      %v1847 = vpack.c.b16 %v1845, %v1845
      %v1850 = vsel %vm1480, %v1790, 0
      %v1853 = vsel %vm1480, %v1793, 0
      %v1856 = vsel %vm1480, %v1796, 0
      %v1859 = vsel %vm1480, %v1799, 0
      %v1862 = vsel %vm1480, %v1802, 0
      %v1865 = vsel %vm1480, %v1805, 0
      %v1868 = vsel %vm1480, %v1808, 0
      %v1871 = vsel %vm1480, %v1811, 0
      %v1874 = vsel %vm1480, %v1814, 0
      %v1877 = vsel %vm1480, %v1817, 0
      %v1880 = vsel %vm1480, %v1820, 0
      %v1883 = vsel %vm1480, %v1823, 0
      %v1886 = vsel %vm1480, %v1826, 0
      %v1889 = vsel %vm1480, %v1829, 0
      %v1892 = vsel %vm1480, %v1832, 0
      %v1895 = vsel %vm1480, %v1835, 0
      %v1898 = vsel %vm1529, %v1847, 0
      %1900 = vmatpush.bf16.msra.mxu0 0
      %1901 = vmatpush.bf16.msra.mxu0 0
      %1902 = vmatpush.bf16.msra.mxu0 0
      %1903 = vmatpush.bf16.msra.mxu0 0
      %1904 = vmatpush.bf16.msra.mxu0 0
      %1905 = vmatpush.bf16.msra.mxu0 0
      %1906 = vmatpush.bf16.msra.mxu0 %v1898
      %1907 = vmatpush.bf16.msra.mxu0 %v1846
      %1908 = vmatmul.bf16.gmra.mxu0 %v1850
      %v1909 = vpop.f32.mrf.mxu0
      %v1910 = vadd.f32 0.0, %v1909
      %v1911 = vpop.f32.mrf.mxu0
      %v1912 = vadd.f32 0.0, %v1911
      %1913 = vmatmul.bf16.gmra.mxu0 %v1853
      %v1914 = vpop.f32.mrf.mxu0
      %v1915 = vadd.f32 0.0, %v1914
      %v1916 = vpop.f32.mrf.mxu0
      %v1917 = vadd.f32 0.0, %v1916
      %1918 = vmatmul.bf16.gmra.mxu0 %v1856
      %v1919 = vpop.f32.mrf.mxu0
      %v1920 = vadd.f32 0.0, %v1919
      %v1921 = vpop.f32.mrf.mxu0
      %v1922 = vadd.f32 0.0, %v1921
      %1923 = vmatmul.bf16.gmra.mxu0 %v1859
      %v1924 = vpop.f32.mrf.mxu0
      %v1925 = vadd.f32 0.0, %v1924
      %v1926 = vpop.f32.mrf.mxu0
      %v1927 = vadd.f32 0.0, %v1926
      %1928 = vmatmul.bf16.gmra.mxu0 %v1862
      %v1929 = vpop.f32.mrf.mxu0
      %v1930 = vadd.f32 0.0, %v1929
      %v1931 = vpop.f32.mrf.mxu0
      %v1932 = vadd.f32 0.0, %v1931
      %1933 = vmatmul.bf16.gmra.mxu0 %v1865
      %v1934 = vpop.f32.mrf.mxu0
      %v1935 = vadd.f32 0.0, %v1934
      %v1936 = vpop.f32.mrf.mxu0
      %v1937 = vadd.f32 0.0, %v1936
      %1938 = vmatmul.bf16.gmra.mxu0 %v1868
      %v1939 = vpop.f32.mrf.mxu0
      %v1940 = vadd.f32 0.0, %v1939
      %v1941 = vpop.f32.mrf.mxu0
      %v1942 = vadd.f32 0.0, %v1941
      %1943 = vmatmul.bf16.gmra.mxu0 %v1871
      %v1944 = vpop.f32.mrf.mxu0
      %v1945 = vadd.f32 0.0, %v1944
      %v1946 = vpop.f32.mrf.mxu0
      %v1947 = vadd.f32 0.0, %v1946
      %1948 = vmatmul.bf16.gmra.mxu0 %v1874
      %v1949 = vpop.f32.mrf.mxu0
      %v1950 = vadd.f32 0.0, %v1949
      %v1951 = vpop.f32.mrf.mxu0
      %v1952 = vadd.f32 0.0, %v1951
      %1953 = vmatmul.bf16.gmra.mxu0 %v1877
      %v1954 = vpop.f32.mrf.mxu0
      %v1955 = vadd.f32 0.0, %v1954
      %v1956 = vpop.f32.mrf.mxu0
      %v1957 = vadd.f32 0.0, %v1956
      %1958 = vmatmul.bf16.gmra.mxu0 %v1880
      %v1959 = vpop.f32.mrf.mxu0
      %v1960 = vadd.f32 0.0, %v1959
      %v1961 = vpop.f32.mrf.mxu0
      %v1962 = vadd.f32 0.0, %v1961
      %1963 = vmatmul.bf16.gmra.mxu0 %v1883
      %v1964 = vpop.f32.mrf.mxu0
      %v1965 = vadd.f32 0.0, %v1964
      %v1966 = vpop.f32.mrf.mxu0
      %v1967 = vadd.f32 0.0, %v1966
      %1968 = vmatmul.bf16.gmra.mxu0 %v1886
      %v1969 = vpop.f32.mrf.mxu0
      %v1970 = vadd.f32 0.0, %v1969
      %v1971 = vpop.f32.mrf.mxu0
      %v1972 = vadd.f32 0.0, %v1971
      %1973 = vmatmul.bf16.gmra.mxu0 %v1889
      %v1974 = vpop.f32.mrf.mxu0
      %v1975 = vadd.f32 0.0, %v1974
      %v1976 = vpop.f32.mrf.mxu0
      %v1977 = vadd.f32 0.0, %v1976
      %1978 = vmatmul.bf16.gmra.mxu0 %v1892
      %v1979 = vpop.f32.mrf.mxu0
      %v1980 = vadd.f32 0.0, %v1979
      %v1981 = vpop.f32.mrf.mxu0
      %v1982 = vadd.f32 0.0, %v1981
      %1983 = vmatmul.bf16.gmra.mxu0 %v1895
      %v1984 = vpop.f32.mrf.mxu0
      %v1985 = vadd.f32 0.0, %v1984
      %v1986 = vpop.f32.mrf.mxu0
      %v1987 = vadd.f32 0.0, %v1986
      %1988 = vdwg.mxu0
      %v1989 = vadd.f32 %v1676, %v1910
      %v1990 = vadd.f32 %v1678, %v1912
      %v1991 = vadd.f32 %v1681, %v1915
      %v1992 = vadd.f32 %v1683, %v1917
      %v1993 = vadd.f32 %v1686, %v1920
      %v1994 = vadd.f32 %v1688, %v1922
      %v1995 = vadd.f32 %v1691, %v1925
      %v1996 = vadd.f32 %v1693, %v1927
      %v1997 = vadd.f32 %v1696, %v1930
      %v1998 = vadd.f32 %v1698, %v1932
      %v1999 = vadd.f32 %v1701, %v1935
      %v2000 = vadd.f32 %v1703, %v1937
      %v2001 = vadd.f32 %v1706, %v1940
      %v2002 = vadd.f32 %v1708, %v1942
      %v2003 = vadd.f32 %v1711, %v1945
      %v2004 = vadd.f32 %v1713, %v1947
      %v2005 = vadd.f32 %v1716, %v1950
      %v2006 = vadd.f32 %v1718, %v1952
      %v2007 = vadd.f32 %v1721, %v1955
      %v2008 = vadd.f32 %v1723, %v1957
      %v2009 = vadd.f32 %v1726, %v1960
      %v2010 = vadd.f32 %v1728, %v1962
      %v2011 = vadd.f32 %v1731, %v1965
      %v2012 = vadd.f32 %v1733, %v1967
      %v2013 = vadd.f32 %v1736, %v1970
      %v2014 = vadd.f32 %v1738, %v1972
      %v2015 = vadd.f32 %v1741, %v1975
      %v2016 = vadd.f32 %v1743, %v1977
      %v2017 = vadd.f32 %v1746, %v1980
      %v2018 = vadd.f32 %v1748, %v1982
      %v2019 = vadd.f32 %v1751, %v1985
      %v2020 = vadd.f32 %v1753, %v1987
      %v2021 = vpack.c.bf16 %v1989, %v1989
      %v2022 = vpack.c.bf16 %v1990, %v1990
      %v2023 = vpack.c.bf16 %v1991, %v1991
      %v2024 = vpack.c.bf16 %v1992, %v1992
      %v2025 = vpack.c.bf16 %v1993, %v1993
      %v2026 = vpack.c.bf16 %v1994, %v1994
      %v2027 = vpack.c.bf16 %v1995, %v1995
      %v2028 = vpack.c.bf16 %v1996, %v1996
      %v2029 = vpack.c.bf16 %v1997, %v1997
      %v2030 = vpack.c.bf16 %v1998, %v1998
      %v2031 = vpack.c.bf16 %v1999, %v1999
      %v2032 = vpack.c.bf16 %v2000, %v2000
      %v2033 = vpack.c.bf16 %v2001, %v2001
      %v2034 = vpack.c.bf16 %v2002, %v2002
      %v2035 = vpack.c.bf16 %v2003, %v2003
      %v2036 = vpack.c.bf16 %v2004, %v2004
      %v2037 = vpack.c.bf16 %v2005, %v2005
      %v2038 = vpack.c.bf16 %v2006, %v2006
      %v2039 = vpack.c.bf16 %v2007, %v2007
      %v2040 = vpack.c.bf16 %v2008, %v2008
      %v2041 = vpack.c.bf16 %v2009, %v2009
      %v2042 = vpack.c.bf16 %v2010, %v2010
      %v2043 = vpack.c.bf16 %v2011, %v2011
      %v2044 = vpack.c.bf16 %v2012, %v2012
      %v2045 = vpack.c.bf16 %v2013, %v2013
      %v2046 = vpack.c.bf16 %v2014, %v2014
      %v2047 = vpack.c.bf16 %v2015, %v2015
      %v2048 = vpack.c.bf16 %v2016, %v2016
      %v2049 = vpack.c.bf16 %v2017, %v2017
      %v2050 = vpack.c.bf16 %v2018, %v2018
      %v2051 = vpack.c.bf16 %v2019, %v2019
      %v2052 = vpack.c.bf16 %v2020, %v2020
      %v2085 = vunpack.c.l.b16 %v2021
      %v2086 = vunpack.c.l.b16 %v2022
      %v2087 = vunpack.c.l.b16 %v2023
      %v2088 = vunpack.c.l.b16 %v2024
      %v2089 = vunpack.c.l.b16 %v2025
      %v2090 = vunpack.c.l.b16 %v2026
      %v2091 = vunpack.c.l.b16 %v2027
      %v2092 = vunpack.c.l.b16 %v2028
      %v2093 = vunpack.c.l.b16 %v2029
      %v2094 = vunpack.c.l.b16 %v2030
      %v2095 = vunpack.c.l.b16 %v2031
      %v2096 = vunpack.c.l.b16 %v2032
      %v2097 = vunpack.c.l.b16 %v2033
      %v2098 = vunpack.c.l.b16 %v2034
      %v2099 = vunpack.c.l.b16 %v2035
      %v2100 = vunpack.c.l.b16 %v2036
      %v2101 = vunpack.c.l.b16 %v2037
      %v2102 = vunpack.c.l.b16 %v2038
      %v2103 = vunpack.c.l.b16 %v2039
      %v2104 = vunpack.c.l.b16 %v2040
      %v2105 = vunpack.c.l.b16 %v2041
      %v2106 = vunpack.c.l.b16 %v2042
      %v2107 = vunpack.c.l.b16 %v2043
      %v2108 = vunpack.c.l.b16 %v2044
      %v2109 = vunpack.c.l.b16 %v2045
      %v2110 = vunpack.c.l.b16 %v2046
      %v2111 = vunpack.c.l.b16 %v2047
      %v2112 = vunpack.c.l.b16 %v2048
      %v2113 = vunpack.c.l.b16 %v2049
      %v2114 = vunpack.c.l.b16 %v2050
      %v2115 = vunpack.c.l.b16 %v2051
      %v2116 = vunpack.c.l.b16 %v2052
      %v2117 = vpack.c.b16 %v2086, %v2085
      %v2118 = vpack.c.b16 %v2088, %v2087
      %v2119 = vpack.c.b16 %v2090, %v2089
      %v2120 = vpack.c.b16 %v2092, %v2091
      %v2121 = vpack.c.b16 %v2094, %v2093
      %v2122 = vpack.c.b16 %v2096, %v2095
      %v2123 = vpack.c.b16 %v2098, %v2097
      %v2124 = vpack.c.b16 %v2100, %v2099
      %v2125 = vpack.c.b16 %v2102, %v2101
      %v2126 = vpack.c.b16 %v2104, %v2103
      %v2127 = vpack.c.b16 %v2106, %v2105
      %v2128 = vpack.c.b16 %v2108, %v2107
      %v2129 = vpack.c.b16 %v2110, %v2109
      %v2130 = vpack.c.b16 %v2112, %v2111
      %v2131 = vpack.c.b16 %v2114, %v2113
      %v2132 = vpack.c.b16 %v2116, %v2115
      %v2134 = vshrl.u32 %v2117, 16
      %v2136 = vrot.slane %v2134, 7
      %v2137 = vshll.u32 %v2117, 16
      %v2139 = vor.u32 %v2136, %v2137
      %v2141 = vshrl.u32 %v2118, 16
      %v2143 = vrot.slane %v2141, 7
      %v2144 = vshll.u32 %v2118, 16
      %v2146 = vor.u32 %v2143, %v2144
      %v2148 = vshrl.u32 %v2119, 16
      %v2150 = vrot.slane %v2148, 7
      %v2151 = vshll.u32 %v2119, 16
      %v2153 = vor.u32 %v2150, %v2151
      %v2155 = vshrl.u32 %v2120, 16
      %v2157 = vrot.slane %v2155, 7
      %v2158 = vshll.u32 %v2120, 16
      %v2160 = vor.u32 %v2157, %v2158
      %v2162 = vshrl.u32 %v2121, 16
      %v2164 = vrot.slane %v2162, 7
      %v2165 = vshll.u32 %v2121, 16
      %v2167 = vor.u32 %v2164, %v2165
      %v2169 = vshrl.u32 %v2122, 16
      %v2171 = vrot.slane %v2169, 7
      %v2172 = vshll.u32 %v2122, 16
      %v2174 = vor.u32 %v2171, %v2172
      %v2176 = vshrl.u32 %v2123, 16
      %v2178 = vrot.slane %v2176, 7
      %v2179 = vshll.u32 %v2123, 16
      %v2181 = vor.u32 %v2178, %v2179
      %v2183 = vshrl.u32 %v2124, 16
      %v2185 = vrot.slane %v2183, 7
      %v2186 = vshll.u32 %v2124, 16
      %v2188 = vor.u32 %v2185, %v2186
      %v2190 = vshrl.u32 %v2125, 16
      %v2192 = vrot.slane %v2190, 7
      %v2193 = vshll.u32 %v2125, 16
      %v2195 = vor.u32 %v2192, %v2193
      %v2197 = vshrl.u32 %v2126, 16
      %v2199 = vrot.slane %v2197, 7
      %v2200 = vshll.u32 %v2126, 16
      %v2202 = vor.u32 %v2199, %v2200
      %v2204 = vshrl.u32 %v2127, 16
      %v2206 = vrot.slane %v2204, 7
      %v2207 = vshll.u32 %v2127, 16
      %v2209 = vor.u32 %v2206, %v2207
      %v2211 = vshrl.u32 %v2128, 16
      %v2213 = vrot.slane %v2211, 7
      %v2214 = vshll.u32 %v2128, 16
      %v2216 = vor.u32 %v2213, %v2214
      %v2218 = vshrl.u32 %v2129, 16
      %v2220 = vrot.slane %v2218, 7
      %v2221 = vshll.u32 %v2129, 16
      %v2223 = vor.u32 %v2220, %v2221
      %v2225 = vshrl.u32 %v2130, 16
      %v2227 = vrot.slane %v2225, 7
      %v2228 = vshll.u32 %v2130, 16
      %v2230 = vor.u32 %v2227, %v2228
      %v2232 = vshrl.u32 %v2131, 16
      %v2234 = vrot.slane %v2232, 7
      %v2235 = vshll.u32 %v2131, 16
      %v2237 = vor.u32 %v2234, %v2235
      %v2239 = vshrl.u32 %v2132, 16
      %v2241 = vrot.slane %v2239, 7
      %v2242 = vshll.u32 %v2132, 16
      %v2244 = vor.u32 %v2241, %v2242
      %vm2277 = vcmask 1040384
      %vm2278 = vsmask.f32 256
      %vm2279 = vmand %vm2277, %vm2278
      %v2280 = vsel %vm2279, 0, %v2139
      %v2281 = vsel %vm2279, 0, %v2146
      %v2282 = vsel %vm2279, 0, %v2153
      %v2283 = vsel %vm2279, 0, %v2160
      %v2284 = vsel %vm2279, 0, %v2167
      %v2285 = vsel %vm2279, 0, %v2174
      %v2286 = vsel %vm2279, 0, %v2181
      %v2287 = vsel %vm2279, 0, %v2188
      %v2288 = vsel %vm2279, 0, %v2195
      %v2289 = vsel %vm2279, 0, %v2202
      %v2290 = vsel %vm2279, 0, %v2209
      %v2291 = vsel %vm2279, 0, %v2216
      %v2292 = vsel %vm2279, 0, %v2223
      %v2293 = vsel %vm2279, 0, %v2230
      %v2294 = vsel %vm2279, 0, %v2237
      %v2295 = vsel %vm2279, 0, %v2244
      %v2296 = vsel %vm2279, %v2136, 0
      %v2297 = vsel %vm2279, %v2143, 0
      %v2298 = vsel %vm2279, %v2150, 0
      %v2299 = vsel %vm2279, %v2157, 0
      %v2300 = vsel %vm2279, %v2164, 0
      %v2301 = vsel %vm2279, %v2171, 0
      %v2302 = vsel %vm2279, %v2178, 0
      %v2303 = vsel %vm2279, %v2185, 0
      %v2304 = vsel %vm2279, %v2192, 0
      %v2305 = vsel %vm2279, %v2199, 0
      %v2306 = vsel %vm2279, %v2206, 0
      %v2307 = vsel %vm2279, %v2213, 0
      %v2308 = vsel %vm2279, %v2220, 0
      %v2309 = vsel %vm2279, %v2227, 0
      %v2310 = vsel %vm2279, %v2234, 0
      %v2311 = vsel %vm2279, %v2241, 0
      %v2345 = vunpack.c.l.b16 0
      %v2346 = vunpack.c.h.b16 0
      %v2347 = vunpack.c.l.b16 %v2280
      %v2348 = vunpack.c.h.b16 %v2280
      %v2349 = vunpack.c.l.b16 %v2296
      %v2350 = vunpack.c.l.b16 %v2281
      %v2351 = vunpack.c.h.b16 %v2281
      %v2352 = vunpack.c.l.b16 %v2297
      %v2353 = vunpack.c.l.b16 %v2282
      %v2354 = vunpack.c.h.b16 %v2282
      %v2355 = vunpack.c.l.b16 %v2298
      %v2356 = vunpack.c.l.b16 %v2283
      %v2357 = vunpack.c.h.b16 %v2283
      %v2358 = vunpack.c.l.b16 %v2299
      %v2359 = vunpack.c.l.b16 %v2284
      %v2360 = vunpack.c.h.b16 %v2284
      %v2361 = vunpack.c.l.b16 %v2300
      %v2362 = vunpack.c.l.b16 %v2285
      %v2363 = vunpack.c.h.b16 %v2285
      %v2364 = vunpack.c.l.b16 %v2301
      %v2365 = vunpack.c.l.b16 %v2286
      %v2366 = vunpack.c.h.b16 %v2286
      %v2367 = vunpack.c.l.b16 %v2302
      %v2368 = vunpack.c.l.b16 %v2287
      %v2369 = vunpack.c.h.b16 %v2287
      %v2370 = vunpack.c.l.b16 %v2303
      %v2371 = vunpack.c.l.b16 %v2288
      %v2372 = vunpack.c.h.b16 %v2288
      %v2373 = vunpack.c.l.b16 %v2304
      %v2374 = vunpack.c.l.b16 %v2289
      %v2375 = vunpack.c.h.b16 %v2289
      %v2376 = vunpack.c.l.b16 %v2305
      %v2377 = vunpack.c.l.b16 %v2290
      %v2378 = vunpack.c.h.b16 %v2290
      %v2379 = vunpack.c.l.b16 %v2306
      %v2380 = vunpack.c.l.b16 %v2291
      %v2381 = vunpack.c.h.b16 %v2291
      %v2382 = vunpack.c.l.b16 %v2307
      %v2383 = vunpack.c.l.b16 %v2292
      %v2384 = vunpack.c.h.b16 %v2292
      %v2385 = vunpack.c.l.b16 %v2308
      %v2386 = vunpack.c.l.b16 %v2293
      %v2387 = vunpack.c.h.b16 %v2293
      %v2388 = vunpack.c.l.b16 %v2309
      %v2389 = vunpack.c.l.b16 %v2294
      %v2390 = vunpack.c.h.b16 %v2294
      %v2391 = vunpack.c.l.b16 %v2310
      %v2392 = vunpack.c.l.b16 %v2295
      %v2393 = vunpack.c.h.b16 %v2295
      %v2394 = vunpack.c.l.b16 %v2311
      %v2395 = vpack.c.b16 %v2345, %v2345
      %v2396 = vpack.c.b16 %v2346, %v2346
      %v2397 = vpack.c.b16 %v2347, %v2347
      %v2398 = vpack.c.b16 %v2348, %v2348
      %v2399 = vpack.c.b16 %v2349, %v2349
      %v2400 = vpack.c.b16 %v2350, %v2350
      %v2401 = vpack.c.b16 %v2351, %v2351
      %v2402 = vpack.c.b16 %v2352, %v2352
      %v2403 = vpack.c.b16 %v2353, %v2353
      %v2404 = vpack.c.b16 %v2354, %v2354
      %v2405 = vpack.c.b16 %v2355, %v2355
      %v2406 = vpack.c.b16 %v2356, %v2356
      %v2407 = vpack.c.b16 %v2357, %v2357
      %v2408 = vpack.c.b16 %v2358, %v2358
      %v2409 = vpack.c.b16 %v2359, %v2359
      %v2410 = vpack.c.b16 %v2360, %v2360
      %v2411 = vpack.c.b16 %v2361, %v2361
      %v2412 = vpack.c.b16 %v2362, %v2362
      %v2413 = vpack.c.b16 %v2363, %v2363
      %v2414 = vpack.c.b16 %v2364, %v2364
      %v2415 = vpack.c.b16 %v2365, %v2365
      %v2416 = vpack.c.b16 %v2366, %v2366
      %v2417 = vpack.c.b16 %v2367, %v2367
      %v2418 = vpack.c.b16 %v2368, %v2368
      %v2419 = vpack.c.b16 %v2369, %v2369
      %v2420 = vpack.c.b16 %v2370, %v2370
      %v2421 = vpack.c.b16 %v2371, %v2371
      %v2422 = vpack.c.b16 %v2372, %v2372
      %v2423 = vpack.c.b16 %v2373, %v2373
      %v2424 = vpack.c.b16 %v2374, %v2374
      %v2425 = vpack.c.b16 %v2375, %v2375
      %v2426 = vpack.c.b16 %v2376, %v2376
      %v2427 = vpack.c.b16 %v2377, %v2377
      %v2428 = vpack.c.b16 %v2378, %v2378
      %v2429 = vpack.c.b16 %v2379, %v2379
      %v2430 = vpack.c.b16 %v2380, %v2380
      %v2431 = vpack.c.b16 %v2381, %v2381
      %v2432 = vpack.c.b16 %v2382, %v2382
      %v2433 = vpack.c.b16 %v2383, %v2383
      %v2434 = vpack.c.b16 %v2384, %v2384
      %v2435 = vpack.c.b16 %v2385, %v2385
      %v2436 = vpack.c.b16 %v2386, %v2386
      %v2437 = vpack.c.b16 %v2387, %v2387
      %v2438 = vpack.c.b16 %v2388, %v2388
      %v2439 = vpack.c.b16 %v2389, %v2389
      %v2440 = vpack.c.b16 %v2390, %v2390
      %v2441 = vpack.c.b16 %v2391, %v2391
      %v2442 = vpack.c.b16 %v2392, %v2392
      %v2443 = vpack.c.b16 %v2393, %v2393
      %v2444 = vpack.c.b16 %v2394, %v2394
      %2495 = vst [vmem:[%s224] sm:$0xf] %v2395
      %2496 = vst [vmem:[%s224 + $0x4] sm:$0xf] %v2396
      %2497 = vst [vmem:[%s224 + $0x8] sm:$0x1] %v2395
      %2498 = vst [vmem:[%s224 + $0xc] sm:$0xf] %v2397
      %2499 = vst [vmem:[%s224 + $0x10] sm:$0xf] %v2398
      %2500 = vst [vmem:[%s224 + $0x14] sm:$0x1] %v2399
      %2501 = vst [vmem:[%s224 + $0x18] sm:$0xf] %v2400
      %2502 = vst [vmem:[%s224 + $0x1c] sm:$0xf] %v2401
      %2503 = vst [vmem:[%s224 + $0x20] sm:$0x1] %v2402
      %2504 = vst [vmem:[%s224 + $0x24] sm:$0xf] %v2403
      %2505 = vst [vmem:[%s224 + $0x28] sm:$0xf] %v2404
      %2506 = vst [vmem:[%s224 + $0x2c] sm:$0x1] %v2405
      %2507 = vst [vmem:[%s224 + $0x30] sm:$0xf] %v2406
      %2508 = vst [vmem:[%s224 + $0x34] sm:$0xf] %v2407
      %2509 = vst [vmem:[%s224 + $0x38] sm:$0x1] %v2408
      %2510 = vst [vmem:[%s224 + $0x3c] sm:$0xf] %v2409
      %2511 = vst [vmem:[%s224 + $0x40] sm:$0xf] %v2410
      %2512 = vst [vmem:[%s224 + $0x44] sm:$0x1] %v2411
      %2513 = vst [vmem:[%s224 + $0x48] sm:$0xf] %v2412
      %2514 = vst [vmem:[%s224 + $0x4c] sm:$0xf] %v2413
      %2515 = vst [vmem:[%s224 + $0x50] sm:$0x1] %v2414
      %2516 = vst [vmem:[%s224 + $0x54] sm:$0xf] %v2415
      %2517 = vst [vmem:[%s224 + $0x58] sm:$0xf] %v2416
      %2518 = vst [vmem:[%s224 + $0x5c] sm:$0x1] %v2417
      %2519 = vst [vmem:[%s224 + $0x60] sm:$0xf] %v2418
      %2520 = vst [vmem:[%s224 + $0x64] sm:$0xf] %v2419
      %2521 = vst [vmem:[%s224 + $0x68] sm:$0x1] %v2420
      %2522 = vst [vmem:[%s224 + $0x6c] sm:$0xf] %v2421
      %2523 = vst [vmem:[%s224 + $0x70] sm:$0xf] %v2422
      %2524 = vst [vmem:[%s224 + $0x74] sm:$0x1] %v2423
      %2525 = vst [vmem:[%s224 + $0x78] sm:$0xf] %v2424
      %2526 = vst [vmem:[%s224 + $0x7c] sm:$0xf] %v2425
      %2527 = vst [vmem:[%s224 + $0x80] sm:$0x1] %v2426
      %2528 = vst [vmem:[%s224 + $0x84] sm:$0xf] %v2427
      %2529 = vst [vmem:[%s224 + $0x88] sm:$0xf] %v2428
      %2530 = vst [vmem:[%s224 + $0x8c] sm:$0x1] %v2429
      %2531 = vst [vmem:[%s224 + $0x90] sm:$0xf] %v2430
      %2532 = vst [vmem:[%s224 + $0x94] sm:$0xf] %v2431
      %2533 = vst [vmem:[%s224 + $0x98] sm:$0x1] %v2432
      %2534 = vst [vmem:[%s224 + $0x9c] sm:$0xf] %v2433
      %2535 = vst [vmem:[%s224 + $0xa0] sm:$0xf] %v2434
      %2536 = vst [vmem:[%s224 + $0xa4] sm:$0x1] %v2435
      %2537 = vst [vmem:[%s224 + $0xa8] sm:$0xf] %v2436
      %2538 = vst [vmem:[%s224 + $0xac] sm:$0xf] %v2437
      %2539 = vst [vmem:[%s224 + $0xb0] sm:$0x1] %v2438
      %2540 = vst [vmem:[%s224 + $0xb4] sm:$0xf] %v2439
      %2541 = vst [vmem:[%s224 + $0xb8] sm:$0xf] %v2440
      %2542 = vst [vmem:[%s224 + $0xbc] sm:$0x1] %v2441
      %2543 = vst [vmem:[%s224 + $0xc0] sm:$0xf] %v2442
      %2544 = vst [vmem:[%s224 + $0xc4] sm:$0xf] %v2443
      %2545 = vst [vmem:[%s224 + $0xc8] sm:$0x1] %v2444
      %2546 = vst [vmem:[%s224 + $0xcc] sm:$0xf] %v2395
      %2547 = vst [vmem:[%s224 + $0xd0] sm:$0xf] %v2396
      %2548 = vst [vmem:[%s224 + $0xd4] sm:$0x1] %v2395
      %v2549 = vadd.f32 %v1989, %v1990
      %v2550 = vadd.f32 %v2549, %v1991
      %v2551 = vadd.f32 %v2550, %v1992
      %v2552 = vadd.f32 %v2551, %v1993
      %v2553 = vadd.f32 %v2552, %v1994
      %v2554 = vadd.f32 %v2553, %v1995
      %v2555 = vadd.f32 %v2554, %v1996
      %v2556 = vadd.f32 %v2555, %v1997
      %v2557 = vadd.f32 %v2556, %v1998
      %v2558 = vadd.f32 %v2557, %v1999
      %v2559 = vadd.f32 %v2558, %v2000
      %v2560 = vadd.f32 %v2559, %v2001
      %v2561 = vadd.f32 %v2560, %v2002
      %v2562 = vadd.f32 %v2561, %v2003
      %v2563 = vadd.f32 %v2562, %v2004
      %v2564 = vadd.f32 %v2563, %v2005
      %v2565 = vadd.f32 %v2564, %v2006
      %v2566 = vadd.f32 %v2565, %v2007
      %v2567 = vadd.f32 %v2566, %v2008
      %v2568 = vadd.f32 %v2567, %v2009
      %v2569 = vadd.f32 %v2568, %v2010
      %v2570 = vadd.f32 %v2569, %v2011
      %v2571 = vadd.f32 %v2570, %v2012
      %v2572 = vadd.f32 %v2571, %v2013
      %v2573 = vadd.f32 %v2572, %v2014
      %v2574 = vadd.f32 %v2573, %v2015
      %v2575 = vadd.f32 %v2574, %v2016
      %v2576 = vadd.f32 %v2575, %v2017
      %v2577 = vadd.f32 %v2576, %v2018
      %v2578 = vadd.f32 %v2577, %v2019
      %v2579 = vadd.f32 %v2578, %v2020
      %v2580 = vrot.slane %v2579, 4
      %v2581 = vadd.f32 %v2579, %v2580
      %v2582 = vrot.slane %v2581, 2
      %v2583 = vadd.f32 %v2581, %v2582
      %v2584 = vrot.slane %v2583, 1
      %v2585 = vadd.f32 %v2583, %v2584
      %v2586 = vmul.f32 %v1989, %v1989
      %v2587 = vmul.f32 %v1990, %v1990
      %v2588 = vmul.f32 %v1991, %v1991
      %v2589 = vmul.f32 %v1992, %v1992
      %v2590 = vmul.f32 %v1993, %v1993
      %v2591 = vmul.f32 %v1994, %v1994
      %v2592 = vmul.f32 %v1995, %v1995
      %v2593 = vmul.f32 %v1996, %v1996
      %v2594 = vmul.f32 %v1997, %v1997
      %v2595 = vmul.f32 %v1998, %v1998
      %v2596 = vmul.f32 %v1999, %v1999
      %v2597 = vmul.f32 %v2000, %v2000
      %v2598 = vmul.f32 %v2001, %v2001
      %v2599 = vmul.f32 %v2002, %v2002
      %v2600 = vmul.f32 %v2003, %v2003
      %v2601 = vmul.f32 %v2004, %v2004
      %v2602 = vmul.f32 %v2005, %v2005
      %v2603 = vmul.f32 %v2006, %v2006
      %v2604 = vmul.f32 %v2007, %v2007
      %v2605 = vmul.f32 %v2008, %v2008
      %v2606 = vmul.f32 %v2009, %v2009
      %v2607 = vmul.f32 %v2010, %v2010
      %v2608 = vmul.f32 %v2011, %v2011
      %v2609 = vmul.f32 %v2012, %v2012
      %v2610 = vmul.f32 %v2013, %v2013
      %v2611 = vmul.f32 %v2014, %v2014
      %v2612 = vmul.f32 %v2015, %v2015
      %v2613 = vmul.f32 %v2016, %v2016
      %v2614 = vmul.f32 %v2017, %v2017
      %v2615 = vmul.f32 %v2018, %v2018
      %v2616 = vmul.f32 %v2019, %v2019
      %v2617 = vmul.f32 %v2020, %v2020
      %v2618 = vadd.f32 %v2586, %v2587
      %v2619 = vadd.f32 %v2618, %v2588
      %v2620 = vadd.f32 %v2619, %v2589
      %v2621 = vadd.f32 %v2620, %v2590
      %v2622 = vadd.f32 %v2621, %v2591
      %v2623 = vadd.f32 %v2622, %v2592
      %v2624 = vadd.f32 %v2623, %v2593
      %v2625 = vadd.f32 %v2624, %v2594
      %v2626 = vadd.f32 %v2625, %v2595
      %v2627 = vadd.f32 %v2626, %v2596
      %v2628 = vadd.f32 %v2627, %v2597
      %v2629 = vadd.f32 %v2628, %v2598
      %v2630 = vadd.f32 %v2629, %v2599
      %v2631 = vadd.f32 %v2630, %v2600
      %v2632 = vadd.f32 %v2631, %v2601
      %v2633 = vadd.f32 %v2632, %v2602
      %v2634 = vadd.f32 %v2633, %v2603
      %v2635 = vadd.f32 %v2634, %v2604
      %v2636 = vadd.f32 %v2635, %v2605
      %v2637 = vadd.f32 %v2636, %v2606
      %v2638 = vadd.f32 %v2637, %v2607
      %v2639 = vadd.f32 %v2638, %v2608
      %v2640 = vadd.f32 %v2639, %v2609
      %v2641 = vadd.f32 %v2640, %v2610
      %v2642 = vadd.f32 %v2641, %v2611
      %v2643 = vadd.f32 %v2642, %v2612
      %v2644 = vadd.f32 %v2643, %v2613
      %v2645 = vadd.f32 %v2644, %v2614
      %v2646 = vadd.f32 %v2645, %v2615
      %v2647 = vadd.f32 %v2646, %v2616
      %v2648 = vadd.f32 %v2647, %v2617
      %v2649 = vrot.slane %v2648, 4
      %v2650 = vadd.f32 %v2648, %v2649
      %v2651 = vrot.slane %v2650, 2
      %v2652 = vadd.f32 %v2650, %v2651
      %v2653 = vrot.slane %v2652, 1
      %v2654 = vadd.f32 %v2652, %v2653
      %vm2655 = vcmask 1040384
      %v2656 = vsel %vm2655, %v2585, %v2654
      %vm2657 = vcmask 1041408
      %v2658 = vsel %vm2657, %v2656, 0.0
      %2659 = vst [vmem:[%s228] sm:$0xff] %v2658
      %p2660 = scmp.lt.s32.totalorder %s16, 1
      %s2661 = scalar_select %p2660, %s16, 1
      %s2662 = smul.addr %s2661, 54
      %s2663 = smul.addr %s2662, 4
      %s2664 = scalar_lea.vmem %s3, %s2663
      %p2665 = scmp.lt.s32.totalorder %s16, 1
      %s2666 = scalar_select %p2665, %s16, 1
      %s2667 = smul.addr %s2666, 8
      %s2668 = scalar_lea.vmem %s4, %s2667
      // Predicated region
      $region33: #{up_block_forward.3} parent=31 // pred_check
        %p2669 = pneg %p107
      $region34: #{up_block_forward.3} parent=31 // pred_check_branch
        %2671 = sbr.rel (%p2669) target = $region36
      $region35: #{up_block_forward.3} parent=31 // pred_region
        _
      $region36: #{up_block_forward.3} parent=31 // pred_fallthru
        _
      // Predicated region
      $region37: #{up_block_forward.3} parent=31 // pred_check
        %p2672 = pneg %p133
      $region38: #{up_block_forward.3} parent=31 // pred_check_branch
        %2674 = sbr.rel (%p2672) target = $region40
      $region39: #{up_block_forward.3} parent=31 // pred_region
        _
      $region40: #{up_block_forward.3} parent=31 // pred_fallthru
        _
    $region32: #{up_block_forward.3} parent=5 // pred_fallthru
      _
    %p2675 = scmp.le.s32.totalorder 2, %s11
    // Predicated region
    $region41: #{up_block_forward.3} parent=5 // pred_check
      %p2676 = pneg %p2675
    $region42: #{up_block_forward.3} parent=5 // pred_check_branch
      %2678 = sbr.rel (%p2676) target = $region44
    $region43: #{up_block_forward.3} parent=5 // pred_region
      %s2679 = ssub.s32 %s11, 2
      // Predicated region
      $region45: #{up_block_forward.3} parent=43 // pred_check
        %p2680 = pneg %p113
      $region46: #{up_block_forward.3} parent=43 // pred_check_branch
        %2682 = sbr.rel (%p2680) target = $region48
      $region47: #{up_block_forward.3} parent=43 // pred_region
        %p2683 = scmp.lt.s32.totalorder %s17, 1
        %s2684 = scalar_select %p2683, %s17, 1
        %s2685 = smul.addr %s2684, 54
        %s2686 = smul.addr %s2685, 4
        %s2687 = scalar_lea.vmem %s3, %s2686
      $region48: #{up_block_forward.3} parent=43 // pred_fallthru
        _
      // Predicated region
      $region49: #{up_block_forward.3} parent=43 // pred_check
        %p2688 = pneg %p139
      $region50: #{up_block_forward.3} parent=43 // pred_check_branch
        %2690 = sbr.rel (%p2688) target = $region52
      $region51: #{up_block_forward.3} parent=43 // pred_region
        %p2691 = scmp.lt.s32.totalorder %s17, 1
        %s2692 = scalar_select %p2691, %s17, 1
        %s2693 = smul.addr %s2692, 8
        %s2694 = scalar_lea.vmem %s4, %s2693
      $region52: #{up_block_forward.3} parent=43 // pred_fallthru
        _
    $region44: #{up_block_forward.3} parent=5 // pred_fallthru
      _
  $region6: #{up_block_forward.3} parent=0 // loop_footer
    %s15 = sadd.s32 1, %s11
  $region7: #{up_block_forward.3} parent=0 // loop_footer_branch
    %10 = sbr.rel target = $region3
  $region8: #{up_block_forward.3} parent=0 // loop_exit
    _

// kernel: up_block_forward.4
$region0: #{up_block_forward.4}
  #allocation0 [shape = 'u32[]', space=smem, size = 0x4, offset = 0x4, fixed_abs, tag = 'smem constant byte address 0x4 - core index']
  #allocation1 [shape = 'u32[72,128]{1,0:T(1,128)}', space=vmem, size = 0x9000, scoped, tag = 'internal scratch']
  %s0 = inlined_call_operand.vmem [shape: bf16[2,18,18,128], index: 0, kind: input, shape index: {}]
  %s1 = inlined_call_operand.vmem [shape: bf16[3,384,128], index: 1, kind: input, shape index: {}]
  %s2 = inlined_call_operand.vmem [shape: f32[1,1,128], index: 2, kind: input, shape index: {}]
  %s3 = inlined_call_operand.vmem [shape: f32[1,1,128], index: 3, kind: input, shape index: {}]
  %s4 = inlined_call_operand.vmem [shape: bf16[2,256,128], index: 4, kind: output, shape index: {0}]
  %s5 = inlined_call_operand.vmem [shape: f32[2,8,128], index: 5, kind: output, shape index: {1}]
  %6 = xla_tuple %s4, %s5
  %s7 = sld [smem:[#allocation0]]
  $region57: #{up_block_forward.4} parent=0
    _
  %s9 = ssub.s32 1, %s7
  %s10 = scalar_select 0, %s9, %s7
  loop: start=0, step=1, limit=4
  $region2: #{up_block_forward.4} parent=0 // loop_pre_header
    _
  $region3: #{up_block_forward.4} parent=0 // loop_header
    %s12 = sphi 0, %s16
    %p13 = scmp.ge.s32.totalorder %s12, 4
    %s22 = sphi 0, %s24
    %s25 = sphi 0, %s22
    %s26 = sphi 0, %s25
    %s42 = sphi 0, %s26
    %s46 = sphi 0, %s46
    %s48 = sphi 0, %s46
    %s49 = sphi 0, %s48
    %s63 = sphi 0, %s49
    %s67 = sphi 0, %s67
    %s69 = sphi 0, %s67
    %s70 = sphi 0, %s69
    %s84 = sphi 0, %s70
    %s88 = sphi 0, %s88
    %s90 = sphi 0, %s88
    %s91 = sphi 0, %s90
    %s105 = sphi 0, %s91
    %s111 = sphi 0, %s113
    %s114 = sphi 0, %s111
    %s115 = sphi 0, %s114
    %s131 = sphi 0, %s115
    %s137 = sphi 0, %s139
    %s140 = sphi 0, %s137
    %s141 = sphi 0, %s140
    %s157 = sphi 0, %s141
  $region4: #{up_block_forward.4} parent=0 // loop_header_branch
    %15 = sbr.rel (%p13) target = $region8
  $region5: #{up_block_forward.4} parent=0 // loop_body
    %s17 = ssub.s32 %s12, 1
    %s18 = ssub.s32 %s12, 2
    %s19 = sadd.s32 %s12, 1
    %s20 = ssub.s32 %s12, %s19
    %p21 = scmp.eq.s32.totalorder %s20, 0
    %s23 = sadd.s32 %s22, 1
    %s24 = scalar_select %p21, %s22, %s23
    %p27 = pneg %p21
    %p28 = scmp.eq.s32.totalorder %s12, 1
    %p29 = por %p27, %p28
    %p30 = scmp.ne.s32.totalorder %s22, %s25
    %p31 = scmp.eq.s32.totalorder %s12, 0
    %p32 = por %p30, %p31
    %p33 = scmp.ne.s32.totalorder %s22, %s25
    %p34 = scmp.eq.s32.totalorder %s17, 1
    %p35 = por %p33, %p34
    %p36 = scmp.ne.s32.totalorder %s25, %s26
    %p37 = scmp.eq.s32.totalorder %s17, 0
    %p38 = por %p36, %p37
    %p39 = scmp.ne.s32.totalorder %s25, %s26
    %p40 = scmp.eq.s32.totalorder %s18, 1
    %p41 = por %p39, %p40
    %p43 = scmp.ne.s32.totalorder %s26, %s42
    %p44 = scmp.eq.s32.totalorder %s18, 0
    %p45 = por %p43, %p44
    %s47 = sadd.s32 %s46, 1
    %p50 = scmp.eq.s32.totalorder %s12, 1
    %p51 = scmp.ne.s32.totalorder %s46, %s48
    %p52 = scmp.eq.s32.totalorder %s12, 0
    %p53 = por %p51, %p52
    %p54 = scmp.ne.s32.totalorder %s46, %s48
    %p55 = scmp.eq.s32.totalorder %s17, 1
    %p56 = por %p54, %p55
    %p57 = scmp.ne.s32.totalorder %s48, %s49
    %p58 = scmp.eq.s32.totalorder %s17, 0
    %p59 = por %p57, %p58
    %p60 = scmp.ne.s32.totalorder %s48, %s49
    %p61 = scmp.eq.s32.totalorder %s18, 1
    %p62 = por %p60, %p61
    %p64 = scmp.ne.s32.totalorder %s49, %s63
    %p65 = scmp.eq.s32.totalorder %s18, 0
    %p66 = por %p64, %p65
    %s68 = sadd.s32 %s67, 1
    %p71 = scmp.eq.s32.totalorder %s12, 1
    %p72 = scmp.ne.s32.totalorder %s67, %s69
    %p73 = scmp.eq.s32.totalorder %s12, 0
    %p74 = por %p72, %p73
    %p75 = scmp.ne.s32.totalorder %s67, %s69
    %p76 = scmp.eq.s32.totalorder %s17, 1
    %p77 = por %p75, %p76
    %p78 = scmp.ne.s32.totalorder %s69, %s70
    %p79 = scmp.eq.s32.totalorder %s17, 0
    %p80 = por %p78, %p79
    %p81 = scmp.ne.s32.totalorder %s69, %s70
    %p82 = scmp.eq.s32.totalorder %s18, 1
    %p83 = por %p81, %p82
    %p85 = scmp.ne.s32.totalorder %s70, %s84
    %p86 = scmp.eq.s32.totalorder %s18, 0
    %p87 = por %p85, %p86
    %s89 = sadd.s32 %s88, 1
    %p92 = scmp.eq.s32.totalorder %s12, 1
    %p93 = scmp.ne.s32.totalorder %s88, %s90
    %p94 = scmp.eq.s32.totalorder %s12, 0
    %p95 = por %p93, %p94
    %p96 = scmp.ne.s32.totalorder %s88, %s90
    %p97 = scmp.eq.s32.totalorder %s17, 1
    %p98 = por %p96, %p97
    %p99 = scmp.ne.s32.totalorder %s90, %s91
    %p100 = scmp.eq.s32.totalorder %s17, 0
    %p101 = por %p99, %p100
    %p102 = scmp.ne.s32.totalorder %s90, %s91
    %p103 = scmp.eq.s32.totalorder %s18, 1
    %p104 = por %p102, %p103
    %p106 = scmp.ne.s32.totalorder %s91, %s105
    %p107 = scmp.eq.s32.totalorder %s18, 0
    %p108 = por %p106, %p107
    %s109 = ssub.s32 %s12, %s19
    %p110 = scmp.eq.s32.totalorder %s109, 0
    %s112 = sadd.s32 %s111, 1
    %s113 = scalar_select %p110, %s111, %s112
    %p116 = pneg %p110
    %p117 = scmp.eq.s32.totalorder %s12, 1
    %p118 = por %p116, %p117
    %p119 = scmp.ne.s32.totalorder %s111, %s114
    %p120 = scmp.eq.s32.totalorder %s12, 0
    %p121 = por %p119, %p120
    %p122 = scmp.ne.s32.totalorder %s111, %s114
    %p123 = scmp.eq.s32.totalorder %s17, 1
    %p124 = por %p122, %p123
    %p125 = scmp.ne.s32.totalorder %s114, %s115
    %p126 = scmp.eq.s32.totalorder %s17, 0
    %p127 = por %p125, %p126
    %p128 = scmp.ne.s32.totalorder %s114, %s115
    %p129 = scmp.eq.s32.totalorder %s18, 1
    %p130 = por %p128, %p129
    %p132 = scmp.ne.s32.totalorder %s115, %s131
    %p133 = scmp.eq.s32.totalorder %s18, 0
    %p134 = por %p132, %p133
    %s135 = ssub.s32 %s12, %s19
    %p136 = scmp.eq.s32.totalorder %s135, 0
    %s138 = sadd.s32 %s137, 1
    %s139 = scalar_select %p136, %s137, %s138
    %p142 = pneg %p136
    %p143 = scmp.eq.s32.totalorder %s12, 1
    %p144 = por %p142, %p143
    %p145 = scmp.ne.s32.totalorder %s137, %s140
    %p146 = scmp.eq.s32.totalorder %s12, 0
    %p147 = por %p145, %p146
    %p148 = scmp.ne.s32.totalorder %s137, %s140
    %p149 = scmp.eq.s32.totalorder %s17, 1
    %p150 = por %p148, %p149
    %p151 = scmp.ne.s32.totalorder %s140, %s141
    %p152 = scmp.eq.s32.totalorder %s17, 0
    %p153 = por %p151, %p152
    %p154 = scmp.ne.s32.totalorder %s140, %s141
    %p155 = scmp.eq.s32.totalorder %s18, 1
    %p156 = por %p154, %p155
    %p158 = scmp.ne.s32.totalorder %s141, %s157
    %p159 = scmp.eq.s32.totalorder %s18, 0
    %p160 = por %p158, %p159
    %p161 = scmp.le.s32.totalorder 1, %s12
    %p162 = scmp.lt.s32.totalorder %s12, 3
    %p163 = pnand %p161, %p162
    %p164 = pneg %p163
    // Predicated region
    $region9: #{up_block_forward.4} parent=5 // pred_check
      _
    $region10: #{up_block_forward.4} parent=5 // pred_check_branch
      %166 = sbr.rel (%p163) target = $region12
    $region11: #{up_block_forward.4} parent=5 // pred_region
      %s167 = ssub.s32 %s12, 1
      // Predicated region
      $region13: #{up_block_forward.4} parent=11 // pred_check
        %p168 = pneg %p59
      $region14: #{up_block_forward.4} parent=11 // pred_check_branch
        %170 = sbr.rel (%p168) target = $region16
      $region15: #{up_block_forward.4} parent=11 // pred_region
        _
      $region16: #{up_block_forward.4} parent=11 // pred_fallthru
        _
      // Predicated region
      $region17: #{up_block_forward.4} parent=11 // pred_check
        %p171 = pneg %p80
      $region18: #{up_block_forward.4} parent=11 // pred_check_branch
        %173 = sbr.rel (%p171) target = $region20
      $region19: #{up_block_forward.4} parent=11 // pred_region
        _
      $region20: #{up_block_forward.4} parent=11 // pred_fallthru
        _
      // Predicated region
      $region21: #{up_block_forward.4} parent=11 // pred_check
        %p174 = pneg %p101
      $region22: #{up_block_forward.4} parent=11 // pred_check_branch
        %176 = sbr.rel (%p174) target = $region24
      $region23: #{up_block_forward.4} parent=11 // pred_region
        _
      $region24: #{up_block_forward.4} parent=11 // pred_fallthru
        _
    $region12: #{up_block_forward.4} parent=5 // pred_fallthru
      _
    %p177 = scmp.lt.s32.totalorder %s12, 2
    // Predicated region
    $region25: #{up_block_forward.4} parent=5 // pred_check
      %p178 = pneg %p177
    $region26: #{up_block_forward.4} parent=5 // pred_check_branch
      %180 = sbr.rel (%p178) target = $region28
    $region27: #{up_block_forward.4} parent=5 // pred_region
      // Predicated region
      $region29: #{up_block_forward.4} parent=27 // pred_check
        %p181 = pneg %p32
      $region30: #{up_block_forward.4} parent=27 // pred_check_branch
        %183 = sbr.rel (%p181) target = $region32
      $region31: #{up_block_forward.4} parent=27 // pred_region
        %p184 = scmp.lt.s32.totalorder %s12, 1
        %s185 = scalar_select %p184, %s12, 1
        %s186 = smul.addr %s185, 54
        %s187 = smul.addr %s186, 4
        %s188 = scalar_lea.vmem %s0, %s187
      $region32: #{up_block_forward.4} parent=27 // pred_fallthru
        _
    $region28: #{up_block_forward.4} parent=5 // pred_fallthru
      _
    %p189 = scmp.le.s32.totalorder 1, %s12
    %p190 = scmp.lt.s32.totalorder %s12, 3
    %p191 = pnand %p189, %p190
    %p192 = pneg %p191
    // Predicated region
    $region33: #{up_block_forward.4} parent=5 // pred_check
      _
    $region34: #{up_block_forward.4} parent=5 // pred_check_branch
      %194 = sbr.rel (%p191) target = $region36
    $region35: #{up_block_forward.4} parent=5 // pred_region
      %s195 = ssub.s32 %s12, 1
      %p196 = scmp.lt.s32.totalorder %s17, 1
      %s197 = scalar_select %p196, %s17, 1
      %s198 = smul.addr %s197, 54
      %s199 = smul.addr %s198, 4
      %s200 = scalar_lea.vmem %s0, %s199
      %p201 = pneg %p38
      %p202 = pneg %p35
      %p203 = pneg %p59
      %p204 = pneg %p56
      %p205 = pneg %p80
      %p206 = pneg %p77
      %p207 = pneg %p101
      %p208 = pneg %p98
      %p209 = pneg %p127
      %p210 = pneg %p124
      %p211 = scmp.lt.s32.totalorder %s17, 1
      %s212 = scalar_select %p211, %s17, 1
      %s213 = smul.addr %s212, 32
      %s214 = smul.addr %s213, 4
      %s215 = scalar_lea.vmem %s4, %s214
      %p216 = pneg %p153
      %p217 = pneg %p150
      %p218 = scmp.lt.s32.totalorder %s17, 1
      %s219 = scalar_select %p218, %s17, 1
      %s220 = smul.addr %s219, 8
      %s221 = scalar_lea.vmem %s5, %s220
      %p222 = scmp.lt.s32.totalorder %s17, 1
      %s223 = scalar_select %p222, %s17, 1
      %s224 = smul.addr %s223, 54
      %s225 = smul.addr %s224, 4
      %s226 = scalar_lea.vmem %s0, %s225
      %p227 = scmp.lt.s32.totalorder %s17, 1
      %s228 = scalar_select %p227, %s17, 1
      %s229 = smul.addr %s228, 32
      %s230 = smul.addr %s229, 4
      %s231 = scalar_lea.vmem %s4, %s230
      %p232 = scmp.lt.s32.totalorder %s17, 1
      %s233 = scalar_select %p232, %s17, 1
      %s234 = smul.addr %s233, 8
      %s235 = scalar_lea.vmem %s5, %s234
      %v237 = vld [vmem:[%s226 + $0xc] sm:$0xf]
      %v238 = vld [vmem:[%s226 + $0x10] sm:$0xf]
      %v239 = vld [vmem:[%s226 + $0x14] sm:$0x1]
      %v240 = vld [vmem:[%s226 + $0x18] sm:$0xf]
      %v241 = vld [vmem:[%s226 + $0x1c] sm:$0xf]
      %v242 = vld [vmem:[%s226 + $0x20] sm:$0x1]
      %v243 = vld [vmem:[%s226 + $0x24] sm:$0xf]
      %v244 = vld [vmem:[%s226 + $0x28] sm:$0xf]
      %v245 = vld [vmem:[%s226 + $0x2c] sm:$0x1]
      %v246 = vld [vmem:[%s226 + $0x30] sm:$0xf]
      %v247 = vld [vmem:[%s226 + $0x34] sm:$0xf]
      %v248 = vld [vmem:[%s226 + $0x38] sm:$0x1]
      %v249 = vld [vmem:[%s226 + $0x3c] sm:$0xf]
      %v250 = vld [vmem:[%s226 + $0x40] sm:$0xf]
      %v251 = vld [vmem:[%s226 + $0x44] sm:$0x1]
      %v252 = vld [vmem:[%s226 + $0x48] sm:$0xf]
      %v253 = vld [vmem:[%s226 + $0x4c] sm:$0xf]
      %v254 = vld [vmem:[%s226 + $0x50] sm:$0x1]
      %v255 = vld [vmem:[%s226 + $0x54] sm:$0xf]
      %v256 = vld [vmem:[%s226 + $0x58] sm:$0xf]
      %v257 = vld [vmem:[%s226 + $0x5c] sm:$0x1]
      %v258 = vld [vmem:[%s226 + $0x60] sm:$0xf]
      %v259 = vld [vmem:[%s226 + $0x64] sm:$0xf]
      %v260 = vld [vmem:[%s226 + $0x68] sm:$0x1]
      %v261 = vld [vmem:[%s226 + $0x6c] sm:$0xf]
      %v262 = vld [vmem:[%s226 + $0x70] sm:$0xf]
      %v263 = vld [vmem:[%s226 + $0x74] sm:$0x1]
      %v264 = vld [vmem:[%s226 + $0x78] sm:$0xf]
      %v265 = vld [vmem:[%s226 + $0x7c] sm:$0xf]
      %v266 = vld [vmem:[%s226 + $0x80] sm:$0x1]
      %v267 = vld [vmem:[%s226 + $0x84] sm:$0xf]
      %v268 = vld [vmem:[%s226 + $0x88] sm:$0xf]
      %v269 = vld [vmem:[%s226 + $0x8c] sm:$0x1]
      %v270 = vld [vmem:[%s226 + $0x90] sm:$0xf]
      %v271 = vld [vmem:[%s226 + $0x94] sm:$0xf]
      %v272 = vld [vmem:[%s226 + $0x98] sm:$0x1]
      %v273 = vld [vmem:[%s226 + $0x9c] sm:$0xf]
      %v274 = vld [vmem:[%s226 + $0xa0] sm:$0xf]
      %v275 = vld [vmem:[%s226 + $0xa4] sm:$0x1]
      %v276 = vld [vmem:[%s226 + $0xa8] sm:$0xf]
      %v277 = vld [vmem:[%s226 + $0xac] sm:$0xf]
      %v278 = vld [vmem:[%s226 + $0xb0] sm:$0x1]
      %v279 = vld [vmem:[%s226 + $0xb4] sm:$0xf]
      %v280 = vld [vmem:[%s226 + $0xb8] sm:$0xf]
      %v281 = vld [vmem:[%s226 + $0xbc] sm:$0x1]
      %v282 = vld [vmem:[%s226 + $0xc0] sm:$0xf]
      %v283 = vld [vmem:[%s226 + $0xc4] sm:$0xf]
      %v284 = vld [vmem:[%s226 + $0xc8] sm:$0x1]
      %v285 = vunpack.c.l.bf16 %v237
      %v286 = vunpack.c.l.bf16 %v238
      %v287 = vunpack.c.l.bf16 %v239
      %v288 = vunpack.c.l.bf16 %v240
      %v289 = vunpack.c.l.bf16 %v241
      %v290 = vunpack.c.l.bf16 %v242
      %v291 = vunpack.c.l.bf16 %v243
      %v292 = vunpack.c.l.bf16 %v244
      %v293 = vunpack.c.l.bf16 %v245
      %v294 = vunpack.c.l.bf16 %v246
      %v295 = vunpack.c.l.bf16 %v247
      %v296 = vunpack.c.l.bf16 %v248
      %v297 = vunpack.c.l.bf16 %v249
      %v298 = vunpack.c.l.bf16 %v250
      %v299 = vunpack.c.l.bf16 %v251
      %v300 = vunpack.c.l.bf16 %v252
      %v301 = vunpack.c.l.bf16 %v253
      %v302 = vunpack.c.l.bf16 %v254
      %v303 = vunpack.c.l.bf16 %v255
      %v304 = vunpack.c.l.bf16 %v256
      %v305 = vunpack.c.l.bf16 %v257
      %v306 = vunpack.c.l.bf16 %v258
      %v307 = vunpack.c.l.bf16 %v259
      %v308 = vunpack.c.l.bf16 %v260
      %v309 = vunpack.c.l.bf16 %v261
      %v310 = vunpack.c.l.bf16 %v262
      %v311 = vunpack.c.l.bf16 %v263
      %v312 = vunpack.c.l.bf16 %v264
      %v313 = vunpack.c.l.bf16 %v265
      %v314 = vunpack.c.l.bf16 %v266
      %v315 = vunpack.c.l.bf16 %v267
      %v316 = vunpack.c.l.bf16 %v268
      %v317 = vunpack.c.l.bf16 %v269
      %v318 = vunpack.c.l.bf16 %v270
      %v319 = vunpack.c.l.bf16 %v271
      %v320 = vunpack.c.l.bf16 %v272
      %v321 = vunpack.c.l.bf16 %v273
      %v322 = vunpack.c.l.bf16 %v274
      %v323 = vunpack.c.l.bf16 %v275
      %v324 = vunpack.c.l.bf16 %v276
      %v325 = vunpack.c.l.bf16 %v277
      %v326 = vunpack.c.l.bf16 %v278
      %v327 = vunpack.c.l.bf16 %v279
      %v328 = vunpack.c.l.bf16 %v280
      %v329 = vunpack.c.l.bf16 %v281
      %v330 = vunpack.c.l.bf16 %v282
      %v331 = vunpack.c.l.bf16 %v283
      %v332 = vunpack.c.l.bf16 %v284
      %v333 = vld [vmem:[%s2] sm:$0x1]
      %v335 = vperm.slane %v333, 0
      %v337 = vmul.f32 %v285, %v335
      %v338 = vmul.f32 %v286, %v335
      %v339 = vmul.f32 %v287, %v335
      %v340 = vmul.f32 %v288, %v335
      %v341 = vmul.f32 %v289, %v335
      %v342 = vmul.f32 %v290, %v335
      %v343 = vmul.f32 %v291, %v335
      %v344 = vmul.f32 %v292, %v335
      %v345 = vmul.f32 %v293, %v335
      %v346 = vmul.f32 %v294, %v335
      %v347 = vmul.f32 %v295, %v335
      %v348 = vmul.f32 %v296, %v335
      %v349 = vmul.f32 %v297, %v335
      %v350 = vmul.f32 %v298, %v335
      %v351 = vmul.f32 %v299, %v335
      %v352 = vmul.f32 %v300, %v335
      %v353 = vmul.f32 %v301, %v335
      %v354 = vmul.f32 %v302, %v335
      %v355 = vmul.f32 %v303, %v335
      %v356 = vmul.f32 %v304, %v335
      %v357 = vmul.f32 %v305, %v335
      %v358 = vmul.f32 %v306, %v335
      %v359 = vmul.f32 %v307, %v335
      %v360 = vmul.f32 %v308, %v335
      %v361 = vmul.f32 %v309, %v335
      %v362 = vmul.f32 %v310, %v335
      %v363 = vmul.f32 %v311, %v335
      %v364 = vmul.f32 %v312, %v335
      %v365 = vmul.f32 %v313, %v335
      %v366 = vmul.f32 %v314, %v335
      %v367 = vmul.f32 %v315, %v335
      %v368 = vmul.f32 %v316, %v335
      %v369 = vmul.f32 %v317, %v335
      %v370 = vmul.f32 %v318, %v335
      %v371 = vmul.f32 %v319, %v335
      %v372 = vmul.f32 %v320, %v335
      %v373 = vmul.f32 %v321, %v335
      %v374 = vmul.f32 %v322, %v335
      %v375 = vmul.f32 %v323, %v335
      %v376 = vmul.f32 %v324, %v335
      %v377 = vmul.f32 %v325, %v335
      %v378 = vmul.f32 %v326, %v335
      %v379 = vmul.f32 %v327, %v335
      %v380 = vmul.f32 %v328, %v335
      %v381 = vmul.f32 %v329, %v335
      %v382 = vmul.f32 %v330, %v335
      %v383 = vmul.f32 %v331, %v335
      %v384 = vmul.f32 %v332, %v335
      %v385 = vld [vmem:[%s3] sm:$0x1]
      %v387 = vperm.slane %v385, 0
      %v389 = vadd.f32 %v337, %v387
      %v390 = vadd.f32 %v338, %v387
      %v391 = vadd.f32 %v339, %v387
      %v392 = vadd.f32 %v340, %v387
      %v393 = vadd.f32 %v341, %v387
      %v394 = vadd.f32 %v342, %v387
      %v395 = vadd.f32 %v343, %v387
      %v396 = vadd.f32 %v344, %v387
      %v397 = vadd.f32 %v345, %v387
      %v398 = vadd.f32 %v346, %v387
      %v399 = vadd.f32 %v347, %v387
      %v400 = vadd.f32 %v348, %v387
      %v401 = vadd.f32 %v349, %v387
      %v402 = vadd.f32 %v350, %v387
      %v403 = vadd.f32 %v351, %v387
      %v404 = vadd.f32 %v352, %v387
      %v405 = vadd.f32 %v353, %v387
      %v406 = vadd.f32 %v354, %v387
      %v407 = vadd.f32 %v355, %v387
      %v408 = vadd.f32 %v356, %v387
      %v409 = vadd.f32 %v357, %v387
      %v410 = vadd.f32 %v358, %v387
      %v411 = vadd.f32 %v359, %v387
      %v412 = vadd.f32 %v360, %v387
      %v413 = vadd.f32 %v361, %v387
      %v414 = vadd.f32 %v362, %v387
      %v415 = vadd.f32 %v363, %v387
      %v416 = vadd.f32 %v364, %v387
      %v417 = vadd.f32 %v365, %v387
      %v418 = vadd.f32 %v366, %v387
      %v419 = vadd.f32 %v367, %v387
      %v420 = vadd.f32 %v368, %v387
      %v421 = vadd.f32 %v369, %v387
      %v422 = vadd.f32 %v370, %v387
      %v423 = vadd.f32 %v371, %v387
      %v424 = vadd.f32 %v372, %v387
      %v425 = vadd.f32 %v373, %v387
      %v426 = vadd.f32 %v374, %v387
      %v427 = vadd.f32 %v375, %v387
      %v428 = vadd.f32 %v376, %v387
      %v429 = vadd.f32 %v377, %v387
      %v430 = vadd.f32 %v378, %v387
      %v431 = vadd.f32 %v379, %v387
      %v432 = vadd.f32 %v380, %v387
      %v433 = vadd.f32 %v381, %v387
      %v434 = vadd.f32 %v382, %v387
      %v435 = vadd.f32 %v383, %v387
      %v436 = vadd.f32 %v384, %v387
      %v437 = vxor.u32 %v389, 2147483648
      %v438 = vxor.u32 %v390, 2147483648
      %v439 = vxor.u32 %v391, 2147483648
      %v440 = vxor.u32 %v392, 2147483648
      %v441 = vxor.u32 %v393, 2147483648
      %v442 = vxor.u32 %v394, 2147483648
      %v443 = vxor.u32 %v395, 2147483648
      %v444 = vxor.u32 %v396, 2147483648
      %v445 = vxor.u32 %v397, 2147483648
      %v446 = vxor.u32 %v398, 2147483648
      %v447 = vxor.u32 %v399, 2147483648
      %v448 = vxor.u32 %v400, 2147483648
      %v449 = vxor.u32 %v401, 2147483648
      %v450 = vxor.u32 %v402, 2147483648
      %v451 = vxor.u32 %v403, 2147483648
      %v452 = vxor.u32 %v404, 2147483648
      %v453 = vxor.u32 %v405, 2147483648
      %v454 = vxor.u32 %v406, 2147483648
      %v455 = vxor.u32 %v407, 2147483648
      %v456 = vxor.u32 %v408, 2147483648
      %v457 = vxor.u32 %v409, 2147483648
      %v458 = vxor.u32 %v410, 2147483648
      %v459 = vxor.u32 %v411, 2147483648
      %v460 = vxor.u32 %v412, 2147483648
      %v461 = vxor.u32 %v413, 2147483648
      %v462 = vxor.u32 %v414, 2147483648
      %v463 = vxor.u32 %v415, 2147483648
      %v464 = vxor.u32 %v416, 2147483648
      %v465 = vxor.u32 %v417, 2147483648
      %v466 = vxor.u32 %v418, 2147483648
      %v467 = vxor.u32 %v419, 2147483648
      %v468 = vxor.u32 %v420, 2147483648
      %v469 = vxor.u32 %v421, 2147483648
      %v470 = vxor.u32 %v422, 2147483648
      %v471 = vxor.u32 %v423, 2147483648
      %v472 = vxor.u32 %v424, 2147483648
      %v473 = vxor.u32 %v425, 2147483648
      %v474 = vxor.u32 %v426, 2147483648
      %v475 = vxor.u32 %v427, 2147483648
      %v476 = vxor.u32 %v428, 2147483648
      %v477 = vxor.u32 %v429, 2147483648
      %v478 = vxor.u32 %v430, 2147483648
      %v479 = vxor.u32 %v431, 2147483648
      %v480 = vxor.u32 %v432, 2147483648
      %v481 = vxor.u32 %v433, 2147483648
      %v482 = vxor.u32 %v434, 2147483648
      %v483 = vxor.u32 %v435, 2147483648
      %v484 = vxor.u32 %v436, 2147483648
      %v485 = vmul.f32 %v437, 1.442695
      %v486 = vpow.pop %v485
      %v487 = vmul.f32 %v438, 1.442695
      %v488 = vpow.pop %v487
      %v489 = vmul.f32 %v439, 1.442695
      %v490 = vpow.pop %v489
      %v491 = vmul.f32 %v440, 1.442695
      %v492 = vpow.pop %v491
      %v493 = vmul.f32 %v441, 1.442695
      %v494 = vpow.pop %v493
      %v495 = vmul.f32 %v442, 1.442695
      %v496 = vpow.pop %v495
      %v497 = vmul.f32 %v443, 1.442695
      %v498 = vpow.pop %v497
      %v499 = vmul.f32 %v444, 1.442695
      %v500 = vpow.pop %v499
      %v501 = vmul.f32 %v445, 1.442695
      %v502 = vpow.pop %v501
      %v503 = vmul.f32 %v446, 1.442695
      %v504 = vpow.pop %v503
      %v505 = vmul.f32 %v447, 1.442695
      %v506 = vpow.pop %v505
      %v507 = vmul.f32 %v448, 1.442695
      %v508 = vpow.pop %v507
      %v509 = vmul.f32 %v449, 1.442695
      %v510 = vpow.pop %v509
      %v511 = vmul.f32 %v450, 1.442695
      %v512 = vpow.pop %v511
      %v513 = vmul.f32 %v451, 1.442695
      %v514 = vpow.pop %v513
      %v515 = vmul.f32 %v452, 1.442695
      %v516 = vpow.pop %v515
      %v517 = vmul.f32 %v453, 1.442695
      %v518 = vpow.pop %v517
      %v519 = vmul.f32 %v454, 1.442695
      %v520 = vpow.pop %v519
      %v521 = vmul.f32 %v455, 1.442695
      %v522 = vpow.pop %v521
      %v523 = vmul.f32 %v456, 1.442695
      %v524 = vpow.pop %v523
      %v525 = vmul.f32 %v457, 1.442695
      %v526 = vpow.pop %v525
      %v527 = vmul.f32 %v458, 1.442695
      %v528 = vpow.pop %v527
      %v529 = vmul.f32 %v459, 1.442695
      %v530 = vpow.pop %v529
      %v531 = vmul.f32 %v460, 1.442695
      %v532 = vpow.pop %v531
      %v533 = vmul.f32 %v461, 1.442695
      %v534 = vpow.pop %v533
      %v535 = vmul.f32 %v462, 1.442695
      %v536 = vpow.pop %v535
      %v537 = vmul.f32 %v463, 1.442695
      %v538 = vpow.pop %v537
      %v539 = vmul.f32 %v464, 1.442695
      %v540 = vpow.pop %v539
      %v541 = vmul.f32 %v465, 1.442695
      %v542 = vpow.pop %v541
      %v543 = vmul.f32 %v466, 1.442695
      %v544 = vpow.pop %v543
      %v545 = vmul.f32 %v467, 1.442695
      %v546 = vpow.pop %v545
      %v547 = vmul.f32 %v468, 1.442695
      %v548 = vpow.pop %v547
      %v549 = vmul.f32 %v469, 1.442695
      %v550 = vpow.pop %v549
      %v551 = vmul.f32 %v470, 1.442695
      %v552 = vpow.pop %v551
      %v553 = vmul.f32 %v471, 1.442695
      %v554 = vpow.pop %v553
      %v555 = vmul.f32 %v472, 1.442695
      %v556 = vpow.pop %v555
      %v557 = vmul.f32 %v473, 1.442695
      %v558 = vpow.pop %v557
      %v559 = vmul.f32 %v474, 1.442695
      %v560 = vpow.pop %v559
      %v561 = vmul.f32 %v475, 1.442695
      %v562 = vpow.pop %v561
      %v563 = vmul.f32 %v476, 1.442695
      %v564 = vpow.pop %v563
      %v565 = vmul.f32 %v477, 1.442695
      %v566 = vpow.pop %v565
      %v567 = vmul.f32 %v478, 1.442695
      %v568 = vpow.pop %v567
      %v569 = vmul.f32 %v479, 1.442695
      %v570 = vpow.pop %v569
      %v571 = vmul.f32 %v480, 1.442695
      %v572 = vpow.pop %v571
      %v573 = vmul.f32 %v481, 1.442695
      %v574 = vpow.pop %v573
      %v575 = vmul.f32 %v482, 1.442695
      %v576 = vpow.pop %v575
      %v577 = vmul.f32 %v483, 1.442695
      %v578 = vpow.pop %v577
      %v579 = vmul.f32 %v484, 1.442695
      %v580 = vpow.pop %v579
      %v581 = vadd.f32 %v486, 1.0
      %v582 = vadd.f32 %v488, 1.0
      %v583 = vadd.f32 %v490, 1.0
      %v584 = vadd.f32 %v492, 1.0
      %v585 = vadd.f32 %v494, 1.0
      %v586 = vadd.f32 %v496, 1.0
      %v587 = vadd.f32 %v498, 1.0
      %v588 = vadd.f32 %v500, 1.0
      %v589 = vadd.f32 %v502, 1.0
      %v590 = vadd.f32 %v504, 1.0
      %v591 = vadd.f32 %v506, 1.0
      %v592 = vadd.f32 %v508, 1.0
      %v593 = vadd.f32 %v510, 1.0
      %v594 = vadd.f32 %v512, 1.0
      %v595 = vadd.f32 %v514, 1.0
      %v596 = vadd.f32 %v516, 1.0
      %v597 = vadd.f32 %v518, 1.0
      %v598 = vadd.f32 %v520, 1.0
      %v599 = vadd.f32 %v522, 1.0
      %v600 = vadd.f32 %v524, 1.0
      %v601 = vadd.f32 %v526, 1.0
      %v602 = vadd.f32 %v528, 1.0
      %v603 = vadd.f32 %v530, 1.0
      %v604 = vadd.f32 %v532, 1.0
      %v605 = vadd.f32 %v534, 1.0
      %v606 = vadd.f32 %v536, 1.0
      %v607 = vadd.f32 %v538, 1.0
      %v608 = vadd.f32 %v540, 1.0
      %v609 = vadd.f32 %v542, 1.0
      %v610 = vadd.f32 %v544, 1.0
      %v611 = vadd.f32 %v546, 1.0
      %v612 = vadd.f32 %v548, 1.0
      %v613 = vadd.f32 %v550, 1.0
      %v614 = vadd.f32 %v552, 1.0
      %v615 = vadd.f32 %v554, 1.0
      %v616 = vadd.f32 %v556, 1.0
      %v617 = vadd.f32 %v558, 1.0
      %v618 = vadd.f32 %v560, 1.0
      %v619 = vadd.f32 %v562, 1.0
      %v620 = vadd.f32 %v564, 1.0
      %v621 = vadd.f32 %v566, 1.0
      %v622 = vadd.f32 %v568, 1.0
      %v623 = vadd.f32 %v570, 1.0
      %v624 = vadd.f32 %v572, 1.0
      %v625 = vadd.f32 %v574, 1.0
      %v626 = vadd.f32 %v576, 1.0
      %v627 = vadd.f32 %v578, 1.0
      %v628 = vadd.f32 %v580, 1.0
      %v629 = vrcp.pop %v581
      %v630 = vmul.f32 %v581, %v629
      %v631 = vsub.f32 1.0, %v630
      %v632 = vmul.f32 %v629, %v631
      %v633 = vadd.f32 %v629, %v632
      %vm634 = vweird.f32 %v581
      %vm635 = vweird.f32 %v629
      %vm636 = vmor %vm634, %vm635
      %v637 = vsel %vm636, %v629, %v633
      %v638 = vand.u32 2147483647, %v581
      %vm639 = vcmp.eq.f32.partialorder %v638, 8.507059e+37
      %v640 = vand.u32 %v581, 2147483648
      %v641 = vor.u32 1.1754944e-38, %v640
      %v642 = vsel %vm639, %v641, %v637
      %v643 = vmul.f32 1.0, %v642
      %v644 = vrcp.pop %v582
      %v645 = vmul.f32 %v582, %v644
      %v646 = vsub.f32 1.0, %v645
      %v647 = vmul.f32 %v644, %v646
      %v648 = vadd.f32 %v644, %v647
      %vm649 = vweird.f32 %v582
      %vm650 = vweird.f32 %v644
      %vm651 = vmor %vm649, %vm650
      %v652 = vsel %vm651, %v644, %v648
      %v653 = vand.u32 2147483647, %v582
      %vm654 = vcmp.eq.f32.partialorder %v653, 8.507059e+37
      %v655 = vand.u32 %v582, 2147483648
      %v656 = vor.u32 1.1754944e-38, %v655
      %v657 = vsel %vm654, %v656, %v652
      %v658 = vmul.f32 1.0, %v657
      %v659 = vrcp.pop %v583
      %v660 = vmul.f32 %v583, %v659
      %v661 = vsub.f32 1.0, %v660
      %v662 = vmul.f32 %v659, %v661
      %v663 = vadd.f32 %v659, %v662
      %vm664 = vweird.f32 %v583
      %vm665 = vweird.f32 %v659
      %vm666 = vmor %vm664, %vm665
      %v667 = vsel %vm666, %v659, %v663
      %v668 = vand.u32 2147483647, %v583
      %vm669 = vcmp.eq.f32.partialorder %v668, 8.507059e+37
      %v670 = vand.u32 %v583, 2147483648
      %v671 = vor.u32 1.1754944e-38, %v670
      %v672 = vsel %vm669, %v671, %v667
      %v673 = vmul.f32 1.0, %v672
      %v674 = vrcp.pop %v584
      %v675 = vmul.f32 %v584, %v674
      %v676 = vsub.f32 1.0, %v675
      %v677 = vmul.f32 %v674, %v676
      %v678 = vadd.f32 %v674, %v677
      %vm679 = vweird.f32 %v584
      %vm680 = vweird.f32 %v674
      %vm681 = vmor %vm679, %vm680
      %v682 = vsel %vm681, %v674, %v678
      %v683 = vand.u32 2147483647, %v584
      %vm684 = vcmp.eq.f32.partialorder %v683, 8.507059e+37
      %v685 = vand.u32 %v584, 2147483648
      %v686 = vor.u32 1.1754944e-38, %v685
      %v687 = vsel %vm684, %v686, %v682
      %v688 = vmul.f32 1.0, %v687
      %v689 = vrcp.pop %v585
      %v690 = vmul.f32 %v585, %v689
      %v691 = vsub.f32 1.0, %v690
      %v692 = vmul.f32 %v689, %v691
      %v693 = vadd.f32 %v689, %v692
      %vm694 = vweird.f32 %v585
      %vm695 = vweird.f32 %v689
      %vm696 = vmor %vm694, %vm695
      %v697 = vsel %vm696, %v689, %v693
      %v698 = vand.u32 2147483647, %v585
      %vm699 = vcmp.eq.f32.partialorder %v698, 8.507059e+37
      %v700 = vand.u32 %v585, 2147483648
      %v701 = vor.u32 1.1754944e-38, %v700
      %v702 = vsel %vm699, %v701, %v697
      %v703 = vmul.f32 1.0, %v702
      %v704 = vrcp.pop %v586
      %v705 = vmul.f32 %v586, %v704
      %v706 = vsub.f32 1.0, %v705
      %v707 = vmul.f32 %v704, %v706
      %v708 = vadd.f32 %v704, %v707
      %vm709 = vweird.f32 %v586
      %vm710 = vweird.f32 %v704
      %vm711 = vmor %vm709, %vm710
      %v712 = vsel %vm711, %v704, %v708
      %v713 = vand.u32 2147483647, %v586
      %vm714 = vcmp.eq.f32.partialorder %v713, 8.507059e+37
      %v715 = vand.u32 %v586, 2147483648
      %v716 = vor.u32 1.1754944e-38, %v715
      %v717 = vsel %vm714, %v716, %v712
      %v718 = vmul.f32 1.0, %v717
      %v719 = vrcp.pop %v587
      %v720 = vmul.f32 %v587, %v719
      %v721 = vsub.f32 1.0, %v720
      %v722 = vmul.f32 %v719, %v721
      %v723 = vadd.f32 %v719, %v722
      %vm724 = vweird.f32 %v587
      %vm725 = vweird.f32 %v719
      %vm726 = vmor %vm724, %vm725
      %v727 = vsel %vm726, %v719, %v723
      %v728 = vand.u32 2147483647, %v587
      %vm729 = vcmp.eq.f32.partialorder %v728, 8.507059e+37
      %v730 = vand.u32 %v587, 2147483648
      %v731 = vor.u32 1.1754944e-38, %v730
      %v732 = vsel %vm729, %v731, %v727
      %v733 = vmul.f32 1.0, %v732
      %v734 = vrcp.pop %v588
      %v735 = vmul.f32 %v588, %v734
      %v736 = vsub.f32 1.0, %v735
      %v737 = vmul.f32 %v734, %v736
      %v738 = vadd.f32 %v734, %v737
      %vm739 = vweird.f32 %v588
      %vm740 = vweird.f32 %v734
      %vm741 = vmor %vm739, %vm740
      %v742 = vsel %vm741, %v734, %v738
      %v743 = vand.u32 2147483647, %v588
      %vm744 = vcmp.eq.f32.partialorder %v743, 8.507059e+37
      %v745 = vand.u32 %v588, 2147483648
      %v746 = vor.u32 1.1754944e-38, %v745
      %v747 = vsel %vm744, %v746, %v742
      %v748 = vmul.f32 1.0, %v747
      %v749 = vrcp.pop %v589
      %v750 = vmul.f32 %v589, %v749
      %v751 = vsub.f32 1.0, %v750
      %v752 = vmul.f32 %v749, %v751
      %v753 = vadd.f32 %v749, %v752
      %vm754 = vweird.f32 %v589
      %vm755 = vweird.f32 %v749
      %vm756 = vmor %vm754, %vm755
      %v757 = vsel %vm756, %v749, %v753
      %v758 = vand.u32 2147483647, %v589
      %vm759 = vcmp.eq.f32.partialorder %v758, 8.507059e+37
      %v760 = vand.u32 %v589, 2147483648
      %v761 = vor.u32 1.1754944e-38, %v760
      %v762 = vsel %vm759, %v761, %v757
      %v763 = vmul.f32 1.0, %v762
      %v764 = vrcp.pop %v590
      %v765 = vmul.f32 %v590, %v764
      %v766 = vsub.f32 1.0, %v765
      %v767 = vmul.f32 %v764, %v766
      %v768 = vadd.f32 %v764, %v767
      %vm769 = vweird.f32 %v590
      %vm770 = vweird.f32 %v764
      %vm771 = vmor %vm769, %vm770
      %v772 = vsel %vm771, %v764, %v768
      %v773 = vand.u32 2147483647, %v590
      %vm774 = vcmp.eq.f32.partialorder %v773, 8.507059e+37
      %v775 = vand.u32 %v590, 2147483648
      %v776 = vor.u32 1.1754944e-38, %v775
      %v777 = vsel %vm774, %v776, %v772
      %v778 = vmul.f32 1.0, %v777
      %v779 = vrcp.pop %v591
      %v780 = vmul.f32 %v591, %v779
      %v781 = vsub.f32 1.0, %v780
      %v782 = vmul.f32 %v779, %v781
      %v783 = vadd.f32 %v779, %v782
      %vm784 = vweird.f32 %v591
      %vm785 = vweird.f32 %v779
      %vm786 = vmor %vm784, %vm785
      %v787 = vsel %vm786, %v779, %v783
      %v788 = vand.u32 2147483647, %v591
      %vm789 = vcmp.eq.f32.partialorder %v788, 8.507059e+37
      %v790 = vand.u32 %v591, 2147483648
      %v791 = vor.u32 1.1754944e-38, %v790
      %v792 = vsel %vm789, %v791, %v787
      %v793 = vmul.f32 1.0, %v792
      %v794 = vrcp.pop %v592
      %v795 = vmul.f32 %v592, %v794
      %v796 = vsub.f32 1.0, %v795
      %v797 = vmul.f32 %v794, %v796
      %v798 = vadd.f32 %v794, %v797
      %vm799 = vweird.f32 %v592
      %vm800 = vweird.f32 %v794
      %vm801 = vmor %vm799, %vm800
      %v802 = vsel %vm801, %v794, %v798
      %v803 = vand.u32 2147483647, %v592
      %vm804 = vcmp.eq.f32.partialorder %v803, 8.507059e+37
      %v805 = vand.u32 %v592, 2147483648
      %v806 = vor.u32 1.1754944e-38, %v805
      %v807 = vsel %vm804, %v806, %v802
      %v808 = vmul.f32 1.0, %v807
      %v809 = vrcp.pop %v593
      %v810 = vmul.f32 %v593, %v809
      %v811 = vsub.f32 1.0, %v810
      %v812 = vmul.f32 %v809, %v811
      %v813 = vadd.f32 %v809, %v812
      %vm814 = vweird.f32 %v593
      %vm815 = vweird.f32 %v809
      %vm816 = vmor %vm814, %vm815
      %v817 = vsel %vm816, %v809, %v813
      %v818 = vand.u32 2147483647, %v593
      %vm819 = vcmp.eq.f32.partialorder %v818, 8.507059e+37
      %v820 = vand.u32 %v593, 2147483648
      %v821 = vor.u32 1.1754944e-38, %v820
      %v822 = vsel %vm819, %v821, %v817
      %v823 = vmul.f32 1.0, %v822
      %v824 = vrcp.pop %v594
      %v825 = vmul.f32 %v594, %v824
      %v826 = vsub.f32 1.0, %v825
      %v827 = vmul.f32 %v824, %v826
      %v828 = vadd.f32 %v824, %v827
      %vm829 = vweird.f32 %v594
      %vm830 = vweird.f32 %v824
      %vm831 = vmor %vm829, %vm830
      %v832 = vsel %vm831, %v824, %v828
      %v833 = vand.u32 2147483647, %v594
      %vm834 = vcmp.eq.f32.partialorder %v833, 8.507059e+37
      %v835 = vand.u32 %v594, 2147483648
      %v836 = vor.u32 1.1754944e-38, %v835
      %v837 = vsel %vm834, %v836, %v832
      %v838 = vmul.f32 1.0, %v837
      %v839 = vrcp.pop %v595
      %v840 = vmul.f32 %v595, %v839
      %v841 = vsub.f32 1.0, %v840
      %v842 = vmul.f32 %v839, %v841
      %v843 = vadd.f32 %v839, %v842
      %vm844 = vweird.f32 %v595
      %vm845 = vweird.f32 %v839
      %vm846 = vmor %vm844, %vm845
      %v847 = vsel %vm846, %v839, %v843
      %v848 = vand.u32 2147483647, %v595
      %vm849 = vcmp.eq.f32.partialorder %v848, 8.507059e+37
      %v850 = vand.u32 %v595, 2147483648
      %v851 = vor.u32 1.1754944e-38, %v850
      %v852 = vsel %vm849, %v851, %v847
      %v853 = vmul.f32 1.0, %v852
      %v854 = vrcp.pop %v596
      %v855 = vmul.f32 %v596, %v854
      %v856 = vsub.f32 1.0, %v855
      %v857 = vmul.f32 %v854, %v856
      %v858 = vadd.f32 %v854, %v857
      %vm859 = vweird.f32 %v596
      %vm860 = vweird.f32 %v854
      %vm861 = vmor %vm859, %vm860
      %v862 = vsel %vm861, %v854, %v858
      %v863 = vand.u32 2147483647, %v596
      %vm864 = vcmp.eq.f32.partialorder %v863, 8.507059e+37
      %v865 = vand.u32 %v596, 2147483648
      %v866 = vor.u32 1.1754944e-38, %v865
      %v867 = vsel %vm864, %v866, %v862
      %v868 = vmul.f32 1.0, %v867
      %v869 = vrcp.pop %v597
      %v870 = vmul.f32 %v597, %v869
      %v871 = vsub.f32 1.0, %v870
      %v872 = vmul.f32 %v869, %v871
      %v873 = vadd.f32 %v869, %v872
      %vm874 = vweird.f32 %v597
      %vm875 = vweird.f32 %v869
      %vm876 = vmor %vm874, %vm875
      %v877 = vsel %vm876, %v869, %v873
      %v878 = vand.u32 2147483647, %v597
      %vm879 = vcmp.eq.f32.partialorder %v878, 8.507059e+37
      %v880 = vand.u32 %v597, 2147483648
      %v881 = vor.u32 1.1754944e-38, %v880
      %v882 = vsel %vm879, %v881, %v877
      %v883 = vmul.f32 1.0, %v882
      %v884 = vrcp.pop %v598
      %v885 = vmul.f32 %v598, %v884
      %v886 = vsub.f32 1.0, %v885
      %v887 = vmul.f32 %v884, %v886
      %v888 = vadd.f32 %v884, %v887
      %vm889 = vweird.f32 %v598
      %vm890 = vweird.f32 %v884
      %vm891 = vmor %vm889, %vm890
      %v892 = vsel %vm891, %v884, %v888
      %v893 = vand.u32 2147483647, %v598
      %vm894 = vcmp.eq.f32.partialorder %v893, 8.507059e+37
      %v895 = vand.u32 %v598, 2147483648
      %v896 = vor.u32 1.1754944e-38, %v895
      %v897 = vsel %vm894, %v896, %v892
      %v898 = vmul.f32 1.0, %v897
      %v899 = vrcp.pop %v599
      %v900 = vmul.f32 %v599, %v899
      %v901 = vsub.f32 1.0, %v900
      %v902 = vmul.f32 %v899, %v901
      %v903 = vadd.f32 %v899, %v902
      %vm904 = vweird.f32 %v599
      %vm905 = vweird.f32 %v899
      %vm906 = vmor %vm904, %vm905
      %v907 = vsel %vm906, %v899, %v903
      %v908 = vand.u32 2147483647, %v599
      %vm909 = vcmp.eq.f32.partialorder %v908, 8.507059e+37
      %v910 = vand.u32 %v599, 2147483648
      %v911 = vor.u32 1.1754944e-38, %v910
      %v912 = vsel %vm909, %v911, %v907
      %v913 = vmul.f32 1.0, %v912
      %v914 = vrcp.pop %v600
      %v915 = vmul.f32 %v600, %v914
      %v916 = vsub.f32 1.0, %v915
      %v917 = vmul.f32 %v914, %v916
      %v918 = vadd.f32 %v914, %v917
      %vm919 = vweird.f32 %v600
      %vm920 = vweird.f32 %v914
      %vm921 = vmor %vm919, %vm920
      %v922 = vsel %vm921, %v914, %v918
      %v923 = vand.u32 2147483647, %v600
      %vm924 = vcmp.eq.f32.partialorder %v923, 8.507059e+37
      %v925 = vand.u32 %v600, 2147483648
      %v926 = vor.u32 1.1754944e-38, %v925
      %v927 = vsel %vm924, %v926, %v922
      %v928 = vmul.f32 1.0, %v927
      %v929 = vrcp.pop %v601
      %v930 = vmul.f32 %v601, %v929
      %v931 = vsub.f32 1.0, %v930
      %v932 = vmul.f32 %v929, %v931
      %v933 = vadd.f32 %v929, %v932
      %vm934 = vweird.f32 %v601
      %vm935 = vweird.f32 %v929
      %vm936 = vmor %vm934, %vm935
      %v937 = vsel %vm936, %v929, %v933
      %v938 = vand.u32 2147483647, %v601
      %vm939 = vcmp.eq.f32.partialorder %v938, 8.507059e+37
      %v940 = vand.u32 %v601, 2147483648
      %v941 = vor.u32 1.1754944e-38, %v940
      %v942 = vsel %vm939, %v941, %v937
      %v943 = vmul.f32 1.0, %v942
      %v944 = vrcp.pop %v602
      %v945 = vmul.f32 %v602, %v944
      %v946 = vsub.f32 1.0, %v945
      %v947 = vmul.f32 %v944, %v946
      %v948 = vadd.f32 %v944, %v947
      %vm949 = vweird.f32 %v602
      %vm950 = vweird.f32 %v944
      %vm951 = vmor %vm949, %vm950
      %v952 = vsel %vm951, %v944, %v948
      %v953 = vand.u32 2147483647, %v602
      %vm954 = vcmp.eq.f32.partialorder %v953, 8.507059e+37
      %v955 = vand.u32 %v602, 2147483648
      %v956 = vor.u32 1.1754944e-38, %v955
      %v957 = vsel %vm954, %v956, %v952
      %v958 = vmul.f32 1.0, %v957
      %v959 = vrcp.pop %v603
      %v960 = vmul.f32 %v603, %v959
      %v961 = vsub.f32 1.0, %v960
      %v962 = vmul.f32 %v959, %v961
      %v963 = vadd.f32 %v959, %v962
      %vm964 = vweird.f32 %v603
      %vm965 = vweird.f32 %v959
      %vm966 = vmor %vm964, %vm965
      %v967 = vsel %vm966, %v959, %v963
      %v968 = vand.u32 2147483647, %v603
      %vm969 = vcmp.eq.f32.partialorder %v968, 8.507059e+37
      %v970 = vand.u32 %v603, 2147483648
      %v971 = vor.u32 1.1754944e-38, %v970
      %v972 = vsel %vm969, %v971, %v967
      %v973 = vmul.f32 1.0, %v972
      %v974 = vrcp.pop %v604
      %v975 = vmul.f32 %v604, %v974
      %v976 = vsub.f32 1.0, %v975
      %v977 = vmul.f32 %v974, %v976
      %v978 = vadd.f32 %v974, %v977
      %vm979 = vweird.f32 %v604
      %vm980 = vweird.f32 %v974
      %vm981 = vmor %vm979, %vm980
      %v982 = vsel %vm981, %v974, %v978
      %v983 = vand.u32 2147483647, %v604
      %vm984 = vcmp.eq.f32.partialorder %v983, 8.507059e+37
      %v985 = vand.u32 %v604, 2147483648
      %v986 = vor.u32 1.1754944e-38, %v985
      %v987 = vsel %vm984, %v986, %v982
      %v988 = vmul.f32 1.0, %v987
      %v989 = vrcp.pop %v605
      %v990 = vmul.f32 %v605, %v989
      %v991 = vsub.f32 1.0, %v990
      %v992 = vmul.f32 %v989, %v991
      %v993 = vadd.f32 %v989, %v992
      %vm994 = vweird.f32 %v605
      %vm995 = vweird.f32 %v989
      %vm996 = vmor %vm994, %vm995
      %v997 = vsel %vm996, %v989, %v993
      %v998 = vand.u32 2147483647, %v605
      %vm999 = vcmp.eq.f32.partialorder %v998, 8.507059e+37
      %v1000 = vand.u32 %v605, 2147483648
      %v1001 = vor.u32 1.1754944e-38, %v1000
      %v1002 = vsel %vm999, %v1001, %v997
      %v1003 = vmul.f32 1.0, %v1002
      %v1004 = vrcp.pop %v606
      %v1005 = vmul.f32 %v606, %v1004
      %v1006 = vsub.f32 1.0, %v1005
      %v1007 = vmul.f32 %v1004, %v1006
      %v1008 = vadd.f32 %v1004, %v1007
      %vm1009 = vweird.f32 %v606
      %vm1010 = vweird.f32 %v1004
      %vm1011 = vmor %vm1009, %vm1010
      %v1012 = vsel %vm1011, %v1004, %v1008
      %v1013 = vand.u32 2147483647, %v606
      %vm1014 = vcmp.eq.f32.partialorder %v1013, 8.507059e+37
      %v1015 = vand.u32 %v606, 2147483648
      %v1016 = vor.u32 1.1754944e-38, %v1015
      %v1017 = vsel %vm1014, %v1016, %v1012
      %v1018 = vmul.f32 1.0, %v1017
      %v1019 = vrcp.pop %v607
      %v1020 = vmul.f32 %v607, %v1019
      %v1021 = vsub.f32 1.0, %v1020
      %v1022 = vmul.f32 %v1019, %v1021
      %v1023 = vadd.f32 %v1019, %v1022
      %vm1024 = vweird.f32 %v607
      %vm1025 = vweird.f32 %v1019
      %vm1026 = vmor %vm1024, %vm1025
      %v1027 = vsel %vm1026, %v1019, %v1023
      %v1028 = vand.u32 2147483647, %v607
      %vm1029 = vcmp.eq.f32.partialorder %v1028, 8.507059e+37
      %v1030 = vand.u32 %v607, 2147483648
      %v1031 = vor.u32 1.1754944e-38, %v1030
      %v1032 = vsel %vm1029, %v1031, %v1027
      %v1033 = vmul.f32 1.0, %v1032
      %v1034 = vrcp.pop %v608
      %v1035 = vmul.f32 %v608, %v1034
      %v1036 = vsub.f32 1.0, %v1035
      %v1037 = vmul.f32 %v1034, %v1036
      %v1038 = vadd.f32 %v1034, %v1037
      %vm1039 = vweird.f32 %v608
      %vm1040 = vweird.f32 %v1034
      %vm1041 = vmor %vm1039, %vm1040
      %v1042 = vsel %vm1041, %v1034, %v1038
      %v1043 = vand.u32 2147483647, %v608
      %vm1044 = vcmp.eq.f32.partialorder %v1043, 8.507059e+37
      %v1045 = vand.u32 %v608, 2147483648
      %v1046 = vor.u32 1.1754944e-38, %v1045
      %v1047 = vsel %vm1044, %v1046, %v1042
      %v1048 = vmul.f32 1.0, %v1047
      %v1049 = vrcp.pop %v609
      %v1050 = vmul.f32 %v609, %v1049
      %v1051 = vsub.f32 1.0, %v1050
      %v1052 = vmul.f32 %v1049, %v1051
      %v1053 = vadd.f32 %v1049, %v1052
      %vm1054 = vweird.f32 %v609
      %vm1055 = vweird.f32 %v1049
      %vm1056 = vmor %vm1054, %vm1055
      %v1057 = vsel %vm1056, %v1049, %v1053
      %v1058 = vand.u32 2147483647, %v609
      %vm1059 = vcmp.eq.f32.partialorder %v1058, 8.507059e+37
      %v1060 = vand.u32 %v609, 2147483648
      %v1061 = vor.u32 1.1754944e-38, %v1060
      %v1062 = vsel %vm1059, %v1061, %v1057
      %v1063 = vmul.f32 1.0, %v1062
      %v1064 = vrcp.pop %v610
      %v1065 = vmul.f32 %v610, %v1064
      %v1066 = vsub.f32 1.0, %v1065
      %v1067 = vmul.f32 %v1064, %v1066
      %v1068 = vadd.f32 %v1064, %v1067
      %vm1069 = vweird.f32 %v610
      %vm1070 = vweird.f32 %v1064
      %vm1071 = vmor %vm1069, %vm1070
      %v1072 = vsel %vm1071, %v1064, %v1068
      %v1073 = vand.u32 2147483647, %v610
      %vm1074 = vcmp.eq.f32.partialorder %v1073, 8.507059e+37
      %v1075 = vand.u32 %v610, 2147483648
      %v1076 = vor.u32 1.1754944e-38, %v1075
      %v1077 = vsel %vm1074, %v1076, %v1072
      %v1078 = vmul.f32 1.0, %v1077
      %v1079 = vrcp.pop %v611
      %v1080 = vmul.f32 %v611, %v1079
      %v1081 = vsub.f32 1.0, %v1080
      %v1082 = vmul.f32 %v1079, %v1081
      %v1083 = vadd.f32 %v1079, %v1082
      %vm1084 = vweird.f32 %v611
      %vm1085 = vweird.f32 %v1079
      %vm1086 = vmor %vm1084, %vm1085
      %v1087 = vsel %vm1086, %v1079, %v1083
      %v1088 = vand.u32 2147483647, %v611
      %vm1089 = vcmp.eq.f32.partialorder %v1088, 8.507059e+37
      %v1090 = vand.u32 %v611, 2147483648
      %v1091 = vor.u32 1.1754944e-38, %v1090
      %v1092 = vsel %vm1089, %v1091, %v1087
      %v1093 = vmul.f32 1.0, %v1092
      %v1094 = vrcp.pop %v612
      %v1095 = vmul.f32 %v612, %v1094
      %v1096 = vsub.f32 1.0, %v1095
      %v1097 = vmul.f32 %v1094, %v1096
      %v1098 = vadd.f32 %v1094, %v1097
      %vm1099 = vweird.f32 %v612
      %vm1100 = vweird.f32 %v1094
      %vm1101 = vmor %vm1099, %vm1100
      %v1102 = vsel %vm1101, %v1094, %v1098
      %v1103 = vand.u32 2147483647, %v612
      %vm1104 = vcmp.eq.f32.partialorder %v1103, 8.507059e+37
      %v1105 = vand.u32 %v612, 2147483648
      %v1106 = vor.u32 1.1754944e-38, %v1105
      %v1107 = vsel %vm1104, %v1106, %v1102
      %v1108 = vmul.f32 1.0, %v1107
      %v1109 = vrcp.pop %v613
      %v1110 = vmul.f32 %v613, %v1109
      %v1111 = vsub.f32 1.0, %v1110
      %v1112 = vmul.f32 %v1109, %v1111
      %v1113 = vadd.f32 %v1109, %v1112
      %vm1114 = vweird.f32 %v613
      %vm1115 = vweird.f32 %v1109
      %vm1116 = vmor %vm1114, %vm1115
      %v1117 = vsel %vm1116, %v1109, %v1113
      %v1118 = vand.u32 2147483647, %v613
      %vm1119 = vcmp.eq.f32.partialorder %v1118, 8.507059e+37
      %v1120 = vand.u32 %v613, 2147483648
      %v1121 = vor.u32 1.1754944e-38, %v1120
      %v1122 = vsel %vm1119, %v1121, %v1117
      %v1123 = vmul.f32 1.0, %v1122
      %v1124 = vrcp.pop %v614
      %v1125 = vmul.f32 %v614, %v1124
      %v1126 = vsub.f32 1.0, %v1125
      %v1127 = vmul.f32 %v1124, %v1126
      %v1128 = vadd.f32 %v1124, %v1127
      %vm1129 = vweird.f32 %v614
      %vm1130 = vweird.f32 %v1124
      %vm1131 = vmor %vm1129, %vm1130
      %v1132 = vsel %vm1131, %v1124, %v1128
      %v1133 = vand.u32 2147483647, %v614
      %vm1134 = vcmp.eq.f32.partialorder %v1133, 8.507059e+37
      %v1135 = vand.u32 %v614, 2147483648
      %v1136 = vor.u32 1.1754944e-38, %v1135
      %v1137 = vsel %vm1134, %v1136, %v1132
      %v1138 = vmul.f32 1.0, %v1137
      %v1139 = vrcp.pop %v615
      %v1140 = vmul.f32 %v615, %v1139
      %v1141 = vsub.f32 1.0, %v1140
      %v1142 = vmul.f32 %v1139, %v1141
      %v1143 = vadd.f32 %v1139, %v1142
      %vm1144 = vweird.f32 %v615
      %vm1145 = vweird.f32 %v1139
      %vm1146 = vmor %vm1144, %vm1145
      %v1147 = vsel %vm1146, %v1139, %v1143
      %v1148 = vand.u32 2147483647, %v615
      %vm1149 = vcmp.eq.f32.partialorder %v1148, 8.507059e+37
      %v1150 = vand.u32 %v615, 2147483648
      %v1151 = vor.u32 1.1754944e-38, %v1150
      %v1152 = vsel %vm1149, %v1151, %v1147
      %v1153 = vmul.f32 1.0, %v1152
      %v1154 = vrcp.pop %v616
      %v1155 = vmul.f32 %v616, %v1154
      %v1156 = vsub.f32 1.0, %v1155
      %v1157 = vmul.f32 %v1154, %v1156
      %v1158 = vadd.f32 %v1154, %v1157
      %vm1159 = vweird.f32 %v616
      %vm1160 = vweird.f32 %v1154
      %vm1161 = vmor %vm1159, %vm1160
      %v1162 = vsel %vm1161, %v1154, %v1158
      %v1163 = vand.u32 2147483647, %v616
      %vm1164 = vcmp.eq.f32.partialorder %v1163, 8.507059e+37
      %v1165 = vand.u32 %v616, 2147483648
      %v1166 = vor.u32 1.1754944e-38, %v1165
      %v1167 = vsel %vm1164, %v1166, %v1162
      %v1168 = vmul.f32 1.0, %v1167
      %v1169 = vrcp.pop %v617
      %v1170 = vmul.f32 %v617, %v1169
      %v1171 = vsub.f32 1.0, %v1170
      %v1172 = vmul.f32 %v1169, %v1171
      %v1173 = vadd.f32 %v1169, %v1172
      %vm1174 = vweird.f32 %v617
      %vm1175 = vweird.f32 %v1169
      %vm1176 = vmor %vm1174, %vm1175
      %v1177 = vsel %vm1176, %v1169, %v1173
      %v1178 = vand.u32 2147483647, %v617
      %vm1179 = vcmp.eq.f32.partialorder %v1178, 8.507059e+37
      %v1180 = vand.u32 %v617, 2147483648
      %v1181 = vor.u32 1.1754944e-38, %v1180
      %v1182 = vsel %vm1179, %v1181, %v1177
      %v1183 = vmul.f32 1.0, %v1182
      %v1184 = vrcp.pop %v618
      %v1185 = vmul.f32 %v618, %v1184
      %v1186 = vsub.f32 1.0, %v1185
      %v1187 = vmul.f32 %v1184, %v1186
      %v1188 = vadd.f32 %v1184, %v1187
      %vm1189 = vweird.f32 %v618
      %vm1190 = vweird.f32 %v1184
      %vm1191 = vmor %vm1189, %vm1190
      %v1192 = vsel %vm1191, %v1184, %v1188
      %v1193 = vand.u32 2147483647, %v618
      %vm1194 = vcmp.eq.f32.partialorder %v1193, 8.507059e+37
      %v1195 = vand.u32 %v618, 2147483648
      %v1196 = vor.u32 1.1754944e-38, %v1195
      %v1197 = vsel %vm1194, %v1196, %v1192
      %v1198 = vmul.f32 1.0, %v1197
      %v1199 = vrcp.pop %v619
      %v1200 = vmul.f32 %v619, %v1199
      %v1201 = vsub.f32 1.0, %v1200
      %v1202 = vmul.f32 %v1199, %v1201
      %v1203 = vadd.f32 %v1199, %v1202
      %vm1204 = vweird.f32 %v619
      %vm1205 = vweird.f32 %v1199
      %vm1206 = vmor %vm1204, %vm1205
      %v1207 = vsel %vm1206, %v1199, %v1203
      %v1208 = vand.u32 2147483647, %v619
      %vm1209 = vcmp.eq.f32.partialorder %v1208, 8.507059e+37
      %v1210 = vand.u32 %v619, 2147483648
      %v1211 = vor.u32 1.1754944e-38, %v1210
      %v1212 = vsel %vm1209, %v1211, %v1207
      %v1213 = vmul.f32 1.0, %v1212
      %v1214 = vrcp.pop %v620
      %v1215 = vmul.f32 %v620, %v1214
      %v1216 = vsub.f32 1.0, %v1215
      %v1217 = vmul.f32 %v1214, %v1216
      %v1218 = vadd.f32 %v1214, %v1217
      %vm1219 = vweird.f32 %v620
      %vm1220 = vweird.f32 %v1214
      %vm1221 = vmor %vm1219, %vm1220
      %v1222 = vsel %vm1221, %v1214, %v1218
      %v1223 = vand.u32 2147483647, %v620
      %vm1224 = vcmp.eq.f32.partialorder %v1223, 8.507059e+37
      %v1225 = vand.u32 %v620, 2147483648
      %v1226 = vor.u32 1.1754944e-38, %v1225
      %v1227 = vsel %vm1224, %v1226, %v1222
      %v1228 = vmul.f32 1.0, %v1227
      %v1229 = vrcp.pop %v621
      %v1230 = vmul.f32 %v621, %v1229
      %v1231 = vsub.f32 1.0, %v1230
      %v1232 = vmul.f32 %v1229, %v1231
      %v1233 = vadd.f32 %v1229, %v1232
      %vm1234 = vweird.f32 %v621
      %vm1235 = vweird.f32 %v1229
      %vm1236 = vmor %vm1234, %vm1235
      %v1237 = vsel %vm1236, %v1229, %v1233
      %v1238 = vand.u32 2147483647, %v621
      %vm1239 = vcmp.eq.f32.partialorder %v1238, 8.507059e+37
      %v1240 = vand.u32 %v621, 2147483648
      %v1241 = vor.u32 1.1754944e-38, %v1240
      %v1242 = vsel %vm1239, %v1241, %v1237
      %v1243 = vmul.f32 1.0, %v1242
      %v1244 = vrcp.pop %v622
      %v1245 = vmul.f32 %v622, %v1244
      %v1246 = vsub.f32 1.0, %v1245
      %v1247 = vmul.f32 %v1244, %v1246
      %v1248 = vadd.f32 %v1244, %v1247
      %vm1249 = vweird.f32 %v622
      %vm1250 = vweird.f32 %v1244
      %vm1251 = vmor %vm1249, %vm1250
      %v1252 = vsel %vm1251, %v1244, %v1248
      %v1253 = vand.u32 2147483647, %v622
      %vm1254 = vcmp.eq.f32.partialorder %v1253, 8.507059e+37
      %v1255 = vand.u32 %v622, 2147483648
      %v1256 = vor.u32 1.1754944e-38, %v1255
      %v1257 = vsel %vm1254, %v1256, %v1252
      %v1258 = vmul.f32 1.0, %v1257
      %v1259 = vrcp.pop %v623
      %v1260 = vmul.f32 %v623, %v1259
      %v1261 = vsub.f32 1.0, %v1260
      %v1262 = vmul.f32 %v1259, %v1261
      %v1263 = vadd.f32 %v1259, %v1262
      %vm1264 = vweird.f32 %v623
      %vm1265 = vweird.f32 %v1259
      %vm1266 = vmor %vm1264, %vm1265
      %v1267 = vsel %vm1266, %v1259, %v1263
      %v1268 = vand.u32 2147483647, %v623
      %vm1269 = vcmp.eq.f32.partialorder %v1268, 8.507059e+37
      %v1270 = vand.u32 %v623, 2147483648
      %v1271 = vor.u32 1.1754944e-38, %v1270
      %v1272 = vsel %vm1269, %v1271, %v1267
      %v1273 = vmul.f32 1.0, %v1272
      %v1274 = vrcp.pop %v624
      %v1275 = vmul.f32 %v624, %v1274
      %v1276 = vsub.f32 1.0, %v1275
      %v1277 = vmul.f32 %v1274, %v1276
      %v1278 = vadd.f32 %v1274, %v1277
      %vm1279 = vweird.f32 %v624
      %vm1280 = vweird.f32 %v1274
      %vm1281 = vmor %vm1279, %vm1280
      %v1282 = vsel %vm1281, %v1274, %v1278
      %v1283 = vand.u32 2147483647, %v624
      %vm1284 = vcmp.eq.f32.partialorder %v1283, 8.507059e+37
      %v1285 = vand.u32 %v624, 2147483648
      %v1286 = vor.u32 1.1754944e-38, %v1285
      %v1287 = vsel %vm1284, %v1286, %v1282
      %v1288 = vmul.f32 1.0, %v1287
      %v1289 = vrcp.pop %v625
      %v1290 = vmul.f32 %v625, %v1289
      %v1291 = vsub.f32 1.0, %v1290
      %v1292 = vmul.f32 %v1289, %v1291
      %v1293 = vadd.f32 %v1289, %v1292
      %vm1294 = vweird.f32 %v625
      %vm1295 = vweird.f32 %v1289
      %vm1296 = vmor %vm1294, %vm1295
      %v1297 = vsel %vm1296, %v1289, %v1293
      %v1298 = vand.u32 2147483647, %v625
      %vm1299 = vcmp.eq.f32.partialorder %v1298, 8.507059e+37
      %v1300 = vand.u32 %v625, 2147483648
      %v1301 = vor.u32 1.1754944e-38, %v1300
      %v1302 = vsel %vm1299, %v1301, %v1297
      %v1303 = vmul.f32 1.0, %v1302
      %v1304 = vrcp.pop %v626
      %v1305 = vmul.f32 %v626, %v1304
      %v1306 = vsub.f32 1.0, %v1305
      %v1307 = vmul.f32 %v1304, %v1306
      %v1308 = vadd.f32 %v1304, %v1307
      %vm1309 = vweird.f32 %v626
      %vm1310 = vweird.f32 %v1304
      %vm1311 = vmor %vm1309, %vm1310
      %v1312 = vsel %vm1311, %v1304, %v1308
      %v1313 = vand.u32 2147483647, %v626
      %vm1314 = vcmp.eq.f32.partialorder %v1313, 8.507059e+37
      %v1315 = vand.u32 %v626, 2147483648
      %v1316 = vor.u32 1.1754944e-38, %v1315
      %v1317 = vsel %vm1314, %v1316, %v1312
      %v1318 = vmul.f32 1.0, %v1317
      %v1319 = vrcp.pop %v627
      %v1320 = vmul.f32 %v627, %v1319
      %v1321 = vsub.f32 1.0, %v1320
      %v1322 = vmul.f32 %v1319, %v1321
      %v1323 = vadd.f32 %v1319, %v1322
      %vm1324 = vweird.f32 %v627
      %vm1325 = vweird.f32 %v1319
      %vm1326 = vmor %vm1324, %vm1325
      %v1327 = vsel %vm1326, %v1319, %v1323
      %v1328 = vand.u32 2147483647, %v627
      %vm1329 = vcmp.eq.f32.partialorder %v1328, 8.507059e+37
      %v1330 = vand.u32 %v627, 2147483648
      %v1331 = vor.u32 1.1754944e-38, %v1330
      %v1332 = vsel %vm1329, %v1331, %v1327
      %v1333 = vmul.f32 1.0, %v1332
      %v1334 = vrcp.pop %v628
      %v1335 = vmul.f32 %v628, %v1334
      %v1336 = vsub.f32 1.0, %v1335
      %v1337 = vmul.f32 %v1334, %v1336
      %v1338 = vadd.f32 %v1334, %v1337
      %vm1339 = vweird.f32 %v628
      %vm1340 = vweird.f32 %v1334
      %vm1341 = vmor %vm1339, %vm1340
      %v1342 = vsel %vm1341, %v1334, %v1338
      %v1343 = vand.u32 2147483647, %v628
      %vm1344 = vcmp.eq.f32.partialorder %v1343, 8.507059e+37
      %v1345 = vand.u32 %v628, 2147483648
      %v1346 = vor.u32 1.1754944e-38, %v1345
      %v1347 = vsel %vm1344, %v1346, %v1342
      %v1348 = vmul.f32 1.0, %v1347
      %v1349 = vmul.f32 %v389, %v643
      %v1350 = vmul.f32 %v390, %v658
      %v1351 = vmul.f32 %v391, %v673
      %v1352 = vmul.f32 %v392, %v688
      %v1353 = vmul.f32 %v393, %v703
      %v1354 = vmul.f32 %v394, %v718
      %v1355 = vmul.f32 %v395, %v733
      %v1356 = vmul.f32 %v396, %v748
      %v1357 = vmul.f32 %v397, %v763
      %v1358 = vmul.f32 %v398, %v778
      %v1359 = vmul.f32 %v399, %v793
      %v1360 = vmul.f32 %v400, %v808
      %v1361 = vmul.f32 %v401, %v823
      %v1362 = vmul.f32 %v402, %v838
      %v1363 = vmul.f32 %v403, %v853
      %v1364 = vmul.f32 %v404, %v868
      %v1365 = vmul.f32 %v405, %v883
      %v1366 = vmul.f32 %v406, %v898
      %v1367 = vmul.f32 %v407, %v913
      %v1368 = vmul.f32 %v408, %v928
      %v1369 = vmul.f32 %v409, %v943
      %v1370 = vmul.f32 %v410, %v958
      %v1371 = vmul.f32 %v411, %v973
      %v1372 = vmul.f32 %v412, %v988
      %v1373 = vmul.f32 %v413, %v1003
      %v1374 = vmul.f32 %v414, %v1018
      %v1375 = vmul.f32 %v415, %v1033
      %v1376 = vmul.f32 %v416, %v1048
      %v1377 = vmul.f32 %v417, %v1063
      %v1378 = vmul.f32 %v418, %v1078
      %v1379 = vmul.f32 %v419, %v1093
      %v1380 = vmul.f32 %v420, %v1108
      %v1381 = vmul.f32 %v421, %v1123
      %v1382 = vmul.f32 %v422, %v1138
      %v1383 = vmul.f32 %v423, %v1153
      %v1384 = vmul.f32 %v424, %v1168
      %v1385 = vmul.f32 %v425, %v1183
      %v1386 = vmul.f32 %v426, %v1198
      %v1387 = vmul.f32 %v427, %v1213
      %v1388 = vmul.f32 %v428, %v1228
      %v1389 = vmul.f32 %v429, %v1243
      %v1390 = vmul.f32 %v430, %v1258
      %v1391 = vmul.f32 %v431, %v1273
      %v1392 = vmul.f32 %v432, %v1288
      %v1393 = vmul.f32 %v433, %v1303
      %v1394 = vmul.f32 %v434, %v1318
      %v1395 = vmul.f32 %v435, %v1333
      %v1396 = vmul.f32 %v436, %v1348
      %v1397 = vpack.c.bf16 %v1349, %v1349
      %v1398 = vpack.c.bf16 %v1350, %v1350
      %v1399 = vpack.c.bf16 %v1351, %v1351
      %v1400 = vpack.c.bf16 %v1352, %v1352
      %v1401 = vpack.c.bf16 %v1353, %v1353
      %v1402 = vpack.c.bf16 %v1354, %v1354
      %v1403 = vpack.c.bf16 %v1355, %v1355
      %v1404 = vpack.c.bf16 %v1356, %v1356
      %v1405 = vpack.c.bf16 %v1357, %v1357
      %v1406 = vpack.c.bf16 %v1358, %v1358
      %v1407 = vpack.c.bf16 %v1359, %v1359
      %v1408 = vpack.c.bf16 %v1360, %v1360
      %v1409 = vpack.c.bf16 %v1361, %v1361
      %v1410 = vpack.c.bf16 %v1362, %v1362
      %v1411 = vpack.c.bf16 %v1363, %v1363
      %v1412 = vpack.c.bf16 %v1364, %v1364
      %v1413 = vpack.c.bf16 %v1365, %v1365
      %v1414 = vpack.c.bf16 %v1366, %v1366
      %v1415 = vpack.c.bf16 %v1367, %v1367
      %v1416 = vpack.c.bf16 %v1368, %v1368
      %v1417 = vpack.c.bf16 %v1369, %v1369
      %v1418 = vpack.c.bf16 %v1370, %v1370
      %v1419 = vpack.c.bf16 %v1371, %v1371
      %v1420 = vpack.c.bf16 %v1372, %v1372
      %v1421 = vpack.c.bf16 %v1373, %v1373
      %v1422 = vpack.c.bf16 %v1374, %v1374
      %v1423 = vpack.c.bf16 %v1375, %v1375
      %v1424 = vpack.c.bf16 %v1376, %v1376
      %v1425 = vpack.c.bf16 %v1377, %v1377
      %v1426 = vpack.c.bf16 %v1378, %v1378
      %v1427 = vpack.c.bf16 %v1379, %v1379
      %v1428 = vpack.c.bf16 %v1380, %v1380
      %v1429 = vpack.c.bf16 %v1381, %v1381
      %v1430 = vpack.c.bf16 %v1382, %v1382
      %v1431 = vpack.c.bf16 %v1383, %v1383
      %v1432 = vpack.c.bf16 %v1384, %v1384
      %v1433 = vpack.c.bf16 %v1385, %v1385
      %v1434 = vpack.c.bf16 %v1386, %v1386
      %v1435 = vpack.c.bf16 %v1387, %v1387
      %v1436 = vpack.c.bf16 %v1388, %v1388
      %v1437 = vpack.c.bf16 %v1389, %v1389
      %v1438 = vpack.c.bf16 %v1390, %v1390
      %v1439 = vpack.c.bf16 %v1391, %v1391
      %v1440 = vpack.c.bf16 %v1392, %v1392
      %v1441 = vpack.c.bf16 %v1393, %v1393
      %v1442 = vpack.c.bf16 %v1394, %v1394
      %v1443 = vpack.c.bf16 %v1395, %v1395
      %v1444 = vpack.c.bf16 %v1396, %v1396
      %v1493 = vunpack.c.l.b16 %v1397
      %v1494 = vunpack.c.l.b16 %v1398
      %v1495 = vunpack.c.l.b16 %v1399
      %v1496 = vunpack.c.l.b16 %v1400
      %v1497 = vunpack.c.l.b16 %v1401
      %v1498 = vunpack.c.l.b16 %v1402
      %v1499 = vunpack.c.l.b16 %v1403
      %v1500 = vunpack.c.l.b16 %v1404
      %v1501 = vunpack.c.l.b16 %v1405
      %v1502 = vunpack.c.l.b16 %v1406
      %v1503 = vunpack.c.l.b16 %v1407
      %v1504 = vunpack.c.l.b16 %v1408
      %v1505 = vunpack.c.l.b16 %v1409
      %v1506 = vunpack.c.l.b16 %v1410
      %v1507 = vunpack.c.l.b16 %v1411
      %v1508 = vunpack.c.l.b16 %v1412
      %v1509 = vunpack.c.l.b16 %v1413
      %v1510 = vunpack.c.l.b16 %v1414
      %v1511 = vunpack.c.l.b16 %v1415
      %v1512 = vunpack.c.l.b16 %v1416
      %v1513 = vunpack.c.l.b16 %v1417
      %v1514 = vunpack.c.l.b16 %v1418
      %v1515 = vunpack.c.l.b16 %v1419
      %v1516 = vunpack.c.l.b16 %v1420
      %v1517 = vunpack.c.l.b16 %v1421
      %v1518 = vunpack.c.l.b16 %v1422
      %v1519 = vunpack.c.l.b16 %v1423
      %v1520 = vunpack.c.l.b16 %v1424
      %v1521 = vunpack.c.l.b16 %v1425
      %v1522 = vunpack.c.l.b16 %v1426
      %v1523 = vunpack.c.l.b16 %v1427
      %v1524 = vunpack.c.l.b16 %v1428
      %v1525 = vunpack.c.l.b16 %v1429
      %v1526 = vunpack.c.l.b16 %v1430
      %v1527 = vunpack.c.l.b16 %v1431
      %v1528 = vunpack.c.l.b16 %v1432
      %v1529 = vunpack.c.l.b16 %v1433
      %v1530 = vunpack.c.l.b16 %v1434
      %v1531 = vunpack.c.l.b16 %v1435
      %v1532 = vunpack.c.l.b16 %v1436
      %v1533 = vunpack.c.l.b16 %v1437
      %v1534 = vunpack.c.l.b16 %v1438
      %v1535 = vunpack.c.l.b16 %v1439
      %v1536 = vunpack.c.l.b16 %v1440
      %v1537 = vunpack.c.l.b16 %v1441
      %v1538 = vunpack.c.l.b16 %v1442
      %v1539 = vunpack.c.l.b16 %v1443
      %v1540 = vunpack.c.l.b16 %v1444
      %v1541 = vpack.c.b16 %v1494, %v1493
      %v1542 = vpack.c.b16 %v1495, %v1495
      %v1543 = vpack.c.b16 %v1497, %v1496
      %v1544 = vpack.c.b16 %v1498, %v1498
      %v1545 = vpack.c.b16 %v1500, %v1499
      %v1546 = vpack.c.b16 %v1501, %v1501
      %v1547 = vpack.c.b16 %v1503, %v1502
      %v1548 = vpack.c.b16 %v1504, %v1504
      %v1549 = vpack.c.b16 %v1506, %v1505
      %v1550 = vpack.c.b16 %v1507, %v1507
      %v1551 = vpack.c.b16 %v1509, %v1508
      %v1552 = vpack.c.b16 %v1510, %v1510
      %v1553 = vpack.c.b16 %v1512, %v1511
      %v1554 = vpack.c.b16 %v1513, %v1513
      %v1555 = vpack.c.b16 %v1515, %v1514
      %v1556 = vpack.c.b16 %v1516, %v1516
      %v1557 = vpack.c.b16 %v1518, %v1517
      %v1558 = vpack.c.b16 %v1519, %v1519
      %v1559 = vpack.c.b16 %v1521, %v1520
      %v1560 = vpack.c.b16 %v1522, %v1522
      %v1561 = vpack.c.b16 %v1524, %v1523
      %v1562 = vpack.c.b16 %v1525, %v1525
      %v1563 = vpack.c.b16 %v1527, %v1526
      %v1564 = vpack.c.b16 %v1528, %v1528
      %v1565 = vpack.c.b16 %v1530, %v1529
      %v1566 = vpack.c.b16 %v1531, %v1531
      %v1567 = vpack.c.b16 %v1533, %v1532
      %v1568 = vpack.c.b16 %v1534, %v1534
      %v1569 = vpack.c.b16 %v1536, %v1535
      %v1570 = vpack.c.b16 %v1537, %v1537
      %v1571 = vpack.c.b16 %v1539, %v1538
      %v1572 = vpack.c.b16 %v1540, %v1540
      %vm1605 = vcmask 1040384
      %vm1606 = vsmask.f32 256
      %vm1607 = vmand %vm1605, %vm1606
      %v1608 = vsel %vm1607, 0, %v1541
      %v1609 = vsel %vm1607, 0, %v1543
      %v1610 = vsel %vm1607, 0, %v1545
      %v1611 = vsel %vm1607, 0, %v1547
      %v1612 = vsel %vm1607, 0, %v1549
      %v1613 = vsel %vm1607, 0, %v1551
      %v1614 = vsel %vm1607, 0, %v1553
      %v1615 = vsel %vm1607, 0, %v1555
      %v1616 = vsel %vm1607, 0, %v1557
      %v1617 = vsel %vm1607, 0, %v1559
      %v1618 = vsel %vm1607, 0, %v1561
      %v1619 = vsel %vm1607, 0, %v1563
      %v1620 = vsel %vm1607, 0, %v1565
      %v1621 = vsel %vm1607, 0, %v1567
      %v1622 = vsel %vm1607, 0, %v1569
      %v1623 = vsel %vm1607, 0, %v1571
      %v1624 = vsel %vm1607, %v1542, 0
      %v1625 = vsel %vm1607, %v1544, 0
      %v1626 = vsel %vm1607, %v1546, 0
      %v1627 = vsel %vm1607, %v1548, 0
      %v1628 = vsel %vm1607, %v1550, 0
      %v1629 = vsel %vm1607, %v1552, 0
      %v1630 = vsel %vm1607, %v1554, 0
      %v1631 = vsel %vm1607, %v1556, 0
      %v1632 = vsel %vm1607, %v1558, 0
      %v1633 = vsel %vm1607, %v1560, 0
      %v1634 = vsel %vm1607, %v1562, 0
      %v1635 = vsel %vm1607, %v1564, 0
      %v1636 = vsel %vm1607, %v1566, 0
      %v1637 = vsel %vm1607, %v1568, 0
      %v1638 = vsel %vm1607, %v1570, 0
      %v1639 = vsel %vm1607, %v1572, 0
      %v1640 = vld [vmem:[%s1] sm:$0xf]
      %v1641 = vld [vmem:[%s1 + $0x4] sm:$0xf]
      %v1642 = vld [vmem:[%s1 + $0x8] sm:$0xf]
      %v1643 = vld [vmem:[%s1 + $0xc] sm:$0xf]
      %v1644 = vld [vmem:[%s1 + $0x10] sm:$0xf]
      %v1645 = vld [vmem:[%s1 + $0x14] sm:$0xf]
      %v1646 = vld [vmem:[%s1 + $0x18] sm:$0xf]
      %v1647 = vld [vmem:[%s1 + $0x1c] sm:$0xf]
      %v1648 = vld [vmem:[%s1 + $0x20] sm:$0xf]
      %v1649 = vld [vmem:[%s1 + $0x24] sm:$0xf]
      %v1650 = vld [vmem:[%s1 + $0x28] sm:$0xf]
      %v1651 = vld [vmem:[%s1 + $0x2c] sm:$0xf]
      %v1652 = vld [vmem:[%s1 + $0x30] sm:$0xf]
      %v1653 = vld [vmem:[%s1 + $0x34] sm:$0xf]
      %v1654 = vld [vmem:[%s1 + $0x38] sm:$0xf]
      %v1655 = vld [vmem:[%s1 + $0x3c] sm:$0xf]
      %v1656 = vld [vmem:[%s1 + $0x40] sm:$0xf]
      %v1657 = vld [vmem:[%s1 + $0x44] sm:$0xf]
      %v1658 = vld [vmem:[%s1 + $0x48] sm:$0xf]
      %v1659 = vld [vmem:[%s1 + $0x4c] sm:$0xf]
      %v1660 = vld [vmem:[%s1 + $0x50] sm:$0xf]
      %v1661 = vld [vmem:[%s1 + $0x54] sm:$0xf]
      %v1662 = vld [vmem:[%s1 + $0x58] sm:$0xf]
      %v1663 = vld [vmem:[%s1 + $0x5c] sm:$0xf]
      %v1664 = vld [vmem:[%s1 + $0x60] sm:$0xf]
      %v1665 = vld [vmem:[%s1 + $0x64] sm:$0xf]
      %v1666 = vld [vmem:[%s1 + $0x68] sm:$0xf]
      %v1667 = vld [vmem:[%s1 + $0x6c] sm:$0xf]
      %v1668 = vld [vmem:[%s1 + $0x70] sm:$0xf]
      %v1669 = vld [vmem:[%s1 + $0x74] sm:$0xf]
      %v1670 = vld [vmem:[%s1 + $0x78] sm:$0xf]
      %v1671 = vld [vmem:[%s1 + $0x7c] sm:$0xf]
      %v1672 = vld [vmem:[%s1 + $0x80] sm:$0xf]
      %v1673 = vld [vmem:[%s1 + $0x84] sm:$0xf]
      %v1674 = vld [vmem:[%s1 + $0x88] sm:$0xf]
      %v1675 = vld [vmem:[%s1 + $0x8c] sm:$0xf]
      %v1676 = vld [vmem:[%s1 + $0x90] sm:$0xf]
      %v1677 = vld [vmem:[%s1 + $0x94] sm:$0xf]
      %v1678 = vld [vmem:[%s1 + $0x98] sm:$0xf]
      %v1679 = vld [vmem:[%s1 + $0x9c] sm:$0xf]
      %v1680 = vld [vmem:[%s1 + $0xa0] sm:$0xf]
      %v1681 = vld [vmem:[%s1 + $0xa4] sm:$0xf]
      %v1682 = vld [vmem:[%s1 + $0xa8] sm:$0xf]
      %v1683 = vld [vmem:[%s1 + $0xac] sm:$0xf]
      %v1684 = vld [vmem:[%s1 + $0xb0] sm:$0xf]
      %v1685 = vld [vmem:[%s1 + $0xb4] sm:$0xf]
      %v1686 = vld [vmem:[%s1 + $0xb8] sm:$0xf]
      %v1687 = vld [vmem:[%s1 + $0xbc] sm:$0xf]
      %vm1688 = vsmask.f32 7424
      %v1690 = vshrl.u32 0, 16
      %v1692 = vshll.u32 0, 16
      %v1694 = vrot.slane %v1692, 1
      %v1695 = vor.u32 %v1690, %v1694
      %v1696 = vsel %vm1688, %v1695, %v1694
      %v1698 = vshrl.u32 %v1608, 16
      %v1700 = vshll.u32 %v1608, 16
      %v1702 = vrot.slane %v1700, 1
      %v1703 = vor.u32 %v1698, %v1702
      %v1705 = vshll.u32 %v1624, 16
      %v1707 = vrot.slane %v1705, 1
      %v1708 = vsel %vm1688, %v1703, %v1707
      %v1710 = vshrl.u32 %v1609, 16
      %v1712 = vshll.u32 %v1609, 16
      %v1714 = vrot.slane %v1712, 1
      %v1715 = vor.u32 %v1710, %v1714
      %v1717 = vshll.u32 %v1625, 16
      %v1719 = vrot.slane %v1717, 1
      %v1720 = vsel %vm1688, %v1715, %v1719
      %v1722 = vshrl.u32 %v1610, 16
      %v1724 = vshll.u32 %v1610, 16
      %v1726 = vrot.slane %v1724, 1
      %v1727 = vor.u32 %v1722, %v1726
      %v1729 = vshll.u32 %v1626, 16
      %v1731 = vrot.slane %v1729, 1
      %v1732 = vsel %vm1688, %v1727, %v1731
      %v1734 = vshrl.u32 %v1611, 16
      %v1736 = vshll.u32 %v1611, 16
      %v1738 = vrot.slane %v1736, 1
      %v1739 = vor.u32 %v1734, %v1738
      %v1741 = vshll.u32 %v1627, 16
      %v1743 = vrot.slane %v1741, 1
      %v1744 = vsel %vm1688, %v1739, %v1743
      %v1746 = vshrl.u32 %v1612, 16
      %v1748 = vshll.u32 %v1612, 16
      %v1750 = vrot.slane %v1748, 1
      %v1751 = vor.u32 %v1746, %v1750
      %v1753 = vshll.u32 %v1628, 16
      %v1755 = vrot.slane %v1753, 1
      %v1756 = vsel %vm1688, %v1751, %v1755
      %v1758 = vshrl.u32 %v1613, 16
      %v1760 = vshll.u32 %v1613, 16
      %v1762 = vrot.slane %v1760, 1
      %v1763 = vor.u32 %v1758, %v1762
      %v1765 = vshll.u32 %v1629, 16
      %v1767 = vrot.slane %v1765, 1
      %v1768 = vsel %vm1688, %v1763, %v1767
      %v1770 = vshrl.u32 %v1614, 16
      %v1772 = vshll.u32 %v1614, 16
      %v1774 = vrot.slane %v1772, 1
      %v1775 = vor.u32 %v1770, %v1774
      %v1777 = vshll.u32 %v1630, 16
      %v1779 = vrot.slane %v1777, 1
      %v1780 = vsel %vm1688, %v1775, %v1779
      %v1782 = vshrl.u32 %v1615, 16
      %v1784 = vshll.u32 %v1615, 16
      %v1786 = vrot.slane %v1784, 1
      %v1787 = vor.u32 %v1782, %v1786
      %v1789 = vshll.u32 %v1631, 16
      %v1791 = vrot.slane %v1789, 1
      %v1792 = vsel %vm1688, %v1787, %v1791
      %v1794 = vshrl.u32 %v1616, 16
      %v1796 = vshll.u32 %v1616, 16
      %v1798 = vrot.slane %v1796, 1
      %v1799 = vor.u32 %v1794, %v1798
      %v1801 = vshll.u32 %v1632, 16
      %v1803 = vrot.slane %v1801, 1
      %v1804 = vsel %vm1688, %v1799, %v1803
      %v1806 = vshrl.u32 %v1617, 16
      %v1808 = vshll.u32 %v1617, 16
      %v1810 = vrot.slane %v1808, 1
      %v1811 = vor.u32 %v1806, %v1810
      %v1813 = vshll.u32 %v1633, 16
      %v1815 = vrot.slane %v1813, 1
      %v1816 = vsel %vm1688, %v1811, %v1815
      %v1818 = vshrl.u32 %v1618, 16
      %v1820 = vshll.u32 %v1618, 16
      %v1822 = vrot.slane %v1820, 1
      %v1823 = vor.u32 %v1818, %v1822
      %v1825 = vshll.u32 %v1634, 16
      %v1827 = vrot.slane %v1825, 1
      %v1828 = vsel %vm1688, %v1823, %v1827
      %v1830 = vshrl.u32 %v1619, 16
      %v1832 = vshll.u32 %v1619, 16
      %v1834 = vrot.slane %v1832, 1
      %v1835 = vor.u32 %v1830, %v1834
      %v1837 = vshll.u32 %v1635, 16
      %v1839 = vrot.slane %v1837, 1
      %v1840 = vsel %vm1688, %v1835, %v1839
      %v1842 = vshrl.u32 %v1620, 16
      %v1844 = vshll.u32 %v1620, 16
      %v1846 = vrot.slane %v1844, 1
      %v1847 = vor.u32 %v1842, %v1846
      %v1849 = vshll.u32 %v1636, 16
      %v1851 = vrot.slane %v1849, 1
      %v1852 = vsel %vm1688, %v1847, %v1851
      %v1854 = vshrl.u32 %v1621, 16
      %v1856 = vshll.u32 %v1621, 16
      %v1858 = vrot.slane %v1856, 1
      %v1859 = vor.u32 %v1854, %v1858
      %v1861 = vshll.u32 %v1637, 16
      %v1863 = vrot.slane %v1861, 1
      %v1864 = vsel %vm1688, %v1859, %v1863
      %v1866 = vshrl.u32 %v1622, 16
      %v1868 = vshll.u32 %v1622, 16
      %v1870 = vrot.slane %v1868, 1
      %v1871 = vor.u32 %v1866, %v1870
      %v1873 = vshll.u32 %v1638, 16
      %v1875 = vrot.slane %v1873, 1
      %v1876 = vsel %vm1688, %v1871, %v1875
      %v1878 = vshrl.u32 %v1623, 16
      %v1880 = vshll.u32 %v1623, 16
      %v1882 = vrot.slane %v1880, 1
      %v1883 = vor.u32 %v1878, %v1882
      %v1885 = vshll.u32 %v1639, 16
      %v1887 = vrot.slane %v1885, 1
      %v1888 = vsel %vm1688, %v1883, %v1887
      %s1906 = scalar_lea.vmem %s1, 192
      %v1907 = vld [vmem:[%s1906] sm:$0xf]
      %v1908 = vld [vmem:[%s1906 + $0x4] sm:$0xf]
      %v1909 = vld [vmem:[%s1906 + $0x8] sm:$0xf]
      %v1910 = vld [vmem:[%s1906 + $0xc] sm:$0xf]
      %v1911 = vld [vmem:[%s1906 + $0x10] sm:$0xf]
      %v1912 = vld [vmem:[%s1906 + $0x14] sm:$0xf]
      %v1913 = vld [vmem:[%s1906 + $0x18] sm:$0xf]
      %v1914 = vld [vmem:[%s1906 + $0x1c] sm:$0xf]
      %v1915 = vld [vmem:[%s1906 + $0x20] sm:$0xf]
      %v1916 = vld [vmem:[%s1906 + $0x24] sm:$0xf]
      %v1917 = vld [vmem:[%s1906 + $0x28] sm:$0xf]
      %v1918 = vld [vmem:[%s1906 + $0x2c] sm:$0xf]
      %v1919 = vld [vmem:[%s1906 + $0x30] sm:$0xf]
      %v1920 = vld [vmem:[%s1906 + $0x34] sm:$0xf]
      %v1921 = vld [vmem:[%s1906 + $0x38] sm:$0xf]
      %v1922 = vld [vmem:[%s1906 + $0x3c] sm:$0xf]
      %v1923 = vld [vmem:[%s1906 + $0x40] sm:$0xf]
      %v1924 = vld [vmem:[%s1906 + $0x44] sm:$0xf]
      %v1925 = vld [vmem:[%s1906 + $0x48] sm:$0xf]
      %v1926 = vld [vmem:[%s1906 + $0x4c] sm:$0xf]
      %v1927 = vld [vmem:[%s1906 + $0x50] sm:$0xf]
      %v1928 = vld [vmem:[%s1906 + $0x54] sm:$0xf]
      %v1929 = vld [vmem:[%s1906 + $0x58] sm:$0xf]
      %v1930 = vld [vmem:[%s1906 + $0x5c] sm:$0xf]
      %v1931 = vld [vmem:[%s1906 + $0x60] sm:$0xf]
      %v1932 = vld [vmem:[%s1906 + $0x64] sm:$0xf]
      %v1933 = vld [vmem:[%s1906 + $0x68] sm:$0xf]
      %v1934 = vld [vmem:[%s1906 + $0x6c] sm:$0xf]
      %v1935 = vld [vmem:[%s1906 + $0x70] sm:$0xf]
      %v1936 = vld [vmem:[%s1906 + $0x74] sm:$0xf]
      %v1937 = vld [vmem:[%s1906 + $0x78] sm:$0xf]
      %v1938 = vld [vmem:[%s1906 + $0x7c] sm:$0xf]
      %v1939 = vld [vmem:[%s1906 + $0x80] sm:$0xf]
      %v1940 = vld [vmem:[%s1906 + $0x84] sm:$0xf]
      %v1941 = vld [vmem:[%s1906 + $0x88] sm:$0xf]
      %v1942 = vld [vmem:[%s1906 + $0x8c] sm:$0xf]
      %v1943 = vld [vmem:[%s1906 + $0x90] sm:$0xf]
      %v1944 = vld [vmem:[%s1906 + $0x94] sm:$0xf]
      %v1945 = vld [vmem:[%s1906 + $0x98] sm:$0xf]
      %v1946 = vld [vmem:[%s1906 + $0x9c] sm:$0xf]
      %v1947 = vld [vmem:[%s1906 + $0xa0] sm:$0xf]
      %v1948 = vld [vmem:[%s1906 + $0xa4] sm:$0xf]
      %v1949 = vld [vmem:[%s1906 + $0xa8] sm:$0xf]
      %v1950 = vld [vmem:[%s1906 + $0xac] sm:$0xf]
      %v1951 = vld [vmem:[%s1906 + $0xb0] sm:$0xf]
      %v1952 = vld [vmem:[%s1906 + $0xb4] sm:$0xf]
      %v1953 = vld [vmem:[%s1906 + $0xb8] sm:$0xf]
      %v1954 = vld [vmem:[%s1906 + $0xbc] sm:$0xf]
      %v2003 = vunpack.c.l.b16 %v1907
      %v2004 = vunpack.c.l.b16 %v1908
      %v2005 = vunpack.c.l.b16 %v1909
      %v2006 = vunpack.c.l.b16 %v1910
      %v2007 = vunpack.c.l.b16 %v1911
      %v2008 = vunpack.c.l.b16 %v1912
      %v2009 = vunpack.c.l.b16 %v1913
      %v2010 = vunpack.c.l.b16 %v1914
      %v2011 = vunpack.c.l.b16 %v1915
      %v2012 = vunpack.c.l.b16 %v1916
      %v2013 = vunpack.c.l.b16 %v1917
      %v2014 = vunpack.c.l.b16 %v1918
      %v2015 = vunpack.c.l.b16 %v1919
      %v2016 = vunpack.c.l.b16 %v1920
      %v2017 = vunpack.c.l.b16 %v1921
      %v2018 = vunpack.c.l.b16 %v1922
      %v2019 = vunpack.c.l.b16 %v1923
      %v2020 = vunpack.c.l.b16 %v1924
      %v2021 = vunpack.c.l.b16 %v1925
      %v2022 = vunpack.c.l.b16 %v1926
      %v2023 = vunpack.c.l.b16 %v1927
      %v2024 = vunpack.c.l.b16 %v1928
      %v2025 = vunpack.c.l.b16 %v1929
      %v2026 = vunpack.c.l.b16 %v1930
      %v2027 = vunpack.c.l.b16 %v1931
      %v2028 = vunpack.c.l.b16 %v1932
      %v2029 = vunpack.c.l.b16 %v1933
      %v2030 = vunpack.c.l.b16 %v1934
      %v2031 = vunpack.c.l.b16 %v1935
      %v2032 = vunpack.c.l.b16 %v1936
      %v2033 = vunpack.c.l.b16 %v1937
      %v2034 = vunpack.c.l.b16 %v1938
      %v2035 = vunpack.c.l.b16 %v1939
      %v2036 = vunpack.c.l.b16 %v1940
      %v2037 = vunpack.c.l.b16 %v1941
      %v2038 = vunpack.c.l.b16 %v1942
      %v2039 = vunpack.c.l.b16 %v1943
      %v2040 = vunpack.c.l.b16 %v1944
      %v2041 = vunpack.c.l.b16 %v1945
      %v2042 = vunpack.c.l.b16 %v1946
      %v2043 = vunpack.c.l.b16 %v1947
      %v2044 = vunpack.c.l.b16 %v1948
      %v2045 = vunpack.c.l.b16 %v1949
      %v2046 = vunpack.c.l.b16 %v1950
      %v2047 = vunpack.c.l.b16 %v1951
      %v2048 = vunpack.c.l.b16 %v1952
      %v2049 = vunpack.c.l.b16 %v1953
      %v2050 = vunpack.c.l.b16 %v1954
      %v2051 = vpack.c.b16 %v2004, %v2003
      %v2052 = vpack.c.b16 %v2006, %v2005
      %v2053 = vpack.c.b16 %v2008, %v2007
      %v2054 = vpack.c.b16 %v2010, %v2009
      %v2055 = vpack.c.b16 %v2012, %v2011
      %v2056 = vpack.c.b16 %v2014, %v2013
      %v2057 = vpack.c.b16 %v2016, %v2015
      %v2058 = vpack.c.b16 %v2018, %v2017
      %v2059 = vpack.c.b16 %v2020, %v2019
      %v2060 = vpack.c.b16 %v2022, %v2021
      %v2061 = vpack.c.b16 %v2024, %v2023
      %v2062 = vpack.c.b16 %v2026, %v2025
      %v2063 = vpack.c.b16 %v2028, %v2027
      %v2064 = vpack.c.b16 %v2030, %v2029
      %v2065 = vpack.c.b16 %v2032, %v2031
      %v2066 = vpack.c.b16 %v2034, %v2033
      %v2067 = vpack.c.b16 %v2036, %v2035
      %v2068 = vpack.c.b16 %v2038, %v2037
      %v2069 = vpack.c.b16 %v2040, %v2039
      %v2070 = vpack.c.b16 %v2042, %v2041
      %v2071 = vpack.c.b16 %v2044, %v2043
      %v2072 = vpack.c.b16 %v2046, %v2045
      %v2073 = vpack.c.b16 %v2048, %v2047
      %v2074 = vpack.c.b16 %v2050, %v2049
      %2099 = vmatpush.bf16.msra.mxu0 %v2058
      %2100 = vmatpush.bf16.msra.mxu0 %v2057
      %2101 = vmatpush.bf16.msra.mxu0 %v2056
      %2102 = vmatpush.bf16.msra.mxu0 %v2055
      %2103 = vmatpush.bf16.msra.mxu0 %v2054
      %2104 = vmatpush.bf16.msra.mxu0 %v2053
      %2105 = vmatpush.bf16.msra.mxu0 %v2052
      %2106 = vmatpush.bf16.msra.mxu0 %v2051
      %2107 = vmatmul.bf16.gmra.mxu0 %v1696
      %v2108 = vpop.f32.mrf.mxu0
      %v2109 = vadd.f32 0.0, %v2108
      %v2110 = vpop.f32.mrf.mxu0
      %v2111 = vadd.f32 0.0, %v2110
      %2112 = vmatmul.bf16.gmra.mxu0 %v1708
      %v2113 = vpop.f32.mrf.mxu0
      %v2114 = vadd.f32 0.0, %v2113
      %v2115 = vpop.f32.mrf.mxu0
      %v2116 = vadd.f32 0.0, %v2115
      %2117 = vmatmul.bf16.gmra.mxu0 %v1720
      %v2118 = vpop.f32.mrf.mxu0
      %v2119 = vadd.f32 0.0, %v2118
      %v2120 = vpop.f32.mrf.mxu0
      %v2121 = vadd.f32 0.0, %v2120
      %2122 = vmatmul.bf16.gmra.mxu0 %v1732
      %v2123 = vpop.f32.mrf.mxu0
      %v2124 = vadd.f32 0.0, %v2123
      %v2125 = vpop.f32.mrf.mxu0
      %v2126 = vadd.f32 0.0, %v2125
      %2127 = vmatmul.bf16.gmra.mxu0 %v1744
      %v2128 = vpop.f32.mrf.mxu0
      %v2129 = vadd.f32 0.0, %v2128
      %v2130 = vpop.f32.mrf.mxu0
      %v2131 = vadd.f32 0.0, %v2130
      %2132 = vmatmul.bf16.gmra.mxu0 %v1756
      %v2133 = vpop.f32.mrf.mxu0
      %v2134 = vadd.f32 0.0, %v2133
      %v2135 = vpop.f32.mrf.mxu0
      %v2136 = vadd.f32 0.0, %v2135
      %2137 = vmatmul.bf16.gmra.mxu0 %v1768
      %v2138 = vpop.f32.mrf.mxu0
      %v2139 = vadd.f32 0.0, %v2138
      %v2140 = vpop.f32.mrf.mxu0
      %v2141 = vadd.f32 0.0, %v2140
      %2142 = vmatmul.bf16.gmra.mxu0 %v1780
      %v2143 = vpop.f32.mrf.mxu0
      %v2144 = vadd.f32 0.0, %v2143
      %v2145 = vpop.f32.mrf.mxu0
      %v2146 = vadd.f32 0.0, %v2145
      %2147 = vmatmul.bf16.gmra.mxu0 %v1792
      %v2148 = vpop.f32.mrf.mxu0
      %v2149 = vadd.f32 0.0, %v2148
      %v2150 = vpop.f32.mrf.mxu0
      %v2151 = vadd.f32 0.0, %v2150
      %2152 = vmatmul.bf16.gmra.mxu0 %v1804
      %v2153 = vpop.f32.mrf.mxu0
      %v2154 = vadd.f32 0.0, %v2153
      %v2155 = vpop.f32.mrf.mxu0
      %v2156 = vadd.f32 0.0, %v2155
      %2157 = vmatmul.bf16.gmra.mxu0 %v1816
      %v2158 = vpop.f32.mrf.mxu0
      %v2159 = vadd.f32 0.0, %v2158
      %v2160 = vpop.f32.mrf.mxu0
      %v2161 = vadd.f32 0.0, %v2160
      %2162 = vmatmul.bf16.gmra.mxu0 %v1828
      %v2163 = vpop.f32.mrf.mxu0
      %v2164 = vadd.f32 0.0, %v2163
      %v2165 = vpop.f32.mrf.mxu0
      %v2166 = vadd.f32 0.0, %v2165
      %2167 = vmatmul.bf16.gmra.mxu0 %v1840
      %v2168 = vpop.f32.mrf.mxu0
      %v2169 = vadd.f32 0.0, %v2168
      %v2170 = vpop.f32.mrf.mxu0
      %v2171 = vadd.f32 0.0, %v2170
      %2172 = vmatmul.bf16.gmra.mxu0 %v1852
      %v2173 = vpop.f32.mrf.mxu0
      %v2174 = vadd.f32 0.0, %v2173
      %v2175 = vpop.f32.mrf.mxu0
      %v2176 = vadd.f32 0.0, %v2175
      %2177 = vmatmul.bf16.gmra.mxu0 %v1864
      %v2178 = vpop.f32.mrf.mxu0
      %v2179 = vadd.f32 0.0, %v2178
      %v2180 = vpop.f32.mrf.mxu0
      %v2181 = vadd.f32 0.0, %v2180
      %2182 = vmatmul.bf16.gmra.mxu0 %v1876
      %v2183 = vpop.f32.mrf.mxu0
      %v2184 = vadd.f32 0.0, %v2183
      %v2185 = vpop.f32.mrf.mxu0
      %v2186 = vadd.f32 0.0, %v2185
      %2187 = vdwg.mxu0
      %2188 = vmatpush.bf16.msra.mxu0 %v2066
      %2189 = vmatpush.bf16.msra.mxu0 %v2065
      %2190 = vmatpush.bf16.msra.mxu0 %v2064
      %2191 = vmatpush.bf16.msra.mxu0 %v2063
      %2192 = vmatpush.bf16.msra.mxu0 %v2062
      %2193 = vmatpush.bf16.msra.mxu0 %v2061
      %2194 = vmatpush.bf16.msra.mxu0 %v2060
      %2195 = vmatpush.bf16.msra.mxu0 %v2059
      %2196 = vmatmul.bf16.gmra.mxu0 %v1708
      %v2197 = vpop.f32.mrf.mxu0
      %v2198 = vadd.f32 %v2109, %v2197
      %v2199 = vpop.f32.mrf.mxu0
      %v2200 = vadd.f32 %v2111, %v2199
      %2201 = vmatmul.bf16.gmra.mxu0 %v1720
      %v2202 = vpop.f32.mrf.mxu0
      %v2203 = vadd.f32 %v2114, %v2202
      %v2204 = vpop.f32.mrf.mxu0
      %v2205 = vadd.f32 %v2116, %v2204
      %2206 = vmatmul.bf16.gmra.mxu0 %v1732
      %v2207 = vpop.f32.mrf.mxu0
      %v2208 = vadd.f32 %v2119, %v2207
      %v2209 = vpop.f32.mrf.mxu0
      %v2210 = vadd.f32 %v2121, %v2209
      %2211 = vmatmul.bf16.gmra.mxu0 %v1744
      %v2212 = vpop.f32.mrf.mxu0
      %v2213 = vadd.f32 %v2124, %v2212
      %v2214 = vpop.f32.mrf.mxu0
      %v2215 = vadd.f32 %v2126, %v2214
      %2216 = vmatmul.bf16.gmra.mxu0 %v1756
      %v2217 = vpop.f32.mrf.mxu0
      %v2218 = vadd.f32 %v2129, %v2217
      %v2219 = vpop.f32.mrf.mxu0
      %v2220 = vadd.f32 %v2131, %v2219
      %2221 = vmatmul.bf16.gmra.mxu0 %v1768
      %v2222 = vpop.f32.mrf.mxu0
      %v2223 = vadd.f32 %v2134, %v2222
      %v2224 = vpop.f32.mrf.mxu0
      %v2225 = vadd.f32 %v2136, %v2224
      %2226 = vmatmul.bf16.gmra.mxu0 %v1780
      %v2227 = vpop.f32.mrf.mxu0
      %v2228 = vadd.f32 %v2139, %v2227
      %v2229 = vpop.f32.mrf.mxu0
      %v2230 = vadd.f32 %v2141, %v2229
      %2231 = vmatmul.bf16.gmra.mxu0 %v1792
      %v2232 = vpop.f32.mrf.mxu0
      %v2233 = vadd.f32 %v2144, %v2232
      %v2234 = vpop.f32.mrf.mxu0
      %v2235 = vadd.f32 %v2146, %v2234
      %2236 = vmatmul.bf16.gmra.mxu0 %v1804
      %v2237 = vpop.f32.mrf.mxu0
      %v2238 = vadd.f32 %v2149, %v2237
      %v2239 = vpop.f32.mrf.mxu0
      %v2240 = vadd.f32 %v2151, %v2239
      %2241 = vmatmul.bf16.gmra.mxu0 %v1816
      %v2242 = vpop.f32.mrf.mxu0
      %v2243 = vadd.f32 %v2154, %v2242
      %v2244 = vpop.f32.mrf.mxu0
      %v2245 = vadd.f32 %v2156, %v2244
      %2246 = vmatmul.bf16.gmra.mxu0 %v1828
      %v2247 = vpop.f32.mrf.mxu0
      %v2248 = vadd.f32 %v2159, %v2247
      %v2249 = vpop.f32.mrf.mxu0
      %v2250 = vadd.f32 %v2161, %v2249
      %2251 = vmatmul.bf16.gmra.mxu0 %v1840
      %v2252 = vpop.f32.mrf.mxu0
      %v2253 = vadd.f32 %v2164, %v2252
      %v2254 = vpop.f32.mrf.mxu0
      %v2255 = vadd.f32 %v2166, %v2254
      %2256 = vmatmul.bf16.gmra.mxu0 %v1852
      %v2257 = vpop.f32.mrf.mxu0
      %v2258 = vadd.f32 %v2169, %v2257
      %v2259 = vpop.f32.mrf.mxu0
      %v2260 = vadd.f32 %v2171, %v2259
      %2261 = vmatmul.bf16.gmra.mxu0 %v1864
      %v2262 = vpop.f32.mrf.mxu0
      %v2263 = vadd.f32 %v2174, %v2262
      %v2264 = vpop.f32.mrf.mxu0
      %v2265 = vadd.f32 %v2176, %v2264
      %2266 = vmatmul.bf16.gmra.mxu0 %v1876
      %v2267 = vpop.f32.mrf.mxu0
      %v2268 = vadd.f32 %v2179, %v2267
      %v2269 = vpop.f32.mrf.mxu0
      %v2270 = vadd.f32 %v2181, %v2269
      %2271 = vmatmul.bf16.gmra.mxu0 %v1888
      %v2272 = vpop.f32.mrf.mxu0
      %v2273 = vadd.f32 %v2184, %v2272
      %v2274 = vpop.f32.mrf.mxu0
      %v2275 = vadd.f32 %v2186, %v2274
      %2276 = vdwg.mxu0
      %2277 = vmatpush.bf16.msra.mxu0 %v2074
      %2278 = vmatpush.bf16.msra.mxu0 %v2073
      %2279 = vmatpush.bf16.msra.mxu0 %v2072
      %2280 = vmatpush.bf16.msra.mxu0 %v2071
      %2281 = vmatpush.bf16.msra.mxu0 %v2070
      %2282 = vmatpush.bf16.msra.mxu0 %v2069
      %2283 = vmatpush.bf16.msra.mxu0 %v2068
      %2284 = vmatpush.bf16.msra.mxu0 %v2067
      %2285 = vmatmul.bf16.gmra.mxu0 %v1720
      %v2286 = vpop.f32.mrf.mxu0
      %v2287 = vadd.f32 %v2198, %v2286
      %v2288 = vpop.f32.mrf.mxu0
      %v2289 = vadd.f32 %v2200, %v2288
      %2290 = vmatmul.bf16.gmra.mxu0 %v1732
      %v2291 = vpop.f32.mrf.mxu0
      %v2292 = vadd.f32 %v2203, %v2291
      %v2293 = vpop.f32.mrf.mxu0
      %v2294 = vadd.f32 %v2205, %v2293
      %2295 = vmatmul.bf16.gmra.mxu0 %v1744
      %v2296 = vpop.f32.mrf.mxu0
      %v2297 = vadd.f32 %v2208, %v2296
      %v2298 = vpop.f32.mrf.mxu0
      %v2299 = vadd.f32 %v2210, %v2298
      %2300 = vmatmul.bf16.gmra.mxu0 %v1756
      %v2301 = vpop.f32.mrf.mxu0
      %v2302 = vadd.f32 %v2213, %v2301
      %v2303 = vpop.f32.mrf.mxu0
      %v2304 = vadd.f32 %v2215, %v2303
      %2305 = vmatmul.bf16.gmra.mxu0 %v1768
      %v2306 = vpop.f32.mrf.mxu0
      %v2307 = vadd.f32 %v2218, %v2306
      %v2308 = vpop.f32.mrf.mxu0
      %v2309 = vadd.f32 %v2220, %v2308
      %2310 = vmatmul.bf16.gmra.mxu0 %v1780
      %v2311 = vpop.f32.mrf.mxu0
      %v2312 = vadd.f32 %v2223, %v2311
      %v2313 = vpop.f32.mrf.mxu0
      %v2314 = vadd.f32 %v2225, %v2313
      %2315 = vmatmul.bf16.gmra.mxu0 %v1792
      %v2316 = vpop.f32.mrf.mxu0
      %v2317 = vadd.f32 %v2228, %v2316
      %v2318 = vpop.f32.mrf.mxu0
      %v2319 = vadd.f32 %v2230, %v2318
      %2320 = vmatmul.bf16.gmra.mxu0 %v1804
      %v2321 = vpop.f32.mrf.mxu0
      %v2322 = vadd.f32 %v2233, %v2321
      %v2323 = vpop.f32.mrf.mxu0
      %v2324 = vadd.f32 %v2235, %v2323
      %2325 = vmatmul.bf16.gmra.mxu0 %v1816
      %v2326 = vpop.f32.mrf.mxu0
      %v2327 = vadd.f32 %v2238, %v2326
      %v2328 = vpop.f32.mrf.mxu0
      %v2329 = vadd.f32 %v2240, %v2328
      %2330 = vmatmul.bf16.gmra.mxu0 %v1828
      %v2331 = vpop.f32.mrf.mxu0
      %v2332 = vadd.f32 %v2243, %v2331
      %v2333 = vpop.f32.mrf.mxu0
      %v2334 = vadd.f32 %v2245, %v2333
      %2335 = vmatmul.bf16.gmra.mxu0 %v1840
      %v2336 = vpop.f32.mrf.mxu0
      %v2337 = vadd.f32 %v2248, %v2336
      %v2338 = vpop.f32.mrf.mxu0
      %v2339 = vadd.f32 %v2250, %v2338
      %2340 = vmatmul.bf16.gmra.mxu0 %v1852
      %v2341 = vpop.f32.mrf.mxu0
      %v2342 = vadd.f32 %v2253, %v2341
      %v2343 = vpop.f32.mrf.mxu0
      %v2344 = vadd.f32 %v2255, %v2343
      %2345 = vmatmul.bf16.gmra.mxu0 %v1864
      %v2346 = vpop.f32.mrf.mxu0
      %v2347 = vadd.f32 %v2258, %v2346
      %v2348 = vpop.f32.mrf.mxu0
      %v2349 = vadd.f32 %v2260, %v2348
      %2350 = vmatmul.bf16.gmra.mxu0 %v1876
      %v2351 = vpop.f32.mrf.mxu0
      %v2352 = vadd.f32 %v2263, %v2351
      %v2353 = vpop.f32.mrf.mxu0
      %v2354 = vadd.f32 %v2265, %v2353
      %2355 = vmatmul.bf16.gmra.mxu0 %v1888
      %v2356 = vpop.f32.mrf.mxu0
      %v2357 = vadd.f32 %v2268, %v2356
      %v2358 = vpop.f32.mrf.mxu0
      %v2359 = vadd.f32 %v2270, %v2358
      %2360 = vmatmul.bf16.gmra.mxu0 %v1696
      %v2361 = vpop.f32.mrf.mxu0
      %v2362 = vadd.f32 %v2273, %v2361
      %v2363 = vpop.f32.mrf.mxu0
      %v2364 = vadd.f32 %v2275, %v2363
      %2365 = vdwg.mxu0
      %v2414 = vunpack.c.l.b16 %v1640
      %v2415 = vunpack.c.l.b16 %v1641
      %v2416 = vunpack.c.l.b16 %v1642
      %v2417 = vunpack.c.l.b16 %v1643
      %v2418 = vunpack.c.l.b16 %v1644
      %v2419 = vunpack.c.l.b16 %v1645
      %v2420 = vunpack.c.l.b16 %v1646
      %v2421 = vunpack.c.l.b16 %v1647
      %v2422 = vunpack.c.l.b16 %v1648
      %v2423 = vunpack.c.l.b16 %v1649
      %v2424 = vunpack.c.l.b16 %v1650
      %v2425 = vunpack.c.l.b16 %v1651
      %v2426 = vunpack.c.l.b16 %v1652
      %v2427 = vunpack.c.l.b16 %v1653
      %v2428 = vunpack.c.l.b16 %v1654
      %v2429 = vunpack.c.l.b16 %v1655
      %v2430 = vunpack.c.l.b16 %v1656
      %v2431 = vunpack.c.l.b16 %v1657
      %v2432 = vunpack.c.l.b16 %v1658
      %v2433 = vunpack.c.l.b16 %v1659
      %v2434 = vunpack.c.l.b16 %v1660
      %v2435 = vunpack.c.l.b16 %v1661
      %v2436 = vunpack.c.l.b16 %v1662
      %v2437 = vunpack.c.l.b16 %v1663
      %v2438 = vunpack.c.l.b16 %v1664
      %v2439 = vunpack.c.l.b16 %v1665
      %v2440 = vunpack.c.l.b16 %v1666
      %v2441 = vunpack.c.l.b16 %v1667
      %v2442 = vunpack.c.l.b16 %v1668
      %v2443 = vunpack.c.l.b16 %v1669
      %v2444 = vunpack.c.l.b16 %v1670
      %v2445 = vunpack.c.l.b16 %v1671
      %v2446 = vunpack.c.l.b16 %v1672
      %v2447 = vunpack.c.l.b16 %v1673
      %v2448 = vunpack.c.l.b16 %v1674
      %v2449 = vunpack.c.l.b16 %v1675
      %v2450 = vunpack.c.l.b16 %v1676
      %v2451 = vunpack.c.l.b16 %v1677
      %v2452 = vunpack.c.l.b16 %v1678
      %v2453 = vunpack.c.l.b16 %v1679
      %v2454 = vunpack.c.l.b16 %v1680
      %v2455 = vunpack.c.l.b16 %v1681
      %v2456 = vunpack.c.l.b16 %v1682
      %v2457 = vunpack.c.l.b16 %v1683
      %v2458 = vunpack.c.l.b16 %v1684
      %v2459 = vunpack.c.l.b16 %v1685
      %v2460 = vunpack.c.l.b16 %v1686
      %v2461 = vunpack.c.l.b16 %v1687
      %v2462 = vpack.c.b16 %v2415, %v2414
      %v2463 = vpack.c.b16 %v2417, %v2416
      %v2464 = vpack.c.b16 %v2419, %v2418
      %v2465 = vpack.c.b16 %v2421, %v2420
      %v2466 = vpack.c.b16 %v2423, %v2422
      %v2467 = vpack.c.b16 %v2425, %v2424
      %v2468 = vpack.c.b16 %v2427, %v2426
      %v2469 = vpack.c.b16 %v2429, %v2428
      %v2470 = vpack.c.b16 %v2431, %v2430
      %v2471 = vpack.c.b16 %v2433, %v2432
      %v2472 = vpack.c.b16 %v2435, %v2434
      %v2473 = vpack.c.b16 %v2437, %v2436
      %v2474 = vpack.c.b16 %v2439, %v2438
      %v2475 = vpack.c.b16 %v2441, %v2440
      %v2476 = vpack.c.b16 %v2443, %v2442
      %v2477 = vpack.c.b16 %v2445, %v2444
      %v2478 = vpack.c.b16 %v2447, %v2446
      %v2479 = vpack.c.b16 %v2449, %v2448
      %v2480 = vpack.c.b16 %v2451, %v2450
      %v2481 = vpack.c.b16 %v2453, %v2452
      %v2482 = vpack.c.b16 %v2455, %v2454
      %v2483 = vpack.c.b16 %v2457, %v2456
      %v2484 = vpack.c.b16 %v2459, %v2458
      %v2485 = vpack.c.b16 %v2461, %v2460
      %2510 = vmatpush.bf16.msra.mxu0 %v2469
      %2511 = vmatpush.bf16.msra.mxu0 %v2468
      %2512 = vmatpush.bf16.msra.mxu0 %v2467
      %2513 = vmatpush.bf16.msra.mxu0 %v2466
      %2514 = vmatpush.bf16.msra.mxu0 %v2465
      %2515 = vmatpush.bf16.msra.mxu0 %v2464
      %2516 = vmatpush.bf16.msra.mxu0 %v2463
      %2517 = vmatpush.bf16.msra.mxu0 %v2462
      %2518 = vmatmul.bf16.gmra.mxu0 0
      %v2519 = vpop.f32.mrf.mxu0
      %v2520 = vadd.f32 %v2287, %v2519
      %v2521 = vpop.f32.mrf.mxu0
      %v2522 = vadd.f32 %v2289, %v2521
      %2523 = vmatmul.bf16.gmra.mxu0 %v1608
      %v2524 = vpop.f32.mrf.mxu0
      %v2525 = vadd.f32 %v2292, %v2524
      %v2526 = vpop.f32.mrf.mxu0
      %v2527 = vadd.f32 %v2294, %v2526
      %2528 = vmatmul.bf16.gmra.mxu0 %v1609
      %v2529 = vpop.f32.mrf.mxu0
      %v2530 = vadd.f32 %v2297, %v2529
      %v2531 = vpop.f32.mrf.mxu0
      %v2532 = vadd.f32 %v2299, %v2531
      %2533 = vmatmul.bf16.gmra.mxu0 %v1610
      %v2534 = vpop.f32.mrf.mxu0
      %v2535 = vadd.f32 %v2302, %v2534
      %v2536 = vpop.f32.mrf.mxu0
      %v2537 = vadd.f32 %v2304, %v2536
      %2538 = vmatmul.bf16.gmra.mxu0 %v1611
      %v2539 = vpop.f32.mrf.mxu0
      %v2540 = vadd.f32 %v2307, %v2539
      %v2541 = vpop.f32.mrf.mxu0
      %v2542 = vadd.f32 %v2309, %v2541
      %2543 = vmatmul.bf16.gmra.mxu0 %v1612
      %v2544 = vpop.f32.mrf.mxu0
      %v2545 = vadd.f32 %v2312, %v2544
      %v2546 = vpop.f32.mrf.mxu0
      %v2547 = vadd.f32 %v2314, %v2546
      %2548 = vmatmul.bf16.gmra.mxu0 %v1613
      %v2549 = vpop.f32.mrf.mxu0
      %v2550 = vadd.f32 %v2317, %v2549
      %v2551 = vpop.f32.mrf.mxu0
      %v2552 = vadd.f32 %v2319, %v2551
      %2553 = vmatmul.bf16.gmra.mxu0 %v1614
      %v2554 = vpop.f32.mrf.mxu0
      %v2555 = vadd.f32 %v2322, %v2554
      %v2556 = vpop.f32.mrf.mxu0
      %v2557 = vadd.f32 %v2324, %v2556
      %2558 = vmatmul.bf16.gmra.mxu0 %v1615
      %v2559 = vpop.f32.mrf.mxu0
      %v2560 = vadd.f32 %v2327, %v2559
      %v2561 = vpop.f32.mrf.mxu0
      %v2562 = vadd.f32 %v2329, %v2561
      %2563 = vmatmul.bf16.gmra.mxu0 %v1616
      %v2564 = vpop.f32.mrf.mxu0
      %v2565 = vadd.f32 %v2332, %v2564
      %v2566 = vpop.f32.mrf.mxu0
      %v2567 = vadd.f32 %v2334, %v2566
      %2568 = vmatmul.bf16.gmra.mxu0 %v1617
      %v2569 = vpop.f32.mrf.mxu0
      %v2570 = vadd.f32 %v2337, %v2569
      %v2571 = vpop.f32.mrf.mxu0
      %v2572 = vadd.f32 %v2339, %v2571
      %2573 = vmatmul.bf16.gmra.mxu0 %v1618
      %v2574 = vpop.f32.mrf.mxu0
      %v2575 = vadd.f32 %v2342, %v2574
      %v2576 = vpop.f32.mrf.mxu0
      %v2577 = vadd.f32 %v2344, %v2576
      %2578 = vmatmul.bf16.gmra.mxu0 %v1619
      %v2579 = vpop.f32.mrf.mxu0
      %v2580 = vadd.f32 %v2347, %v2579
      %v2581 = vpop.f32.mrf.mxu0
      %v2582 = vadd.f32 %v2349, %v2581
      %2583 = vmatmul.bf16.gmra.mxu0 %v1620
      %v2584 = vpop.f32.mrf.mxu0
      %v2585 = vadd.f32 %v2352, %v2584
      %v2586 = vpop.f32.mrf.mxu0
      %v2587 = vadd.f32 %v2354, %v2586
      %2588 = vmatmul.bf16.gmra.mxu0 %v1621
      %v2589 = vpop.f32.mrf.mxu0
      %v2590 = vadd.f32 %v2357, %v2589
      %v2591 = vpop.f32.mrf.mxu0
      %v2592 = vadd.f32 %v2359, %v2591
      %2593 = vmatmul.bf16.gmra.mxu0 %v1622
      %v2594 = vpop.f32.mrf.mxu0
      %v2595 = vadd.f32 %v2362, %v2594
      %v2596 = vpop.f32.mrf.mxu0
      %v2597 = vadd.f32 %v2364, %v2596
      %2598 = vdwg.mxu0
      %2599 = vmatpush.bf16.msra.mxu0 %v2477
      %2600 = vmatpush.bf16.msra.mxu0 %v2476
      %2601 = vmatpush.bf16.msra.mxu0 %v2475
      %2602 = vmatpush.bf16.msra.mxu0 %v2474
      %2603 = vmatpush.bf16.msra.mxu0 %v2473
      %2604 = vmatpush.bf16.msra.mxu0 %v2472
      %2605 = vmatpush.bf16.msra.mxu0 %v2471
      %2606 = vmatpush.bf16.msra.mxu0 %v2470
      %2607 = vmatmul.bf16.gmra.mxu0 %v1608
      %v2608 = vpop.f32.mrf.mxu0
      %v2609 = vadd.f32 %v2520, %v2608
      %v2610 = vpop.f32.mrf.mxu0
      %v2611 = vadd.f32 %v2522, %v2610
      %2612 = vmatmul.bf16.gmra.mxu0 %v1609
      %v2613 = vpop.f32.mrf.mxu0
      %v2614 = vadd.f32 %v2525, %v2613
      %v2615 = vpop.f32.mrf.mxu0
      %v2616 = vadd.f32 %v2527, %v2615
      %2617 = vmatmul.bf16.gmra.mxu0 %v1610
      %v2618 = vpop.f32.mrf.mxu0
      %v2619 = vadd.f32 %v2530, %v2618
      %v2620 = vpop.f32.mrf.mxu0
      %v2621 = vadd.f32 %v2532, %v2620
      %2622 = vmatmul.bf16.gmra.mxu0 %v1611
      %v2623 = vpop.f32.mrf.mxu0
      %v2624 = vadd.f32 %v2535, %v2623
      %v2625 = vpop.f32.mrf.mxu0
      %v2626 = vadd.f32 %v2537, %v2625
      %2627 = vmatmul.bf16.gmra.mxu0 %v1612
      %v2628 = vpop.f32.mrf.mxu0
      %v2629 = vadd.f32 %v2540, %v2628
      %v2630 = vpop.f32.mrf.mxu0
      %v2631 = vadd.f32 %v2542, %v2630
      %2632 = vmatmul.bf16.gmra.mxu0 %v1613
      %v2633 = vpop.f32.mrf.mxu0
      %v2634 = vadd.f32 %v2545, %v2633
      %v2635 = vpop.f32.mrf.mxu0
      %v2636 = vadd.f32 %v2547, %v2635
      %2637 = vmatmul.bf16.gmra.mxu0 %v1614
      %v2638 = vpop.f32.mrf.mxu0
      %v2639 = vadd.f32 %v2550, %v2638
      %v2640 = vpop.f32.mrf.mxu0
      %v2641 = vadd.f32 %v2552, %v2640
      %2642 = vmatmul.bf16.gmra.mxu0 %v1615
      %v2643 = vpop.f32.mrf.mxu0
      %v2644 = vadd.f32 %v2555, %v2643
      %v2645 = vpop.f32.mrf.mxu0
      %v2646 = vadd.f32 %v2557, %v2645
      %2647 = vmatmul.bf16.gmra.mxu0 %v1616
      %v2648 = vpop.f32.mrf.mxu0
      %v2649 = vadd.f32 %v2560, %v2648
      %v2650 = vpop.f32.mrf.mxu0
      %v2651 = vadd.f32 %v2562, %v2650
      %2652 = vmatmul.bf16.gmra.mxu0 %v1617
      %v2653 = vpop.f32.mrf.mxu0
      %v2654 = vadd.f32 %v2565, %v2653
      %v2655 = vpop.f32.mrf.mxu0
      %v2656 = vadd.f32 %v2567, %v2655
      %2657 = vmatmul.bf16.gmra.mxu0 %v1618
      %v2658 = vpop.f32.mrf.mxu0
      %v2659 = vadd.f32 %v2570, %v2658
      %v2660 = vpop.f32.mrf.mxu0
      %v2661 = vadd.f32 %v2572, %v2660
      %2662 = vmatmul.bf16.gmra.mxu0 %v1619
      %v2663 = vpop.f32.mrf.mxu0
      %v2664 = vadd.f32 %v2575, %v2663
      %v2665 = vpop.f32.mrf.mxu0
      %v2666 = vadd.f32 %v2577, %v2665
      %2667 = vmatmul.bf16.gmra.mxu0 %v1620
      %v2668 = vpop.f32.mrf.mxu0
      %v2669 = vadd.f32 %v2580, %v2668
      %v2670 = vpop.f32.mrf.mxu0
      %v2671 = vadd.f32 %v2582, %v2670
      %2672 = vmatmul.bf16.gmra.mxu0 %v1621
      %v2673 = vpop.f32.mrf.mxu0
      %v2674 = vadd.f32 %v2585, %v2673
      %v2675 = vpop.f32.mrf.mxu0
      %v2676 = vadd.f32 %v2587, %v2675
      %2677 = vmatmul.bf16.gmra.mxu0 %v1622
      %v2678 = vpop.f32.mrf.mxu0
      %v2679 = vadd.f32 %v2590, %v2678
      %v2680 = vpop.f32.mrf.mxu0
      %v2681 = vadd.f32 %v2592, %v2680
      %2682 = vmatmul.bf16.gmra.mxu0 %v1623
      %v2683 = vpop.f32.mrf.mxu0
      %v2684 = vadd.f32 %v2595, %v2683
      %v2685 = vpop.f32.mrf.mxu0
      %v2686 = vadd.f32 %v2597, %v2685
      %2687 = vdwg.mxu0
      %2688 = vmatpush.bf16.msra.mxu0 %v2485
      %2689 = vmatpush.bf16.msra.mxu0 %v2484
      %2690 = vmatpush.bf16.msra.mxu0 %v2483
      %2691 = vmatpush.bf16.msra.mxu0 %v2482
      %2692 = vmatpush.bf16.msra.mxu0 %v2481
      %2693 = vmatpush.bf16.msra.mxu0 %v2480
      %2694 = vmatpush.bf16.msra.mxu0 %v2479
      %2695 = vmatpush.bf16.msra.mxu0 %v2478
      %2696 = vmatmul.bf16.gmra.mxu0 %v1609
      %v2697 = vpop.f32.mrf.mxu0
      %v2698 = vadd.f32 %v2609, %v2697
      %v2699 = vpop.f32.mrf.mxu0
      %v2700 = vadd.f32 %v2611, %v2699
      %2701 = vmatmul.bf16.gmra.mxu0 %v1610
      %v2702 = vpop.f32.mrf.mxu0
      %v2703 = vadd.f32 %v2614, %v2702
      %v2704 = vpop.f32.mrf.mxu0
      %v2705 = vadd.f32 %v2616, %v2704
      %2706 = vmatmul.bf16.gmra.mxu0 %v1611
      %v2707 = vpop.f32.mrf.mxu0
      %v2708 = vadd.f32 %v2619, %v2707
      %v2709 = vpop.f32.mrf.mxu0
      %v2710 = vadd.f32 %v2621, %v2709
      %2711 = vmatmul.bf16.gmra.mxu0 %v1612
      %v2712 = vpop.f32.mrf.mxu0
      %v2713 = vadd.f32 %v2624, %v2712
      %v2714 = vpop.f32.mrf.mxu0
      %v2715 = vadd.f32 %v2626, %v2714
      %2716 = vmatmul.bf16.gmra.mxu0 %v1613
      %v2717 = vpop.f32.mrf.mxu0
      %v2718 = vadd.f32 %v2629, %v2717
      %v2719 = vpop.f32.mrf.mxu0
      %v2720 = vadd.f32 %v2631, %v2719
      %2721 = vmatmul.bf16.gmra.mxu0 %v1614
      %v2722 = vpop.f32.mrf.mxu0
      %v2723 = vadd.f32 %v2634, %v2722
      %v2724 = vpop.f32.mrf.mxu0
      %v2725 = vadd.f32 %v2636, %v2724
      %2726 = vmatmul.bf16.gmra.mxu0 %v1615
      %v2727 = vpop.f32.mrf.mxu0
      %v2728 = vadd.f32 %v2639, %v2727
      %v2729 = vpop.f32.mrf.mxu0
      %v2730 = vadd.f32 %v2641, %v2729
      %2731 = vmatmul.bf16.gmra.mxu0 %v1616
      %v2732 = vpop.f32.mrf.mxu0
      %v2733 = vadd.f32 %v2644, %v2732
      %v2734 = vpop.f32.mrf.mxu0
      %v2735 = vadd.f32 %v2646, %v2734
      %2736 = vmatmul.bf16.gmra.mxu0 %v1617
      %v2737 = vpop.f32.mrf.mxu0
      %v2738 = vadd.f32 %v2649, %v2737
      %v2739 = vpop.f32.mrf.mxu0
      %v2740 = vadd.f32 %v2651, %v2739
      %2741 = vmatmul.bf16.gmra.mxu0 %v1618
      %v2742 = vpop.f32.mrf.mxu0
      %v2743 = vadd.f32 %v2654, %v2742
      %v2744 = vpop.f32.mrf.mxu0
      %v2745 = vadd.f32 %v2656, %v2744
      %2746 = vmatmul.bf16.gmra.mxu0 %v1619
      %v2747 = vpop.f32.mrf.mxu0
      %v2748 = vadd.f32 %v2659, %v2747
      %v2749 = vpop.f32.mrf.mxu0
      %v2750 = vadd.f32 %v2661, %v2749
      %2751 = vmatmul.bf16.gmra.mxu0 %v1620
      %v2752 = vpop.f32.mrf.mxu0
      %v2753 = vadd.f32 %v2664, %v2752
      %v2754 = vpop.f32.mrf.mxu0
      %v2755 = vadd.f32 %v2666, %v2754
      %2756 = vmatmul.bf16.gmra.mxu0 %v1621
      %v2757 = vpop.f32.mrf.mxu0
      %v2758 = vadd.f32 %v2669, %v2757
      %v2759 = vpop.f32.mrf.mxu0
      %v2760 = vadd.f32 %v2671, %v2759
      %2761 = vmatmul.bf16.gmra.mxu0 %v1622
      %v2762 = vpop.f32.mrf.mxu0
      %v2763 = vadd.f32 %v2674, %v2762
      %v2764 = vpop.f32.mrf.mxu0
      %v2765 = vadd.f32 %v2676, %v2764
      %2766 = vmatmul.bf16.gmra.mxu0 %v1623
      %v2767 = vpop.f32.mrf.mxu0
      %v2768 = vadd.f32 %v2679, %v2767
      %v2769 = vpop.f32.mrf.mxu0
      %v2770 = vadd.f32 %v2681, %v2769
      %2771 = vmatmul.bf16.gmra.mxu0 0
      %v2772 = vpop.f32.mrf.mxu0
      %v2773 = vadd.f32 %v2684, %v2772
      %v2774 = vpop.f32.mrf.mxu0
      %v2775 = vadd.f32 %v2686, %v2774
      %2776 = vdwg.mxu0
      %vm2810 = vcmask 1046528
      %v2811 = vrot.slane 0, 1
      %v2812 = vsel %vm2810, %v2811, %v2811
      %v2813 = vrot.slane %v1608, 1
      %v2814 = vrot.slane %v1624, 1
      %v2815 = vsel %vm2810, %v2813, %v2814
      %v2816 = vrot.slane %v1609, 1
      %v2817 = vrot.slane %v1625, 1
      %v2818 = vsel %vm2810, %v2816, %v2817
      %v2819 = vrot.slane %v1610, 1
      %v2820 = vrot.slane %v1626, 1
      %v2821 = vsel %vm2810, %v2819, %v2820
      %v2822 = vrot.slane %v1611, 1
      %v2823 = vrot.slane %v1627, 1
      %v2824 = vsel %vm2810, %v2822, %v2823
      %v2825 = vrot.slane %v1612, 1
      %v2826 = vrot.slane %v1628, 1
      %v2827 = vsel %vm2810, %v2825, %v2826
      %v2828 = vrot.slane %v1613, 1
      %v2829 = vrot.slane %v1629, 1
      %v2830 = vsel %vm2810, %v2828, %v2829
      %v2831 = vrot.slane %v1614, 1
      %v2832 = vrot.slane %v1630, 1
      %v2833 = vsel %vm2810, %v2831, %v2832
      %v2834 = vrot.slane %v1615, 1
      %v2835 = vrot.slane %v1631, 1
      %v2836 = vsel %vm2810, %v2834, %v2835
      %v2837 = vrot.slane %v1616, 1
      %v2838 = vrot.slane %v1632, 1
      %v2839 = vsel %vm2810, %v2837, %v2838
      %v2840 = vrot.slane %v1617, 1
      %v2841 = vrot.slane %v1633, 1
      %v2842 = vsel %vm2810, %v2840, %v2841
      %v2843 = vrot.slane %v1618, 1
      %v2844 = vrot.slane %v1634, 1
      %v2845 = vsel %vm2810, %v2843, %v2844
      %v2846 = vrot.slane %v1619, 1
      %v2847 = vrot.slane %v1635, 1
      %v2848 = vsel %vm2810, %v2846, %v2847
      %v2849 = vrot.slane %v1620, 1
      %v2850 = vrot.slane %v1636, 1
      %v2851 = vsel %vm2810, %v2849, %v2850
      %v2852 = vrot.slane %v1621, 1
      %v2853 = vrot.slane %v1637, 1
      %v2854 = vsel %vm2810, %v2852, %v2853
      %v2855 = vrot.slane %v1622, 1
      %v2856 = vrot.slane %v1638, 1
      %v2857 = vsel %vm2810, %v2855, %v2856
      %v2858 = vrot.slane %v1623, 1
      %v2859 = vrot.slane %v1639, 1
      %v2860 = vsel %vm2810, %v2858, %v2859
      %s2878 = scalar_lea.vmem %s1, 384
      %v2879 = vld [vmem:[%s2878] sm:$0xf]
      %v2880 = vld [vmem:[%s2878 + $0x4] sm:$0xf]
      %v2881 = vld [vmem:[%s2878 + $0x8] sm:$0xf]
      %v2882 = vld [vmem:[%s2878 + $0xc] sm:$0xf]
      %v2883 = vld [vmem:[%s2878 + $0x10] sm:$0xf]
      %v2884 = vld [vmem:[%s2878 + $0x14] sm:$0xf]
      %v2885 = vld [vmem:[%s2878 + $0x18] sm:$0xf]
      %v2886 = vld [vmem:[%s2878 + $0x1c] sm:$0xf]
      %v2887 = vld [vmem:[%s2878 + $0x20] sm:$0xf]
      %v2888 = vld [vmem:[%s2878 + $0x24] sm:$0xf]
      %v2889 = vld [vmem:[%s2878 + $0x28] sm:$0xf]
      %v2890 = vld [vmem:[%s2878 + $0x2c] sm:$0xf]
      %v2891 = vld [vmem:[%s2878 + $0x30] sm:$0xf]
      %v2892 = vld [vmem:[%s2878 + $0x34] sm:$0xf]
      %v2893 = vld [vmem:[%s2878 + $0x38] sm:$0xf]
      %v2894 = vld [vmem:[%s2878 + $0x3c] sm:$0xf]
      %v2895 = vld [vmem:[%s2878 + $0x40] sm:$0xf]
      %v2896 = vld [vmem:[%s2878 + $0x44] sm:$0xf]
      %v2897 = vld [vmem:[%s2878 + $0x48] sm:$0xf]
      %v2898 = vld [vmem:[%s2878 + $0x4c] sm:$0xf]
      %v2899 = vld [vmem:[%s2878 + $0x50] sm:$0xf]
      %v2900 = vld [vmem:[%s2878 + $0x54] sm:$0xf]
      %v2901 = vld [vmem:[%s2878 + $0x58] sm:$0xf]
      %v2902 = vld [vmem:[%s2878 + $0x5c] sm:$0xf]
      %v2903 = vld [vmem:[%s2878 + $0x60] sm:$0xf]
      %v2904 = vld [vmem:[%s2878 + $0x64] sm:$0xf]
      %v2905 = vld [vmem:[%s2878 + $0x68] sm:$0xf]
      %v2906 = vld [vmem:[%s2878 + $0x6c] sm:$0xf]
      %v2907 = vld [vmem:[%s2878 + $0x70] sm:$0xf]
      %v2908 = vld [vmem:[%s2878 + $0x74] sm:$0xf]
      %v2909 = vld [vmem:[%s2878 + $0x78] sm:$0xf]
      %v2910 = vld [vmem:[%s2878 + $0x7c] sm:$0xf]
      %v2911 = vld [vmem:[%s2878 + $0x80] sm:$0xf]
      %v2912 = vld [vmem:[%s2878 + $0x84] sm:$0xf]
      %v2913 = vld [vmem:[%s2878 + $0x88] sm:$0xf]
      %v2914 = vld [vmem:[%s2878 + $0x8c] sm:$0xf]
      %v2915 = vld [vmem:[%s2878 + $0x90] sm:$0xf]
      %v2916 = vld [vmem:[%s2878 + $0x94] sm:$0xf]
      %v2917 = vld [vmem:[%s2878 + $0x98] sm:$0xf]
      %v2918 = vld [vmem:[%s2878 + $0x9c] sm:$0xf]
      %v2919 = vld [vmem:[%s2878 + $0xa0] sm:$0xf]
      %v2920 = vld [vmem:[%s2878 + $0xa4] sm:$0xf]
      %v2921 = vld [vmem:[%s2878 + $0xa8] sm:$0xf]
      %v2922 = vld [vmem:[%s2878 + $0xac] sm:$0xf]
      %v2923 = vld [vmem:[%s2878 + $0xb0] sm:$0xf]
      %v2924 = vld [vmem:[%s2878 + $0xb4] sm:$0xf]
      %v2925 = vld [vmem:[%s2878 + $0xb8] sm:$0xf]
      %v2926 = vld [vmem:[%s2878 + $0xbc] sm:$0xf]
      %v2975 = vunpack.c.l.b16 %v2879
      %v2976 = vunpack.c.l.b16 %v2880
      %v2977 = vunpack.c.l.b16 %v2881
      %v2978 = vunpack.c.l.b16 %v2882
      %v2979 = vunpack.c.l.b16 %v2883
      %v2980 = vunpack.c.l.b16 %v2884
      %v2981 = vunpack.c.l.b16 %v2885
      %v2982 = vunpack.c.l.b16 %v2886
      %v2983 = vunpack.c.l.b16 %v2887
      %v2984 = vunpack.c.l.b16 %v2888
      %v2985 = vunpack.c.l.b16 %v2889
      %v2986 = vunpack.c.l.b16 %v2890
      %v2987 = vunpack.c.l.b16 %v2891
      %v2988 = vunpack.c.l.b16 %v2892
      %v2989 = vunpack.c.l.b16 %v2893
      %v2990 = vunpack.c.l.b16 %v2894
      %v2991 = vunpack.c.l.b16 %v2895
      %v2992 = vunpack.c.l.b16 %v2896
      %v2993 = vunpack.c.l.b16 %v2897
      %v2994 = vunpack.c.l.b16 %v2898
      %v2995 = vunpack.c.l.b16 %v2899
      %v2996 = vunpack.c.l.b16 %v2900
      %v2997 = vunpack.c.l.b16 %v2901
      %v2998 = vunpack.c.l.b16 %v2902
      %v2999 = vunpack.c.l.b16 %v2903
      %v3000 = vunpack.c.l.b16 %v2904
      %v3001 = vunpack.c.l.b16 %v2905
      %v3002 = vunpack.c.l.b16 %v2906
      %v3003 = vunpack.c.l.b16 %v2907
      %v3004 = vunpack.c.l.b16 %v2908
      %v3005 = vunpack.c.l.b16 %v2909
      %v3006 = vunpack.c.l.b16 %v2910
      %v3007 = vunpack.c.l.b16 %v2911
      %v3008 = vunpack.c.l.b16 %v2912
      %v3009 = vunpack.c.l.b16 %v2913
      %v3010 = vunpack.c.l.b16 %v2914
      %v3011 = vunpack.c.l.b16 %v2915
      %v3012 = vunpack.c.l.b16 %v2916
      %v3013 = vunpack.c.l.b16 %v2917
      %v3014 = vunpack.c.l.b16 %v2918
      %v3015 = vunpack.c.l.b16 %v2919
      %v3016 = vunpack.c.l.b16 %v2920
      %v3017 = vunpack.c.l.b16 %v2921
      %v3018 = vunpack.c.l.b16 %v2922
      %v3019 = vunpack.c.l.b16 %v2923
      %v3020 = vunpack.c.l.b16 %v2924
      %v3021 = vunpack.c.l.b16 %v2925
      %v3022 = vunpack.c.l.b16 %v2926
      %v3023 = vpack.c.b16 %v2976, %v2975
      %v3024 = vpack.c.b16 %v2978, %v2977
      %v3025 = vpack.c.b16 %v2980, %v2979
      %v3026 = vpack.c.b16 %v2982, %v2981
      %v3027 = vpack.c.b16 %v2984, %v2983
      %v3028 = vpack.c.b16 %v2986, %v2985
      %v3029 = vpack.c.b16 %v2988, %v2987
      %v3030 = vpack.c.b16 %v2990, %v2989
      %v3031 = vpack.c.b16 %v2992, %v2991
      %v3032 = vpack.c.b16 %v2994, %v2993
      %v3033 = vpack.c.b16 %v2996, %v2995
      %v3034 = vpack.c.b16 %v2998, %v2997
      %v3035 = vpack.c.b16 %v3000, %v2999
      %v3036 = vpack.c.b16 %v3002, %v3001
      %v3037 = vpack.c.b16 %v3004, %v3003
      %v3038 = vpack.c.b16 %v3006, %v3005
      %v3039 = vpack.c.b16 %v3008, %v3007
      %v3040 = vpack.c.b16 %v3010, %v3009
      %v3041 = vpack.c.b16 %v3012, %v3011
      %v3042 = vpack.c.b16 %v3014, %v3013
      %v3043 = vpack.c.b16 %v3016, %v3015
      %v3044 = vpack.c.b16 %v3018, %v3017
      %v3045 = vpack.c.b16 %v3020, %v3019
      %v3046 = vpack.c.b16 %v3022, %v3021
      %3071 = vmatpush.bf16.msra.mxu0 %v3030
      %3072 = vmatpush.bf16.msra.mxu0 %v3029
      %3073 = vmatpush.bf16.msra.mxu0 %v3028
      %3074 = vmatpush.bf16.msra.mxu0 %v3027
      %3075 = vmatpush.bf16.msra.mxu0 %v3026
      %3076 = vmatpush.bf16.msra.mxu0 %v3025
      %3077 = vmatpush.bf16.msra.mxu0 %v3024
      %3078 = vmatpush.bf16.msra.mxu0 %v3023
      %3079 = vmatmul.bf16.gmra.mxu0 %v2812
      %v3080 = vpop.f32.mrf.mxu0
      %v3081 = vadd.f32 0.0, %v3080
      %v3082 = vpop.f32.mrf.mxu0
      %v3083 = vadd.f32 0.0, %v3082
      %3084 = vmatmul.bf16.gmra.mxu0 %v2815
      %v3085 = vpop.f32.mrf.mxu0
      %v3086 = vadd.f32 0.0, %v3085
      %v3087 = vpop.f32.mrf.mxu0
      %v3088 = vadd.f32 0.0, %v3087
      %3089 = vmatmul.bf16.gmra.mxu0 %v2818
      %v3090 = vpop.f32.mrf.mxu0
      %v3091 = vadd.f32 0.0, %v3090
      %v3092 = vpop.f32.mrf.mxu0
      %v3093 = vadd.f32 0.0, %v3092
      %3094 = vmatmul.bf16.gmra.mxu0 %v2821
      %v3095 = vpop.f32.mrf.mxu0
      %v3096 = vadd.f32 0.0, %v3095
      %v3097 = vpop.f32.mrf.mxu0
      %v3098 = vadd.f32 0.0, %v3097
      %3099 = vmatmul.bf16.gmra.mxu0 %v2824
      %v3100 = vpop.f32.mrf.mxu0
      %v3101 = vadd.f32 0.0, %v3100
      %v3102 = vpop.f32.mrf.mxu0
      %v3103 = vadd.f32 0.0, %v3102
      %3104 = vmatmul.bf16.gmra.mxu0 %v2827
      %v3105 = vpop.f32.mrf.mxu0
      %v3106 = vadd.f32 0.0, %v3105
      %v3107 = vpop.f32.mrf.mxu0
      %v3108 = vadd.f32 0.0, %v3107
      %3109 = vmatmul.bf16.gmra.mxu0 %v2830
      %v3110 = vpop.f32.mrf.mxu0
      %v3111 = vadd.f32 0.0, %v3110
      %v3112 = vpop.f32.mrf.mxu0
      %v3113 = vadd.f32 0.0, %v3112
      %3114 = vmatmul.bf16.gmra.mxu0 %v2833
      %v3115 = vpop.f32.mrf.mxu0
      %v3116 = vadd.f32 0.0, %v3115
      %v3117 = vpop.f32.mrf.mxu0
      %v3118 = vadd.f32 0.0, %v3117
      %3119 = vmatmul.bf16.gmra.mxu0 %v2836
      %v3120 = vpop.f32.mrf.mxu0
      %v3121 = vadd.f32 0.0, %v3120
      %v3122 = vpop.f32.mrf.mxu0
      %v3123 = vadd.f32 0.0, %v3122
      %3124 = vmatmul.bf16.gmra.mxu0 %v2839
      %v3125 = vpop.f32.mrf.mxu0
      %v3126 = vadd.f32 0.0, %v3125
      %v3127 = vpop.f32.mrf.mxu0
      %v3128 = vadd.f32 0.0, %v3127
      %3129 = vmatmul.bf16.gmra.mxu0 %v2842
      %v3130 = vpop.f32.mrf.mxu0
      %v3131 = vadd.f32 0.0, %v3130
      %v3132 = vpop.f32.mrf.mxu0
      %v3133 = vadd.f32 0.0, %v3132
      %3134 = vmatmul.bf16.gmra.mxu0 %v2845
      %v3135 = vpop.f32.mrf.mxu0
      %v3136 = vadd.f32 0.0, %v3135
      %v3137 = vpop.f32.mrf.mxu0
      %v3138 = vadd.f32 0.0, %v3137
      %3139 = vmatmul.bf16.gmra.mxu0 %v2848
      %v3140 = vpop.f32.mrf.mxu0
      %v3141 = vadd.f32 0.0, %v3140
      %v3142 = vpop.f32.mrf.mxu0
      %v3143 = vadd.f32 0.0, %v3142
      %3144 = vmatmul.bf16.gmra.mxu0 %v2851
      %v3145 = vpop.f32.mrf.mxu0
      %v3146 = vadd.f32 0.0, %v3145
      %v3147 = vpop.f32.mrf.mxu0
      %v3148 = vadd.f32 0.0, %v3147
      %3149 = vmatmul.bf16.gmra.mxu0 %v2854
      %v3150 = vpop.f32.mrf.mxu0
      %v3151 = vadd.f32 0.0, %v3150
      %v3152 = vpop.f32.mrf.mxu0
      %v3153 = vadd.f32 0.0, %v3152
      %3154 = vmatmul.bf16.gmra.mxu0 %v2857
      %v3155 = vpop.f32.mrf.mxu0
      %v3156 = vadd.f32 0.0, %v3155
      %v3157 = vpop.f32.mrf.mxu0
      %v3158 = vadd.f32 0.0, %v3157
      %3159 = vdwg.mxu0
      %3160 = vmatpush.bf16.msra.mxu0 %v3038
      %3161 = vmatpush.bf16.msra.mxu0 %v3037
      %3162 = vmatpush.bf16.msra.mxu0 %v3036
      %3163 = vmatpush.bf16.msra.mxu0 %v3035
      %3164 = vmatpush.bf16.msra.mxu0 %v3034
      %3165 = vmatpush.bf16.msra.mxu0 %v3033
      %3166 = vmatpush.bf16.msra.mxu0 %v3032
      %3167 = vmatpush.bf16.msra.mxu0 %v3031
      %3168 = vmatmul.bf16.gmra.mxu0 %v2815
      %v3169 = vpop.f32.mrf.mxu0
      %v3170 = vadd.f32 %v3081, %v3169
      %v3171 = vpop.f32.mrf.mxu0
      %v3172 = vadd.f32 %v3083, %v3171
      %3173 = vmatmul.bf16.gmra.mxu0 %v2818
      %v3174 = vpop.f32.mrf.mxu0
      %v3175 = vadd.f32 %v3086, %v3174
      %v3176 = vpop.f32.mrf.mxu0
      %v3177 = vadd.f32 %v3088, %v3176
      %3178 = vmatmul.bf16.gmra.mxu0 %v2821
      %v3179 = vpop.f32.mrf.mxu0
      %v3180 = vadd.f32 %v3091, %v3179
      %v3181 = vpop.f32.mrf.mxu0
      %v3182 = vadd.f32 %v3093, %v3181
      %3183 = vmatmul.bf16.gmra.mxu0 %v2824
      %v3184 = vpop.f32.mrf.mxu0
      %v3185 = vadd.f32 %v3096, %v3184
      %v3186 = vpop.f32.mrf.mxu0
      %v3187 = vadd.f32 %v3098, %v3186
      %3188 = vmatmul.bf16.gmra.mxu0 %v2827
      %v3189 = vpop.f32.mrf.mxu0
      %v3190 = vadd.f32 %v3101, %v3189
      %v3191 = vpop.f32.mrf.mxu0
      %v3192 = vadd.f32 %v3103, %v3191
      %3193 = vmatmul.bf16.gmra.mxu0 %v2830
      %v3194 = vpop.f32.mrf.mxu0
      %v3195 = vadd.f32 %v3106, %v3194
      %v3196 = vpop.f32.mrf.mxu0
      %v3197 = vadd.f32 %v3108, %v3196
      %3198 = vmatmul.bf16.gmra.mxu0 %v2833
      %v3199 = vpop.f32.mrf.mxu0
      %v3200 = vadd.f32 %v3111, %v3199
      %v3201 = vpop.f32.mrf.mxu0
      %v3202 = vadd.f32 %v3113, %v3201
      %3203 = vmatmul.bf16.gmra.mxu0 %v2836
      %v3204 = vpop.f32.mrf.mxu0
      %v3205 = vadd.f32 %v3116, %v3204
      %v3206 = vpop.f32.mrf.mxu0
      %v3207 = vadd.f32 %v3118, %v3206
      %3208 = vmatmul.bf16.gmra.mxu0 %v2839
      %v3209 = vpop.f32.mrf.mxu0
      %v3210 = vadd.f32 %v3121, %v3209
      %v3211 = vpop.f32.mrf.mxu0
      %v3212 = vadd.f32 %v3123, %v3211
      %3213 = vmatmul.bf16.gmra.mxu0 %v2842
      %v3214 = vpop.f32.mrf.mxu0
      %v3215 = vadd.f32 %v3126, %v3214
      %v3216 = vpop.f32.mrf.mxu0
      %v3217 = vadd.f32 %v3128, %v3216
      %3218 = vmatmul.bf16.gmra.mxu0 %v2845
      %v3219 = vpop.f32.mrf.mxu0
      %v3220 = vadd.f32 %v3131, %v3219
      %v3221 = vpop.f32.mrf.mxu0
      %v3222 = vadd.f32 %v3133, %v3221
      %3223 = vmatmul.bf16.gmra.mxu0 %v2848
      %v3224 = vpop.f32.mrf.mxu0
      %v3225 = vadd.f32 %v3136, %v3224
      %v3226 = vpop.f32.mrf.mxu0
      %v3227 = vadd.f32 %v3138, %v3226
      %3228 = vmatmul.bf16.gmra.mxu0 %v2851
      %v3229 = vpop.f32.mrf.mxu0
      %v3230 = vadd.f32 %v3141, %v3229
      %v3231 = vpop.f32.mrf.mxu0
      %v3232 = vadd.f32 %v3143, %v3231
      %3233 = vmatmul.bf16.gmra.mxu0 %v2854
      %v3234 = vpop.f32.mrf.mxu0
      %v3235 = vadd.f32 %v3146, %v3234
      %v3236 = vpop.f32.mrf.mxu0
      %v3237 = vadd.f32 %v3148, %v3236
      %3238 = vmatmul.bf16.gmra.mxu0 %v2857
      %v3239 = vpop.f32.mrf.mxu0
      %v3240 = vadd.f32 %v3151, %v3239
      %v3241 = vpop.f32.mrf.mxu0
      %v3242 = vadd.f32 %v3153, %v3241
      %3243 = vmatmul.bf16.gmra.mxu0 %v2860
      %v3244 = vpop.f32.mrf.mxu0
      %v3245 = vadd.f32 %v3156, %v3244
      %v3246 = vpop.f32.mrf.mxu0
      %v3247 = vadd.f32 %v3158, %v3246
      %3248 = vdwg.mxu0
      %3249 = vmatpush.bf16.msra.mxu0 %v3046
      %3250 = vmatpush.bf16.msra.mxu0 %v3045
      %3251 = vmatpush.bf16.msra.mxu0 %v3044
      %3252 = vmatpush.bf16.msra.mxu0 %v3043
      %3253 = vmatpush.bf16.msra.mxu0 %v3042
      %3254 = vmatpush.bf16.msra.mxu0 %v3041
      %3255 = vmatpush.bf16.msra.mxu0 %v3040
      %3256 = vmatpush.bf16.msra.mxu0 %v3039
      %3257 = vmatmul.bf16.gmra.mxu0 %v2818
      %v3258 = vpop.f32.mrf.mxu0
      %v3259 = vadd.f32 %v3170, %v3258
      %v3260 = vpop.f32.mrf.mxu0
      %v3261 = vadd.f32 %v3172, %v3260
      %3262 = vmatmul.bf16.gmra.mxu0 %v2821
      %v3263 = vpop.f32.mrf.mxu0
      %v3264 = vadd.f32 %v3175, %v3263
      %v3265 = vpop.f32.mrf.mxu0
      %v3266 = vadd.f32 %v3177, %v3265
      %3267 = vmatmul.bf16.gmra.mxu0 %v2824
      %v3268 = vpop.f32.mrf.mxu0
      %v3269 = vadd.f32 %v3180, %v3268
      %v3270 = vpop.f32.mrf.mxu0
      %v3271 = vadd.f32 %v3182, %v3270
      %3272 = vmatmul.bf16.gmra.mxu0 %v2827
      %v3273 = vpop.f32.mrf.mxu0
      %v3274 = vadd.f32 %v3185, %v3273
      %v3275 = vpop.f32.mrf.mxu0
      %v3276 = vadd.f32 %v3187, %v3275
      %3277 = vmatmul.bf16.gmra.mxu0 %v2830
      %v3278 = vpop.f32.mrf.mxu0
      %v3279 = vadd.f32 %v3190, %v3278
      %v3280 = vpop.f32.mrf.mxu0
      %v3281 = vadd.f32 %v3192, %v3280
      %3282 = vmatmul.bf16.gmra.mxu0 %v2833
      %v3283 = vpop.f32.mrf.mxu0
      %v3284 = vadd.f32 %v3195, %v3283
      %v3285 = vpop.f32.mrf.mxu0
      %v3286 = vadd.f32 %v3197, %v3285
      %3287 = vmatmul.bf16.gmra.mxu0 %v2836
      %v3288 = vpop.f32.mrf.mxu0
      %v3289 = vadd.f32 %v3200, %v3288
      %v3290 = vpop.f32.mrf.mxu0
      %v3291 = vadd.f32 %v3202, %v3290
      %3292 = vmatmul.bf16.gmra.mxu0 %v2839
      %v3293 = vpop.f32.mrf.mxu0
      %v3294 = vadd.f32 %v3205, %v3293
      %v3295 = vpop.f32.mrf.mxu0
      %v3296 = vadd.f32 %v3207, %v3295
      %3297 = vmatmul.bf16.gmra.mxu0 %v2842
      %v3298 = vpop.f32.mrf.mxu0
      %v3299 = vadd.f32 %v3210, %v3298
      %v3300 = vpop.f32.mrf.mxu0
      %v3301 = vadd.f32 %v3212, %v3300
      %3302 = vmatmul.bf16.gmra.mxu0 %v2845
      %v3303 = vpop.f32.mrf.mxu0
      %v3304 = vadd.f32 %v3215, %v3303
      %v3305 = vpop.f32.mrf.mxu0
      %v3306 = vadd.f32 %v3217, %v3305
      %3307 = vmatmul.bf16.gmra.mxu0 %v2848
      %v3308 = vpop.f32.mrf.mxu0
      %v3309 = vadd.f32 %v3220, %v3308
      %v3310 = vpop.f32.mrf.mxu0
      %v3311 = vadd.f32 %v3222, %v3310
      %3312 = vmatmul.bf16.gmra.mxu0 %v2851
      %v3313 = vpop.f32.mrf.mxu0
      %v3314 = vadd.f32 %v3225, %v3313
      %v3315 = vpop.f32.mrf.mxu0
      %v3316 = vadd.f32 %v3227, %v3315
      %3317 = vmatmul.bf16.gmra.mxu0 %v2854
      %v3318 = vpop.f32.mrf.mxu0
      %v3319 = vadd.f32 %v3230, %v3318
      %v3320 = vpop.f32.mrf.mxu0
      %v3321 = vadd.f32 %v3232, %v3320
      %3322 = vmatmul.bf16.gmra.mxu0 %v2857
      %v3323 = vpop.f32.mrf.mxu0
      %v3324 = vadd.f32 %v3235, %v3323
      %v3325 = vpop.f32.mrf.mxu0
      %v3326 = vadd.f32 %v3237, %v3325
      %3327 = vmatmul.bf16.gmra.mxu0 %v2860
      %v3328 = vpop.f32.mrf.mxu0
      %v3329 = vadd.f32 %v3240, %v3328
      %v3330 = vpop.f32.mrf.mxu0
      %v3331 = vadd.f32 %v3242, %v3330
      %3332 = vmatmul.bf16.gmra.mxu0 %v2812
      %v3333 = vpop.f32.mrf.mxu0
      %v3334 = vadd.f32 %v3245, %v3333
      %v3335 = vpop.f32.mrf.mxu0
      %v3336 = vadd.f32 %v3247, %v3335
      %3337 = vdwg.mxu0
      %v3338 = vadd.f32 %v2698, %v3259
      %v3339 = vadd.f32 %v2700, %v3261
      %v3340 = vadd.f32 %v2703, %v3264
      %v3341 = vadd.f32 %v2705, %v3266
      %v3342 = vadd.f32 %v2708, %v3269
      %v3343 = vadd.f32 %v2710, %v3271
      %v3344 = vadd.f32 %v2713, %v3274
      %v3345 = vadd.f32 %v2715, %v3276
      %v3346 = vadd.f32 %v2718, %v3279
      %v3347 = vadd.f32 %v2720, %v3281
      %v3348 = vadd.f32 %v2723, %v3284
      %v3349 = vadd.f32 %v2725, %v3286
      %v3350 = vadd.f32 %v2728, %v3289
      %v3351 = vadd.f32 %v2730, %v3291
      %v3352 = vadd.f32 %v2733, %v3294
      %v3353 = vadd.f32 %v2735, %v3296
      %v3354 = vadd.f32 %v2738, %v3299
      %v3355 = vadd.f32 %v2740, %v3301
      %v3356 = vadd.f32 %v2743, %v3304
      %v3357 = vadd.f32 %v2745, %v3306
      %v3358 = vadd.f32 %v2748, %v3309
      %v3359 = vadd.f32 %v2750, %v3311
      %v3360 = vadd.f32 %v2753, %v3314
      %v3361 = vadd.f32 %v2755, %v3316
      %v3362 = vadd.f32 %v2758, %v3319
      %v3363 = vadd.f32 %v2760, %v3321
      %v3364 = vadd.f32 %v2763, %v3324
      %v3365 = vadd.f32 %v2765, %v3326
      %v3366 = vadd.f32 %v2768, %v3329
      %v3367 = vadd.f32 %v2770, %v3331
      %v3368 = vadd.f32 %v2773, %v3334
      %v3369 = vadd.f32 %v2775, %v3336
      %v3370 = vpack.c.bf16 %v3338, %v3338
      %v3371 = vpack.c.bf16 %v3339, %v3339
      %v3372 = vpack.c.bf16 %v3340, %v3340
      %v3373 = vpack.c.bf16 %v3341, %v3341
      %v3374 = vpack.c.bf16 %v3342, %v3342
      %v3375 = vpack.c.bf16 %v3343, %v3343
      %v3376 = vpack.c.bf16 %v3344, %v3344
      %v3377 = vpack.c.bf16 %v3345, %v3345
      %v3378 = vpack.c.bf16 %v3346, %v3346
      %v3379 = vpack.c.bf16 %v3347, %v3347
      %v3380 = vpack.c.bf16 %v3348, %v3348
      %v3381 = vpack.c.bf16 %v3349, %v3349
      %v3382 = vpack.c.bf16 %v3350, %v3350
      %v3383 = vpack.c.bf16 %v3351, %v3351
      %v3384 = vpack.c.bf16 %v3352, %v3352
      %v3385 = vpack.c.bf16 %v3353, %v3353
      %v3386 = vpack.c.bf16 %v3354, %v3354
      %v3387 = vpack.c.bf16 %v3355, %v3355
      %v3388 = vpack.c.bf16 %v3356, %v3356
      %v3389 = vpack.c.bf16 %v3357, %v3357
      %v3390 = vpack.c.bf16 %v3358, %v3358
      %v3391 = vpack.c.bf16 %v3359, %v3359
      %v3392 = vpack.c.bf16 %v3360, %v3360
      %v3393 = vpack.c.bf16 %v3361, %v3361
      %v3394 = vpack.c.bf16 %v3362, %v3362
      %v3395 = vpack.c.bf16 %v3363, %v3363
      %v3396 = vpack.c.bf16 %v3364, %v3364
      %v3397 = vpack.c.bf16 %v3365, %v3365
      %v3398 = vpack.c.bf16 %v3366, %v3366
      %v3399 = vpack.c.bf16 %v3367, %v3367
      %v3400 = vpack.c.bf16 %v3368, %v3368
      %v3401 = vpack.c.bf16 %v3369, %v3369
      %3402 = vst [vmem:[%s231] sm:$0xf] %v3370
      %3403 = vst [vmem:[%s231 + $0x4] sm:$0xf] %v3371
      %3404 = vst [vmem:[%s231 + $0x8] sm:$0xf] %v3372
      %3405 = vst [vmem:[%s231 + $0xc] sm:$0xf] %v3373
      %3406 = vst [vmem:[%s231 + $0x10] sm:$0xf] %v3374
      %3407 = vst [vmem:[%s231 + $0x14] sm:$0xf] %v3375
      %3408 = vst [vmem:[%s231 + $0x18] sm:$0xf] %v3376
      %3409 = vst [vmem:[%s231 + $0x1c] sm:$0xf] %v3377
      %3410 = vst [vmem:[%s231 + $0x20] sm:$0xf] %v3378
      %3411 = vst [vmem:[%s231 + $0x24] sm:$0xf] %v3379
      %3412 = vst [vmem:[%s231 + $0x28] sm:$0xf] %v3380
      %3413 = vst [vmem:[%s231 + $0x2c] sm:$0xf] %v3381
      %3414 = vst [vmem:[%s231 + $0x30] sm:$0xf] %v3382
      %3415 = vst [vmem:[%s231 + $0x34] sm:$0xf] %v3383
      %3416 = vst [vmem:[%s231 + $0x38] sm:$0xf] %v3384
      %3417 = vst [vmem:[%s231 + $0x3c] sm:$0xf] %v3385
      %3418 = vst [vmem:[%s231 + $0x40] sm:$0xf] %v3386
      %3419 = vst [vmem:[%s231 + $0x44] sm:$0xf] %v3387
      %3420 = vst [vmem:[%s231 + $0x48] sm:$0xf] %v3388
      %3421 = vst [vmem:[%s231 + $0x4c] sm:$0xf] %v3389
      %3422 = vst [vmem:[%s231 + $0x50] sm:$0xf] %v3390
      %3423 = vst [vmem:[%s231 + $0x54] sm:$0xf] %v3391
      %3424 = vst [vmem:[%s231 + $0x58] sm:$0xf] %v3392
      %3425 = vst [vmem:[%s231 + $0x5c] sm:$0xf] %v3393
      %3426 = vst [vmem:[%s231 + $0x60] sm:$0xf] %v3394
      %3427 = vst [vmem:[%s231 + $0x64] sm:$0xf] %v3395
      %3428 = vst [vmem:[%s231 + $0x68] sm:$0xf] %v3396
      %3429 = vst [vmem:[%s231 + $0x6c] sm:$0xf] %v3397
      %3430 = vst [vmem:[%s231 + $0x70] sm:$0xf] %v3398
      %3431 = vst [vmem:[%s231 + $0x74] sm:$0xf] %v3399
      %3432 = vst [vmem:[%s231 + $0x78] sm:$0xf] %v3400
      %3433 = vst [vmem:[%s231 + $0x7c] sm:$0xf] %v3401
      %v3434 = vadd.f32 %v3338, %v3339
      %v3435 = vadd.f32 %v3434, %v3340
      %v3436 = vadd.f32 %v3435, %v3341
      %v3437 = vadd.f32 %v3436, %v3342
      %v3438 = vadd.f32 %v3437, %v3343
      %v3439 = vadd.f32 %v3438, %v3344
      %v3440 = vadd.f32 %v3439, %v3345
      %v3441 = vadd.f32 %v3440, %v3346
      %v3442 = vadd.f32 %v3441, %v3347
      %v3443 = vadd.f32 %v3442, %v3348
      %v3444 = vadd.f32 %v3443, %v3349
      %v3445 = vadd.f32 %v3444, %v3350
      %v3446 = vadd.f32 %v3445, %v3351
      %v3447 = vadd.f32 %v3446, %v3352
      %v3448 = vadd.f32 %v3447, %v3353
      %v3449 = vadd.f32 %v3448, %v3354
      %v3450 = vadd.f32 %v3449, %v3355
      %v3451 = vadd.f32 %v3450, %v3356
      %v3452 = vadd.f32 %v3451, %v3357
      %v3453 = vadd.f32 %v3452, %v3358
      %v3454 = vadd.f32 %v3453, %v3359
      %v3455 = vadd.f32 %v3454, %v3360
      %v3456 = vadd.f32 %v3455, %v3361
      %v3457 = vadd.f32 %v3456, %v3362
      %v3458 = vadd.f32 %v3457, %v3363
      %v3459 = vadd.f32 %v3458, %v3364
      %v3460 = vadd.f32 %v3459, %v3365
      %v3461 = vadd.f32 %v3460, %v3366
      %v3462 = vadd.f32 %v3461, %v3367
      %v3463 = vadd.f32 %v3462, %v3368
      %v3464 = vadd.f32 %v3463, %v3369
      %v3465 = vrot.slane %v3464, 4
      %v3466 = vadd.f32 %v3464, %v3465
      %v3467 = vrot.slane %v3466, 2
      %v3468 = vadd.f32 %v3466, %v3467
      %v3469 = vrot.slane %v3468, 1
      %v3470 = vadd.f32 %v3468, %v3469
      %v3471 = vmul.f32 %v3338, %v3338
      %v3472 = vmul.f32 %v3339, %v3339
      %v3473 = vmul.f32 %v3340, %v3340
      %v3474 = vmul.f32 %v3341, %v3341
      %v3475 = vmul.f32 %v3342, %v3342
      %v3476 = vmul.f32 %v3343, %v3343
      %v3477 = vmul.f32 %v3344, %v3344
      %v3478 = vmul.f32 %v3345, %v3345
      %v3479 = vmul.f32 %v3346, %v3346
      %v3480 = vmul.f32 %v3347, %v3347
      %v3481 = vmul.f32 %v3348, %v3348
      %v3482 = vmul.f32 %v3349, %v3349
      %v3483 = vmul.f32 %v3350, %v3350
      %v3484 = vmul.f32 %v3351, %v3351
      %v3485 = vmul.f32 %v3352, %v3352
      %v3486 = vmul.f32 %v3353, %v3353
      %v3487 = vmul.f32 %v3354, %v3354
      %v3488 = vmul.f32 %v3355, %v3355
      %v3489 = vmul.f32 %v3356, %v3356
      %v3490 = vmul.f32 %v3357, %v3357
      %v3491 = vmul.f32 %v3358, %v3358
      %v3492 = vmul.f32 %v3359, %v3359
      %v3493 = vmul.f32 %v3360, %v3360
      %v3494 = vmul.f32 %v3361, %v3361
      %v3495 = vmul.f32 %v3362, %v3362
      %v3496 = vmul.f32 %v3363, %v3363
      %v3497 = vmul.f32 %v3364, %v3364
      %v3498 = vmul.f32 %v3365, %v3365
      %v3499 = vmul.f32 %v3366, %v3366
      %v3500 = vmul.f32 %v3367, %v3367
      %v3501 = vmul.f32 %v3368, %v3368
      %v3502 = vmul.f32 %v3369, %v3369
      %v3503 = vadd.f32 %v3471, %v3472
      %v3504 = vadd.f32 %v3503, %v3473
      %v3505 = vadd.f32 %v3504, %v3474
      %v3506 = vadd.f32 %v3505, %v3475
      %v3507 = vadd.f32 %v3506, %v3476
      %v3508 = vadd.f32 %v3507, %v3477
      %v3509 = vadd.f32 %v3508, %v3478
      %v3510 = vadd.f32 %v3509, %v3479
      %v3511 = vadd.f32 %v3510, %v3480
      %v3512 = vadd.f32 %v3511, %v3481
      %v3513 = vadd.f32 %v3512, %v3482
      %v3514 = vadd.f32 %v3513, %v3483
      %v3515 = vadd.f32 %v3514, %v3484
      %v3516 = vadd.f32 %v3515, %v3485
      %v3517 = vadd.f32 %v3516, %v3486
      %v3518 = vadd.f32 %v3517, %v3487
      %v3519 = vadd.f32 %v3518, %v3488
      %v3520 = vadd.f32 %v3519, %v3489
      %v3521 = vadd.f32 %v3520, %v3490
      %v3522 = vadd.f32 %v3521, %v3491
      %v3523 = vadd.f32 %v3522, %v3492
      %v3524 = vadd.f32 %v3523, %v3493
      %v3525 = vadd.f32 %v3524, %v3494
      %v3526 = vadd.f32 %v3525, %v3495
      %v3527 = vadd.f32 %v3526, %v3496
      %v3528 = vadd.f32 %v3527, %v3497
      %v3529 = vadd.f32 %v3528, %v3498
      %v3530 = vadd.f32 %v3529, %v3499
      %v3531 = vadd.f32 %v3530, %v3500
      %v3532 = vadd.f32 %v3531, %v3501
      %v3533 = vadd.f32 %v3532, %v3502
      %v3534 = vrot.slane %v3533, 4
      %v3535 = vadd.f32 %v3533, %v3534
      %v3536 = vrot.slane %v3535, 2
      %v3537 = vadd.f32 %v3535, %v3536
      %v3538 = vrot.slane %v3537, 1
      %v3539 = vadd.f32 %v3537, %v3538
      %vm3540 = vcmask 1040384
      %v3541 = vsel %vm3540, %v3470, %v3539
      %vm3542 = vcmask 1041408
      %v3543 = vsel %vm3542, %v3541, 0.0
      %3544 = vst [vmem:[%s235] sm:$0xff] %v3543
      %p3545 = scmp.lt.s32.totalorder %s17, 1
      %s3546 = scalar_select %p3545, %s17, 1
      %s3547 = smul.addr %s3546, 32
      %s3548 = smul.addr %s3547, 4
      %s3549 = scalar_lea.vmem %s4, %s3548
      %p3550 = scmp.lt.s32.totalorder %s17, 1
      %s3551 = scalar_select %p3550, %s17, 1
      %s3552 = smul.addr %s3551, 8
      %s3553 = scalar_lea.vmem %s5, %s3552
      // Predicated region
      $region37: #{up_block_forward.4} parent=35 // pred_check
        %p3554 = pneg %p124
      $region38: #{up_block_forward.4} parent=35 // pred_check_branch
        %3556 = sbr.rel (%p3554) target = $region40
      $region39: #{up_block_forward.4} parent=35 // pred_region
        _
      $region40: #{up_block_forward.4} parent=35 // pred_fallthru
        _
      // Predicated region
      $region41: #{up_block_forward.4} parent=35 // pred_check
        %p3557 = pneg %p150
      $region42: #{up_block_forward.4} parent=35 // pred_check_branch
        %3559 = sbr.rel (%p3557) target = $region44
      $region43: #{up_block_forward.4} parent=35 // pred_region
        _
      $region44: #{up_block_forward.4} parent=35 // pred_fallthru
        _
    $region36: #{up_block_forward.4} parent=5 // pred_fallthru
      _
    %p3560 = scmp.le.s32.totalorder 2, %s12
    // Predicated region
    $region45: #{up_block_forward.4} parent=5 // pred_check
      %p3561 = pneg %p3560
    $region46: #{up_block_forward.4} parent=5 // pred_check_branch
      %3563 = sbr.rel (%p3561) target = $region48
    $region47: #{up_block_forward.4} parent=5 // pred_region
      %s3564 = ssub.s32 %s12, 2
      // Predicated region
      $region49: #{up_block_forward.4} parent=47 // pred_check
        %p3565 = pneg %p130
      $region50: #{up_block_forward.4} parent=47 // pred_check_branch
        %3567 = sbr.rel (%p3565) target = $region52
      $region51: #{up_block_forward.4} parent=47 // pred_region
        %p3568 = scmp.lt.s32.totalorder %s18, 1
        %s3569 = scalar_select %p3568, %s18, 1
        %s3570 = smul.addr %s3569, 32
        %s3571 = smul.addr %s3570, 4
        %s3572 = scalar_lea.vmem %s4, %s3571
      $region52: #{up_block_forward.4} parent=47 // pred_fallthru
        _
      // Predicated region
      $region53: #{up_block_forward.4} parent=47 // pred_check
        %p3573 = pneg %p156
      $region54: #{up_block_forward.4} parent=47 // pred_check_branch
        %3575 = sbr.rel (%p3573) target = $region56
      $region55: #{up_block_forward.4} parent=47 // pred_region
        %p3576 = scmp.lt.s32.totalorder %s18, 1
        %s3577 = scalar_select %p3576, %s18, 1
        %s3578 = smul.addr %s3577, 8
        %s3579 = scalar_lea.vmem %s5, %s3578
      $region56: #{up_block_forward.4} parent=47 // pred_fallthru
        _
    $region48: #{up_block_forward.4} parent=5 // pred_fallthru
      _
  $region6: #{up_block_forward.4} parent=0 // loop_footer
    %s16 = sadd.s32 1, %s12
  $region7: #{up_block_forward.4} parent=0 // loop_footer_branch
    %11 = sbr.rel target = $region3
  $region8: #{up_block_forward.4} parent=0 // loop_exit
    _

</llo_original>
